<compile_context>
chip_gen: v7x
topology: tpu7x:2x2x1
jax: 0.10.0
libtpu: 0.0.40
codegen_flags: <defaults>
</compile_context>

<pallas_src>
import functools
import numpy as np
import jax
import jax.numpy as jnp
from jax import lax
from jax.experimental import pallas as pl
from jax.experimental.pallas import tpu as pltpu

BN_EPS = 1e-5


def _rup(x, m):
    return ((x + m - 1) // m) * m


def _pad_ch(x, mult=128):
    """Zero-pad the channel (lane) dim of an NHWC tensor to a multiple of `mult`."""
    c = x.shape[-1]
    cp = _rup(c, mult)
    if cp == c:
        return x
    # TODO(synk): for channel counts that are not multiples of 128 this is an extra HBM pad pass.
    return jnp.pad(x, ((0, 0),) * (x.ndim - 1) + ((0, cp - c),))


@functools.lru_cache(maxsize=None)
def _vmem_limit_bytes():
    """Per-generation scoped-VMEM cap: ~48 MiB on 64 MiB parts (v7x), larger on 128 MiB parts."""
    try:
        cap = int(pltpu.get_tpu_info().vmem_capacity_bytes)
    except Exception:
        return 32 * 1024 * 1024
    if cap >= 128 * 1024 * 1024:
        return 80 * 1024 * 1024
    if cap >= 64 * 1024 * 1024:
        return 48 * 1024 * 1024
    return max(16 * 1024 * 1024, cap // 2)


def _pick_tile_rows(H, batch, per_row_bytes, fixed_bytes, budget):
    """Largest divisor of H (multiple of 8 when possible) that fits the VMEM budget, preferring a
    split that gives the pipeline at least ~4 grid steps."""
    cands = [d for d in range(H, 0, -1) if H % d == 0 and (d % 8 == 0 or d == H)]
    chosen = None
    for th in cands:
        if fixed_bytes + per_row_bytes * (th + 2) > budget:
            continue
        if chosen is None:
            chosen = th
        if (H // th) * batch >= 4:
            return th
    return chosen if chosen is not None else cands[-1]


# ----------------------------------------------------------------------------------------
# Kernel 1: row-tiled 3x3 stride-1 conv over one or more channel segments, fused BN + ReLU.
# Input arrives as halo row-tiles (tile, TH+2, W+2, C_seg); per segment only 3 column-shifted
# slabs are materialised in VMEM and the 9 taps accumulate into a local f32 value.
# ----------------------------------------------------------------------------------------

def _conv3x3_kernel(*refs, n_seg, TH, W, act):
    xs = refs[:n_seg]
    ws = refs[n_seg:2 * n_seg]
    sc_ref, sh_ref, o_ref = refs[2 * n_seg:2 * n_seg + 3]
    acc = None
    for x_ref, w_ref in zip(xs, ws):
        xv = x_ref[0]                                       # (TH+2, W+2, C_seg) bf16
        c_seg = xv.shape[-1]
        for kw in range(3):
            slab = xv[:, kw:kw + W, :].reshape((TH + 2) * W, c_seg)   # one relayout per kw
            for kh in range(3):
                p = jnp.dot(slab[kh * W:(kh + TH) * W, :], w_ref[kh * 3 + kw],
                            preferred_element_type=jnp.float32)
                acc = p if acc is None else acc + p
    y = acc * sc_ref[...] + sh_ref[...]
    if act == "relu":
        y = jnp.maximum(y, 0.0)
    o_ref[0] = y.reshape(TH, W, o_ref.shape[-1]).astype(o_ref.dtype)


def conv3x3_bn_act(xs, w9s, scale, shift, act="relu"):
    """xs: list of NHWC bf16 segments (same N,H,W; channels multiples of 128).
    w9s: list of (9, C_seg, Co_pad) bf16. scale/shift: (1, Co_pad) f32 folded BN."""
    assert len(xs) == len(w9s)
    N, H, W, _ = xs[0].shape
    for x, w in zip(xs, w9s):
        assert x.shape[:3] == (N, H, W) and x.shape[-1] == w.shape[1], (x.shape, w.shape)
    Co = w9s[0].shape[-1]
    Wp = W + 2
    c_tot = sum(x.shape[-1] for x in xs)

    budget = _vmem_limit_bytes() // 2
    per_row = c_tot * Wp * 2 * 2 + W * Co * (2 * 2 + 4) + 3 * W * c_tot * 2
    fixed = sum(int(np.prod(w.shape)) * 2 * 2 for w in w9s) + Co * 8 * 2
    TH = _pick_tile_rows(H, N, per_row, fixed, budget)
    nT = H // TH

    # Halo row-tiles (N*nT, TH+2, W+2, C_seg) built in one XLA pass per segment.
    # TODO(synk): fold this halo pad / tile gather into the producing kernel's output spec.
    tiles = []
    for x in xs:
        xp = jnp.pad(x, ((0, 0), (1, 1), (1, 1), (0, 0)))
        xt = jnp.stack([xp[:, t * TH:t * TH + TH + 2] for t in range(nT)], axis=1)
        tiles.append(xt.reshape(N * nT, TH + 2, Wp, x.shape[-1]))

    def _in_map(n, t):
        return (n * nT + t, 0, 0, 0)

    in_specs = ([pl.BlockSpec((1, TH + 2, Wp, x.shape[-1]), _in_map) for x in xs]
                + [pl.BlockSpec(w.shape, lambda n, t: (0, 0, 0)) for w in w9s]
                + [pl.BlockSpec((1, Co), lambda n, t: (0, 0)),
                   pl.BlockSpec((1, Co), lambda n, t: (0, 0))])

    return pl.pallas_call(
        functools.partial(_conv3x3_kernel, n_seg=len(xs), TH=TH, W=W, act=act),
        out_shape=jax.ShapeDtypeStruct((N, H, W, Co), jnp.bfloat16),
        grid=(N, nT),
        in_specs=in_specs,
        out_specs=pl.BlockSpec((1, TH, W, Co), lambda n, t: (n, t, 0, 0)),
        compiler_params=pltpu.CompilerParams(
            dimension_semantics=("parallel", "parallel"),
            vmem_limit_bytes=_vmem_limit_bytes()),
    )(*tiles, *w9s, scale, shift)


# ----------------------------------------------------------------------------------------
# Kernel 2: ConvTranspose2d(k=2, s=2) with the pixel-shuffle + bias fused (row-tiled, no halo).
# ----------------------------------------------------------------------------------------

def _convT_kernel(x_ref, w_ref, sh_ref, o_ref, *, TH, W, half_p):
    cin = x_ref.shape[-1]
    x = x_ref[0].reshape(TH * W, cin)                       # bf16
    sh = sh_ref[...]
    y0 = jnp.dot(x, w_ref[0], preferred_element_type=jnp.float32) + sh   # rows 2h+0
    y1 = jnp.dot(x, w_ref[1], preferred_element_type=jnp.float32) + sh   # rows 2h+1
    y0 = y0.reshape(TH, 1, 2 * W, half_p)
    y1 = y1.reshape(TH, 1, 2 * W, half_p)
    out = jnp.concatenate([y0, y1], axis=1).reshape(2 * TH, 2 * W, half_p)
    o_ref[0] = out.astype(o_ref.dtype)


def conv_transpose_2x2_s2(x, wk, shift, half_p):
    """x: (N,H,W,Cin_pad) bf16.  wk: (2, Cin_pad, 2*half_p) bf16 (di, cin, dj*half_p+co).
    Output: (N, 2H, 2W, half_p) bf16 with bias added; padded out-channels are exactly 0."""
    N, H, W, Cin = x.shape
    budget = _vmem_limit_bytes() // 2
    per_row = W * Cin * 2 * 2 + 2 * (2 * W) * half_p * (2 * 2 + 4)
    fixed = int(np.prod(wk.shape)) * 2 * 2 + int(np.prod(shift.shape)) * 4 * 2
    TH = _pick_tile_rows(H, N, per_row, fixed, budget)
    nT = H // TH

    return pl.pallas_call(
        functools.partial(_convT_kernel, TH=TH, W=W, half_p=half_p),
        out_shape=jax.ShapeDtypeStruct((N, 2 * H, 2 * W, half_p), jnp.bfloat16),
        grid=(N, nT),
        in_specs=[pl.BlockSpec((1, TH, W, Cin), lambda n, t: (n, t, 0, 0)),
                  pl.BlockSpec(wk.shape, lambda n, t: (0, 0, 0)),
                  pl.BlockSpec(shift.shape, lambda n, t: (0, 0))],
        out_specs=pl.BlockSpec((1, 2 * TH, 2 * W, half_p), lambda n, t: (n, t, 0, 0)),
        compiler_params=pltpu.CompilerParams(
            dimension_semantics=("parallel", "parallel"),
            vmem_limit_bytes=_vmem_limit_bytes()),
    )(x, wk, shift)


# ----------------------------------------------------------------------------------------
# Kernel 3: 2x bilinear upsample, align_corners=True, as a VPU stencil (static 2-tap lerps).
# ----------------------------------------------------------------------------------------

def _ac_points(in_size, out_size):
    pts = []
    for i in range(out_size):
        src = 0.0 if out_size == 1 else i * (in_size - 1) / (out_size - 1)
        i0 = min(max(int(np.floor(src)), 0), in_size - 1)
        i1 = min(i0 + 1, in_size - 1)
        pts.append((i0, i1, float(src - i0)))
    return pts


def _bilinear2x_kernel(x_ref, o_ref, *, H, W):
    x = x_ref[0].astype(jnp.float32)                        # (H, W, C)
    rows = []
    for (i0, i1, w) in _ac_points(H, 2 * H):
        r = x[i0] if w == 0.0 else (1.0 - w) * x[i0] + w * x[i1]
        rows.append(r[None])
    y = jnp.concatenate(rows, axis=0)                       # (2H, W, C)
    cols = []
    for (j0, j1, w) in _ac_points(W, 2 * W):
        c = y[:, j0] if w == 0.0 else (1.0 - w) * y[:, j0] + w * y[:, j1]
        cols.append(c[:, None])
    o_ref[0] = jnp.concatenate(cols, axis=1).astype(o_ref.dtype)


def bilinear_up2(x):
    # TODO(synk): for large W the per-column static lerp loop should be blocked to bound op count.
    N, H, W, C = x.shape
    return pl.pallas_call(
        functools.partial(_bilinear2x_kernel, H=H, W=W),
        out_shape=jax.ShapeDtypeStruct((N, 2 * H, 2 * W, C), jnp.bfloat16),
        grid=(N,),
        in_specs=[pl.BlockSpec((1, H, W, C), lambda n: (n, 0, 0, 0))],
        out_specs=pl.BlockSpec((1, 2 * H, 2 * W, C), lambda n: (n, 0, 0, 0)),
        compiler_params=pltpu.CompilerParams(
            dimension_semantics=("parallel",),
            vmem_limit_bytes=_vmem_limit_bytes()),
    )(x)


# ----------------------------------------------------------------------------------------
# Deterministic parameters (packed / padded once at init, BN folded). Raw params kept for the
# pure-JAX reference used in the numerical check.
# ----------------------------------------------------------------------------------------

class ParamGen:
    def __init__(self, seed=0):
        self._key = jax.random.PRNGKey(seed)

    def _next(self):
        self._key, sub = jax.random.split(self._key)
        return sub

    def conv(self, kh, kw, cin, cout):
        std = 1.0 / np.sqrt(kh * kw * cin)
        return std * jax.random.normal(self._next(), (kh, kw, cin, cout), jnp.float32)

    def bias(self, c):
        return 0.05 * jax.random.normal(self._next(), (c,), jnp.float32)

    def bn(self, c):
        g = 1.0 + 0.1 * jax.random.normal(self._next(), (c,), jnp.float32)
        b = 0.05 * jax.random.normal(self._next(), (c,), jnp.float32)
        m = 0.05 * jax.random.normal(self._next(), (c,), jnp.float32)
        v = 0.5 + jax.random.uniform(self._next(), (c,), jnp.float32)
        return (g, b, m, v)


def _fold_bn(bn, cout):
    g, b, m, v = bn
    scale = g / jnp.sqrt(v + BN_EPS)
    shift = b - m * scale
    cop = _rup(cout, 128)
    sc = jnp.zeros((1, cop), jnp.float32).at[0, :cout].set(scale)
    sh = jnp.zeros((1, cop), jnp.float32).at[0, :cout].set(shift)
    return sc, sh


def _pack_conv3x3_segments(w, segments):
    """w: (3,3,Cin,Co) f32; segments: [(logical_C, phys_C), ...] in torch.cat channel order.
    Returns list of (9, phys_C, Co_pad) bf16 with zero rows/cols for channel padding."""
    _, _, cin, cout = w.shape
    assert sum(l for l, _ in segments) == cin
    cop = _rup(cout, 128)
    wn = np.asarray(w, np.float32)
    packs, off = [], 0
    for logical, phys in segments:
        arr = np.zeros((9, phys, cop), np.float32)
        arr[:, :logical, :cout] = wn[:, :, off:off + logical, :].reshape(9, logical, cout)
        packs.append(jnp.asarray(arr, jnp.bfloat16))
        off += logical
    return packs


def make_up_params(in_channels, out_channels, bilinear=True, x2_channels=None, seed=0):
    pg = ParamGen(seed)
    P = {"bilinear": bilinear, "out_channels": out_channels}
    raw = {"bilinear": bilinear}

    if bilinear:
        x2_ch = in_channels // 2 if x2_channels is None else x2_channels
        x1_ch = in_channels - x2_ch            # upsample does not change channels
        mid = in_channels // 2                 # DoubleConv(in, out, mid=in//2)
    else:
        half = in_channels // 2
        x1_ch = half
        x2_ch = (in_channels - half) if x2_channels is None else x2_channels
        mid = out_channels                     # DoubleConv(in, out)
        wt = pg.conv(2, 2, in_channels, half)  # (di, dj, cin, half)
        bias = pg.bias(half)
        raw["ct_w"], raw["ct_b"] = wt, bias
        cin_p, half_p = _rup(in_channels, 128), _rup(half, 128)
        wk = np.zeros((2, cin_p, 2 * half_p), np.float32)
        sh = np.zeros((1, 2 * half_p), np.float32)
        wt_np, b_np = np.asarray(wt, np.float32), np.asarray(bias, np.float32)
        for di in range(2):
            for dj in range(2):
                wk[di, :in_channels, dj * half_p:dj * half_p + half] = wt_np[di, dj]
        sh[0, :half] = b_np
        sh[0, half_p:half_p + half] = b_np
        P["ct_w"] = jnp.asarray(wk, jnp.bfloat16)
        P["ct_shift"] = jnp.asarray(sh, jnp.float32)
        P["ct_half_p"] = half_p

    assert x1_ch + x2_ch == in_channels
    x1_phys, x2_phys = _rup(x1_ch, 128), _rup(x2_ch, 128)

    c1_w, c1_bn = pg.conv(3, 3, in_channels, mid), pg.bn(mid)
    c2_w, c2_bn = pg.conv(3, 3, mid, out_channels), pg.bn(out_channels)
    raw.update(c1_w=c1_w, c1_bn=c1_bn, c2_w=c2_w, c2_bn=c2_bn)

    # torch.cat([x2, x1], dim=1) order -> segment 0 = x2, segment 1 = x1.
    P["c1_w9"] = _pack_conv3x3_segments(c1_w, [(x2_ch, x2_phys), (x1_ch, x1_phys)])
    P["c1_scale"], P["c1_shift"] = _fold_bn(c1_bn, mid)
    P["c2_w9"] = _pack_conv3x3_segments(c2_w, [(mid, _rup(mid, 128))])
    P["c2_scale"], P["c2_shift"] = _fold_bn(c2_bn, out_channels)
    P["raw"] = raw
    return P


# ----------------------------------------------------------------------------------------
# Up.forward
# ----------------------------------------------------------------------------------------

def up_forward(params, x1_nchw, x2_nchw):
    x1 = jnp.transpose(x1_nchw, (0, 2, 3, 1)).astype(jnp.bfloat16)   # NCHW -> NHWC
    x2 = jnp.transpose(x2_nchw, (0, 2, 3, 1)).astype(jnp.bfloat16)

    if params["bilinear"]:
        x1 = bilinear_up2(_pad_ch(x1))
    else:
        x1 = conv_transpose_2x2_s2(_pad_ch(x1), params["ct_w"], params["ct_shift"],
                                   params["ct_half_p"])

    # F.pad(x1, [dx//2, dx-dx//2, dy//2, dy-dy//2]) to match x2's spatial size.
    dy = x2.shape[1] - x1.shape[1]
    dx = x2.shape[2] - x1.shape[2]
    if dy or dx:
        # TODO(synk): fuse this F.pad into the upsample kernel's output spec when dy/dx != 0.
        x1 = jnp.pad(x1, ((0, 0), (dy // 2, dy - dy // 2), (dx // 2, dx - dx // 2), (0, 0)))

    # DoubleConv; conv1 consumes the two cat segments directly (no channel concat in HBM).
    # TODO(synk): DoubleConv fusion (keep conv1's row tile in VMEM for conv2) not implemented.
    x = conv3x3_bn_act([_pad_ch(x2), x1], params["c1_w9"],
                       params["c1_scale"], params["c1_shift"], act="relu")
    x = conv3x3_bn_act([x], params["c2_w9"],
                       params["c2_scale"], params["c2_shift"], act="relu")

    if x.shape[-1] != params["out_channels"]:
        x = x[..., :params["out_channels"]]
    return jnp.transpose(x, (0, 3, 1, 2)).astype(jnp.float32)        # NHWC -> NCHW


# ----------------------------------------------------------------------------------------
# Pure-JAX f32 reference (PyTorch semantics) for the numerical check.
# ----------------------------------------------------------------------------------------

def _ref_conv3x3_bn_relu(x, w, bn):
    y = lax.conv_general_dilated(x, w, window_strides=(1, 1), padding=((1, 1), (1, 1)),
                                 dimension_numbers=("NHWC", "HWIO", "NHWC"),
                                 precision=lax.Precision.HIGHEST)
    g, b, m, v = bn
    y = (y - m) * (g / jnp.sqrt(v + BN_EPS)) + b
    return jnp.maximum(y, 0.0)


def _ref_conv_transpose(x, wt, bias):
    N, H, W, _ = x.shape
    co = wt.shape[-1]
    y = jnp.einsum("nhwc,ijcd->nhiwjd", x, wt, precision=lax.Precision.HIGHEST)
    return y.reshape(N, 2 * H, 2 * W, co) + bias


def _ref_bilinear2x(x):
    def interp(a, axis):
        in_size = a.shape[axis]
        pts = _ac_points(in_size, 2 * in_size)
        i0 = jnp.asarray([p[0] for p in pts])
        i1 = jnp.asarray([p[1] for p in pts])
        w = jnp.asarray([p[2] for p in pts], jnp.float32)
        shp = [1] * a.ndim
        shp[axis] = 2 * in_size
        w = w.reshape(shp)
        return jnp.take(a, i0, axis=axis) * (1.0 - w) + jnp.take(a, i1, axis=axis) * w
    return interp(interp(x, 1), 2)


def ref_up_forward(params, x1_nchw, x2_nchw):
    raw = params["raw"]
    x1 = jnp.transpose(x1_nchw, (0, 2, 3, 1)).astype(jnp.float32)
    x2 = jnp.transpose(x2_nchw, (0, 2, 3, 1)).astype(jnp.float32)
    if raw["bilinear"]:
        x1 = _ref_bilinear2x(x1)
    else:
        x1 = _ref_conv_transpose(x1, raw["ct_w"], raw["ct_b"])
    dy = x2.shape[1] - x1.shape[1]
    dx = x2.shape[2] - x1.shape[2]
    if dy or dx:
        x1 = jnp.pad(x1, ((0, 0), (dy // 2, dy - dy // 2), (dx // 2, dx - dx // 2), (0, 0)))
    x = jnp.concatenate([x2, x1], axis=-1)
    x = _ref_conv3x3_bn_relu(x, raw["c1_w"], raw["c1_bn"])
    x = _ref_conv3x3_bn_relu(x, raw["c2_w"], raw["c2_bn"])
    return jnp.transpose(x, (0, 3, 1, 2))


def _check(name, y, ref, shape):
    assert y.shape == shape, (name, y.shape)
    assert bool(jnp.all(jnp.isfinite(y))), name
    max_err = float(jnp.max(jnp.abs(y - ref)))
    mean_err = float(jnp.mean(jnp.abs(y - ref)))
    assert max_err < 0.25 and mean_err < 0.02, (name, max_err, mean_err)


if __name__ == "__main__":
    key = jax.random.PRNGKey(0)
    k1, k2, k3, k4 = jax.random.split(key, 4)

    # Up(256, 128, bilinear=False): ConvTranspose2d(256,128,2,2) -> cat(skip 128ch) -> DoubleConv(256,128)
    x1 = jax.random.normal(k1, (2, 256, 8, 8), jnp.float32)       # NCHW, like PyTorch
    x2 = jax.random.normal(k2, (2, 128, 16, 16), jnp.float32)
    params_ct = make_up_params(256, 128, bilinear=False, seed=0)
    y_ct = jax.jit(functools.partial(up_forward, params_ct))(x1, x2)
    jax.block_until_ready(y_ct)
    ref_ct = ref_up_forward(params_ct, x1, x2)
    _check("convtranspose", y_ct, ref_ct, (2, 128, 16, 16))

    # Up(256, 128) with the constructor default bilinear=True: Upsample -> cat -> DoubleConv(256,128,128)
    x1b = jax.random.normal(k3, (2, 128, 8, 8), jnp.float32)
    x2b = jax.random.normal(k4, (2, 128, 16, 16), jnp.float32)
    params_bi = make_up_params(256, 128, bilinear=True, seed=1)
    y_bi = jax.jit(functools.partial(up_forward, params_bi))(x1b, x2b)
    jax.block_until_ready(y_bi)
    ref_bi = ref_up_forward(params_bi, x1b, x2b)
    _check("bilinear", y_bi, ref_bi, (2, 128, 16, 16))

    print("KERNEL_OK")
</pallas_src>

<mosaic_0001>
module attributes {stable_mosaic.version = 11 : i64} {
  func.func @_convT_kernel(%arg0: i32, %arg1: i32, %arg2: memref<1x8x8x256xbf16, #tpu.memory_space<vmem>>, %arg3: memref<2x256x256xbf16, #tpu.memory_space<vmem>>, %arg4: memref<1x256xf32, #tpu.memory_space<vmem>>, %arg5: memref<1x16x16x128xbf16, #tpu.memory_space<vmem>>) attributes {dimension_semantics = [#tpu.dimension_semantics<parallel>, #tpu.dimension_semantics<parallel>], iteration_bounds = array<i64: 2, 1>, scalar_prefetch = 0 : i64, scratch_operands = 0 : i64, tpu.core_type = #tpu.core_type<tc>, window_params = [{transform_indices = @transform_0, window_bounds = array<i64: 1, 8, 8, 256>}, {pipeline_mode = #tpu.pipeline_mode<synchronous>, transform_indices = @transform_1, window_bounds = array<i64: 2, 256, 256>}, {pipeline_mode = #tpu.pipeline_mode<synchronous>, transform_indices = @transform_2, window_bounds = array<i64: 1, 256>}, {transform_indices = @transform_3, window_bounds = array<i64: 1, 16, 16, 128>}]} {
    %c0 = arith.constant 0 : index
    %c0_0 = arith.constant 0 : index
    %c0_1 = arith.constant 0 : index
    %c0_2 = arith.constant 0 : index
    %0 = vector.load %arg2[%c0, %c0_0, %c0_1, %c0_2] : memref<1x8x8x256xbf16, #tpu.memory_space<vmem>>, vector<1x8x8x256xbf16>
    %1 = vector.shape_cast %0 : vector<1x8x8x256xbf16> to vector<8x8x256xbf16>
    %2 = vector.shape_cast %1 : vector<8x8x256xbf16> to vector<64x256xbf16>
    %c0_3 = arith.constant 0 : index
    %c0_4 = arith.constant 0 : index
    %3 = vector.load %arg4[%c0_3, %c0_4] : memref<1x256xf32, #tpu.memory_space<vmem>>, vector<1x256xf32>
    %c0_5 = arith.constant 0 : index
    %c0_6 = arith.constant 0 : index
    %c0_7 = arith.constant 0 : index
    %4 = vector.load %arg3[%c0_5, %c0_6, %c0_7] : memref<2x256x256xbf16, #tpu.memory_space<vmem>>, vector<1x256x256xbf16>
    %5 = vector.shape_cast %4 : vector<1x256x256xbf16> to vector<256x256xbf16>
    %cst = arith.constant dense<0.000000e+00> : vector<64x256xf32>
    %6 = tpu.matmul %2, %5, %cst {dimension_numbers = #tpu.dot_dimension_numbers<[1], [0], [0], [1], [0, 0, 1, 1], [], []>} : vector<64x256xbf16>, vector<256x256xbf16>, vector<64x256xf32> -> vector<64x256xf32>
    %7 = vector.broadcast %3 : vector<1x256xf32> to vector<64x256xf32>
    %8 = arith.addf %6, %7 : vector<64x256xf32>
    %c1 = arith.constant 1 : index
    %c0_8 = arith.constant 0 : index
    %c0_9 = arith.constant 0 : index
    %9 = vector.load %arg3[%c1, %c0_8, %c0_9] : memref<2x256x256xbf16, #tpu.memory_space<vmem>>, vector<1x256x256xbf16>
    %10 = vector.shape_cast %9 : vector<1x256x256xbf16> to vector<256x256xbf16>
    %cst_10 = arith.constant dense<0.000000e+00> : vector<64x256xf32>
    %11 = tpu.matmul %2, %10, %cst_10 {dimension_numbers = #tpu.dot_dimension_numbers<[1], [0], [0], [1], [0, 0, 1, 1], [], []>} : vector<64x256xbf16>, vector<256x256xbf16>, vector<64x256xf32> -> vector<64x256xf32>
    %12 = vector.broadcast %3 : vector<1x256xf32> to vector<64x256xf32>
    %13 = arith.addf %11, %12 : vector<64x256xf32>
    %14 = vector.shape_cast %8 : vector<64x256xf32> to vector<8x1x16x128xf32>
    %15 = vector.shape_cast %13 : vector<64x256xf32> to vector<8x1x16x128xf32>
    %16 = tpu.concatenate %14, %15 in 1 : vector<8x1x16x128xf32>, vector<8x1x16x128xf32> -> vector<8x2x16x128xf32>
    %17 = vector.shape_cast %16 : vector<8x2x16x128xf32> to vector<16x16x128xf32>
    %18 = arith.truncf %17 : vector<16x16x128xf32> to vector<16x16x128xbf16>
    %c0_11 = arith.constant 0 : index
    %c0_12 = arith.constant 0 : index
    %c0_13 = arith.constant 0 : index
    %c0_14 = arith.constant 0 : index
    %19 = vector.load %arg5[%c0_11, %c0_12, %c0_13, %c0_14] : memref<1x16x16x128xbf16, #tpu.memory_space<vmem>>, vector<1x16x16x128xbf16>
    %20 = vector.shape_cast %19 : vector<1x16x16x128xbf16> to vector<16x16x128xbf16>
    %21 = vector.shape_cast %18 : vector<16x16x128xbf16> to vector<1x16x16x128xbf16>
    tpu.vector_store %arg5[%c0_11, %c0_12, %c0_13, %c0_14], %21 {strides = array<i32>} : memref<1x16x16x128xbf16, #tpu.memory_space<vmem>>, vector<1x16x16x128xbf16>,
    return
  }
  func.func @transform_0(%arg0: i32, %arg1: i32) -> (i32, i32, i32, i32) {
    %c0_i32 = arith.constant 0 : i32
    %c0_i32_0 = arith.constant 0 : i32
    %c0_i32_1 = arith.constant 0 : i32
    return %arg0, %arg1, %c0_i32, %c0_i32_0 : i32, i32, i32, i32
  }
  func.func @transform_1(%arg0: i32, %arg1: i32) -> (i32, i32, i32) {
    %c0_i32 = arith.constant 0 : i32
    %c0_i32_0 = arith.constant 0 : i32
    %c0_i32_1 = arith.constant 0 : i32
    %c0_i32_2 = arith.constant 0 : i32
    return %c0_i32, %c0_i32_0, %c0_i32_1 : i32, i32, i32
  }
  func.func @transform_2(%arg0: i32, %arg1: i32) -> (i32, i32) {
    %c0_i32 = arith.constant 0 : i32
    %c0_i32_0 = arith.constant 0 : i32
    %c0_i32_1 = arith.constant 0 : i32
    return %c0_i32, %c0_i32_0 : i32, i32
  }
  func.func @transform_3(%arg0: i32, %arg1: i32) -> (i32, i32, i32, i32) {
    %c0_i32 = arith.constant 0 : i32
    %c0_i32_0 = arith.constant 0 : i32
    %c0_i32_1 = arith.constant 0 : i32
    return %arg0, %arg1, %c0_i32, %c0_i32_0 : i32, i32, i32, i32
  }
}

module attributes {stable_mosaic.version = 11 : i64} {
  func.func @_conv3x3_kernel(%arg0: i32, %arg1: i32, %arg2: memref<1x10x18x128xbf16, #tpu.memory_space<vmem>>, %arg3: memref<9x128x128xbf16, #tpu.memory_space<vmem>>, %arg4: memref<1x128xf32, #tpu.memory_space<vmem>>, %arg5: memref<1x128xf32, #tpu.memory_space<vmem>>, %arg6: memref<1x8x16x128xbf16, #tpu.memory_space<vmem>>) attributes {dimension_semantics = [#tpu.dimension_semantics<parallel>, #tpu.dimension_semantics<parallel>], iteration_bounds = array<i64: 2, 2>, scalar_prefetch = 0 : i64, scratch_operands = 0 : i64, tpu.core_type = #tpu.core_type<tc>, window_params = [{transform_indices = @transform_0, window_bounds = array<i64: 1, 10, 18, 128>}, {pipeline_mode = #tpu.pipeline_mode<synchronous>, transform_indices = @transform_1, window_bounds = array<i64: 9, 128, 128>}, {pipeline_mode = #tpu.pipeline_mode<synchronous>, transform_indices = @transform_2, window_bounds = array<i64: 1, 128>}, {pipeline_mode = #tpu.pipeline_mode<synchronous>, transform_indices = @transform_3, window_bounds = array<i64: 1, 128>}, {transform_indices = @transform_4, window_bounds = array<i64: 1, 8, 16, 128>}]} {
    %c0 = arith.constant 0 : index
    %c0_0 = arith.constant 0 : index
    %c0_1 = arith.constant 0 : index
    %c0_2 = arith.constant 0 : index
    %0 = vector.load %arg2[%c0, %c0_0, %c0_1, %c0_2] : memref<1x10x18x128xbf16, #tpu.memory_space<vmem>>, vector<1x10x18x128xbf16>
    %1 = vector.shape_cast %0 : vector<1x10x18x128xbf16> to vector<10x18x128xbf16>
    %2 = vector.extract_strided_slice %1 {offsets = [0, 0, 0], sizes = [10, 16, 128], strides = [1, 1, 1]} : vector<10x18x128xbf16> to vector<10x16x128xbf16>
    %3 = vector.shape_cast %2 : vector<10x16x128xbf16> to vector<160x128xbf16>
    %4 = vector.extract_strided_slice %3 {offsets = [0, 0], sizes = [128, 128], strides = [1, 1]} : vector<160x128xbf16> to vector<128x128xbf16>
    %c0_3 = arith.constant 0 : index
    %c0_4 = arith.constant 0 : index
    %c0_5 = arith.constant 0 : index
    %5 = vector.load %arg3[%c0_3, %c0_4, %c0_5] : memref<9x128x128xbf16, #tpu.memory_space<vmem>>, vector<1x128x128xbf16>
    %6 = vector.shape_cast %5 : vector<1x128x128xbf16> to vector<128x128xbf16>
    %cst = arith.constant dense<0.000000e+00> : vector<128x128xf32>
    %7 = tpu.matmul %4, %6, %cst {dimension_numbers = #tpu.dot_dimension_numbers<[1], [0], [0], [1], [0, 0, 1, 1], [], []>} : vector<128x128xbf16>, vector<128x128xbf16>, vector<128x128xf32> -> vector<128x128xf32>
    %8 = vector.extract_strided_slice %3 {offsets = [16, 0], sizes = [128, 128], strides = [1, 1]} : vector<160x128xbf16> to vector<128x128xbf16>
    %c3 = arith.constant 3 : index
    %c0_6 = arith.constant 0 : index
    %c0_7 = arith.constant 0 : index
    %9 = vector.load %arg3[%c3, %c0_6, %c0_7] : memref<9x128x128xbf16, #tpu.memory_space<vmem>>, vector<1x128x128xbf16>
    %10 = vector.shape_cast %9 : vector<1x128x128xbf16> to vector<128x128xbf16>
    %cst_8 = arith.constant dense<0.000000e+00> : vector<128x128xf32>
    %11 = tpu.matmul %8, %10, %cst_8 {dimension_numbers = #tpu.dot_dimension_numbers<[1], [0], [0], [1], [0, 0, 1, 1], [], []>} : vector<128x128xbf16>, vector<128x128xbf16>, vector<128x128xf32> -> vector<128x128xf32>
    %12 = arith.addf %7, %11 : vector<128x128xf32>
    %13 = vector.extract_strided_slice %3 {offsets = [32, 0], sizes = [128, 128], strides = [1, 1]} : vector<160x128xbf16> to vector<128x128xbf16>
    %c6 = arith.constant 6 : index
    %c0_9 = arith.constant 0 : index
    %c0_10 = arith.constant 0 : index
    %14 = vector.load %arg3[%c6, %c0_9, %c0_10] : memref<9x128x128xbf16, #tpu.memory_space<vmem>>, vector<1x128x128xbf16>
    %15 = vector.shape_cast %14 : vector<1x128x128xbf16> to vector<128x128xbf16>
    %cst_11 = arith.constant dense<0.000000e+00> : vector<128x128xf32>
    %16 = tpu.matmul %13, %15, %cst_11 {dimension_numbers = #tpu.dot_dimension_numbers<[1], [0], [0], [1], [0, 0, 1, 1], [], []>} : vector<128x128xbf16>, vector<128x128xbf16>, vector<128x128xf32> -> vector<128x128xf32>
    %17 = arith.addf %12, %16 : vector<128x128xf32>
    %18 = vector.extract_strided_slice %1 {offsets = [0, 1, 0], sizes = [10, 16, 128], strides = [1, 1, 1]} : vector<10x18x128xbf16> to vector<10x16x128xbf16>
    %19 = vector.shape_cast %18 : vector<10x16x128xbf16> to vector<160x128xbf16>
    %20 = vector.extract_strided_slice %19 {offsets = [0, 0], sizes = [128, 128], strides = [1, 1]} : vector<160x128xbf16> to vector<128x128xbf16>
    %c1 = arith.constant 1 : index
    %c0_12 = arith.constant 0 : index
    %c0_13 = arith.constant 0 : index
    %21 = vector.load %arg3[%c1, %c0_12, %c0_13] : memref<9x128x128xbf16, #tpu.memory_space<vmem>>, vector<1x128x128xbf16>
    %22 = vector.shape_cast %21 : vector<1x128x128xbf16> to vector<128x128xbf16>
    %cst_14 = arith.constant dense<0.000000e+00> : vector<128x128xf32>
    %23 = tpu.matmul %20, %22, %cst_14 {dimension_numbers = #tpu.dot_dimension_numbers<[1], [0], [0], [1], [0, 0, 1, 1], [], []>} : vector<128x128xbf16>, vector<128x128xbf16>, vector<128x128xf32> -> vector<128x128xf32>
    %24 = arith.addf %17, %23 : vector<128x128xf32>
    %25 = vector.extract_strided_slice %19 {offsets = [16, 0], sizes = [128, 128], strides = [1, 1]} : vector<160x128xbf16> to vector<128x128xbf16>
    %c4 = arith.constant 4 : index
    %c0_15 = arith.constant 0 : index
    %c0_16 = arith.constant 0 : index
    %26 = vector.load %arg3[%c4, %c0_15, %c0_16] : memref<9x128x128xbf16, #tpu.memory_space<vmem>>, vector<1x128x128xbf16>
    %27 = vector.shape_cast %26 : vector<1x128x128xbf16> to vector<128x128xbf16>
    %cst_17 = arith.constant dense<0.000000e+00> : vector<128x128xf32>
    %28 = tpu.matmul %25, %27, %cst_17 {dimension_numbers = #tpu.dot_dimension_numbers<[1], [0], [0], [1], [0, 0, 1, 1], [], []>} : vector<128x128xbf16>, vector<128x128xbf16>, vector<128x128xf32> -> vector<128x128xf32>
    %29 = arith.addf %24, %28 : vector<128x128xf32>
    %30 = vector.extract_strided_slice %19 {offsets = [32, 0], sizes = [128, 128], strides = [1, 1]} : vector<160x128xbf16> to vector<128x128xbf16>
    %c7 = arith.constant 7 : index
    %c0_18 = arith.constant 0 : index
    %c0_19 = arith.constant 0 : index
    %31 = vector.load %arg3[%c7, %c0_18, %c0_19] : memref<9x128x128xbf16, #tpu.memory_space<vmem>>, vector<1x128x128xbf16>
    %32 = vector.shape_cast %31 : vector<1x128x128xbf16> to vector<128x128xbf16>
    %cst_20 = arith.constant dense<0.000000e+00> : vector<128x128xf32>
    %33 = tpu.matmul %30, %32, %cst_20 {dimension_numbers = #tpu.dot_dimension_numbers<[1], [0], [0], [1], [0, 0, 1, 1], [], []>} : vector<128x128xbf16>, vector<128x128xbf16>, vector<128x128xf32> -> vector<128x128xf32>
    %34 = arith.addf %29, %33 : vector<128x128xf32>
    %35 = vector.extract_strided_slice %1 {offsets = [0, 2, 0], sizes = [10, 16, 128], strides = [1, 1, 1]} : vector<10x18x128xbf16> to vector<10x16x128xbf16>
    %36 = vector.shape_cast %35 : vector<10x16x128xbf16> to vector<160x128xbf16>
    %37 = vector.extract_strided_slice %36 {offsets = [0, 0], sizes = [128, 128], strides = [1, 1]} : vector<160x128xbf16> to vector<128x128xbf16>
    %c2 = arith.constant 2 : index
    %c0_21 = arith.constant 0 : index
    %c0_22 = arith.constant 0 : index
    %38 = vector.load %arg3[%c2, %c0_21, %c0_22] : memref<9x128x128xbf16, #tpu.memory_space<vmem>>, vector<1x128x128xbf16>
    %39 = vector.shape_cast %38 : vector<1x128x128xbf16> to vector<128x128xbf16>
    %cst_23 = arith.constant dense<0.000000e+00> : vector<128x128xf32>
    %40 = tpu.matmul %37, %39, %cst_23 {dimension_numbers = #tpu.dot_dimension_numbers<[1], [0], [0], [1], [0, 0, 1, 1], [], []>} : vector<128x128xbf16>, vector<128x128xbf16>, vector<128x128xf32> -> vector<128x128xf32>
    %41 = arith.addf %34, %40 : vector<128x128xf32>
    %42 = vector.extract_strided_slice %36 {offsets = [16, 0], sizes = [128, 128], strides = [1, 1]} : vector<160x128xbf16> to vector<128x128xbf16>
    %c5 = arith.constant 5 : index
    %c0_24 = arith.constant 0 : index
    %c0_25 = arith.constant 0 : index
    %43 = vector.load %arg3[%c5, %c0_24, %c0_25] : memref<9x128x128xbf16, #tpu.memory_space<vmem>>, vector<1x128x128xbf16>
    %44 = vector.shape_cast %43 : vector<1x128x128xbf16> to vector<128x128xbf16>
    %cst_26 = arith.constant dense<0.000000e+00> : vector<128x128xf32>
    %45 = tpu.matmul %42, %44, %cst_26 {dimension_numbers = #tpu.dot_dimension_numbers<[1], [0], [0], [1], [0, 0, 1, 1], [], []>} : vector<128x128xbf16>, vector<128x128xbf16>, vector<128x128xf32> -> vector<128x128xf32>
    %46 = arith.addf %41, %45 : vector<128x128xf32>
    %47 = vector.extract_strided_slice %36 {offsets = [32, 0], sizes = [128, 128], strides = [1, 1]} : vector<160x128xbf16> to vector<128x128xbf16>
    %c8 = arith.constant 8 : index
    %c0_27 = arith.constant 0 : index
    %c0_28 = arith.constant 0 : index
    %48 = vector.load %arg3[%c8, %c0_27, %c0_28] : memref<9x128x128xbf16, #tpu.memory_space<vmem>>, vector<1x128x128xbf16>
    %49 = vector.shape_cast %48 : vector<1x128x128xbf16> to vector<128x128xbf16>
    %cst_29 = arith.constant dense<0.000000e+00> : vector<128x128xf32>
    %50 = tpu.matmul %47, %49, %cst_29 {dimension_numbers = #tpu.dot_dimension_numbers<[1], [0], [0], [1], [0, 0, 1, 1], [], []>} : vector<128x128xbf16>, vector<128x128xbf16>, vector<128x128xf32> -> vector<128x128xf32>
    %51 = arith.addf %46, %50 : vector<128x128xf32>
    %c0_30 = arith.constant 0 : index
    %c0_31 = arith.constant 0 : index
    %52 = vector.load %arg4[%c0_30, %c0_31] : memref<1x128xf32, #tpu.memory_space<vmem>>, vector<1x128xf32>
    %53 = vector.broadcast %52 : vector<1x128xf32> to vector<128x128xf32>
    %54 = arith.mulf %51, %53 : vector<128x128xf32>
    %c0_32 = arith.constant 0 : index
    %c0_33 = arith.constant 0 : index
    %55 = vector.load %arg5[%c0_32, %c0_33] : memref<1x128xf32, #tpu.memory_space<vmem>>, vector<1x128xf32>
    %56 = vector.broadcast %55 : vector<1x128xf32> to vector<128x128xf32>
    %57 = arith.addf %54, %56 : vector<128x128xf32>
    %cst_34 = arith.constant 0.000000e+00 : f32
    %58 = vector.broadcast %cst_34 : f32 to vector<128x128xf32>
    %59 = arith.maximumf %57, %58 : vector<128x128xf32>
    %60 = vector.shape_cast %59 : vector<128x128xf32> to vector<8x16x128xf32>
    %61 = arith.truncf %60 : vector<8x16x128xf32> to vector<8x16x128xbf16>
    %c0_35 = arith.constant 0 : index
    %c0_36 = arith.constant 0 : index
    %c0_37 = arith.constant 0 : index
    %c0_38 = arith.constant 0 : index
    %62 = vector.load %arg6[%c0_35, %c0_36, %c0_37, %c0_38] : memref<1x8x16x128xbf16, #tpu.memory_space<vmem>>, vector<1x8x16x128xbf16>
    %63 = vector.shape_cast %62 : vector<1x8x16x128xbf16> to vector<8x16x128xbf16>
    %64 = vector.shape_cast %61 : vector<8x16x128xbf16> to vector<1x8x16x128xbf16>
    tpu.vector_store %arg6[%c0_35, %c0_36, %c0_37, %c0_38], %64 {strides = array<i32>} : memref<1x8x16x128xbf16, #tpu.memory_space<vmem>>, vector<1x8x16x128xbf16>,
    return
  }
  func.func @transform_0(%arg0: i32, %arg1: i32) -> (i32, i32, i32, i32) {
    %c2_i32 = arith.constant 2 : i32
    %0 = arith.muli %arg0, %c2_i32 : i32
    %1 = arith.addi %0, %arg1 : i32
    %c0_i32 = arith.constant 0 : i32
    %c0_i32_0 = arith.constant 0 : i32
    %c0_i32_1 = arith.constant 0 : i32
    %c0_i32_2 = arith.constant 0 : i32
    return %1, %c0_i32, %c0_i32_0, %c0_i32_1 : i32, i32, i32, i32
  }
  func.func @transform_1(%arg0: i32, %arg1: i32) -> (i32, i32, i32) {
    %c0_i32 = arith.constant 0 : i32
    %c0_i32_0 = arith.constant 0 : i32
    %c0_i32_1 = arith.constant 0 : i32
    %c0_i32_2 = arith.constant 0 : i32
    return %c0_i32, %c0_i32_0, %c0_i32_1 : i32, i32, i32
  }
  func.func @transform_2(%arg0: i32, %arg1: i32) -> (i32, i32) {
    %c0_i32 = arith.constant 0 : i32
    %c0_i32_0 = arith.constant 0 : i32
    %c0_i32_1 = arith.constant 0 : i32
    return %c0_i32, %c0_i32_0 : i32, i32
  }
  func.func @transform_3(%arg0: i32, %arg1: i32) -> (i32, i32) {
    %c0_i32 = arith.constant 0 : i32
    %c0_i32_0 = arith.constant 0 : i32
    %c0_i32_1 = arith.constant 0 : i32
    return %c0_i32, %c0_i32_0 : i32, i32
  }
  func.func @transform_4(%arg0: i32, %arg1: i32) -> (i32, i32, i32, i32) {
    %c0_i32 = arith.constant 0 : i32
    %c0_i32_0 = arith.constant 0 : i32
    %c0_i32_1 = arith.constant 0 : i32
    return %arg0, %arg1, %c0_i32, %c0_i32_0 : i32, i32, i32, i32
  }
}

module attributes {stable_mosaic.version = 11 : i64} {
  func.func @_conv3x3_kernel(%arg0: i32, %arg1: i32, %arg2: memref<1x10x18x128xbf16, #tpu.memory_space<vmem>>, %arg3: memref<1x10x18x128xbf16, #tpu.memory_space<vmem>>, %arg4: memref<9x128x128xbf16, #tpu.memory_space<vmem>>, %arg5: memref<9x128x128xbf16, #tpu.memory_space<vmem>>, %arg6: memref<1x128xf32, #tpu.memory_space<vmem>>, %arg7: memref<1x128xf32, #tpu.memory_space<vmem>>, %arg8: memref<1x8x16x128xbf16, #tpu.memory_space<vmem>>) attributes {dimension_semantics = [#tpu.dimension_semantics<parallel>, #tpu.dimension_semantics<parallel>], iteration_bounds = array<i64: 2, 2>, scalar_prefetch = 0 : i64, scratch_operands = 0 : i64, tpu.core_type = #tpu.core_type<tc>, window_params = [{transform_indices = @transform_0, window_bounds = array<i64: 1, 10, 18, 128>}, {transform_indices = @transform_1, window_bounds = array<i64: 1, 10, 18, 128>}, {pipeline_mode = #tpu.pipeline_mode<synchronous>, transform_indices = @transform_2, window_bounds = array<i64: 9, 128, 128>}, {pipeline_mode = #tpu.pipeline_mode<synchronous>, transform_indices = @transform_3, window_bounds = array<i64: 9, 128, 128>}, {pipeline_mode = #tpu.pipeline_mode<synchronous>, transform_indices = @transform_4, window_bounds = array<i64: 1, 128>}, {pipeline_mode = #tpu.pipeline_mode<synchronous>, transform_indices = @transform_5, window_bounds = array<i64: 1, 128>}, {transform_indices = @transform_6, window_bounds = array<i64: 1, 8, 16, 128>}]} {
    %c0 = arith.constant 0 : index
    %c0_0 = arith.constant 0 : index
    %c0_1 = arith.constant 0 : index
    %c0_2 = arith.constant 0 : index
    %0 = vector.load %arg2[%c0, %c0_0, %c0_1, %c0_2] : memref<1x10x18x128xbf16, #tpu.memory_space<vmem>>, vector<1x10x18x128xbf16>
    %1 = vector.shape_cast %0 : vector<1x10x18x128xbf16> to vector<10x18x128xbf16>
    %2 = vector.extract_strided_slice %1 {offsets = [0, 0, 0], sizes = [10, 16, 128], strides = [1, 1, 1]} : vector<10x18x128xbf16> to vector<10x16x128xbf16>
    %3 = vector.shape_cast %2 : vector<10x16x128xbf16> to vector<160x128xbf16>
    %4 = vector.extract_strided_slice %3 {offsets = [0, 0], sizes = [128, 128], strides = [1, 1]} : vector<160x128xbf16> to vector<128x128xbf16>
    %c0_3 = arith.constant 0 : index
    %c0_4 = arith.constant 0 : index
    %c0_5 = arith.constant 0 : index
    %5 = vector.load %arg4[%c0_3, %c0_4, %c0_5] : memref<9x128x128xbf16, #tpu.memory_space<vmem>>, vector<1x128x128xbf16>
    %6 = vector.shape_cast %5 : vector<1x128x128xbf16> to vector<128x128xbf16>
    %cst = arith.constant dense<0.000000e+00> : vector<128x128xf32>
    %7 = tpu.matmul %4, %6, %cst {dimension_numbers = #tpu.dot_dimension_numbers<[1], [0], [0], [1], [0, 0, 1, 1], [], []>} : vector<128x128xbf16>, vector<128x128xbf16>, vector<128x128xf32> -> vector<128x128xf32>
    %8 = vector.extract_strided_slice %3 {offsets = [16, 0], sizes = [128, 128], strides = [1, 1]} : vector<160x128xbf16> to vector<128x128xbf16>
    %c3 = arith.constant 3 : index
    %c0_6 = arith.constant 0 : index
    %c0_7 = arith.constant 0 : index
    %9 = vector.load %arg4[%c3, %c0_6, %c0_7] : memref<9x128x128xbf16, #tpu.memory_space<vmem>>, vector<1x128x128xbf16>
    %10 = vector.shape_cast %9 : vector<1x128x128xbf16> to vector<128x128xbf16>
    %cst_8 = arith.constant dense<0.000000e+00> : vector<128x128xf32>
    %11 = tpu.matmul %8, %10, %cst_8 {dimension_numbers = #tpu.dot_dimension_numbers<[1], [0], [0], [1], [0, 0, 1, 1], [], []>} : vector<128x128xbf16>, vector<128x128xbf16>, vector<128x128xf32> -> vector<128x128xf32>
    %12 = arith.addf %7, %11 : vector<128x128xf32>
    %13 = vector.extract_strided_slice %3 {offsets = [32, 0], sizes = [128, 128], strides = [1, 1]} : vector<160x128xbf16> to vector<128x128xbf16>
    %c6 = arith.constant 6 : index
    %c0_9 = arith.constant 0 : index
    %c0_10 = arith.constant 0 : index
    %14 = vector.load %arg4[%c6, %c0_9, %c0_10] : memref<9x128x128xbf16, #tpu.memory_space<vmem>>, vector<1x128x128xbf16>
    %15 = vector.shape_cast %14 : vector<1x128x128xbf16> to vector<128x128xbf16>
    %cst_11 = arith.constant dense<0.000000e+00> : vector<128x128xf32>
    %16 = tpu.matmul %13, %15, %cst_11 {dimension_numbers = #tpu.dot_dimension_numbers<[1], [0], [0], [1], [0, 0, 1, 1], [], []>} : vector<128x128xbf16>, vector<128x128xbf16>, vector<128x128xf32> -> vector<128x128xf32>
    %17 = arith.addf %12, %16 : vector<128x128xf32>
    %18 = vector.extract_strided_slice %1 {offsets = [0, 1, 0], sizes = [10, 16, 128], strides = [1, 1, 1]} : vector<10x18x128xbf16> to vector<10x16x128xbf16>
    %19 = vector.shape_cast %18 : vector<10x16x128xbf16> to vector<160x128xbf16>
    %20 = vector.extract_strided_slice %19 {offsets = [0, 0], sizes = [128, 128], strides = [1, 1]} : vector<160x128xbf16> to vector<128x128xbf16>
    %c1 = arith.constant 1 : index
    %c0_12 = arith.constant 0 : index
    %c0_13 = arith.constant 0 : index
    %21 = vector.load %arg4[%c1, %c0_12, %c0_13] : memref<9x128x128xbf16, #tpu.memory_space<vmem>>, vector<1x128x128xbf16>
    %22 = vector.shape_cast %21 : vector<1x128x128xbf16> to vector<128x128xbf16>
    %cst_14 = arith.constant dense<0.000000e+00> : vector<128x128xf32>
    %23 = tpu.matmul %20, %22, %cst_14 {dimension_numbers = #tpu.dot_dimension_numbers<[1], [0], [0], [1], [0, 0, 1, 1], [], []>} : vector<128x128xbf16>, vector<128x128xbf16>, vector<128x128xf32> -> vector<128x128xf32>
    %24 = arith.addf %17, %23 : vector<128x128xf32>
    %25 = vector.extract_strided_slice %19 {offsets = [16, 0], sizes = [128, 128], strides = [1, 1]} : vector<160x128xbf16> to vector<128x128xbf16>
    %c4 = arith.constant 4 : index
    %c0_15 = arith.constant 0 : index
    %c0_16 = arith.constant 0 : index
    %26 = vector.load %arg4[%c4, %c0_15, %c0_16] : memref<9x128x128xbf16, #tpu.memory_space<vmem>>, vector<1x128x128xbf16>
    %27 = vector.shape_cast %26 : vector<1x128x128xbf16> to vector<128x128xbf16>
    %cst_17 = arith.constant dense<0.000000e+00> : vector<128x128xf32>
    %28 = tpu.matmul %25, %27, %cst_17 {dimension_numbers = #tpu.dot_dimension_numbers<[1], [0], [0], [1], [0, 0, 1, 1], [], []>} : vector<128x128xbf16>, vector<128x128xbf16>, vector<128x128xf32> -> vector<128x128xf32>
    %29 = arith.addf %24, %28 : vector<128x128xf32>
    %30 = vector.extract_strided_slice %19 {offsets = [32, 0], sizes = [128, 128], strides = [1, 1]} : vector<160x128xbf16> to vector<128x128xbf16>
    %c7 = arith.constant 7 : index
    %c0_18 = arith.constant 0 : index
    %c0_19 = arith.constant 0 : index
    %31 = vector.load %arg4[%c7, %c0_18, %c0_19] : memref<9x128x128xbf16, #tpu.memory_space<vmem>>, vector<1x128x128xbf16>
    %32 = vector.shape_cast %31 : vector<1x128x128xbf16> to vector<128x128xbf16>
    %cst_20 = arith.constant dense<0.000000e+00> : vector<128x128xf32>
    %33 = tpu.matmul %30, %32, %cst_20 {dimension_numbers = #tpu.dot_dimension_numbers<[1], [0], [0], [1], [0, 0, 1, 1], [], []>} : vector<128x128xbf16>, vector<128x128xbf16>, vector<128x128xf32> -> vector<128x128xf32>
    %34 = arith.addf %29, %33 : vector<128x128xf32>
    %35 = vector.extract_strided_slice %1 {offsets = [0, 2, 0], sizes = [10, 16, 128], strides = [1, 1, 1]} : vector<10x18x128xbf16> to vector<10x16x128xbf16>
    %36 = vector.shape_cast %35 : vector<10x16x128xbf16> to vector<160x128xbf16>
    %37 = vector.extract_strided_slice %36 {offsets = [0, 0], sizes = [128, 128], strides = [1, 1]} : vector<160x128xbf16> to vector<128x128xbf16>
    %c2 = arith.constant 2 : index
    %c0_21 = arith.constant 0 : index
    %c0_22 = arith.constant 0 : index
    %38 = vector.load %arg4[%c2, %c0_21, %c0_22] : memref<9x128x128xbf16, #tpu.memory_space<vmem>>, vector<1x128x128xbf16>
    %39 = vector.shape_cast %38 : vector<1x128x128xbf16> to vector<128x128xbf16>
    %cst_23 = arith.constant dense<0.000000e+00> : vector<128x128xf32>
    %40 = tpu.matmul %37, %39, %cst_23 {dimension_numbers = #tpu.dot_dimension_numbers<[1], [0], [0], [1], [0, 0, 1, 1], [], []>} : vector<128x128xbf16>, vector<128x128xbf16>, vector<128x128xf32> -> vector<128x128xf32>
    %41 = arith.addf %34, %40 : vector<128x128xf32>
    %42 = vector.extract_strided_slice %36 {offsets = [16, 0], sizes = [128, 128], strides = [1, 1]} : vector<160x128xbf16> to vector<128x128xbf16>
    %c5 = arith.constant 5 : index
    %c0_24 = arith.constant 0 : index
    %c0_25 = arith.constant 0 : index
    %43 = vector.load %arg4[%c5, %c0_24, %c0_25] : memref<9x128x128xbf16, #tpu.memory_space<vmem>>, vector<1x128x128xbf16>
    %44 = vector.shape_cast %43 : vector<1x128x128xbf16> to vector<128x128xbf16>
    %cst_26 = arith.constant dense<0.000000e+00> : vector<128x128xf32>
    %45 = tpu.matmul %42, %44, %cst_26 {dimension_numbers = #tpu.dot_dimension_numbers<[1], [0], [0], [1], [0, 0, 1, 1], [], []>} : vector<128x128xbf16>, vector<128x128xbf16>, vector<128x128xf32> -> vector<128x128xf32>
    %46 = arith.addf %41, %45 : vector<128x128xf32>
    %47 = vector.extract_strided_slice %36 {offsets = [32, 0], sizes = [128, 128], strides = [1, 1]} : vector<160x128xbf16> to vector<128x128xbf16>
    %c8 = arith.constant 8 : index
    %c0_27 = arith.constant 0 : index
    %c0_28 = arith.constant 0 : index
    %48 = vector.load %arg4[%c8, %c0_27, %c0_28] : memref<9x128x128xbf16, #tpu.memory_space<vmem>>, vector<1x128x128xbf16>
    %49 = vector.shape_cast %48 : vector<1x128x128xbf16> to vector<128x128xbf16>
    %cst_29 = arith.constant dense<0.000000e+00> : vector<128x128xf32>
    %50 = tpu.matmul %47, %49, %cst_29 {dimension_numbers = #tpu.dot_dimension_numbers<[1], [0], [0], [1], [0, 0, 1, 1], [], []>} : vector<128x128xbf16>, vector<128x128xbf16>, vector<128x128xf32> -> vector<128x128xf32>
    %51 = arith.addf %46, %50 : vector<128x128xf32>
    %c0_30 = arith.constant 0 : index
    %c0_31 = arith.constant 0 : index
    %c0_32 = arith.constant 0 : index
    %c0_33 = arith.constant 0 : index
    %52 = vector.load %arg3[%c0_30, %c0_31, %c0_32, %c0_33] : memref<1x10x18x128xbf16, #tpu.memory_space<vmem>>, vector<1x10x18x128xbf16>
    %53 = vector.shape_cast %52 : vector<1x10x18x128xbf16> to vector<10x18x128xbf16>
    %54 = vector.extract_strided_slice %53 {offsets = [0, 0, 0], sizes = [10, 16, 128], strides = [1, 1, 1]} : vector<10x18x128xbf16> to vector<10x16x128xbf16>
    %55 = vector.shape_cast %54 : vector<10x16x128xbf16> to vector<160x128xbf16>
    %56 = vector.extract_strided_slice %55 {offsets = [0, 0], sizes = [128, 128], strides = [1, 1]} : vector<160x128xbf16> to vector<128x128xbf16>
    %c0_34 = arith.constant 0 : index
    %c0_35 = arith.constant 0 : index
    %c0_36 = arith.constant 0 : index
    %57 = vector.load %arg5[%c0_34, %c0_35, %c0_36] : memref<9x128x128xbf16, #tpu.memory_space<vmem>>, vector<1x128x128xbf16>
    %58 = vector.shape_cast %57 : vector<1x128x128xbf16> to vector<128x128xbf16>
    %cst_37 = arith.constant dense<0.000000e+00> : vector<128x128xf32>
    %59 = tpu.matmul %56, %58, %cst_37 {dimension_numbers = #tpu.dot_dimension_numbers<[1], [0], [0], [1], [0, 0, 1, 1], [], []>} : vector<128x128xbf16>, vector<128x128xbf16>, vector<128x128xf32> -> vector<128x128xf32>
    %60 = arith.addf %51, %59 : vector<128x128xf32>
    %61 = vector.extract_strided_slice %55 {offsets = [16, 0], sizes = [128, 128], strides = [1, 1]} : vector<160x128xbf16> to vector<128x128xbf16>
    %c3_38 = arith.constant 3 : index
    %c0_39 = arith.constant 0 : index
    %c0_40 = arith.constant 0 : index
    %62 = vector.load %arg5[%c3_38, %c0_39, %c0_40] : memref<9x128x128xbf16, #tpu.memory_space<vmem>>, vector<1x128x128xbf16>
    %63 = vector.shape_cast %62 : vector<1x128x128xbf16> to vector<128x128xbf16>
    %cst_41 = arith.constant dense<0.000000e+00> : vector<128x128xf32>
    %64 = tpu.matmul %61, %63, %cst_41 {dimension_numbers = #tpu.dot_dimension_numbers<[1], [0], [0], [1], [0, 0, 1, 1], [], []>} : vector<128x128xbf16>, vector<128x128xbf16>, vector<128x128xf32> -> vector<128x128xf32>
    %65 = arith.addf %60, %64 : vector<128x128xf32>
    %66 = vector.extract_strided_slice %55 {offsets = [32, 0], sizes = [128, 128], strides = [1, 1]} : vector<160x128xbf16> to vector<128x128xbf16>
    %c6_42 = arith.constant 6 : index
    %c0_43 = arith.constant 0 : index
    %c0_44 = arith.constant 0 : index
    %67 = vector.load %arg5[%c6_42, %c0_43, %c0_44] : memref<9x128x128xbf16, #tpu.memory_space<vmem>>, vector<1x128x128xbf16>
    %68 = vector.shape_cast %67 : vector<1x128x128xbf16> to vector<128x128xbf16>
    %cst_45 = arith.constant dense<0.000000e+00> : vector<128x128xf32>
    %69 = tpu.matmul %66, %68, %cst_45 {dimension_numbers = #tpu.dot_dimension_numbers<[1], [0], [0], [1], [0, 0, 1, 1], [], []>} : vector<128x128xbf16>, vector<128x128xbf16>, vector<128x128xf32> -> vector<128x128xf32>
    %70 = arith.addf %65, %69 : vector<128x128xf32>
    %71 = vector.extract_strided_slice %53 {offsets = [0, 1, 0], sizes = [10, 16, 128], strides = [1, 1, 1]} : vector<10x18x128xbf16> to vector<10x16x128xbf16>
    %72 = vector.shape_cast %71 : vector<10x16x128xbf16> to vector<160x128xbf16>
    %73 = vector.extract_strided_slice %72 {offsets = [0, 0], sizes = [128, 128], strides = [1, 1]} : vector<160x128xbf16> to vector<128x128xbf16>
    %c1_46 = arith.constant 1 : index
    %c0_47 = arith.constant 0 : index
    %c0_48 = arith.constant 0 : index
    %74 = vector.load %arg5[%c1_46, %c0_47, %c0_48] : memref<9x128x128xbf16, #tpu.memory_space<vmem>>, vector<1x128x128xbf16>
    %75 = vector.shape_cast %74 : vector<1x128x128xbf16> to vector<128x128xbf16>
    %cst_49 = arith.constant dense<0.000000e+00> : vector<128x128xf32>
    %76 = tpu.matmul %73, %75, %cst_49 {dimension_numbers = #tpu.dot_dimension_numbers<[1], [0], [0], [1], [0, 0, 1, 1], [], []>} : vector<128x128xbf16>, vector<128x128xbf16>, vector<128x128xf32> -> vector<128x128xf32>
    %77 = arith.addf %70, %76 : vector<128x128xf32>
    %78 = vector.extract_strided_slice %72 {offsets = [16, 0], sizes = [128, 128], strides = [1, 1]} : vector<160x128xbf16> to vector<128x128xbf16>
    %c4_50 = arith.constant 4 : index
    %c0_51 = arith.constant 0 : index
    %c0_52 = arith.constant 0 : index
    %79 = vector.load %arg5[%c4_50, %c0_51, %c0_52] : memref<9x128x128xbf16, #tpu.memory_space<vmem>>, vector<1x128x128xbf16>
    %80 = vector.shape_cast %79 : vector<1x128x128xbf16> to vector<128x128xbf16>
    %cst_53 = arith.constant dense<0.000000e+00> : vector<128x128xf32>
    %81 = tpu.matmul %78, %80, %cst_53 {dimension_numbers = #tpu.dot_dimension_numbers<[1], [0], [0], [1], [0, 0, 1, 1], [], []>} : vector<128x128xbf16>, vector<128x128xbf16>, vector<128x128xf32> -> vector<128x128xf32>
    %82 = arith.addf %77, %81 : vector<128x128xf32>
    %83 = vector.extract_strided_slice %72 {offsets = [32, 0], sizes = [128, 128], strides = [1, 1]} : vector<160x128xbf16> to vector<128x128xbf16>
    %c7_54 = arith.constant 7 : index
    %c0_55 = arith.constant 0 : index
    %c0_56 = arith.constant 0 : index
    %84 = vector.load %arg5[%c7_54, %c0_55, %c0_56] : memref<9x128x128xbf16, #tpu.memory_space<vmem>>, vector<1x128x128xbf16>
    %85 = vector.shape_cast %84 : vector<1x128x128xbf16> to vector<128x128xbf16>
    %cst_57 = arith.constant dense<0.000000e+00> : vector<128x128xf32>
    %86 = tpu.matmul %83, %85, %cst_57 {dimension_numbers = #tpu.dot_dimension_numbers<[1], [0], [0], [1], [0, 0, 1, 1], [], []>} : vector<128x128xbf16>, vector<128x128xbf16>, vector<128x128xf32> -> vector<128x128xf32>
    %87 = arith.addf %82, %86 : vector<128x128xf32>
    %88 = vector.extract_strided_slice %53 {offsets = [0, 2, 0], sizes = [10, 16, 128], strides = [1, 1, 1]} : vector<10x18x128xbf16> to vector<10x16x128xbf16>
    %89 = vector.shape_cast %88 : vector<10x16x128xbf16> to vector<160x128xbf16>
    %90 = vector.extract_strided_slice %89 {offsets = [0, 0], sizes = [128, 128], strides = [1, 1]} : vector<160x128xbf16> to vector<128x128xbf16>
    %c2_58 = arith.constant 2 : index
    %c0_59 = arith.constant 0 : index
    %c0_60 = arith.constant 0 : index
    %91 = vector.load %arg5[%c2_58, %c0_59, %c0_60] : memref<9x128x128xbf16, #tpu.memory_space<vmem>>, vector<1x128x128xbf16>
    %92 = vector.shape_cast %91 : vector<1x128x128xbf16> to vector<128x128xbf16>
    %cst_61 = arith.constant dense<0.000000e+00> : vector<128x128xf32>
    %93 = tpu.matmul %90, %92, %cst_61 {dimension_numbers = #tpu.dot_dimension_numbers<[1], [0], [0], [1], [0, 0, 1, 1], [], []>} : vector<128x128xbf16>, vector<128x128xbf16>, vector<128x128xf32> -> vector<128x128xf32>
    %94 = arith.addf %87, %93 : vector<128x128xf32>
    %95 = vector.extract_strided_slice %89 {offsets = [16, 0], sizes = [128, 128], strides = [1, 1]} : vector<160x128xbf16> to vector<128x128xbf16>
    %c5_62 = arith.constant 5 : index
    %c0_63 = arith.constant 0 : index
    %c0_64 = arith.constant 0 : index
    %96 = vector.load %arg5[%c5_62, %c0_63, %c0_64] : memref<9x128x128xbf16, #tpu.memory_space<vmem>>, vector<1x128x128xbf16>
    %97 = vector.shape_cast %96 : vector<1x128x128xbf16> to vector<128x128xbf16>
    %cst_65 = arith.constant dense<0.000000e+00> : vector<128x128xf32>
    %98 = tpu.matmul %95, %97, %cst_65 {dimension_numbers = #tpu.dot_dimension_numbers<[1], [0], [0], [1], [0, 0, 1, 1], [], []>} : vector<128x128xbf16>, vector<128x128xbf16>, vector<128x128xf32> -> vector<128x128xf32>
    %99 = arith.addf %94, %98 : vector<128x128xf32>
    %100 = vector.extract_strided_slice %89 {offsets = [32, 0], sizes = [128, 128], strides = [1, 1]} : vector<160x128xbf16> to vector<128x128xbf16>
    %c8_66 = arith.constant 8 : index
    %c0_67 = arith.constant 0 : index
    %c0_68 = arith.constant 0 : index
    %101 = vector.load %arg5[%c8_66, %c0_67, %c0_68] : memref<9x128x128xbf16, #tpu.memory_space<vmem>>, vector<1x128x128xbf16>
    %102 = vector.shape_cast %101 : vector<1x128x128xbf16> to vector<128x128xbf16>
    %cst_69 = arith.constant dense<0.000000e+00> : vector<128x128xf32>
    %103 = tpu.matmul %100, %102, %cst_69 {dimension_numbers = #tpu.dot_dimension_numbers<[1], [0], [0], [1], [0, 0, 1, 1], [], []>} : vector<128x128xbf16>, vector<128x128xbf16>, vector<128x128xf32> -> vector<128x128xf32>
    %104 = arith.addf %99, %103 : vector<128x128xf32>
    %c0_70 = arith.constant 0 : index
    %c0_71 = arith.constant 0 : index
    %105 = vector.load %arg6[%c0_70, %c0_71] : memref<1x128xf32, #tpu.memory_space<vmem>>, vector<1x128xf32>
    %106 = vector.broadcast %105 : vector<1x128xf32> to vector<128x128xf32>
    %107 = arith.mulf %104, %106 : vector<128x128xf32>
    %c0_72 = arith.constant 0 : index
    %c0_73 = arith.constant 0 : index
    %108 = vector.load %arg7[%c0_72, %c0_73] : memref<1x128xf32, #tpu.memory_space<vmem>>, vector<1x128xf32>
    %109 = vector.broadcast %108 : vector<1x128xf32> to vector<128x128xf32>
    %110 = arith.addf %107, %109 : vector<128x128xf32>
    %cst_74 = arith.constant 0.000000e+00 : f32
    %111 = vector.broadcast %cst_74 : f32 to vector<128x128xf32>
    %112 = arith.maximumf %110, %111 : vector<128x128xf32>
    %113 = vector.shape_cast %112 : vector<128x128xf32> to vector<8x16x128xf32>
    %114 = arith.truncf %113 : vector<8x16x128xf32> to vector<8x16x128xbf16>
    %c0_75 = arith.constant 0 : index
    %c0_76 = arith.constant 0 : index
    %c0_77 = arith.constant 0 : index
    %c0_78 = arith.constant 0 : index
    %115 = vector.load %arg8[%c0_75, %c0_76, %c0_77, %c0_78] : memref<1x8x16x128xbf16, #tpu.memory_space<vmem>>, vector<1x8x16x128xbf16>
    %116 = vector.shape_cast %115 : vector<1x8x16x128xbf16> to vector<8x16x128xbf16>
    %117 = vector.shape_cast %114 : vector<8x16x128xbf16> to vector<1x8x16x128xbf16>
    tpu.vector_store %arg8[%c0_75, %c0_76, %c0_77, %c0_78], %117 {strides = array<i32>} : memref<1x8x16x128xbf16, #tpu.memory_space<vmem>>, vector<1x8x16x128xbf16>,
    return
  }
  func.func @transform_0(%arg0: i32, %arg1: i32) -> (i32, i32, i32, i32) {
    %c2_i32 = arith.constant 2 : i32
    %0 = arith.muli %arg0, %c2_i32 : i32
    %1 = arith.addi %0, %arg1 : i32
    %c0_i32 = arith.constant 0 : i32
    %c0_i32_0 = arith.constant 0 : i32
    %c0_i32_1 = arith.constant 0 : i32
    %c0_i32_2 = arith.constant 0 : i32
    return %1, %c0_i32, %c0_i32_0, %c0_i32_1 : i32, i32, i32, i32
  }
  func.func @transform_1(%arg0: i32, %arg1: i32) -> (i32, i32, i32, i32) {
    %c2_i32 = arith.constant 2 : i32
    %0 = arith.muli %arg0, %c2_i32 : i32
    %1 = arith.addi %0, %arg1 : i32
    %c0_i32 = arith.constant 0 : i32
    %c0_i32_0 = arith.constant 0 : i32
    %c0_i32_1 = arith.constant 0 : i32
    %c0_i32_2 = arith.constant 0 : i32
    return %1, %c0_i32, %c0_i32_0, %c0_i32_1 : i32, i32, i32, i32
  }
  func.func @transform_2(%arg0: i32, %arg1: i32) -> (i32, i32, i32) {
    %c0_i32 = arith.constant 0 : i32
    %c0_i32_0 = arith.constant 0 : i32
    %c0_i32_1 = arith.constant 0 : i32
    %c0_i32_2 = arith.constant 0 : i32
    return %c0_i32, %c0_i32_0, %c0_i32_1 : i32, i32, i32
  }
  func.func @transform_3(%arg0: i32, %arg1: i32) -> (i32, i32, i32) {
    %c0_i32 = arith.constant 0 : i32
    %c0_i32_0 = arith.constant 0 : i32
    %c0_i32_1 = arith.constant 0 : i32
    %c0_i32_2 = arith.constant 0 : i32
    return %c0_i32, %c0_i32_0, %c0_i32_1 : i32, i32, i32
  }
  func.func @transform_4(%arg0: i32, %arg1: i32) -> (i32, i32) {
    %c0_i32 = arith.constant 0 : i32
    %c0_i32_0 = arith.constant 0 : i32
    %c0_i32_1 = arith.constant 0 : i32
    return %c0_i32, %c0_i32_0 : i32, i32
  }
  func.func @transform_5(%arg0: i32, %arg1: i32) -> (i32, i32) {
    %c0_i32 = arith.constant 0 : i32
    %c0_i32_0 = arith.constant 0 : i32
    %c0_i32_1 = arith.constant 0 : i32
    return %c0_i32, %c0_i32_0 : i32, i32
  }
  func.func @transform_6(%arg0: i32, %arg1: i32) -> (i32, i32, i32, i32) {
    %c0_i32 = arith.constant 0 : i32
    %c0_i32_0 = arith.constant 0 : i32
    %c0_i32_1 = arith.constant 0 : i32
    return %arg0, %arg1, %c0_i32, %c0_i32_0 : i32, i32, i32, i32
  }
}

</mosaic_0001>

<llo_original>
// kernel: up_forward.3
$region0: #{up_forward.3}
  #allocation0 [shape = 'u32[]', space=smem, size = 0x4, offset = 0x4, fixed_abs, tag = 'smem constant byte address 0x4 - core index']
  #allocation1 [shape = 'u32[144,128]{1,0:T(1,128)}', space=vmem, size = 0x12000, scoped, tag = 'internal scratch']
  %s0 = inlined_call_operand.vmem [shape: bf16[2,8,8,256], index: 0, kind: input, shape index: {}]
  %s1 = inlined_call_operand.vmem [shape: bf16[2,256,256], index: 1, kind: input, shape index: {}]
  %s2 = inlined_call_operand.vmem [shape: f32[1,256], index: 2, kind: input, shape index: {}]
  %s3 = inlined_call_operand.vmem [shape: bf16[2,16,16,128], index: 3, kind: output, shape index: {}]
  %s4 = sld [smem:[#allocation0]]
  $region45: #{up_forward.3} parent=0
    _
  %s6 = ssub.s32 1, %s4
  %s7 = scalar_select 0, %s6, %s4
  loop: start=0, step=1, limit=4
  $region2: #{up_forward.3} parent=0 // loop_pre_header
    _
  $region3: #{up_forward.3} parent=0 // loop_header
    %s9 = sphi 0, %s13
    %p10 = scmp.ge.s32.totalorder %s9, 4
    %s16 = sphi 0, %s28
    %s17 = sphi 0, %s24
    %s18 = sphi 0, %s16
    %s19 = sphi 0, %s17
    %s20 = sphi 0, %s18
    %s21 = sphi 0, %s19
    %s33 = sphi 0, %s35
    %s36 = sphi 0, %s33
    %s37 = sphi 0, %s36
    %s53 = sphi 0, %s37
    %s57 = sphi 0, %s57
    %s59 = sphi 0, %s57
    %s60 = sphi 0, %s59
    %s74 = sphi 0, %s60
    %s78 = sphi 0, %s78
    %s80 = sphi 0, %s78
    %s81 = sphi 0, %s80
    %s95 = sphi 0, %s81
    %s103 = sphi 0, %s105
    %s106 = sphi 0, %s103
    %s107 = sphi 0, %s106
    %s123 = sphi 0, %s107
  $region4: #{up_forward.3} parent=0 // loop_header_branch
    %12 = sbr.rel (%p10) target = $region8
  $region5: #{up_forward.3} parent=0 // loop_body
    %s14 = ssub.s32 %s9, 1
    %s15 = ssub.s32 %s9, 2
    %s22 = sadd.s32 1, %s17
    %p23 = scmp.ge.s32.totalorder %s22, 1
    %s24 = scalar_select %p23, 0, %s22
    %s25 = sadd.s32 1, %s16
    %s26 = scalar_select %p23, %s25, %s16
    %p27 = scmp.ge.s32.totalorder %s26, 2
    %s28 = scalar_select %p27, 0, %s26
    %s29 = ssub.s32 %s16, %s28
    %s30 = ssub.s32 %s17, %s24
    %s31 = sor.u32 %s29, %s30
    %p32 = scmp.eq.s32.totalorder %s31, 0
    %s34 = sadd.s32 %s33, 1
    %s35 = scalar_select %p32, %s33, %s34
    %p38 = pneg %p32
    %p39 = scmp.eq.s32.totalorder %s9, 1
    %p40 = por %p38, %p39
    %p41 = scmp.ne.s32.totalorder %s33, %s36
    %p42 = scmp.eq.s32.totalorder %s9, 0
    %p43 = por %p41, %p42
    %p44 = scmp.ne.s32.totalorder %s33, %s36
    %p45 = scmp.eq.s32.totalorder %s14, 1
    %p46 = por %p44, %p45
    %p47 = scmp.ne.s32.totalorder %s36, %s37
    %p48 = scmp.eq.s32.totalorder %s14, 0
    %p49 = por %p47, %p48
    %p50 = scmp.ne.s32.totalorder %s36, %s37
    %p51 = scmp.eq.s32.totalorder %s15, 1
    %p52 = por %p50, %p51
    %p54 = scmp.ne.s32.totalorder %s37, %s53
    %p55 = scmp.eq.s32.totalorder %s15, 0
    %p56 = por %p54, %p55
    %s58 = sadd.s32 %s57, 1
    %p61 = scmp.eq.s32.totalorder %s9, 1
    %p62 = scmp.ne.s32.totalorder %s57, %s59
    %p63 = scmp.eq.s32.totalorder %s9, 0
    %p64 = por %p62, %p63
    %p65 = scmp.ne.s32.totalorder %s57, %s59
    %p66 = scmp.eq.s32.totalorder %s14, 1
    %p67 = por %p65, %p66
    %p68 = scmp.ne.s32.totalorder %s59, %s60
    %p69 = scmp.eq.s32.totalorder %s14, 0
    %p70 = por %p68, %p69
    %p71 = scmp.ne.s32.totalorder %s59, %s60
    %p72 = scmp.eq.s32.totalorder %s15, 1
    %p73 = por %p71, %p72
    %p75 = scmp.ne.s32.totalorder %s60, %s74
    %p76 = scmp.eq.s32.totalorder %s15, 0
    %p77 = por %p75, %p76
    %s79 = sadd.s32 %s78, 1
    %p82 = scmp.eq.s32.totalorder %s9, 1
    %p83 = scmp.ne.s32.totalorder %s78, %s80
    %p84 = scmp.eq.s32.totalorder %s9, 0
    %p85 = por %p83, %p84
    %p86 = scmp.ne.s32.totalorder %s78, %s80
    %p87 = scmp.eq.s32.totalorder %s14, 1
    %p88 = por %p86, %p87
    %p89 = scmp.ne.s32.totalorder %s80, %s81
    %p90 = scmp.eq.s32.totalorder %s14, 0
    %p91 = por %p89, %p90
    %p92 = scmp.ne.s32.totalorder %s80, %s81
    %p93 = scmp.eq.s32.totalorder %s15, 1
    %p94 = por %p92, %p93
    %p96 = scmp.ne.s32.totalorder %s81, %s95
    %p97 = scmp.eq.s32.totalorder %s15, 0
    %p98 = por %p96, %p97
    %s99 = ssub.s32 %s16, %s28
    %s100 = ssub.s32 %s17, %s24
    %s101 = sor.u32 %s99, %s100
    %p102 = scmp.eq.s32.totalorder %s101, 0
    %s104 = sadd.s32 %s103, 1
    %s105 = scalar_select %p102, %s103, %s104
    %p108 = pneg %p102
    %p109 = scmp.eq.s32.totalorder %s9, 1
    %p110 = por %p108, %p109
    %p111 = scmp.ne.s32.totalorder %s103, %s106
    %p112 = scmp.eq.s32.totalorder %s9, 0
    %p113 = por %p111, %p112
    %p114 = scmp.ne.s32.totalorder %s103, %s106
    %p115 = scmp.eq.s32.totalorder %s14, 1
    %p116 = por %p114, %p115
    %p117 = scmp.ne.s32.totalorder %s106, %s107
    %p118 = scmp.eq.s32.totalorder %s14, 0
    %p119 = por %p117, %p118
    %p120 = scmp.ne.s32.totalorder %s106, %s107
    %p121 = scmp.eq.s32.totalorder %s15, 1
    %p122 = por %p120, %p121
    %p124 = scmp.ne.s32.totalorder %s107, %s123
    %p125 = scmp.eq.s32.totalorder %s15, 0
    %p126 = por %p124, %p125
    %p127 = scmp.le.s32.totalorder 1, %s9
    %p128 = scmp.lt.s32.totalorder %s9, 3
    %p129 = pnand %p127, %p128
    %p130 = pneg %p129
    // Predicated region
    $region9: #{up_forward.3} parent=5 // pred_check
      _
    $region10: #{up_forward.3} parent=5 // pred_check_branch
      %132 = sbr.rel (%p129) target = $region12
    $region11: #{up_forward.3} parent=5 // pred_region
      %s133 = ssub.s32 %s9, 1
      // Predicated region
      $region13: #{up_forward.3} parent=11 // pred_check
        %p134 = pneg %p70
      $region14: #{up_forward.3} parent=11 // pred_check_branch
        %136 = sbr.rel (%p134) target = $region16
      $region15: #{up_forward.3} parent=11 // pred_region
        _
      $region16: #{up_forward.3} parent=11 // pred_fallthru
        _
      // Predicated region
      $region17: #{up_forward.3} parent=11 // pred_check
        %p137 = pneg %p91
      $region18: #{up_forward.3} parent=11 // pred_check_branch
        %139 = sbr.rel (%p137) target = $region20
      $region19: #{up_forward.3} parent=11 // pred_region
        _
      $region20: #{up_forward.3} parent=11 // pred_fallthru
        _
    $region12: #{up_forward.3} parent=5 // pred_fallthru
      _
    %p140 = scmp.lt.s32.totalorder %s9, 2
    // Predicated region
    $region21: #{up_forward.3} parent=5 // pred_check
      %p141 = pneg %p140
    $region22: #{up_forward.3} parent=5 // pred_check_branch
      %143 = sbr.rel (%p141) target = $region24
    $region23: #{up_forward.3} parent=5 // pred_region
      // Predicated region
      $region25: #{up_forward.3} parent=23 // pred_check
        %p144 = pneg %p43
      $region26: #{up_forward.3} parent=23 // pred_check_branch
        %146 = sbr.rel (%p144) target = $region28
      $region27: #{up_forward.3} parent=23 // pred_region
        %s147 = smul.u32 8, %s17
        %p148 = scmp.lt.s32.totalorder %s16, 1
        %s149 = scalar_select %p148, %s16, 1
        %p150 = scmp.lt.s32.totalorder %s147, 7
        %s151 = scalar_select %p150, %s147, 7
        %s152 = smul.addr %s151, 2
        %s153 = smul.addr %s149, 16
        %s154 = sadd.s32 %s152, %s153
        %s155 = smul.addr %s154, 4
        %s156 = scalar_lea.vmem %s0, %s155
        %s157 = smul.u32 8, %s17
      $region28: #{up_forward.3} parent=23 // pred_fallthru
        _
    $region24: #{up_forward.3} parent=5 // pred_fallthru
      _
    %p158 = scmp.le.s32.totalorder 1, %s9
    %p159 = scmp.lt.s32.totalorder %s9, 3
    %p160 = pnand %p158, %p159
    %p161 = pneg %p160
    // Predicated region
    $region29: #{up_forward.3} parent=5 // pred_check
      _
    $region30: #{up_forward.3} parent=5 // pred_check_branch
      %163 = sbr.rel (%p160) target = $region32
    $region31: #{up_forward.3} parent=5 // pred_region
      %s164 = ssub.s32 %s9, 1
      %s165 = smul.u32 8, %s19
      %p166 = scmp.lt.s32.totalorder %s18, 1
      %s167 = scalar_select %p166, %s18, 1
      %p168 = scmp.lt.s32.totalorder %s165, 7
      %s169 = scalar_select %p168, %s165, 7
      %s170 = smul.addr %s169, 2
      %s171 = smul.addr %s167, 16
      %s172 = sadd.s32 %s170, %s171
      %s173 = smul.addr %s172, 4
      %s174 = scalar_lea.vmem %s0, %s173
      %p175 = pneg %p49
      %p176 = pneg %p46
      %p177 = pneg %p70
      %p178 = pneg %p67
      %p179 = pneg %p91
      %p180 = pneg %p88
      %p181 = pneg %p119
      %p182 = pneg %p116
      %s183 = smul.u32 16, %s19
      %p184 = scmp.lt.s32.totalorder %s18, 1
      %s185 = scalar_select %p184, %s18, 1
      %p186 = scmp.lt.s32.totalorder %s183, 15
      %s187 = scalar_select %p186, %s183, 15
      %s188 = smul.addr %s187, 2
      %s189 = smul.addr %s185, 32
      %s190 = sadd.s32 %s188, %s189
      %s191 = smul.addr %s190, 4
      %s192 = scalar_lea.vmem %s3, %s191
      %s193 = smul.u32 8, %s19
      %p194 = scmp.lt.s32.totalorder %s18, 1
      %s195 = scalar_select %p194, %s18, 1
      %p196 = scmp.lt.s32.totalorder %s193, 7
      %s197 = scalar_select %p196, %s193, 7
      %s198 = smul.addr %s197, 2
      %s199 = smul.addr %s195, 16
      %s200 = sadd.s32 %s198, %s199
      %s201 = smul.addr %s200, 4
      %s202 = scalar_lea.vmem %s0, %s201
      %s203 = smul.u32 8, %s19
      %s204 = smul.u32 16, %s19
      %p205 = scmp.lt.s32.totalorder %s18, 1
      %s206 = scalar_select %p205, %s18, 1
      %p207 = scmp.lt.s32.totalorder %s204, 15
      %s208 = scalar_select %p207, %s204, 15
      %s209 = smul.addr %s208, 2
      %s210 = smul.addr %s206, 32
      %s211 = sadd.s32 %s209, %s210
      %s212 = smul.addr %s211, 4
      %s213 = scalar_lea.vmem %s3, %s212
      %s214 = smul.u32 16, %s19
      %v215 = vld [vmem:[%s202] sm:$0xff]
      %v216 = vld [vmem:[%s202 + $0x8] sm:$0xff]
      %v217 = vld [vmem:[%s202 + $0x10] sm:$0xff]
      %v218 = vld [vmem:[%s202 + $0x18] sm:$0xff]
      %v219 = vld [vmem:[%s202 + $0x20] sm:$0xff]
      %v220 = vld [vmem:[%s202 + $0x28] sm:$0xff]
      %v221 = vld [vmem:[%s202 + $0x30] sm:$0xff]
      %v222 = vld [vmem:[%s202 + $0x38] sm:$0xff]
      %v223 = vld [vmem:[%s2] sm:$0x3]
      %v224 = vld [vmem:[%s1] sm:$0xff]
      %v225 = vld [vmem:[%s1 + $0x8] sm:$0xff]
      %v226 = vld [vmem:[%s1 + $0x10] sm:$0xff]
      %v227 = vld [vmem:[%s1 + $0x18] sm:$0xff]
      %v228 = vld [vmem:[%s1 + $0x20] sm:$0xff]
      %v229 = vld [vmem:[%s1 + $0x28] sm:$0xff]
      %v230 = vld [vmem:[%s1 + $0x30] sm:$0xff]
      %v231 = vld [vmem:[%s1 + $0x38] sm:$0xff]
      %v232 = vld [vmem:[%s1 + $0x40] sm:$0xff]
      %v233 = vld [vmem:[%s1 + $0x48] sm:$0xff]
      %v234 = vld [vmem:[%s1 + $0x50] sm:$0xff]
      %v235 = vld [vmem:[%s1 + $0x58] sm:$0xff]
      %v236 = vld [vmem:[%s1 + $0x60] sm:$0xff]
      %v237 = vld [vmem:[%s1 + $0x68] sm:$0xff]
      %v238 = vld [vmem:[%s1 + $0x70] sm:$0xff]
      %v239 = vld [vmem:[%s1 + $0x78] sm:$0xff]
      %v240 = vld [vmem:[%s1 + $0x80] sm:$0xff]
      %v241 = vld [vmem:[%s1 + $0x88] sm:$0xff]
      %v242 = vld [vmem:[%s1 + $0x90] sm:$0xff]
      %v243 = vld [vmem:[%s1 + $0x98] sm:$0xff]
      %v244 = vld [vmem:[%s1 + $0xa0] sm:$0xff]
      %v245 = vld [vmem:[%s1 + $0xa8] sm:$0xff]
      %v246 = vld [vmem:[%s1 + $0xb0] sm:$0xff]
      %v247 = vld [vmem:[%s1 + $0xb8] sm:$0xff]
      %v248 = vld [vmem:[%s1 + $0xc0] sm:$0xff]
      %v249 = vld [vmem:[%s1 + $0xc8] sm:$0xff]
      %v250 = vld [vmem:[%s1 + $0xd0] sm:$0xff]
      %v251 = vld [vmem:[%s1 + $0xd8] sm:$0xff]
      %v252 = vld [vmem:[%s1 + $0xe0] sm:$0xff]
      %v253 = vld [vmem:[%s1 + $0xe8] sm:$0xff]
      %v254 = vld [vmem:[%s1 + $0xf0] sm:$0xff]
      %v255 = vld [vmem:[%s1 + $0xf8] sm:$0xff]
      %v257 = vlaneseq
      %v258 = vshrl.u32 %v257, 7
      %v259 = vsub.s32 0, %v258
      %v260 = vrot.slane %v223, %v259
      %v261 = vlaneseq
      %v262 = vshrl.u32 %v261, 7
      %v263 = vsub.s32 1, %v262
      %v264 = vrot.slane %v223, %v263
      %v275 = vunpack.c.l.b16 %v215
      %v276 = vunpack.c.h.b16 %v215
      %v277 = vunpack.c.l.b16 %v216
      %v278 = vunpack.c.h.b16 %v216
      %v279 = vunpack.c.l.b16 %v217
      %v280 = vunpack.c.h.b16 %v217
      %v281 = vunpack.c.l.b16 %v218
      %v282 = vunpack.c.h.b16 %v218
      %v283 = vunpack.c.l.b16 %v219
      %v284 = vunpack.c.h.b16 %v219
      %v285 = vunpack.c.l.b16 %v220
      %v286 = vunpack.c.h.b16 %v220
      %v287 = vunpack.c.l.b16 %v221
      %v288 = vunpack.c.h.b16 %v221
      %v289 = vunpack.c.l.b16 %v222
      %v290 = vunpack.c.h.b16 %v222
      %v291 = vpack.c.b16 %v277, %v275
      %v292 = vpack.c.b16 %v278, %v276
      %v293 = vpack.c.b16 %v281, %v279
      %v294 = vpack.c.b16 %v282, %v280
      %v295 = vpack.c.b16 %v285, %v283
      %v296 = vpack.c.b16 %v286, %v284
      %v297 = vpack.c.b16 %v289, %v287
      %v298 = vpack.c.b16 %v290, %v288
      %v339 = vunpack.c.l.b16 %v224
      %v340 = vunpack.c.h.b16 %v224
      %v341 = vunpack.c.l.b16 %v225
      %v342 = vunpack.c.h.b16 %v225
      %v343 = vunpack.c.l.b16 %v226
      %v344 = vunpack.c.h.b16 %v226
      %v345 = vunpack.c.l.b16 %v227
      %v346 = vunpack.c.h.b16 %v227
      %v347 = vunpack.c.l.b16 %v228
      %v348 = vunpack.c.h.b16 %v228
      %v349 = vunpack.c.l.b16 %v229
      %v350 = vunpack.c.h.b16 %v229
      %v351 = vunpack.c.l.b16 %v230
      %v352 = vunpack.c.h.b16 %v230
      %v353 = vunpack.c.l.b16 %v231
      %v354 = vunpack.c.h.b16 %v231
      %v355 = vunpack.c.l.b16 %v232
      %v356 = vunpack.c.h.b16 %v232
      %v357 = vunpack.c.l.b16 %v233
      %v358 = vunpack.c.h.b16 %v233
      %v359 = vunpack.c.l.b16 %v234
      %v360 = vunpack.c.h.b16 %v234
      %v361 = vunpack.c.l.b16 %v235
      %v362 = vunpack.c.h.b16 %v235
      %v363 = vunpack.c.l.b16 %v236
      %v364 = vunpack.c.h.b16 %v236
      %v365 = vunpack.c.l.b16 %v237
      %v366 = vunpack.c.h.b16 %v237
      %v367 = vunpack.c.l.b16 %v238
      %v368 = vunpack.c.h.b16 %v238
      %v369 = vunpack.c.l.b16 %v239
      %v370 = vunpack.c.h.b16 %v239
      %v371 = vunpack.c.l.b16 %v240
      %v372 = vunpack.c.h.b16 %v240
      %v373 = vunpack.c.l.b16 %v241
      %v374 = vunpack.c.h.b16 %v241
      %v375 = vunpack.c.l.b16 %v242
      %v376 = vunpack.c.h.b16 %v242
      %v377 = vunpack.c.l.b16 %v243
      %v378 = vunpack.c.h.b16 %v243
      %v379 = vunpack.c.l.b16 %v244
      %v380 = vunpack.c.h.b16 %v244
      %v381 = vunpack.c.l.b16 %v245
      %v382 = vunpack.c.h.b16 %v245
      %v383 = vunpack.c.l.b16 %v246
      %v384 = vunpack.c.h.b16 %v246
      %v385 = vunpack.c.l.b16 %v247
      %v386 = vunpack.c.h.b16 %v247
      %v387 = vunpack.c.l.b16 %v248
      %v388 = vunpack.c.h.b16 %v248
      %v389 = vunpack.c.l.b16 %v249
      %v390 = vunpack.c.h.b16 %v249
      %v391 = vunpack.c.l.b16 %v250
      %v392 = vunpack.c.h.b16 %v250
      %v393 = vunpack.c.l.b16 %v251
      %v394 = vunpack.c.h.b16 %v251
      %v395 = vunpack.c.l.b16 %v252
      %v396 = vunpack.c.h.b16 %v252
      %v397 = vunpack.c.l.b16 %v253
      %v398 = vunpack.c.h.b16 %v253
      %v399 = vunpack.c.l.b16 %v254
      %v400 = vunpack.c.h.b16 %v254
      %v401 = vunpack.c.l.b16 %v255
      %v402 = vunpack.c.h.b16 %v255
      %v403 = vpack.c.b16 %v341, %v339
      %v404 = vpack.c.b16 %v342, %v340
      %v405 = vpack.c.b16 %v345, %v343
      %v406 = vpack.c.b16 %v346, %v344
      %v407 = vpack.c.b16 %v349, %v347
      %v408 = vpack.c.b16 %v350, %v348
      %v409 = vpack.c.b16 %v353, %v351
      %v410 = vpack.c.b16 %v354, %v352
      %v411 = vpack.c.b16 %v357, %v355
      %v412 = vpack.c.b16 %v358, %v356
      %v413 = vpack.c.b16 %v361, %v359
      %v414 = vpack.c.b16 %v362, %v360
      %v415 = vpack.c.b16 %v365, %v363
      %v416 = vpack.c.b16 %v366, %v364
      %v417 = vpack.c.b16 %v369, %v367
      %v418 = vpack.c.b16 %v370, %v368
      %v419 = vpack.c.b16 %v373, %v371
      %v420 = vpack.c.b16 %v374, %v372
      %v421 = vpack.c.b16 %v377, %v375
      %v422 = vpack.c.b16 %v378, %v376
      %v423 = vpack.c.b16 %v381, %v379
      %v424 = vpack.c.b16 %v382, %v380
      %v425 = vpack.c.b16 %v385, %v383
      %v426 = vpack.c.b16 %v386, %v384
      %v427 = vpack.c.b16 %v389, %v387
      %v428 = vpack.c.b16 %v390, %v388
      %v429 = vpack.c.b16 %v393, %v391
      %v430 = vpack.c.b16 %v394, %v392
      %v431 = vpack.c.b16 %v397, %v395
      %v432 = vpack.c.b16 %v398, %v396
      %v433 = vpack.c.b16 %v401, %v399
      %v434 = vpack.c.b16 %v402, %v400
      %467 = vmatprep.subr.bf16.mxu0 %v404
      %468 = vmatpush1.bf16.msra.mxu0 %v403
      %469 = vmatprep.subr.bf16.mxu0 %v406
      %470 = vmatpush1.bf16.msra.mxu0 %v405
      %471 = vmatprep.subr.bf16.mxu0 %v408
      %472 = vmatpush1.bf16.msra.mxu0 %v407
      %473 = vmatprep.subr.bf16.mxu0 %v410
      %474 = vmatpush1.bf16.msra.mxu0 %v409
      %475 = vmatprep.subr.bf16.mxu0 %v412
      %476 = vmatpush1.bf16.msra.mxu0 %v411
      %477 = vmatprep.subr.bf16.mxu0 %v414
      %478 = vmatpush1.bf16.msra.mxu0 %v413
      %479 = vmatprep.subr.bf16.mxu0 %v416
      %480 = vmatpush1.bf16.msra.mxu0 %v415
      %481 = vmatprep.subr.bf16.mxu0 %v418
      %482 = vmatpush1.bf16.msra.mxu0 %v417
      %483 = vmatprep.subr.bf16.mxu0 %v420
      %484 = vmatpush1.bf16.msra.mxu0 %v419
      %485 = vmatprep.subr.bf16.mxu0 %v422
      %486 = vmatpush1.bf16.msra.mxu0 %v421
      %487 = vmatprep.subr.bf16.mxu0 %v424
      %488 = vmatpush1.bf16.msra.mxu0 %v423
      %489 = vmatprep.subr.bf16.mxu0 %v426
      %490 = vmatpush1.bf16.msra.mxu0 %v425
      %491 = vmatprep.subr.bf16.mxu0 %v428
      %492 = vmatpush1.bf16.msra.mxu0 %v427
      %493 = vmatprep.subr.bf16.mxu0 %v430
      %494 = vmatpush1.bf16.msra.mxu0 %v429
      %495 = vmatprep.subr.bf16.mxu0 %v432
      %496 = vmatpush1.bf16.msra.mxu0 %v431
      %497 = vmatprep.subr.bf16.mxu0 %v434
      %498 = vmatpush1.bf16.msra.mxu0 %v433
      %499 = vmatprep.mubr.bf16.mxu0 %v292
      %500 = vmatmul.mubr.bf16.gmra.mrb[0].mxu0 %v291
      %v501 = vpop.f32.mrb[0].mxu0
      %v502 = vadd.f32 %v260, %v501
      %v503 = vpop.f32.mrb[0].mxu0
      %v504 = vadd.f32 %v264, %v503
      %v505 = vpop.f32.mrb[0].mxu0
      %v506 = vadd.f32 %v260, %v505
      %v507 = vpop.f32.mrb[0].mxu0
      %v508 = vadd.f32 %v264, %v507
      %509 = vmatprep.mubr.bf16.mxu0 %v294
      %510 = vmatmul.mubr.bf16.gmra.mrb[0].mxu0 %v293
      %v511 = vpop.f32.mrb[0].mxu0
      %v512 = vadd.f32 %v260, %v511
      %v513 = vpop.f32.mrb[0].mxu0
      %v514 = vadd.f32 %v264, %v513
      %v515 = vpop.f32.mrb[0].mxu0
      %v516 = vadd.f32 %v260, %v515
      %v517 = vpop.f32.mrb[0].mxu0
      %v518 = vadd.f32 %v264, %v517
      %519 = vmatprep.mubr.bf16.mxu0 %v296
      %520 = vmatmul.mubr.bf16.gmra.mrb[0].mxu0 %v295
      %v521 = vpop.f32.mrb[0].mxu0
      %v522 = vadd.f32 %v260, %v521
      %v523 = vpop.f32.mrb[0].mxu0
      %v524 = vadd.f32 %v264, %v523
      %v525 = vpop.f32.mrb[0].mxu0
      %v526 = vadd.f32 %v260, %v525
      %v527 = vpop.f32.mrb[0].mxu0
      %v528 = vadd.f32 %v264, %v527
      %529 = vmatprep.mubr.bf16.mxu0 %v298
      %530 = vmatmul.mubr.bf16.gmra.mrb[0].mxu0 %v297
      %v531 = vpop.f32.mrb[0].mxu0
      %v532 = vadd.f32 %v260, %v531
      %v533 = vpop.f32.mrb[0].mxu0
      %v534 = vadd.f32 %v264, %v533
      %v535 = vpop.f32.mrb[0].mxu0
      %v536 = vadd.f32 %v260, %v535
      %v537 = vpop.f32.mrb[0].mxu0
      %v538 = vadd.f32 %v264, %v537
      %539 = vdwg.mxu0
      %s540 = scalar_lea.vmem %s1, 256
      %v541 = vld [vmem:[%s540] sm:$0xff]
      %v542 = vld [vmem:[%s540 + $0x8] sm:$0xff]
      %v543 = vld [vmem:[%s540 + $0x10] sm:$0xff]
      %v544 = vld [vmem:[%s540 + $0x18] sm:$0xff]
      %v545 = vld [vmem:[%s540 + $0x20] sm:$0xff]
      %v546 = vld [vmem:[%s540 + $0x28] sm:$0xff]
      %v547 = vld [vmem:[%s540 + $0x30] sm:$0xff]
      %v548 = vld [vmem:[%s540 + $0x38] sm:$0xff]
      %v549 = vld [vmem:[%s540 + $0x40] sm:$0xff]
      %v550 = vld [vmem:[%s540 + $0x48] sm:$0xff]
      %v551 = vld [vmem:[%s540 + $0x50] sm:$0xff]
      %v552 = vld [vmem:[%s540 + $0x58] sm:$0xff]
      %v553 = vld [vmem:[%s540 + $0x60] sm:$0xff]
      %v554 = vld [vmem:[%s540 + $0x68] sm:$0xff]
      %v555 = vld [vmem:[%s540 + $0x70] sm:$0xff]
      %v556 = vld [vmem:[%s540 + $0x78] sm:$0xff]
      %v557 = vld [vmem:[%s540 + $0x80] sm:$0xff]
      %v558 = vld [vmem:[%s540 + $0x88] sm:$0xff]
      %v559 = vld [vmem:[%s540 + $0x90] sm:$0xff]
      %v560 = vld [vmem:[%s540 + $0x98] sm:$0xff]
      %v561 = vld [vmem:[%s540 + $0xa0] sm:$0xff]
      %v562 = vld [vmem:[%s540 + $0xa8] sm:$0xff]
      %v563 = vld [vmem:[%s540 + $0xb0] sm:$0xff]
      %v564 = vld [vmem:[%s540 + $0xb8] sm:$0xff]
      %v565 = vld [vmem:[%s540 + $0xc0] sm:$0xff]
      %v566 = vld [vmem:[%s540 + $0xc8] sm:$0xff]
      %v567 = vld [vmem:[%s540 + $0xd0] sm:$0xff]
      %v568 = vld [vmem:[%s540 + $0xd8] sm:$0xff]
      %v569 = vld [vmem:[%s540 + $0xe0] sm:$0xff]
      %v570 = vld [vmem:[%s540 + $0xe8] sm:$0xff]
      %v571 = vld [vmem:[%s540 + $0xf0] sm:$0xff]
      %v572 = vld [vmem:[%s540 + $0xf8] sm:$0xff]
      %v605 = vunpack.c.l.b16 %v541
      %v606 = vunpack.c.h.b16 %v541
      %v607 = vunpack.c.l.b16 %v542
      %v608 = vunpack.c.h.b16 %v542
      %v609 = vunpack.c.l.b16 %v543
      %v610 = vunpack.c.h.b16 %v543
      %v611 = vunpack.c.l.b16 %v544
      %v612 = vunpack.c.h.b16 %v544
      %v613 = vunpack.c.l.b16 %v545
      %v614 = vunpack.c.h.b16 %v545
      %v615 = vunpack.c.l.b16 %v546
      %v616 = vunpack.c.h.b16 %v546
      %v617 = vunpack.c.l.b16 %v547
      %v618 = vunpack.c.h.b16 %v547
      %v619 = vunpack.c.l.b16 %v548
      %v620 = vunpack.c.h.b16 %v548
      %v621 = vunpack.c.l.b16 %v549
      %v622 = vunpack.c.h.b16 %v549
      %v623 = vunpack.c.l.b16 %v550
      %v624 = vunpack.c.h.b16 %v550
      %v625 = vunpack.c.l.b16 %v551
      %v626 = vunpack.c.h.b16 %v551
      %v627 = vunpack.c.l.b16 %v552
      %v628 = vunpack.c.h.b16 %v552
      %v629 = vunpack.c.l.b16 %v553
      %v630 = vunpack.c.h.b16 %v553
      %v631 = vunpack.c.l.b16 %v554
      %v632 = vunpack.c.h.b16 %v554
      %v633 = vunpack.c.l.b16 %v555
      %v634 = vunpack.c.h.b16 %v555
      %v635 = vunpack.c.l.b16 %v556
      %v636 = vunpack.c.h.b16 %v556
      %v637 = vunpack.c.l.b16 %v557
      %v638 = vunpack.c.h.b16 %v557
      %v639 = vunpack.c.l.b16 %v558
      %v640 = vunpack.c.h.b16 %v558
      %v641 = vunpack.c.l.b16 %v559
      %v642 = vunpack.c.h.b16 %v559
      %v643 = vunpack.c.l.b16 %v560
      %v644 = vunpack.c.h.b16 %v560
      %v645 = vunpack.c.l.b16 %v561
      %v646 = vunpack.c.h.b16 %v561
      %v647 = vunpack.c.l.b16 %v562
      %v648 = vunpack.c.h.b16 %v562
      %v649 = vunpack.c.l.b16 %v563
      %v650 = vunpack.c.h.b16 %v563
      %v651 = vunpack.c.l.b16 %v564
      %v652 = vunpack.c.h.b16 %v564
      %v653 = vunpack.c.l.b16 %v565
      %v654 = vunpack.c.h.b16 %v565
      %v655 = vunpack.c.l.b16 %v566
      %v656 = vunpack.c.h.b16 %v566
      %v657 = vunpack.c.l.b16 %v567
      %v658 = vunpack.c.h.b16 %v567
      %v659 = vunpack.c.l.b16 %v568
      %v660 = vunpack.c.h.b16 %v568
      %v661 = vunpack.c.l.b16 %v569
      %v662 = vunpack.c.h.b16 %v569
      %v663 = vunpack.c.l.b16 %v570
      %v664 = vunpack.c.h.b16 %v570
      %v665 = vunpack.c.l.b16 %v571
      %v666 = vunpack.c.h.b16 %v571
      %v667 = vunpack.c.l.b16 %v572
      %v668 = vunpack.c.h.b16 %v572
      %v669 = vpack.c.b16 %v607, %v605
      %v670 = vpack.c.b16 %v608, %v606
      %v671 = vpack.c.b16 %v611, %v609
      %v672 = vpack.c.b16 %v612, %v610
      %v673 = vpack.c.b16 %v615, %v613
      %v674 = vpack.c.b16 %v616, %v614
      %v675 = vpack.c.b16 %v619, %v617
      %v676 = vpack.c.b16 %v620, %v618
      %v677 = vpack.c.b16 %v623, %v621
      %v678 = vpack.c.b16 %v624, %v622
      %v679 = vpack.c.b16 %v627, %v625
      %v680 = vpack.c.b16 %v628, %v626
      %v681 = vpack.c.b16 %v631, %v629
      %v682 = vpack.c.b16 %v632, %v630
      %v683 = vpack.c.b16 %v635, %v633
      %v684 = vpack.c.b16 %v636, %v634
      %v685 = vpack.c.b16 %v639, %v637
      %v686 = vpack.c.b16 %v640, %v638
      %v687 = vpack.c.b16 %v643, %v641
      %v688 = vpack.c.b16 %v644, %v642
      %v689 = vpack.c.b16 %v647, %v645
      %v690 = vpack.c.b16 %v648, %v646
      %v691 = vpack.c.b16 %v651, %v649
      %v692 = vpack.c.b16 %v652, %v650
      %v693 = vpack.c.b16 %v655, %v653
      %v694 = vpack.c.b16 %v656, %v654
      %v695 = vpack.c.b16 %v659, %v657
      %v696 = vpack.c.b16 %v660, %v658
      %v697 = vpack.c.b16 %v663, %v661
      %v698 = vpack.c.b16 %v664, %v662
      %v699 = vpack.c.b16 %v667, %v665
      %v700 = vpack.c.b16 %v668, %v666
      %733 = vmatprep.subr.bf16.mxu0 %v670
      %734 = vmatpush1.bf16.msra.mxu0 %v669
      %735 = vmatprep.subr.bf16.mxu0 %v672
      %736 = vmatpush1.bf16.msra.mxu0 %v671
      %737 = vmatprep.subr.bf16.mxu0 %v674
      %738 = vmatpush1.bf16.msra.mxu0 %v673
      %739 = vmatprep.subr.bf16.mxu0 %v676
      %740 = vmatpush1.bf16.msra.mxu0 %v675
      %741 = vmatprep.subr.bf16.mxu0 %v678
      %742 = vmatpush1.bf16.msra.mxu0 %v677
      %743 = vmatprep.subr.bf16.mxu0 %v680
      %744 = vmatpush1.bf16.msra.mxu0 %v679
      %745 = vmatprep.subr.bf16.mxu0 %v682
      %746 = vmatpush1.bf16.msra.mxu0 %v681
      %747 = vmatprep.subr.bf16.mxu0 %v684
      %748 = vmatpush1.bf16.msra.mxu0 %v683
      %749 = vmatprep.subr.bf16.mxu0 %v686
      %750 = vmatpush1.bf16.msra.mxu0 %v685
      %751 = vmatprep.subr.bf16.mxu0 %v688
      %752 = vmatpush1.bf16.msra.mxu0 %v687
      %753 = vmatprep.subr.bf16.mxu0 %v690
      %754 = vmatpush1.bf16.msra.mxu0 %v689
      %755 = vmatprep.subr.bf16.mxu0 %v692
      %756 = vmatpush1.bf16.msra.mxu0 %v691
      %757 = vmatprep.subr.bf16.mxu0 %v694
      %758 = vmatpush1.bf16.msra.mxu0 %v693
      %759 = vmatprep.subr.bf16.mxu0 %v696
      %760 = vmatpush1.bf16.msra.mxu0 %v695
      %761 = vmatprep.subr.bf16.mxu0 %v698
      %762 = vmatpush1.bf16.msra.mxu0 %v697
      %763 = vmatprep.subr.bf16.mxu0 %v700
      %764 = vmatpush1.bf16.msra.mxu0 %v699
      %765 = vmatprep.mubr.bf16.mxu0 %v292
      %766 = vmatmul.mubr.bf16.gmra.mrb[0].mxu0 %v291
      %v767 = vpop.f32.mrb[0].mxu0
      %v768 = vadd.f32 %v260, %v767
      %v769 = vpop.f32.mrb[0].mxu0
      %v770 = vadd.f32 %v264, %v769
      %v771 = vpop.f32.mrb[0].mxu0
      %v772 = vadd.f32 %v260, %v771
      %v773 = vpop.f32.mrb[0].mxu0
      %v774 = vadd.f32 %v264, %v773
      %775 = vmatprep.mubr.bf16.mxu0 %v294
      %776 = vmatmul.mubr.bf16.gmra.mrb[0].mxu0 %v293
      %v777 = vpop.f32.mrb[0].mxu0
      %v778 = vadd.f32 %v260, %v777
      %v779 = vpop.f32.mrb[0].mxu0
      %v780 = vadd.f32 %v264, %v779
      %v781 = vpop.f32.mrb[0].mxu0
      %v782 = vadd.f32 %v260, %v781
      %v783 = vpop.f32.mrb[0].mxu0
      %v784 = vadd.f32 %v264, %v783
      %785 = vmatprep.mubr.bf16.mxu0 %v296
      %786 = vmatmul.mubr.bf16.gmra.mrb[0].mxu0 %v295
      %v787 = vpop.f32.mrb[0].mxu0
      %v788 = vadd.f32 %v260, %v787
      %v789 = vpop.f32.mrb[0].mxu0
      %v790 = vadd.f32 %v264, %v789
      %v791 = vpop.f32.mrb[0].mxu0
      %v792 = vadd.f32 %v260, %v791
      %v793 = vpop.f32.mrb[0].mxu0
      %v794 = vadd.f32 %v264, %v793
      %795 = vmatprep.mubr.bf16.mxu0 %v298
      %796 = vmatmul.mubr.bf16.gmra.mrb[0].mxu0 %v297
      %v797 = vpop.f32.mrb[0].mxu0
      %v798 = vadd.f32 %v260, %v797
      %v799 = vpop.f32.mrb[0].mxu0
      %v800 = vadd.f32 %v264, %v799
      %v801 = vpop.f32.mrb[0].mxu0
      %v802 = vadd.f32 %v260, %v801
      %v803 = vpop.f32.mrb[0].mxu0
      %v804 = vadd.f32 %v264, %v803
      %805 = vdwg.mxu0
      %v822 = vcombine.low %v502, %v504
      %v823 = vcombine.high %v502, %v504
      %v824 = vcombine.low %v506, %v508
      %v825 = vcombine.high %v506, %v508
      %v826 = vcombine.low %v512, %v514
      %v827 = vcombine.high %v512, %v514
      %v828 = vcombine.low %v516, %v518
      %v829 = vcombine.high %v516, %v518
      %v830 = vcombine.low %v522, %v524
      %v831 = vcombine.high %v522, %v524
      %v832 = vcombine.low %v526, %v528
      %v833 = vcombine.high %v526, %v528
      %v834 = vcombine.low %v532, %v534
      %v835 = vcombine.high %v532, %v534
      %v836 = vcombine.low %v536, %v538
      %v837 = vcombine.high %v536, %v538
      %v855 = vunpack.c.l.s4 1935823168
      %v856 = vunpack.c.0.s8 %v855
      %v857 = vlaneseq
      %v858 = vshrl.u32 %v857, 7
      %v859 = vsub.s32 %v856, %v858
      %v860 = vrot.slane %v822, %v859
      %v862 = vunpack.c.l.s4 1935823168
      %v863 = vunpack.c.0.s8 %v862
      %v864 = vlaneseq
      %v865 = vshrl.u32 %v864, 7
      %v866 = vsub.s32 %v863, %v865
      %v867 = vrot.slane %v823, %v866
      %v869 = vunpack.c.l.s4 1935823168
      %v870 = vunpack.c.0.s8 %v869
      %v871 = vlaneseq
      %v872 = vshrl.u32 %v871, 7
      %v873 = vsub.s32 %v870, %v872
      %v874 = vrot.slane %v824, %v873
      %v876 = vunpack.c.l.s4 1935823168
      %v877 = vunpack.c.0.s8 %v876
      %v878 = vlaneseq
      %v879 = vshrl.u32 %v878, 7
      %v880 = vsub.s32 %v877, %v879
      %v881 = vrot.slane %v825, %v880
      %v883 = vunpack.c.l.s4 1935823168
      %v884 = vunpack.c.0.s8 %v883
      %v885 = vlaneseq
      %v886 = vshrl.u32 %v885, 7
      %v887 = vsub.s32 %v884, %v886
      %v888 = vrot.slane %v826, %v887
      %v890 = vunpack.c.l.s4 1935823168
      %v891 = vunpack.c.0.s8 %v890
      %v892 = vlaneseq
      %v893 = vshrl.u32 %v892, 7
      %v894 = vsub.s32 %v891, %v893
      %v895 = vrot.slane %v827, %v894
      %v897 = vunpack.c.l.s4 1935823168
      %v898 = vunpack.c.0.s8 %v897
      %v899 = vlaneseq
      %v900 = vshrl.u32 %v899, 7
      %v901 = vsub.s32 %v898, %v900
      %v902 = vrot.slane %v828, %v901
      %v904 = vunpack.c.l.s4 1935823168
      %v905 = vunpack.c.0.s8 %v904
      %v906 = vlaneseq
      %v907 = vshrl.u32 %v906, 7
      %v908 = vsub.s32 %v905, %v907
      %v909 = vrot.slane %v829, %v908
      %v911 = vunpack.c.l.s4 1935823168
      %v912 = vunpack.c.0.s8 %v911
      %v913 = vlaneseq
      %v914 = vshrl.u32 %v913, 7
      %v915 = vsub.s32 %v912, %v914
      %v916 = vrot.slane %v830, %v915
      %v918 = vunpack.c.l.s4 1935823168
      %v919 = vunpack.c.0.s8 %v918
      %v920 = vlaneseq
      %v921 = vshrl.u32 %v920, 7
      %v922 = vsub.s32 %v919, %v921
      %v923 = vrot.slane %v831, %v922
      %v925 = vunpack.c.l.s4 1935823168
      %v926 = vunpack.c.0.s8 %v925
      %v927 = vlaneseq
      %v928 = vshrl.u32 %v927, 7
      %v929 = vsub.s32 %v926, %v928
      %v930 = vrot.slane %v832, %v929
      %v932 = vunpack.c.l.s4 1935823168
      %v933 = vunpack.c.0.s8 %v932
      %v934 = vlaneseq
      %v935 = vshrl.u32 %v934, 7
      %v936 = vsub.s32 %v933, %v935
      %v937 = vrot.slane %v833, %v936
      %v939 = vunpack.c.l.s4 1935823168
      %v940 = vunpack.c.0.s8 %v939
      %v941 = vlaneseq
      %v942 = vshrl.u32 %v941, 7
      %v943 = vsub.s32 %v940, %v942
      %v944 = vrot.slane %v834, %v943
      %v946 = vunpack.c.l.s4 1935823168
      %v947 = vunpack.c.0.s8 %v946
      %v948 = vlaneseq
      %v949 = vshrl.u32 %v948, 7
      %v950 = vsub.s32 %v947, %v949
      %v951 = vrot.slane %v835, %v950
      %v953 = vunpack.c.l.s4 1935823168
      %v954 = vunpack.c.0.s8 %v953
      %v955 = vlaneseq
      %v956 = vshrl.u32 %v955, 7
      %v957 = vsub.s32 %v954, %v956
      %v958 = vrot.slane %v836, %v957
      %v960 = vunpack.c.l.s4 1935823168
      %v961 = vunpack.c.0.s8 %v960
      %v962 = vlaneseq
      %v963 = vshrl.u32 %v962, 7
      %v964 = vsub.s32 %v961, %v963
      %v965 = vrot.slane %v837, %v964
      %v982 = vcombine.low %v768, %v770
      %v983 = vcombine.high %v768, %v770
      %v984 = vcombine.low %v772, %v774
      %v985 = vcombine.high %v772, %v774
      %v986 = vcombine.low %v778, %v780
      %v987 = vcombine.high %v778, %v780
      %v988 = vcombine.low %v782, %v784
      %v989 = vcombine.high %v782, %v784
      %v990 = vcombine.low %v788, %v790
      %v991 = vcombine.high %v788, %v790
      %v992 = vcombine.low %v792, %v794
      %v993 = vcombine.high %v792, %v794
      %v994 = vcombine.low %v798, %v800
      %v995 = vcombine.high %v798, %v800
      %v996 = vcombine.low %v802, %v804
      %v997 = vcombine.high %v802, %v804
      %v1015 = vunpack.c.l.s4 1935823168
      %v1016 = vunpack.c.0.s8 %v1015
      %v1017 = vlaneseq
      %v1018 = vshrl.u32 %v1017, 7
      %v1019 = vsub.s32 %v1016, %v1018
      %v1020 = vrot.slane %v982, %v1019
      %v1022 = vunpack.c.l.s4 1935823168
      %v1023 = vunpack.c.0.s8 %v1022
      %v1024 = vlaneseq
      %v1025 = vshrl.u32 %v1024, 7
      %v1026 = vsub.s32 %v1023, %v1025
      %v1027 = vrot.slane %v983, %v1026
      %v1029 = vunpack.c.l.s4 1935823168
      %v1030 = vunpack.c.0.s8 %v1029
      %v1031 = vlaneseq
      %v1032 = vshrl.u32 %v1031, 7
      %v1033 = vsub.s32 %v1030, %v1032
      %v1034 = vrot.slane %v984, %v1033
      %v1036 = vunpack.c.l.s4 1935823168
      %v1037 = vunpack.c.0.s8 %v1036
      %v1038 = vlaneseq
      %v1039 = vshrl.u32 %v1038, 7
      %v1040 = vsub.s32 %v1037, %v1039
      %v1041 = vrot.slane %v985, %v1040
      %v1043 = vunpack.c.l.s4 1935823168
      %v1044 = vunpack.c.0.s8 %v1043
      %v1045 = vlaneseq
      %v1046 = vshrl.u32 %v1045, 7
      %v1047 = vsub.s32 %v1044, %v1046
      %v1048 = vrot.slane %v986, %v1047
      %v1050 = vunpack.c.l.s4 1935823168
      %v1051 = vunpack.c.0.s8 %v1050
      %v1052 = vlaneseq
      %v1053 = vshrl.u32 %v1052, 7
      %v1054 = vsub.s32 %v1051, %v1053
      %v1055 = vrot.slane %v987, %v1054
      %v1057 = vunpack.c.l.s4 1935823168
      %v1058 = vunpack.c.0.s8 %v1057
      %v1059 = vlaneseq
      %v1060 = vshrl.u32 %v1059, 7
      %v1061 = vsub.s32 %v1058, %v1060
      %v1062 = vrot.slane %v988, %v1061
      %v1064 = vunpack.c.l.s4 1935823168
      %v1065 = vunpack.c.0.s8 %v1064
      %v1066 = vlaneseq
      %v1067 = vshrl.u32 %v1066, 7
      %v1068 = vsub.s32 %v1065, %v1067
      %v1069 = vrot.slane %v989, %v1068
      %v1071 = vunpack.c.l.s4 1935823168
      %v1072 = vunpack.c.0.s8 %v1071
      %v1073 = vlaneseq
      %v1074 = vshrl.u32 %v1073, 7
      %v1075 = vsub.s32 %v1072, %v1074
      %v1076 = vrot.slane %v990, %v1075
      %v1078 = vunpack.c.l.s4 1935823168
      %v1079 = vunpack.c.0.s8 %v1078
      %v1080 = vlaneseq
      %v1081 = vshrl.u32 %v1080, 7
      %v1082 = vsub.s32 %v1079, %v1081
      %v1083 = vrot.slane %v991, %v1082
      %v1085 = vunpack.c.l.s4 1935823168
      %v1086 = vunpack.c.0.s8 %v1085
      %v1087 = vlaneseq
      %v1088 = vshrl.u32 %v1087, 7
      %v1089 = vsub.s32 %v1086, %v1088
      %v1090 = vrot.slane %v992, %v1089
      %v1092 = vunpack.c.l.s4 1935823168
      %v1093 = vunpack.c.0.s8 %v1092
      %v1094 = vlaneseq
      %v1095 = vshrl.u32 %v1094, 7
      %v1096 = vsub.s32 %v1093, %v1095
      %v1097 = vrot.slane %v993, %v1096
      %v1099 = vunpack.c.l.s4 1935823168
      %v1100 = vunpack.c.0.s8 %v1099
      %v1101 = vlaneseq
      %v1102 = vshrl.u32 %v1101, 7
      %v1103 = vsub.s32 %v1100, %v1102
      %v1104 = vrot.slane %v994, %v1103
      %v1106 = vunpack.c.l.s4 1935823168
      %v1107 = vunpack.c.0.s8 %v1106
      %v1108 = vlaneseq
      %v1109 = vshrl.u32 %v1108, 7
      %v1110 = vsub.s32 %v1107, %v1109
      %v1111 = vrot.slane %v995, %v1110
      %v1113 = vunpack.c.l.s4 1935823168
      %v1114 = vunpack.c.0.s8 %v1113
      %v1115 = vlaneseq
      %v1116 = vshrl.u32 %v1115, 7
      %v1117 = vsub.s32 %v1114, %v1116
      %v1118 = vrot.slane %v996, %v1117
      %v1120 = vunpack.c.l.s4 1935823168
      %v1121 = vunpack.c.0.s8 %v1120
      %v1122 = vlaneseq
      %v1123 = vshrl.u32 %v1122, 7
      %v1124 = vsub.s32 %v1121, %v1123
      %v1125 = vrot.slane %v997, %v1124
      %v1126 = vpack.c.bf16 %v867, %v860
      %v1127 = vpack.c.bf16 %v1027, %v1020
      %v1128 = vpack.c.bf16 %v881, %v874
      %v1129 = vpack.c.bf16 %v1041, %v1034
      %v1130 = vpack.c.bf16 %v895, %v888
      %v1131 = vpack.c.bf16 %v1055, %v1048
      %v1132 = vpack.c.bf16 %v909, %v902
      %v1133 = vpack.c.bf16 %v1069, %v1062
      %v1134 = vpack.c.bf16 %v923, %v916
      %v1135 = vpack.c.bf16 %v1083, %v1076
      %v1136 = vpack.c.bf16 %v937, %v930
      %v1137 = vpack.c.bf16 %v1097, %v1090
      %v1138 = vpack.c.bf16 %v951, %v944
      %v1139 = vpack.c.bf16 %v1111, %v1104
      %v1140 = vpack.c.bf16 %v965, %v958
      %v1141 = vpack.c.bf16 %v1125, %v1118
      %v1158 = vunpack.c.l.b16 %v1126
      %v1159 = vunpack.c.h.b16 %v1126
      %v1160 = vunpack.c.l.b16 %v1127
      %v1161 = vunpack.c.h.b16 %v1127
      %v1162 = vunpack.c.l.b16 %v1128
      %v1163 = vunpack.c.h.b16 %v1128
      %v1164 = vunpack.c.l.b16 %v1129
      %v1165 = vunpack.c.h.b16 %v1129
      %v1166 = vunpack.c.l.b16 %v1130
      %v1167 = vunpack.c.h.b16 %v1130
      %v1168 = vunpack.c.l.b16 %v1131
      %v1169 = vunpack.c.h.b16 %v1131
      %v1170 = vunpack.c.l.b16 %v1132
      %v1171 = vunpack.c.h.b16 %v1132
      %v1172 = vunpack.c.l.b16 %v1133
      %v1173 = vunpack.c.h.b16 %v1133
      %v1174 = vunpack.c.l.b16 %v1134
      %v1175 = vunpack.c.h.b16 %v1134
      %v1176 = vunpack.c.l.b16 %v1135
      %v1177 = vunpack.c.h.b16 %v1135
      %v1178 = vunpack.c.l.b16 %v1136
      %v1179 = vunpack.c.h.b16 %v1136
      %v1180 = vunpack.c.l.b16 %v1137
      %v1181 = vunpack.c.h.b16 %v1137
      %v1182 = vunpack.c.l.b16 %v1138
      %v1183 = vunpack.c.h.b16 %v1138
      %v1184 = vunpack.c.l.b16 %v1139
      %v1185 = vunpack.c.h.b16 %v1139
      %v1186 = vunpack.c.l.b16 %v1140
      %v1187 = vunpack.c.h.b16 %v1140
      %v1188 = vunpack.c.l.b16 %v1141
      %v1189 = vunpack.c.h.b16 %v1141
      %v1190 = vpack.c.b16 %v1158, %v1158
      %v1191 = vpack.c.b16 %v1159, %v1159
      %v1192 = vpack.c.b16 %v1160, %v1160
      %v1193 = vpack.c.b16 %v1161, %v1161
      %v1194 = vpack.c.b16 %v1162, %v1162
      %v1195 = vpack.c.b16 %v1163, %v1163
      %v1196 = vpack.c.b16 %v1164, %v1164
      %v1197 = vpack.c.b16 %v1165, %v1165
      %v1198 = vpack.c.b16 %v1166, %v1166
      %v1199 = vpack.c.b16 %v1167, %v1167
      %v1200 = vpack.c.b16 %v1168, %v1168
      %v1201 = vpack.c.b16 %v1169, %v1169
      %v1202 = vpack.c.b16 %v1170, %v1170
      %v1203 = vpack.c.b16 %v1171, %v1171
      %v1204 = vpack.c.b16 %v1172, %v1172
      %v1205 = vpack.c.b16 %v1173, %v1173
      %v1206 = vpack.c.b16 %v1174, %v1174
      %v1207 = vpack.c.b16 %v1175, %v1175
      %v1208 = vpack.c.b16 %v1176, %v1176
      %v1209 = vpack.c.b16 %v1177, %v1177
      %v1210 = vpack.c.b16 %v1178, %v1178
      %v1211 = vpack.c.b16 %v1179, %v1179
      %v1212 = vpack.c.b16 %v1180, %v1180
      %v1213 = vpack.c.b16 %v1181, %v1181
      %v1214 = vpack.c.b16 %v1182, %v1182
      %v1215 = vpack.c.b16 %v1183, %v1183
      %v1216 = vpack.c.b16 %v1184, %v1184
      %v1217 = vpack.c.b16 %v1185, %v1185
      %v1218 = vpack.c.b16 %v1186, %v1186
      %v1219 = vpack.c.b16 %v1187, %v1187
      %v1220 = vpack.c.b16 %v1188, %v1188
      %v1221 = vpack.c.b16 %v1189, %v1189
      %1254 = vst [vmem:[%s213] sm:$0xf] %v1190
      %1255 = vst [vmem:[%s213 + $0x4] sm:$0xf] %v1191
      %1256 = vst [vmem:[%s213 + $0x8] sm:$0xf] %v1192
      %1257 = vst [vmem:[%s213 + $0xc] sm:$0xf] %v1193
      %1258 = vst [vmem:[%s213 + $0x10] sm:$0xf] %v1194
      %1259 = vst [vmem:[%s213 + $0x14] sm:$0xf] %v1195
      %1260 = vst [vmem:[%s213 + $0x18] sm:$0xf] %v1196
      %1261 = vst [vmem:[%s213 + $0x1c] sm:$0xf] %v1197
      %1262 = vst [vmem:[%s213 + $0x20] sm:$0xf] %v1198
      %1263 = vst [vmem:[%s213 + $0x24] sm:$0xf] %v1199
      %1264 = vst [vmem:[%s213 + $0x28] sm:$0xf] %v1200
      %1265 = vst [vmem:[%s213 + $0x2c] sm:$0xf] %v1201
      %1266 = vst [vmem:[%s213 + $0x30] sm:$0xf] %v1202
      %1267 = vst [vmem:[%s213 + $0x34] sm:$0xf] %v1203
      %1268 = vst [vmem:[%s213 + $0x38] sm:$0xf] %v1204
      %1269 = vst [vmem:[%s213 + $0x3c] sm:$0xf] %v1205
      %1270 = vst [vmem:[%s213 + $0x40] sm:$0xf] %v1206
      %1271 = vst [vmem:[%s213 + $0x44] sm:$0xf] %v1207
      %1272 = vst [vmem:[%s213 + $0x48] sm:$0xf] %v1208
      %1273 = vst [vmem:[%s213 + $0x4c] sm:$0xf] %v1209
      %1274 = vst [vmem:[%s213 + $0x50] sm:$0xf] %v1210
      %1275 = vst [vmem:[%s213 + $0x54] sm:$0xf] %v1211
      %1276 = vst [vmem:[%s213 + $0x58] sm:$0xf] %v1212
      %1277 = vst [vmem:[%s213 + $0x5c] sm:$0xf] %v1213
      %1278 = vst [vmem:[%s213 + $0x60] sm:$0xf] %v1214
      %1279 = vst [vmem:[%s213 + $0x64] sm:$0xf] %v1215
      %1280 = vst [vmem:[%s213 + $0x68] sm:$0xf] %v1216
      %1281 = vst [vmem:[%s213 + $0x6c] sm:$0xf] %v1217
      %1282 = vst [vmem:[%s213 + $0x70] sm:$0xf] %v1218
      %1283 = vst [vmem:[%s213 + $0x74] sm:$0xf] %v1219
      %1284 = vst [vmem:[%s213 + $0x78] sm:$0xf] %v1220
      %1285 = vst [vmem:[%s213 + $0x7c] sm:$0xf] %v1221
      %s1286 = smul.u32 16, %s19
      %p1287 = scmp.lt.s32.totalorder %s18, 1
      %s1288 = scalar_select %p1287, %s18, 1
      %p1289 = scmp.lt.s32.totalorder %s1286, 15
      %s1290 = scalar_select %p1289, %s1286, 15
      %s1291 = smul.addr %s1290, 2
      %s1292 = smul.addr %s1288, 32
      %s1293 = sadd.s32 %s1291, %s1292
      %s1294 = smul.addr %s1293, 4
      %s1295 = scalar_lea.vmem %s3, %s1294
      // Predicated region
      $region33: #{up_forward.3} parent=31 // pred_check
        %p1296 = pneg %p116
      $region34: #{up_forward.3} parent=31 // pred_check_branch
        %1298 = sbr.rel (%p1296) target = $region36
      $region35: #{up_forward.3} parent=31 // pred_region
        %s1299 = smul.u32 16, %s19
      $region36: #{up_forward.3} parent=31 // pred_fallthru
        _
    $region32: #{up_forward.3} parent=5 // pred_fallthru
      _
    %p1300 = scmp.le.s32.totalorder 2, %s9
    // Predicated region
    $region37: #{up_forward.3} parent=5 // pred_check
      %p1301 = pneg %p1300
    $region38: #{up_forward.3} parent=5 // pred_check_branch
      %1303 = sbr.rel (%p1301) target = $region40
    $region39: #{up_forward.3} parent=5 // pred_region
      %s1304 = ssub.s32 %s9, 2
      // Predicated region
      $region41: #{up_forward.3} parent=39 // pred_check
        %p1305 = pneg %p122
      $region42: #{up_forward.3} parent=39 // pred_check_branch
        %1307 = sbr.rel (%p1305) target = $region44
      $region43: #{up_forward.3} parent=39 // pred_region
        %s1308 = smul.u32 16, %s21
        %p1309 = scmp.lt.s32.totalorder %s20, 1
        %s1310 = scalar_select %p1309, %s20, 1
        %p1311 = scmp.lt.s32.totalorder %s1308, 15
        %s1312 = scalar_select %p1311, %s1308, 15
        %s1313 = smul.addr %s1312, 2
        %s1314 = smul.addr %s1310, 32
        %s1315 = sadd.s32 %s1313, %s1314
        %s1316 = smul.addr %s1315, 4
        %s1317 = scalar_lea.vmem %s3, %s1316
      $region44: #{up_forward.3} parent=39 // pred_fallthru
        _
    $region40: #{up_forward.3} parent=5 // pred_fallthru
      _
  $region6: #{up_forward.3} parent=0 // loop_footer
    %s13 = sadd.s32 1, %s9
  $region7: #{up_forward.3} parent=0 // loop_footer_branch
    %8 = sbr.rel target = $region3
  $region8: #{up_forward.3} parent=0 // loop_exit
    _

// kernel: up_forward.5
$region0: #{up_forward.5}
  #allocation0 [shape = 'u32[]', space=smem, size = 0x4, offset = 0x4, fixed_abs, tag = 'smem constant byte address 0x4 - core index']
  #allocation1 [shape = 'u32[144,128]{1,0:T(1,128)}', space=vmem, size = 0x12000, scoped, tag = 'internal scratch']
  %s0 = inlined_call_operand.vmem [shape: bf16[4,10,18,128], index: 0, kind: input, shape index: {}]
  %s1 = inlined_call_operand.vmem [shape: bf16[9,128,128], index: 1, kind: input, shape index: {}]
  %s2 = inlined_call_operand.vmem [shape: f32[1,128], index: 2, kind: input, shape index: {}]
  %s3 = inlined_call_operand.vmem [shape: f32[1,128], index: 3, kind: input, shape index: {}]
  %s4 = inlined_call_operand.vmem [shape: bf16[2,16,16,128], index: 4, kind: output, shape index: {}]
  %s5 = sld [smem:[#allocation0]]
  $region49: #{up_forward.5} parent=0
    _
  %s7 = ssub.s32 1, %s5
  %s8 = scalar_select 0, %s7, %s5
  loop: start=0, step=1, limit=6
  $region2: #{up_forward.5} parent=0 // loop_pre_header
    _
  $region3: #{up_forward.5} parent=0 // loop_header
    %s10 = sphi 0, %s14
    %p11 = scmp.ge.s32.totalorder %s10, 6
    %s17 = sphi 0, %s29
    %s18 = sphi 0, %s25
    %s19 = sphi 0, %s17
    %s20 = sphi 0, %s18
    %s21 = sphi 0, %s19
    %s22 = sphi 0, %s20
    %s36 = sphi 0, %s38
    %s39 = sphi 0, %s36
    %s40 = sphi 0, %s39
    %s56 = sphi 0, %s40
    %s60 = sphi 0, %s60
    %s62 = sphi 0, %s60
    %s63 = sphi 0, %s62
    %s77 = sphi 0, %s63
    %s81 = sphi 0, %s81
    %s83 = sphi 0, %s81
    %s84 = sphi 0, %s83
    %s98 = sphi 0, %s84
    %s102 = sphi 0, %s102
    %s104 = sphi 0, %s102
    %s105 = sphi 0, %s104
    %s119 = sphi 0, %s105
    %s127 = sphi 0, %s129
    %s130 = sphi 0, %s127
    %s131 = sphi 0, %s130
    %s147 = sphi 0, %s131
  $region4: #{up_forward.5} parent=0 // loop_header_branch
    %13 = sbr.rel (%p11) target = $region8
  $region5: #{up_forward.5} parent=0 // loop_body
    %s15 = ssub.s32 %s10, 1
    %s16 = ssub.s32 %s10, 2
    %s23 = sadd.s32 1, %s18
    %p24 = scmp.ge.s32.totalorder %s23, 2
    %s25 = scalar_select %p24, 0, %s23
    %s26 = sadd.s32 1, %s17
    %s27 = scalar_select %p24, %s26, %s17
    %p28 = scmp.ge.s32.totalorder %s27, 2
    %s29 = scalar_select %p28, 0, %s27
    %s30 = smul.u32 %s17, 2
    %s31 = sadd.s32 %s30, %s18
    %s32 = smul.u32 %s29, 2
    %s33 = sadd.s32 %s32, %s25
    %s34 = ssub.s32 %s31, %s33
    %p35 = scmp.eq.s32.totalorder %s34, 0
    %s37 = sadd.s32 %s36, 1
    %s38 = scalar_select %p35, %s36, %s37
    %p41 = pneg %p35
    %p42 = scmp.eq.s32.totalorder %s10, 3
    %p43 = por %p41, %p42
    %p44 = scmp.ne.s32.totalorder %s36, %s39
    %p45 = scmp.eq.s32.totalorder %s10, 0
    %p46 = por %p44, %p45
    %p47 = scmp.ne.s32.totalorder %s36, %s39
    %p48 = scmp.eq.s32.totalorder %s15, 3
    %p49 = por %p47, %p48
    %p50 = scmp.ne.s32.totalorder %s39, %s40
    %p51 = scmp.eq.s32.totalorder %s15, 0
    %p52 = por %p50, %p51
    %p53 = scmp.ne.s32.totalorder %s39, %s40
    %p54 = scmp.eq.s32.totalorder %s16, 3
    %p55 = por %p53, %p54
    %p57 = scmp.ne.s32.totalorder %s40, %s56
    %p58 = scmp.eq.s32.totalorder %s16, 0
    %p59 = por %p57, %p58
    %s61 = sadd.s32 %s60, 1
    %p64 = scmp.eq.s32.totalorder %s10, 3
    %p65 = scmp.ne.s32.totalorder %s60, %s62
    %p66 = scmp.eq.s32.totalorder %s10, 0
    %p67 = por %p65, %p66
    %p68 = scmp.ne.s32.totalorder %s60, %s62
    %p69 = scmp.eq.s32.totalorder %s15, 3
    %p70 = por %p68, %p69
    %p71 = scmp.ne.s32.totalorder %s62, %s63
    %p72 = scmp.eq.s32.totalorder %s15, 0
    %p73 = por %p71, %p72
    %p74 = scmp.ne.s32.totalorder %s62, %s63
    %p75 = scmp.eq.s32.totalorder %s16, 3
    %p76 = por %p74, %p75
    %p78 = scmp.ne.s32.totalorder %s63, %s77
    %p79 = scmp.eq.s32.totalorder %s16, 0
    %p80 = por %p78, %p79
    %s82 = sadd.s32 %s81, 1
    %p85 = scmp.eq.s32.totalorder %s10, 3
    %p86 = scmp.ne.s32.totalorder %s81, %s83
    %p87 = scmp.eq.s32.totalorder %s10, 0
    %p88 = por %p86, %p87
    %p89 = scmp.ne.s32.totalorder %s81, %s83
    %p90 = scmp.eq.s32.totalorder %s15, 3
    %p91 = por %p89, %p90
    %p92 = scmp.ne.s32.totalorder %s83, %s84
    %p93 = scmp.eq.s32.totalorder %s15, 0
    %p94 = por %p92, %p93
    %p95 = scmp.ne.s32.totalorder %s83, %s84
    %p96 = scmp.eq.s32.totalorder %s16, 3
    %p97 = por %p95, %p96
    %p99 = scmp.ne.s32.totalorder %s84, %s98
    %p100 = scmp.eq.s32.totalorder %s16, 0
    %p101 = por %p99, %p100
    %s103 = sadd.s32 %s102, 1
    %p106 = scmp.eq.s32.totalorder %s10, 3
    %p107 = scmp.ne.s32.totalorder %s102, %s104
    %p108 = scmp.eq.s32.totalorder %s10, 0
    %p109 = por %p107, %p108
    %p110 = scmp.ne.s32.totalorder %s102, %s104
    %p111 = scmp.eq.s32.totalorder %s15, 3
    %p112 = por %p110, %p111
    %p113 = scmp.ne.s32.totalorder %s104, %s105
    %p114 = scmp.eq.s32.totalorder %s15, 0
    %p115 = por %p113, %p114
    %p116 = scmp.ne.s32.totalorder %s104, %s105
    %p117 = scmp.eq.s32.totalorder %s16, 3
    %p118 = por %p116, %p117
    %p120 = scmp.ne.s32.totalorder %s105, %s119
    %p121 = scmp.eq.s32.totalorder %s16, 0
    %p122 = por %p120, %p121
    %s123 = ssub.s32 %s17, %s29
    %s124 = ssub.s32 %s18, %s25
    %s125 = sor.u32 %s123, %s124
    %p126 = scmp.eq.s32.totalorder %s125, 0
    %s128 = sadd.s32 %s127, 1
    %s129 = scalar_select %p126, %s127, %s128
    %p132 = pneg %p126
    %p133 = scmp.eq.s32.totalorder %s10, 3
    %p134 = por %p132, %p133
    %p135 = scmp.ne.s32.totalorder %s127, %s130
    %p136 = scmp.eq.s32.totalorder %s10, 0
    %p137 = por %p135, %p136
    %p138 = scmp.ne.s32.totalorder %s127, %s130
    %p139 = scmp.eq.s32.totalorder %s15, 3
    %p140 = por %p138, %p139
    %p141 = scmp.ne.s32.totalorder %s130, %s131
    %p142 = scmp.eq.s32.totalorder %s15, 0
    %p143 = por %p141, %p142
    %p144 = scmp.ne.s32.totalorder %s130, %s131
    %p145 = scmp.eq.s32.totalorder %s16, 3
    %p146 = por %p144, %p145
    %p148 = scmp.ne.s32.totalorder %s131, %s147
    %p149 = scmp.eq.s32.totalorder %s16, 0
    %p150 = por %p148, %p149
    %p151 = scmp.le.s32.totalorder 1, %s10
    %p152 = scmp.lt.s32.totalorder %s10, 5
    %p153 = pnand %p151, %p152
    %p154 = pneg %p153
    // Predicated region
    $region9: #{up_forward.5} parent=5 // pred_check
      _
    $region10: #{up_forward.5} parent=5 // pred_check_branch
      %156 = sbr.rel (%p153) target = $region12
    $region11: #{up_forward.5} parent=5 // pred_region
      %s157 = ssub.s32 %s10, 1
      // Predicated region
      $region13: #{up_forward.5} parent=11 // pred_check
        %p158 = pneg %p73
      $region14: #{up_forward.5} parent=11 // pred_check_branch
        %160 = sbr.rel (%p158) target = $region16
      $region15: #{up_forward.5} parent=11 // pred_region
        _
      $region16: #{up_forward.5} parent=11 // pred_fallthru
        _
      // Predicated region
      $region17: #{up_forward.5} parent=11 // pred_check
        %p161 = pneg %p94
      $region18: #{up_forward.5} parent=11 // pred_check_branch
        %163 = sbr.rel (%p161) target = $region20
      $region19: #{up_forward.5} parent=11 // pred_region
        _
      $region20: #{up_forward.5} parent=11 // pred_fallthru
        _
      // Predicated region
      $region21: #{up_forward.5} parent=11 // pred_check
        %p164 = pneg %p115
      $region22: #{up_forward.5} parent=11 // pred_check_branch
        %166 = sbr.rel (%p164) target = $region24
      $region23: #{up_forward.5} parent=11 // pred_region
        _
      $region24: #{up_forward.5} parent=11 // pred_fallthru
        _
    $region12: #{up_forward.5} parent=5 // pred_fallthru
      _
    %p167 = scmp.lt.s32.totalorder %s10, 4
    // Predicated region
    $region25: #{up_forward.5} parent=5 // pred_check
      %p168 = pneg %p167
    $region26: #{up_forward.5} parent=5 // pred_check_branch
      %170 = sbr.rel (%p168) target = $region28
    $region27: #{up_forward.5} parent=5 // pred_region
      // Predicated region
      $region29: #{up_forward.5} parent=27 // pred_check
        %p171 = pneg %p46
      $region30: #{up_forward.5} parent=27 // pred_check_branch
        %173 = sbr.rel (%p171) target = $region32
      $region31: #{up_forward.5} parent=27 // pred_region
        %s174 = smul.u32 %s17, 2
        %s175 = sadd.s32 %s174, %s18
        %p176 = scmp.lt.s32.totalorder %s175, 3
        %s177 = scalar_select %p176, %s175, 3
        %s178 = smul.addr %s177, 30
        %s179 = smul.addr %s178, 4
        %s180 = scalar_lea.vmem %s0, %s179
        %s181 = smul.u32 %s17, 2
        %s182 = sadd.s32 %s181, %s18
      $region32: #{up_forward.5} parent=27 // pred_fallthru
        _
    $region28: #{up_forward.5} parent=5 // pred_fallthru
      _
    %p183 = scmp.le.s32.totalorder 1, %s10
    %p184 = scmp.lt.s32.totalorder %s10, 5
    %p185 = pnand %p183, %p184
    %p186 = pneg %p185
    // Predicated region
    $region33: #{up_forward.5} parent=5 // pred_check
      _
    $region34: #{up_forward.5} parent=5 // pred_check_branch
      %188 = sbr.rel (%p185) target = $region36
    $region35: #{up_forward.5} parent=5 // pred_region
      %s189 = ssub.s32 %s10, 1
      %s190 = smul.u32 %s19, 2
      %s191 = sadd.s32 %s190, %s20
      %p192 = scmp.lt.s32.totalorder %s191, 3
      %s193 = scalar_select %p192, %s191, 3
      %s194 = smul.addr %s193, 30
      %s195 = smul.addr %s194, 4
      %s196 = scalar_lea.vmem %s0, %s195
      %p197 = pneg %p52
      %p198 = pneg %p49
      %p199 = pneg %p73
      %p200 = pneg %p70
      %p201 = pneg %p94
      %p202 = pneg %p91
      %p203 = pneg %p115
      %p204 = pneg %p112
      %p205 = pneg %p143
      %p206 = pneg %p140
      %s207 = smul.u32 8, %s20
      %p208 = scmp.lt.s32.totalorder %s19, 1
      %s209 = scalar_select %p208, %s19, 1
      %p210 = scmp.lt.s32.totalorder %s207, 15
      %s211 = scalar_select %p210, %s207, 15
      %s212 = smul.addr %s211, 2
      %s213 = smul.addr %s209, 32
      %s214 = sadd.s32 %s212, %s213
      %s215 = smul.addr %s214, 4
      %s216 = scalar_lea.vmem %s4, %s215
      %s217 = smul.u32 %s19, 2
      %s218 = sadd.s32 %s217, %s20
      %p219 = scmp.lt.s32.totalorder %s218, 3
      %s220 = scalar_select %p219, %s218, 3
      %s221 = smul.addr %s220, 30
      %s222 = smul.addr %s221, 4
      %s223 = scalar_lea.vmem %s0, %s222
      %s224 = smul.u32 %s19, 2
      %s225 = sadd.s32 %s224, %s20
      %s226 = smul.u32 8, %s20
      %p227 = scmp.lt.s32.totalorder %s19, 1
      %s228 = scalar_select %p227, %s19, 1
      %p229 = scmp.lt.s32.totalorder %s226, 15
      %s230 = scalar_select %p229, %s226, 15
      %s231 = smul.addr %s230, 2
      %s232 = smul.addr %s228, 32
      %s233 = sadd.s32 %s231, %s232
      %s234 = smul.addr %s233, 4
      %s235 = scalar_lea.vmem %s4, %s234
      %s236 = smul.u32 8, %s20
      %v238 = vld [vmem:[%s223] sm:$0xf]
      %v239 = vld [vmem:[%s223 + $0x4] sm:$0xf]
      %v240 = vld [vmem:[%s223 + $0x8] sm:$0x1]
      %v241 = vld [vmem:[%s223 + $0xc] sm:$0xf]
      %v242 = vld [vmem:[%s223 + $0x10] sm:$0xf]
      %v243 = vld [vmem:[%s223 + $0x14] sm:$0x1]
      %v244 = vld [vmem:[%s223 + $0x18] sm:$0xf]
      %v245 = vld [vmem:[%s223 + $0x1c] sm:$0xf]
      %v246 = vld [vmem:[%s223 + $0x20] sm:$0x1]
      %v247 = vld [vmem:[%s223 + $0x24] sm:$0xf]
      %v248 = vld [vmem:[%s223 + $0x28] sm:$0xf]
      %v249 = vld [vmem:[%s223 + $0x2c] sm:$0x1]
      %v250 = vld [vmem:[%s223 + $0x30] sm:$0xf]
      %v251 = vld [vmem:[%s223 + $0x34] sm:$0xf]
      %v252 = vld [vmem:[%s223 + $0x38] sm:$0x1]
      %v253 = vld [vmem:[%s223 + $0x3c] sm:$0xf]
      %v254 = vld [vmem:[%s223 + $0x40] sm:$0xf]
      %v255 = vld [vmem:[%s223 + $0x44] sm:$0x1]
      %v256 = vld [vmem:[%s223 + $0x48] sm:$0xf]
      %v257 = vld [vmem:[%s223 + $0x4c] sm:$0xf]
      %v258 = vld [vmem:[%s223 + $0x50] sm:$0x1]
      %v259 = vld [vmem:[%s223 + $0x54] sm:$0xf]
      %v260 = vld [vmem:[%s223 + $0x58] sm:$0xf]
      %v261 = vld [vmem:[%s223 + $0x5c] sm:$0x1]
      %v262 = vld [vmem:[%s223 + $0x60] sm:$0xf]
      %v263 = vld [vmem:[%s223 + $0x64] sm:$0xf]
      %v264 = vld [vmem:[%s223 + $0x68] sm:$0x1]
      %v265 = vld [vmem:[%s223 + $0x6c] sm:$0xf]
      %v266 = vld [vmem:[%s223 + $0x70] sm:$0xf]
      %v267 = vld [vmem:[%s223 + $0x74] sm:$0x1]
      %v268 = vld [vmem:[%s1] sm:$0xf]
      %v269 = vld [vmem:[%s1 + $0x4] sm:$0xf]
      %v270 = vld [vmem:[%s1 + $0x8] sm:$0xf]
      %v271 = vld [vmem:[%s1 + $0xc] sm:$0xf]
      %v272 = vld [vmem:[%s1 + $0x10] sm:$0xf]
      %v273 = vld [vmem:[%s1 + $0x14] sm:$0xf]
      %v274 = vld [vmem:[%s1 + $0x18] sm:$0xf]
      %v275 = vld [vmem:[%s1 + $0x1c] sm:$0xf]
      %v276 = vld [vmem:[%s1 + $0x20] sm:$0xf]
      %v277 = vld [vmem:[%s1 + $0x24] sm:$0xf]
      %v278 = vld [vmem:[%s1 + $0x28] sm:$0xf]
      %v279 = vld [vmem:[%s1 + $0x2c] sm:$0xf]
      %v280 = vld [vmem:[%s1 + $0x30] sm:$0xf]
      %v281 = vld [vmem:[%s1 + $0x34] sm:$0xf]
      %v282 = vld [vmem:[%s1 + $0x38] sm:$0xf]
      %v283 = vld [vmem:[%s1 + $0x3c] sm:$0xf]
      %s284 = scalar_lea.vmem %s1, 192
      %v285 = vld [vmem:[%s284] sm:$0xf]
      %v286 = vld [vmem:[%s284 + $0x4] sm:$0xf]
      %v287 = vld [vmem:[%s284 + $0x8] sm:$0xf]
      %v288 = vld [vmem:[%s284 + $0xc] sm:$0xf]
      %v289 = vld [vmem:[%s284 + $0x10] sm:$0xf]
      %v290 = vld [vmem:[%s284 + $0x14] sm:$0xf]
      %v291 = vld [vmem:[%s284 + $0x18] sm:$0xf]
      %v292 = vld [vmem:[%s284 + $0x1c] sm:$0xf]
      %v293 = vld [vmem:[%s284 + $0x20] sm:$0xf]
      %v294 = vld [vmem:[%s284 + $0x24] sm:$0xf]
      %v295 = vld [vmem:[%s284 + $0x28] sm:$0xf]
      %v296 = vld [vmem:[%s284 + $0x2c] sm:$0xf]
      %v297 = vld [vmem:[%s284 + $0x30] sm:$0xf]
      %v298 = vld [vmem:[%s284 + $0x34] sm:$0xf]
      %v299 = vld [vmem:[%s284 + $0x38] sm:$0xf]
      %v300 = vld [vmem:[%s284 + $0x3c] sm:$0xf]
      %v317 = vunpack.c.l.b16 %v241
      %v318 = vunpack.c.l.b16 %v242
      %v319 = vunpack.c.l.b16 %v244
      %v320 = vunpack.c.l.b16 %v245
      %v321 = vunpack.c.l.b16 %v247
      %v322 = vunpack.c.l.b16 %v248
      %v323 = vunpack.c.l.b16 %v250
      %v324 = vunpack.c.l.b16 %v251
      %v325 = vunpack.c.l.b16 %v253
      %v326 = vunpack.c.l.b16 %v254
      %v327 = vunpack.c.l.b16 %v256
      %v328 = vunpack.c.l.b16 %v257
      %v329 = vunpack.c.l.b16 %v259
      %v330 = vunpack.c.l.b16 %v260
      %v331 = vunpack.c.l.b16 %v262
      %v332 = vunpack.c.l.b16 %v263
      %v333 = vpack.c.b16 %v318, %v317
      %v334 = vpack.c.b16 %v320, %v319
      %v335 = vpack.c.b16 %v322, %v321
      %v336 = vpack.c.b16 %v324, %v323
      %v337 = vpack.c.b16 %v326, %v325
      %v338 = vpack.c.b16 %v328, %v327
      %v339 = vpack.c.b16 %v330, %v329
      %v340 = vpack.c.b16 %v332, %v331
      %v365 = vunpack.c.l.b16 %v285
      %v366 = vunpack.c.l.b16 %v286
      %v367 = vunpack.c.l.b16 %v287
      %v368 = vunpack.c.l.b16 %v288
      %v369 = vunpack.c.l.b16 %v289
      %v370 = vunpack.c.l.b16 %v290
      %v371 = vunpack.c.l.b16 %v291
      %v372 = vunpack.c.l.b16 %v292
      %v373 = vunpack.c.l.b16 %v293
      %v374 = vunpack.c.l.b16 %v294
      %v375 = vunpack.c.l.b16 %v295
      %v376 = vunpack.c.l.b16 %v296
      %v377 = vunpack.c.l.b16 %v297
      %v378 = vunpack.c.l.b16 %v298
      %v379 = vunpack.c.l.b16 %v299
      %v380 = vunpack.c.l.b16 %v300
      %v381 = vpack.c.b16 %v366, %v365
      %v382 = vpack.c.b16 %v368, %v367
      %v383 = vpack.c.b16 %v370, %v369
      %v384 = vpack.c.b16 %v372, %v371
      %v385 = vpack.c.b16 %v374, %v373
      %v386 = vpack.c.b16 %v376, %v375
      %v387 = vpack.c.b16 %v378, %v377
      %v388 = vpack.c.b16 %v380, %v379
      %397 = vmatprep.subr.bf16.mxu0 0
      %398 = vmatpush1.bf16.msra.mxu0 %v381
      %399 = vmatprep.subr.bf16.mxu0 0
      %400 = vmatpush1.bf16.msra.mxu0 %v382
      %401 = vmatprep.subr.bf16.mxu0 0
      %402 = vmatpush1.bf16.msra.mxu0 %v383
      %403 = vmatprep.subr.bf16.mxu0 0
      %404 = vmatpush1.bf16.msra.mxu0 %v384
      %405 = vmatprep.subr.bf16.mxu0 0
      %406 = vmatpush1.bf16.msra.mxu0 %v385
      %407 = vmatprep.subr.bf16.mxu0 0
      %408 = vmatpush1.bf16.msra.mxu0 %v386
      %409 = vmatprep.subr.bf16.mxu0 0
      %410 = vmatpush1.bf16.msra.mxu0 %v387
      %411 = vmatprep.subr.bf16.mxu0 0
      %412 = vmatpush1.bf16.msra.mxu0 %v388
      %413 = vmatprep.subr.bf16.mxu0 0
      %414 = vmatpush1.bf16.msra.mxu0 0
      %415 = vmatprep.subr.bf16.mxu0 0
      %416 = vmatpush1.bf16.msra.mxu0 0
      %417 = vmatprep.subr.bf16.mxu0 0
      %418 = vmatpush1.bf16.msra.mxu0 0
      %419 = vmatprep.subr.bf16.mxu0 0
      %420 = vmatpush1.bf16.msra.mxu0 0
      %421 = vmatprep.subr.bf16.mxu0 0
      %422 = vmatpush1.bf16.msra.mxu0 0
      %423 = vmatprep.subr.bf16.mxu0 0
      %424 = vmatpush1.bf16.msra.mxu0 0
      %425 = vmatprep.subr.bf16.mxu0 0
      %426 = vmatpush1.bf16.msra.mxu0 0
      %427 = vmatprep.subr.bf16.mxu0 0
      %428 = vmatpush1.bf16.msra.mxu0 0
      %429 = vmatprep.mubr.bf16.mxu0 0
      %430 = vmatmul.mubr.bf16.gmra.mrb[0].mxu0 %v333
      %v431 = vpop.f32.mrb[0].mxu0
      %v432 = vadd.f32 0.0, %v431
      %v433 = vpop.f32.mrb[0].mxu0
      %v434 = vpop.f32.mrb[0].mxu0
      %v435 = vadd.f32 0.0, %v434
      %v436 = vpop.f32.mrb[0].mxu0
      %437 = vmatprep.mubr.bf16.mxu0 0
      %438 = vmatmul.mubr.bf16.gmra.mrb[0].mxu0 %v334
      %v439 = vpop.f32.mrb[0].mxu0
      %v440 = vadd.f32 0.0, %v439
      %v441 = vpop.f32.mrb[0].mxu0
      %v442 = vpop.f32.mrb[0].mxu0
      %v443 = vadd.f32 0.0, %v442
      %v444 = vpop.f32.mrb[0].mxu0
      %445 = vmatprep.mubr.bf16.mxu0 0
      %446 = vmatmul.mubr.bf16.gmra.mrb[0].mxu0 %v335
      %v447 = vpop.f32.mrb[0].mxu0
      %v448 = vadd.f32 0.0, %v447
      %v449 = vpop.f32.mrb[0].mxu0
      %v450 = vpop.f32.mrb[0].mxu0
      %v451 = vadd.f32 0.0, %v450
      %v452 = vpop.f32.mrb[0].mxu0
      %453 = vmatprep.mubr.bf16.mxu0 0
      %454 = vmatmul.mubr.bf16.gmra.mrb[0].mxu0 %v336
      %v455 = vpop.f32.mrb[0].mxu0
      %v456 = vadd.f32 0.0, %v455
      %v457 = vpop.f32.mrb[0].mxu0
      %v458 = vpop.f32.mrb[0].mxu0
      %v459 = vadd.f32 0.0, %v458
      %v460 = vpop.f32.mrb[0].mxu0
      %461 = vmatprep.mubr.bf16.mxu0 0
      %462 = vmatmul.mubr.bf16.gmra.mrb[0].mxu0 %v337
      %v463 = vpop.f32.mrb[0].mxu0
      %v464 = vadd.f32 0.0, %v463
      %v465 = vpop.f32.mrb[0].mxu0
      %v466 = vpop.f32.mrb[0].mxu0
      %v467 = vadd.f32 0.0, %v466
      %v468 = vpop.f32.mrb[0].mxu0
      %469 = vmatprep.mubr.bf16.mxu0 0
      %470 = vmatmul.mubr.bf16.gmra.mrb[0].mxu0 %v338
      %v471 = vpop.f32.mrb[0].mxu0
      %v472 = vadd.f32 0.0, %v471
      %v473 = vpop.f32.mrb[0].mxu0
      %v474 = vpop.f32.mrb[0].mxu0
      %v475 = vadd.f32 0.0, %v474
      %v476 = vpop.f32.mrb[0].mxu0
      %477 = vmatprep.mubr.bf16.mxu0 0
      %478 = vmatmul.mubr.bf16.gmra.mrb[0].mxu0 %v339
      %v479 = vpop.f32.mrb[0].mxu0
      %v480 = vadd.f32 0.0, %v479
      %v481 = vpop.f32.mrb[0].mxu0
      %v482 = vpop.f32.mrb[0].mxu0
      %v483 = vadd.f32 0.0, %v482
      %v484 = vpop.f32.mrb[0].mxu0
      %485 = vmatprep.mubr.bf16.mxu0 0
      %486 = vmatmul.mubr.bf16.gmra.mrb[0].mxu0 %v340
      %v487 = vpop.f32.mrb[0].mxu0
      %v488 = vadd.f32 0.0, %v487
      %v489 = vpop.f32.mrb[0].mxu0
      %v490 = vpop.f32.mrb[0].mxu0
      %v491 = vadd.f32 0.0, %v490
      %v492 = vpop.f32.mrb[0].mxu0
      %493 = vdwg.mxu0
      %v496 = vunpack.c.l.b16 %v238
      %v497 = vunpack.c.l.b16 %v239
      %v498 = vpack.c.b16 %v497, %v496
      %v516 = vunpack.c.l.b16 %v268
      %v517 = vunpack.c.l.b16 %v269
      %v518 = vunpack.c.l.b16 %v270
      %v519 = vunpack.c.l.b16 %v271
      %v520 = vunpack.c.l.b16 %v272
      %v521 = vunpack.c.l.b16 %v273
      %v522 = vunpack.c.l.b16 %v274
      %v523 = vunpack.c.l.b16 %v275
      %v524 = vunpack.c.l.b16 %v276
      %v525 = vunpack.c.l.b16 %v277
      %v526 = vunpack.c.l.b16 %v278
      %v527 = vunpack.c.l.b16 %v279
      %v528 = vunpack.c.l.b16 %v280
      %v529 = vunpack.c.l.b16 %v281
      %v530 = vunpack.c.l.b16 %v282
      %v531 = vunpack.c.l.b16 %v283
      %v532 = vpack.c.b16 %v517, %v516
      %v533 = vpack.c.b16 %v519, %v518
      %v534 = vpack.c.b16 %v521, %v520
      %v535 = vpack.c.b16 %v523, %v522
      %v536 = vpack.c.b16 %v525, %v524
      %v537 = vpack.c.b16 %v527, %v526
      %v538 = vpack.c.b16 %v529, %v528
      %v539 = vpack.c.b16 %v531, %v530
      %548 = vmatprep.subr.bf16.mxu0 0
      %549 = vmatpush1.bf16.msra.mxu0 %v532
      %550 = vmatprep.subr.bf16.mxu0 0
      %551 = vmatpush1.bf16.msra.mxu0 %v533
      %552 = vmatprep.subr.bf16.mxu0 0
      %553 = vmatpush1.bf16.msra.mxu0 %v534
      %554 = vmatprep.subr.bf16.mxu0 0
      %555 = vmatpush1.bf16.msra.mxu0 %v535
      %556 = vmatprep.subr.bf16.mxu0 0
      %557 = vmatpush1.bf16.msra.mxu0 %v536
      %558 = vmatprep.subr.bf16.mxu0 0
      %559 = vmatpush1.bf16.msra.mxu0 %v537
      %560 = vmatprep.subr.bf16.mxu0 0
      %561 = vmatpush1.bf16.msra.mxu0 %v538
      %562 = vmatprep.subr.bf16.mxu0 0
      %563 = vmatpush1.bf16.msra.mxu0 %v539
      %564 = vmatprep.subr.bf16.mxu0 0
      %565 = vmatpush1.bf16.msra.mxu0 0
      %566 = vmatprep.subr.bf16.mxu0 0
      %567 = vmatpush1.bf16.msra.mxu0 0
      %568 = vmatprep.subr.bf16.mxu0 0
      %569 = vmatpush1.bf16.msra.mxu0 0
      %570 = vmatprep.subr.bf16.mxu0 0
      %571 = vmatpush1.bf16.msra.mxu0 0
      %572 = vmatprep.subr.bf16.mxu0 0
      %573 = vmatpush1.bf16.msra.mxu0 0
      %574 = vmatprep.subr.bf16.mxu0 0
      %575 = vmatpush1.bf16.msra.mxu0 0
      %576 = vmatprep.subr.bf16.mxu0 0
      %577 = vmatpush1.bf16.msra.mxu0 0
      %578 = vmatprep.subr.bf16.mxu0 0
      %579 = vmatpush1.bf16.msra.mxu0 0
      %580 = vmatprep.mubr.bf16.mxu0 0
      %581 = vmatmul.mubr.bf16.gmra.mrb[0].mxu0 %v498
      %v582 = vpop.f32.mrb[0].mxu0
      %v583 = vadd.f32 %v432, %v582
      %v584 = vpop.f32.mrb[0].mxu0
      %v585 = vpop.f32.mrb[0].mxu0
      %v586 = vadd.f32 %v435, %v585
      %v587 = vpop.f32.mrb[0].mxu0
      %588 = vmatprep.mubr.bf16.mxu0 0
      %589 = vmatmul.mubr.bf16.gmra.mrb[0].mxu0 %v333
      %v590 = vpop.f32.mrb[0].mxu0
      %v591 = vadd.f32 %v440, %v590
      %v592 = vpop.f32.mrb[0].mxu0
      %v593 = vpop.f32.mrb[0].mxu0
      %v594 = vadd.f32 %v443, %v593
      %v595 = vpop.f32.mrb[0].mxu0
      %596 = vmatprep.mubr.bf16.mxu0 0
      %597 = vmatmul.mubr.bf16.gmra.mrb[0].mxu0 %v334
      %v598 = vpop.f32.mrb[0].mxu0
      %v599 = vadd.f32 %v448, %v598
      %v600 = vpop.f32.mrb[0].mxu0
      %v601 = vpop.f32.mrb[0].mxu0
      %v602 = vadd.f32 %v451, %v601
      %v603 = vpop.f32.mrb[0].mxu0
      %604 = vmatprep.mubr.bf16.mxu0 0
      %605 = vmatmul.mubr.bf16.gmra.mrb[0].mxu0 %v335
      %v606 = vpop.f32.mrb[0].mxu0
      %v607 = vadd.f32 %v456, %v606
      %v608 = vpop.f32.mrb[0].mxu0
      %v609 = vpop.f32.mrb[0].mxu0
      %v610 = vadd.f32 %v459, %v609
      %v611 = vpop.f32.mrb[0].mxu0
      %612 = vmatprep.mubr.bf16.mxu0 0
      %613 = vmatmul.mubr.bf16.gmra.mrb[0].mxu0 %v336
      %v614 = vpop.f32.mrb[0].mxu0
      %v615 = vadd.f32 %v464, %v614
      %v616 = vpop.f32.mrb[0].mxu0
      %v617 = vpop.f32.mrb[0].mxu0
      %v618 = vadd.f32 %v467, %v617
      %v619 = vpop.f32.mrb[0].mxu0
      %620 = vmatprep.mubr.bf16.mxu0 0
      %621 = vmatmul.mubr.bf16.gmra.mrb[0].mxu0 %v337
      %v622 = vpop.f32.mrb[0].mxu0
      %v623 = vadd.f32 %v472, %v622
      %v624 = vpop.f32.mrb[0].mxu0
      %v625 = vpop.f32.mrb[0].mxu0
      %v626 = vadd.f32 %v475, %v625
      %v627 = vpop.f32.mrb[0].mxu0
      %628 = vmatprep.mubr.bf16.mxu0 0
      %629 = vmatmul.mubr.bf16.gmra.mrb[0].mxu0 %v338
      %v630 = vpop.f32.mrb[0].mxu0
      %v631 = vadd.f32 %v480, %v630
      %v632 = vpop.f32.mrb[0].mxu0
      %v633 = vpop.f32.mrb[0].mxu0
      %v634 = vadd.f32 %v483, %v633
      %v635 = vpop.f32.mrb[0].mxu0
      %636 = vmatprep.mubr.bf16.mxu0 0
      %637 = vmatmul.mubr.bf16.gmra.mrb[0].mxu0 %v339
      %v638 = vpop.f32.mrb[0].mxu0
      %v639 = vadd.f32 %v488, %v638
      %v640 = vpop.f32.mrb[0].mxu0
      %v641 = vpop.f32.mrb[0].mxu0
      %v642 = vadd.f32 %v491, %v641
      %v643 = vpop.f32.mrb[0].mxu0
      %644 = vdwg.mxu0
      %s645 = scalar_lea.vmem %s1, 384
      %v646 = vld [vmem:[%s645] sm:$0xf]
      %v647 = vld [vmem:[%s645 + $0x4] sm:$0xf]
      %v648 = vld [vmem:[%s645 + $0x8] sm:$0xf]
      %v649 = vld [vmem:[%s645 + $0xc] sm:$0xf]
      %v650 = vld [vmem:[%s645 + $0x10] sm:$0xf]
      %v651 = vld [vmem:[%s645 + $0x14] sm:$0xf]
      %v652 = vld [vmem:[%s645 + $0x18] sm:$0xf]
      %v653 = vld [vmem:[%s645 + $0x1c] sm:$0xf]
      %v654 = vld [vmem:[%s645 + $0x20] sm:$0xf]
      %v655 = vld [vmem:[%s645 + $0x24] sm:$0xf]
      %v656 = vld [vmem:[%s645 + $0x28] sm:$0xf]
      %v657 = vld [vmem:[%s645 + $0x2c] sm:$0xf]
      %v658 = vld [vmem:[%s645 + $0x30] sm:$0xf]
      %v659 = vld [vmem:[%s645 + $0x34] sm:$0xf]
      %v660 = vld [vmem:[%s645 + $0x38] sm:$0xf]
      %v661 = vld [vmem:[%s645 + $0x3c] sm:$0xf]
      %v664 = vunpack.c.l.b16 %v265
      %v665 = vunpack.c.l.b16 %v266
      %v666 = vpack.c.b16 %v665, %v664
      %v684 = vunpack.c.l.b16 %v646
      %v685 = vunpack.c.l.b16 %v647
      %v686 = vunpack.c.l.b16 %v648
      %v687 = vunpack.c.l.b16 %v649
      %v688 = vunpack.c.l.b16 %v650
      %v689 = vunpack.c.l.b16 %v651
      %v690 = vunpack.c.l.b16 %v652
      %v691 = vunpack.c.l.b16 %v653
      %v692 = vunpack.c.l.b16 %v654
      %v693 = vunpack.c.l.b16 %v655
      %v694 = vunpack.c.l.b16 %v656
      %v695 = vunpack.c.l.b16 %v657
      %v696 = vunpack.c.l.b16 %v658
      %v697 = vunpack.c.l.b16 %v659
      %v698 = vunpack.c.l.b16 %v660
      %v699 = vunpack.c.l.b16 %v661
      %v700 = vpack.c.b16 %v685, %v684
      %v701 = vpack.c.b16 %v687, %v686
      %v702 = vpack.c.b16 %v689, %v688
      %v703 = vpack.c.b16 %v691, %v690
      %v704 = vpack.c.b16 %v693, %v692
      %v705 = vpack.c.b16 %v695, %v694
      %v706 = vpack.c.b16 %v697, %v696
      %v707 = vpack.c.b16 %v699, %v698
      %716 = vmatprep.subr.bf16.mxu0 0
      %717 = vmatpush1.bf16.msra.mxu0 %v700
      %718 = vmatprep.subr.bf16.mxu0 0
      %719 = vmatpush1.bf16.msra.mxu0 %v701
      %720 = vmatprep.subr.bf16.mxu0 0
      %721 = vmatpush1.bf16.msra.mxu0 %v702
      %722 = vmatprep.subr.bf16.mxu0 0
      %723 = vmatpush1.bf16.msra.mxu0 %v703
      %724 = vmatprep.subr.bf16.mxu0 0
      %725 = vmatpush1.bf16.msra.mxu0 %v704
      %726 = vmatprep.subr.bf16.mxu0 0
      %727 = vmatpush1.bf16.msra.mxu0 %v705
      %728 = vmatprep.subr.bf16.mxu0 0
      %729 = vmatpush1.bf16.msra.mxu0 %v706
      %730 = vmatprep.subr.bf16.mxu0 0
      %731 = vmatpush1.bf16.msra.mxu0 %v707
      %732 = vmatprep.subr.bf16.mxu0 0
      %733 = vmatpush1.bf16.msra.mxu0 0
      %734 = vmatprep.subr.bf16.mxu0 0
      %735 = vmatpush1.bf16.msra.mxu0 0
      %736 = vmatprep.subr.bf16.mxu0 0
      %737 = vmatpush1.bf16.msra.mxu0 0
      %738 = vmatprep.subr.bf16.mxu0 0
      %739 = vmatpush1.bf16.msra.mxu0 0
      %740 = vmatprep.subr.bf16.mxu0 0
      %741 = vmatpush1.bf16.msra.mxu0 0
      %742 = vmatprep.subr.bf16.mxu0 0
      %743 = vmatpush1.bf16.msra.mxu0 0
      %744 = vmatprep.subr.bf16.mxu0 0
      %745 = vmatpush1.bf16.msra.mxu0 0
      %746 = vmatprep.subr.bf16.mxu0 0
      %747 = vmatpush1.bf16.msra.mxu0 0
      %748 = vmatprep.mubr.bf16.mxu0 0
      %749 = vmatmul.mubr.bf16.gmra.mrb[0].mxu0 %v334
      %v750 = vpop.f32.mrb[0].mxu0
      %v751 = vadd.f32 0.0, %v750
      %v752 = vpop.f32.mrb[0].mxu0
      %v753 = vpop.f32.mrb[0].mxu0
      %v754 = vadd.f32 0.0, %v753
      %v755 = vpop.f32.mrb[0].mxu0
      %756 = vmatprep.mubr.bf16.mxu0 0
      %757 = vmatmul.mubr.bf16.gmra.mrb[0].mxu0 %v335
      %v758 = vpop.f32.mrb[0].mxu0
      %v759 = vadd.f32 0.0, %v758
      %v760 = vpop.f32.mrb[0].mxu0
      %v761 = vpop.f32.mrb[0].mxu0
      %v762 = vadd.f32 0.0, %v761
      %v763 = vpop.f32.mrb[0].mxu0
      %764 = vmatprep.mubr.bf16.mxu0 0
      %765 = vmatmul.mubr.bf16.gmra.mrb[0].mxu0 %v336
      %v766 = vpop.f32.mrb[0].mxu0
      %v767 = vadd.f32 0.0, %v766
      %v768 = vpop.f32.mrb[0].mxu0
      %v769 = vpop.f32.mrb[0].mxu0
      %v770 = vadd.f32 0.0, %v769
      %v771 = vpop.f32.mrb[0].mxu0
      %772 = vmatprep.mubr.bf16.mxu0 0
      %773 = vmatmul.mubr.bf16.gmra.mrb[0].mxu0 %v337
      %v774 = vpop.f32.mrb[0].mxu0
      %v775 = vadd.f32 0.0, %v774
      %v776 = vpop.f32.mrb[0].mxu0
      %v777 = vpop.f32.mrb[0].mxu0
      %v778 = vadd.f32 0.0, %v777
      %v779 = vpop.f32.mrb[0].mxu0
      %780 = vmatprep.mubr.bf16.mxu0 0
      %781 = vmatmul.mubr.bf16.gmra.mrb[0].mxu0 %v338
      %v782 = vpop.f32.mrb[0].mxu0
      %v783 = vadd.f32 0.0, %v782
      %v784 = vpop.f32.mrb[0].mxu0
      %v785 = vpop.f32.mrb[0].mxu0
      %v786 = vadd.f32 0.0, %v785
      %v787 = vpop.f32.mrb[0].mxu0
      %788 = vmatprep.mubr.bf16.mxu0 0
      %789 = vmatmul.mubr.bf16.gmra.mrb[0].mxu0 %v339
      %v790 = vpop.f32.mrb[0].mxu0
      %v791 = vadd.f32 0.0, %v790
      %v792 = vpop.f32.mrb[0].mxu0
      %v793 = vpop.f32.mrb[0].mxu0
      %v794 = vadd.f32 0.0, %v793
      %v795 = vpop.f32.mrb[0].mxu0
      %796 = vmatprep.mubr.bf16.mxu0 0
      %797 = vmatmul.mubr.bf16.gmra.mrb[0].mxu0 %v340
      %v798 = vpop.f32.mrb[0].mxu0
      %v799 = vadd.f32 0.0, %v798
      %v800 = vpop.f32.mrb[0].mxu0
      %v801 = vpop.f32.mrb[0].mxu0
      %v802 = vadd.f32 0.0, %v801
      %v803 = vpop.f32.mrb[0].mxu0
      %804 = vmatprep.mubr.bf16.mxu0 0
      %805 = vmatmul.mubr.bf16.gmra.mrb[0].mxu0 %v666
      %v806 = vpop.f32.mrb[0].mxu0
      %v807 = vadd.f32 0.0, %v806
      %v808 = vpop.f32.mrb[0].mxu0
      %v809 = vpop.f32.mrb[0].mxu0
      %v810 = vadd.f32 0.0, %v809
      %v811 = vpop.f32.mrb[0].mxu0
      %812 = vdwg.mxu0
      %v813 = vadd.f32 %v583, %v751
      %v814 = vadd.f32 %v586, %v754
      %v815 = vadd.f32 %v591, %v759
      %v816 = vadd.f32 %v594, %v762
      %v817 = vadd.f32 %v599, %v767
      %v818 = vadd.f32 %v602, %v770
      %v819 = vadd.f32 %v607, %v775
      %v820 = vadd.f32 %v610, %v778
      %v821 = vadd.f32 %v615, %v783
      %v822 = vadd.f32 %v618, %v786
      %v823 = vadd.f32 %v623, %v791
      %v824 = vadd.f32 %v626, %v794
      %v825 = vadd.f32 %v631, %v799
      %v826 = vadd.f32 %v634, %v802
      %v827 = vadd.f32 %v639, %v807
      %v828 = vadd.f32 %v642, %v810
      %vm829 = vsmask.f32 3328
      %vm830 = vsmask.f32 7440
      %vm831 = vmor %vm829, %vm830
      %v833 = vshrl.u32 %v238, 16
      %v835 = vrot.slane %v833, 4
      %v836 = vshll.u32 %v238, 16
      %v838 = vrot.slane %v836, 5
      %v839 = vor.u32 %v835, %v838
      %v840 = vrot.slane %v839, 4
      %v842 = vshll.u32 %v239, 16
      %v844 = vrot.slane %v842, 5
      %v845 = vsel %vm831, %v840, %v844
      %v846 = vshrl.u32 %v239, 16
      %v848 = vrot.slane %v846, 4
      %v849 = vor.u32 %v848, %v844
      %v850 = vrot.slane %v849, 4
      %v852 = vshll.u32 %v240, 16
      %v854 = vrot.slane %v852, 5
      %v855 = vsel %vm831, %v850, %v854
      %v857 = vshrl.u32 %v241, 16
      %v859 = vrot.slane %v857, 4
      %v860 = vshll.u32 %v241, 16
      %v862 = vrot.slane %v860, 5
      %v863 = vor.u32 %v859, %v862
      %v864 = vrot.slane %v863, 4
      %v866 = vshll.u32 %v242, 16
      %v868 = vrot.slane %v866, 5
      %v869 = vsel %vm831, %v864, %v868
      %v870 = vshrl.u32 %v242, 16
      %v872 = vrot.slane %v870, 4
      %v873 = vor.u32 %v872, %v868
      %v874 = vrot.slane %v873, 4
      %v876 = vshll.u32 %v243, 16
      %v878 = vrot.slane %v876, 5
      %v879 = vsel %vm831, %v874, %v878
      %v881 = vshrl.u32 %v244, 16
      %v883 = vrot.slane %v881, 4
      %v884 = vshll.u32 %v244, 16
      %v886 = vrot.slane %v884, 5
      %v887 = vor.u32 %v883, %v886
      %v888 = vrot.slane %v887, 4
      %v890 = vshll.u32 %v245, 16
      %v892 = vrot.slane %v890, 5
      %v893 = vsel %vm831, %v888, %v892
      %v894 = vshrl.u32 %v245, 16
      %v896 = vrot.slane %v894, 4
      %v897 = vor.u32 %v896, %v892
      %v898 = vrot.slane %v897, 4
      %v900 = vshll.u32 %v246, 16
      %v902 = vrot.slane %v900, 5
      %v903 = vsel %vm831, %v898, %v902
      %v905 = vshrl.u32 %v247, 16
      %v907 = vrot.slane %v905, 4
      %v908 = vshll.u32 %v247, 16
      %v910 = vrot.slane %v908, 5
      %v911 = vor.u32 %v907, %v910
      %v912 = vrot.slane %v911, 4
      %v914 = vshll.u32 %v248, 16
      %v916 = vrot.slane %v914, 5
      %v917 = vsel %vm831, %v912, %v916
      %v918 = vshrl.u32 %v248, 16
      %v920 = vrot.slane %v918, 4
      %v921 = vor.u32 %v920, %v916
      %v922 = vrot.slane %v921, 4
      %v924 = vshll.u32 %v249, 16
      %v926 = vrot.slane %v924, 5
      %v927 = vsel %vm831, %v922, %v926
      %v929 = vshrl.u32 %v250, 16
      %v931 = vrot.slane %v929, 4
      %v932 = vshll.u32 %v250, 16
      %v934 = vrot.slane %v932, 5
      %v935 = vor.u32 %v931, %v934
      %v936 = vrot.slane %v935, 4
      %v938 = vshll.u32 %v251, 16
      %v940 = vrot.slane %v938, 5
      %v941 = vsel %vm831, %v936, %v940
      %v942 = vshrl.u32 %v251, 16
      %v944 = vrot.slane %v942, 4
      %v945 = vor.u32 %v944, %v940
      %v946 = vrot.slane %v945, 4
      %v948 = vshll.u32 %v252, 16
      %v950 = vrot.slane %v948, 5
      %v951 = vsel %vm831, %v946, %v950
      %v953 = vshrl.u32 %v253, 16
      %v955 = vrot.slane %v953, 4
      %v956 = vshll.u32 %v253, 16
      %v958 = vrot.slane %v956, 5
      %v959 = vor.u32 %v955, %v958
      %v960 = vrot.slane %v959, 4
      %v962 = vshll.u32 %v254, 16
      %v964 = vrot.slane %v962, 5
      %v965 = vsel %vm831, %v960, %v964
      %v966 = vshrl.u32 %v254, 16
      %v968 = vrot.slane %v966, 4
      %v969 = vor.u32 %v968, %v964
      %v970 = vrot.slane %v969, 4
      %v972 = vshll.u32 %v255, 16
      %v974 = vrot.slane %v972, 5
      %v975 = vsel %vm831, %v970, %v974
      %v977 = vshrl.u32 %v256, 16
      %v979 = vrot.slane %v977, 4
      %v980 = vshll.u32 %v256, 16
      %v982 = vrot.slane %v980, 5
      %v983 = vor.u32 %v979, %v982
      %v984 = vrot.slane %v983, 4
      %v986 = vshll.u32 %v257, 16
      %v988 = vrot.slane %v986, 5
      %v989 = vsel %vm831, %v984, %v988
      %v990 = vshrl.u32 %v257, 16
      %v992 = vrot.slane %v990, 4
      %v993 = vor.u32 %v992, %v988
      %v994 = vrot.slane %v993, 4
      %v996 = vshll.u32 %v258, 16
      %v998 = vrot.slane %v996, 5
      %v999 = vsel %vm831, %v994, %v998
      %v1001 = vshrl.u32 %v259, 16
      %v1003 = vrot.slane %v1001, 4
      %v1004 = vshll.u32 %v259, 16
      %v1006 = vrot.slane %v1004, 5
      %v1007 = vor.u32 %v1003, %v1006
      %v1008 = vrot.slane %v1007, 4
      %v1010 = vshll.u32 %v260, 16
      %v1012 = vrot.slane %v1010, 5
      %v1013 = vsel %vm831, %v1008, %v1012
      %v1014 = vshrl.u32 %v260, 16
      %v1016 = vrot.slane %v1014, 4
      %v1017 = vor.u32 %v1016, %v1012
      %v1018 = vrot.slane %v1017, 4
      %v1020 = vshll.u32 %v261, 16
      %v1022 = vrot.slane %v1020, 5
      %v1023 = vsel %vm831, %v1018, %v1022
      %v1025 = vshrl.u32 %v262, 16
      %v1027 = vrot.slane %v1025, 4
      %v1028 = vshll.u32 %v262, 16
      %v1030 = vrot.slane %v1028, 5
      %v1031 = vor.u32 %v1027, %v1030
      %v1032 = vrot.slane %v1031, 4
      %v1034 = vshll.u32 %v263, 16
      %v1036 = vrot.slane %v1034, 5
      %v1037 = vsel %vm831, %v1032, %v1036
      %v1038 = vshrl.u32 %v263, 16
      %v1040 = vrot.slane %v1038, 4
      %v1041 = vor.u32 %v1040, %v1036
      %v1042 = vrot.slane %v1041, 4
      %v1044 = vshll.u32 %v264, 16
      %v1046 = vrot.slane %v1044, 5
      %v1047 = vsel %vm831, %v1042, %v1046
      %v1049 = vshrl.u32 %v265, 16
      %v1051 = vrot.slane %v1049, 4
      %v1052 = vshll.u32 %v265, 16
      %v1054 = vrot.slane %v1052, 5
      %v1055 = vor.u32 %v1051, %v1054
      %v1056 = vrot.slane %v1055, 4
      %v1058 = vshll.u32 %v266, 16
      %v1060 = vrot.slane %v1058, 5
      %v1061 = vsel %vm831, %v1056, %v1060
      %v1062 = vshrl.u32 %v266, 16
      %v1064 = vrot.slane %v1062, 4
      %v1065 = vor.u32 %v1064, %v1060
      %v1066 = vrot.slane %v1065, 4
      %v1068 = vshll.u32 %v267, 16
      %v1070 = vrot.slane %v1068, 5
      %v1071 = vsel %vm831, %v1066, %v1070
      %s1072 = scalar_lea.vmem %s1, 64
      %v1073 = vld [vmem:[%s1072] sm:$0xf]
      %v1074 = vld [vmem:[%s1072 + $0x4] sm:$0xf]
      %v1075 = vld [vmem:[%s1072 + $0x8] sm:$0xf]
      %v1076 = vld [vmem:[%s1072 + $0xc] sm:$0xf]
      %v1077 = vld [vmem:[%s1072 + $0x10] sm:$0xf]
      %v1078 = vld [vmem:[%s1072 + $0x14] sm:$0xf]
      %v1079 = vld [vmem:[%s1072 + $0x18] sm:$0xf]
      %v1080 = vld [vmem:[%s1072 + $0x1c] sm:$0xf]
      %v1081 = vld [vmem:[%s1072 + $0x20] sm:$0xf]
      %v1082 = vld [vmem:[%s1072 + $0x24] sm:$0xf]
      %v1083 = vld [vmem:[%s1072 + $0x28] sm:$0xf]
      %v1084 = vld [vmem:[%s1072 + $0x2c] sm:$0xf]
      %v1085 = vld [vmem:[%s1072 + $0x30] sm:$0xf]
      %v1086 = vld [vmem:[%s1072 + $0x34] sm:$0xf]
      %v1087 = vld [vmem:[%s1072 + $0x38] sm:$0xf]
      %v1088 = vld [vmem:[%s1072 + $0x3c] sm:$0xf]
      %v1089 = vunpack.c.l.b16 %v845
      %v1090 = vunpack.c.l.b16 %v855
      %v1091 = vunpack.c.l.b16 %v869
      %v1092 = vunpack.c.l.b16 %v879
      %v1093 = vunpack.c.l.b16 %v893
      %v1094 = vunpack.c.l.b16 %v903
      %v1095 = vunpack.c.l.b16 %v917
      %v1096 = vunpack.c.l.b16 %v927
      %v1097 = vunpack.c.l.b16 %v941
      %v1098 = vunpack.c.l.b16 %v951
      %v1099 = vunpack.c.l.b16 %v965
      %v1100 = vunpack.c.l.b16 %v975
      %v1101 = vunpack.c.l.b16 %v989
      %v1102 = vunpack.c.l.b16 %v999
      %v1103 = vunpack.c.l.b16 %v1013
      %v1104 = vunpack.c.l.b16 %v1023
      %v1105 = vpack.c.b16 %v1090, %v1089
      %v1106 = vpack.c.b16 %v1092, %v1091
      %v1107 = vpack.c.b16 %v1094, %v1093
      %v1108 = vpack.c.b16 %v1096, %v1095
      %v1109 = vpack.c.b16 %v1098, %v1097
      %v1110 = vpack.c.b16 %v1100, %v1099
      %v1111 = vpack.c.b16 %v1102, %v1101
      %v1112 = vpack.c.b16 %v1104, %v1103
      %v1137 = vunpack.c.l.b16 %v1073
      %v1138 = vunpack.c.l.b16 %v1074
      %v1139 = vunpack.c.l.b16 %v1075
      %v1140 = vunpack.c.l.b16 %v1076
      %v1141 = vunpack.c.l.b16 %v1077
      %v1142 = vunpack.c.l.b16 %v1078
      %v1143 = vunpack.c.l.b16 %v1079
      %v1144 = vunpack.c.l.b16 %v1080
      %v1145 = vunpack.c.l.b16 %v1081
      %v1146 = vunpack.c.l.b16 %v1082
      %v1147 = vunpack.c.l.b16 %v1083
      %v1148 = vunpack.c.l.b16 %v1084
      %v1149 = vunpack.c.l.b16 %v1085
      %v1150 = vunpack.c.l.b16 %v1086
      %v1151 = vunpack.c.l.b16 %v1087
      %v1152 = vunpack.c.l.b16 %v1088
      %v1153 = vpack.c.b16 %v1138, %v1137
      %v1154 = vpack.c.b16 %v1140, %v1139
      %v1155 = vpack.c.b16 %v1142, %v1141
      %v1156 = vpack.c.b16 %v1144, %v1143
      %v1157 = vpack.c.b16 %v1146, %v1145
      %v1158 = vpack.c.b16 %v1148, %v1147
      %v1159 = vpack.c.b16 %v1150, %v1149
      %v1160 = vpack.c.b16 %v1152, %v1151
      %1169 = vmatprep.subr.bf16.mxu0 0
      %1170 = vmatpush1.bf16.msra.mxu0 %v1153
      %1171 = vmatprep.subr.bf16.mxu0 0
      %1172 = vmatpush1.bf16.msra.mxu0 %v1154
      %1173 = vmatprep.subr.bf16.mxu0 0
      %1174 = vmatpush1.bf16.msra.mxu0 %v1155
      %1175 = vmatprep.subr.bf16.mxu0 0
      %1176 = vmatpush1.bf16.msra.mxu0 %v1156
      %1177 = vmatprep.subr.bf16.mxu0 0
      %1178 = vmatpush1.bf16.msra.mxu0 %v1157
      %1179 = vmatprep.subr.bf16.mxu0 0
      %1180 = vmatpush1.bf16.msra.mxu0 %v1158
      %1181 = vmatprep.subr.bf16.mxu0 0
      %1182 = vmatpush1.bf16.msra.mxu0 %v1159
      %1183 = vmatprep.subr.bf16.mxu0 0
      %1184 = vmatpush1.bf16.msra.mxu0 %v1160
      %1185 = vmatprep.subr.bf16.mxu0 0
      %1186 = vmatpush1.bf16.msra.mxu0 0
      %1187 = vmatprep.subr.bf16.mxu0 0
      %1188 = vmatpush1.bf16.msra.mxu0 0
      %1189 = vmatprep.subr.bf16.mxu0 0
      %1190 = vmatpush1.bf16.msra.mxu0 0
      %1191 = vmatprep.subr.bf16.mxu0 0
      %1192 = vmatpush1.bf16.msra.mxu0 0
      %1193 = vmatprep.subr.bf16.mxu0 0
      %1194 = vmatpush1.bf16.msra.mxu0 0
      %1195 = vmatprep.subr.bf16.mxu0 0
      %1196 = vmatpush1.bf16.msra.mxu0 0
      %1197 = vmatprep.subr.bf16.mxu0 0
      %1198 = vmatpush1.bf16.msra.mxu0 0
      %1199 = vmatprep.subr.bf16.mxu0 0
      %1200 = vmatpush1.bf16.msra.mxu0 0
      %1201 = vmatprep.mubr.bf16.mxu0 0
      %1202 = vmatmul.mubr.bf16.gmra.mrb[0].mxu0 %v1105
      %v1203 = vpop.f32.mrb[0].mxu0
      %v1204 = vadd.f32 0.0, %v1203
      %v1205 = vpop.f32.mrb[0].mxu0
      %v1206 = vpop.f32.mrb[0].mxu0
      %v1207 = vadd.f32 0.0, %v1206
      %v1208 = vpop.f32.mrb[0].mxu0
      %1209 = vmatprep.mubr.bf16.mxu0 0
      %1210 = vmatmul.mubr.bf16.gmra.mrb[0].mxu0 %v1106
      %v1211 = vpop.f32.mrb[0].mxu0
      %v1212 = vadd.f32 0.0, %v1211
      %v1213 = vpop.f32.mrb[0].mxu0
      %v1214 = vpop.f32.mrb[0].mxu0
      %v1215 = vadd.f32 0.0, %v1214
      %v1216 = vpop.f32.mrb[0].mxu0
      %1217 = vmatprep.mubr.bf16.mxu0 0
      %1218 = vmatmul.mubr.bf16.gmra.mrb[0].mxu0 %v1107
      %v1219 = vpop.f32.mrb[0].mxu0
      %v1220 = vadd.f32 0.0, %v1219
      %v1221 = vpop.f32.mrb[0].mxu0
      %v1222 = vpop.f32.mrb[0].mxu0
      %v1223 = vadd.f32 0.0, %v1222
      %v1224 = vpop.f32.mrb[0].mxu0
      %1225 = vmatprep.mubr.bf16.mxu0 0
      %1226 = vmatmul.mubr.bf16.gmra.mrb[0].mxu0 %v1108
      %v1227 = vpop.f32.mrb[0].mxu0
      %v1228 = vadd.f32 0.0, %v1227
      %v1229 = vpop.f32.mrb[0].mxu0
      %v1230 = vpop.f32.mrb[0].mxu0
      %v1231 = vadd.f32 0.0, %v1230
      %v1232 = vpop.f32.mrb[0].mxu0
      %1233 = vmatprep.mubr.bf16.mxu0 0
      %1234 = vmatmul.mubr.bf16.gmra.mrb[0].mxu0 %v1109
      %v1235 = vpop.f32.mrb[0].mxu0
      %v1236 = vadd.f32 0.0, %v1235
      %v1237 = vpop.f32.mrb[0].mxu0
      %v1238 = vpop.f32.mrb[0].mxu0
      %v1239 = vadd.f32 0.0, %v1238
      %v1240 = vpop.f32.mrb[0].mxu0
      %1241 = vmatprep.mubr.bf16.mxu0 0
      %1242 = vmatmul.mubr.bf16.gmra.mrb[0].mxu0 %v1110
      %v1243 = vpop.f32.mrb[0].mxu0
      %v1244 = vadd.f32 0.0, %v1243
      %v1245 = vpop.f32.mrb[0].mxu0
      %v1246 = vpop.f32.mrb[0].mxu0
      %v1247 = vadd.f32 0.0, %v1246
      %v1248 = vpop.f32.mrb[0].mxu0
      %1249 = vmatprep.mubr.bf16.mxu0 0
      %1250 = vmatmul.mubr.bf16.gmra.mrb[0].mxu0 %v1111
      %v1251 = vpop.f32.mrb[0].mxu0
      %v1252 = vadd.f32 0.0, %v1251
      %v1253 = vpop.f32.mrb[0].mxu0
      %v1254 = vpop.f32.mrb[0].mxu0
      %v1255 = vadd.f32 0.0, %v1254
      %v1256 = vpop.f32.mrb[0].mxu0
      %1257 = vmatprep.mubr.bf16.mxu0 0
      %1258 = vmatmul.mubr.bf16.gmra.mrb[0].mxu0 %v1112
      %v1259 = vpop.f32.mrb[0].mxu0
      %v1260 = vadd.f32 0.0, %v1259
      %v1261 = vpop.f32.mrb[0].mxu0
      %v1262 = vpop.f32.mrb[0].mxu0
      %v1263 = vadd.f32 0.0, %v1262
      %v1264 = vpop.f32.mrb[0].mxu0
      %1265 = vdwg.mxu0
      %v1266 = vadd.f32 %v813, %v1204
      %v1267 = vadd.f32 %v814, %v1207
      %v1268 = vadd.f32 %v815, %v1212
      %v1269 = vadd.f32 %v816, %v1215
      %v1270 = vadd.f32 %v817, %v1220
      %v1271 = vadd.f32 %v818, %v1223
      %v1272 = vadd.f32 %v819, %v1228
      %v1273 = vadd.f32 %v820, %v1231
      %v1274 = vadd.f32 %v821, %v1236
      %v1275 = vadd.f32 %v822, %v1239
      %v1276 = vadd.f32 %v823, %v1244
      %v1277 = vadd.f32 %v824, %v1247
      %v1278 = vadd.f32 %v825, %v1252
      %v1279 = vadd.f32 %v826, %v1255
      %v1280 = vadd.f32 %v827, %v1260
      %v1281 = vadd.f32 %v828, %v1263
      %s1282 = scalar_lea.vmem %s1, 256
      %v1283 = vld [vmem:[%s1282] sm:$0xf]
      %v1284 = vld [vmem:[%s1282 + $0x4] sm:$0xf]
      %v1285 = vld [vmem:[%s1282 + $0x8] sm:$0xf]
      %v1286 = vld [vmem:[%s1282 + $0xc] sm:$0xf]
      %v1287 = vld [vmem:[%s1282 + $0x10] sm:$0xf]
      %v1288 = vld [vmem:[%s1282 + $0x14] sm:$0xf]
      %v1289 = vld [vmem:[%s1282 + $0x18] sm:$0xf]
      %v1290 = vld [vmem:[%s1282 + $0x1c] sm:$0xf]
      %v1291 = vld [vmem:[%s1282 + $0x20] sm:$0xf]
      %v1292 = vld [vmem:[%s1282 + $0x24] sm:$0xf]
      %v1293 = vld [vmem:[%s1282 + $0x28] sm:$0xf]
      %v1294 = vld [vmem:[%s1282 + $0x2c] sm:$0xf]
      %v1295 = vld [vmem:[%s1282 + $0x30] sm:$0xf]
      %v1296 = vld [vmem:[%s1282 + $0x34] sm:$0xf]
      %v1297 = vld [vmem:[%s1282 + $0x38] sm:$0xf]
      %v1298 = vld [vmem:[%s1282 + $0x3c] sm:$0xf]
      %v1299 = vunpack.c.l.b16 %v1037
      %v1300 = vunpack.c.l.b16 %v1047
      %v1301 = vpack.c.b16 %v1300, %v1299
      %v1319 = vunpack.c.l.b16 %v1283
      %v1320 = vunpack.c.l.b16 %v1284
      %v1321 = vunpack.c.l.b16 %v1285
      %v1322 = vunpack.c.l.b16 %v1286
      %v1323 = vunpack.c.l.b16 %v1287
      %v1324 = vunpack.c.l.b16 %v1288
      %v1325 = vunpack.c.l.b16 %v1289
      %v1326 = vunpack.c.l.b16 %v1290
      %v1327 = vunpack.c.l.b16 %v1291
      %v1328 = vunpack.c.l.b16 %v1292
      %v1329 = vunpack.c.l.b16 %v1293
      %v1330 = vunpack.c.l.b16 %v1294
      %v1331 = vunpack.c.l.b16 %v1295
      %v1332 = vunpack.c.l.b16 %v1296
      %v1333 = vunpack.c.l.b16 %v1297
      %v1334 = vunpack.c.l.b16 %v1298
      %v1335 = vpack.c.b16 %v1320, %v1319
      %v1336 = vpack.c.b16 %v1322, %v1321
      %v1337 = vpack.c.b16 %v1324, %v1323
      %v1338 = vpack.c.b16 %v1326, %v1325
      %v1339 = vpack.c.b16 %v1328, %v1327
      %v1340 = vpack.c.b16 %v1330, %v1329
      %v1341 = vpack.c.b16 %v1332, %v1331
      %v1342 = vpack.c.b16 %v1334, %v1333
      %1351 = vmatprep.subr.bf16.mxu0 0
      %1352 = vmatpush1.bf16.msra.mxu0 %v1335
      %1353 = vmatprep.subr.bf16.mxu0 0
      %1354 = vmatpush1.bf16.msra.mxu0 %v1336
      %1355 = vmatprep.subr.bf16.mxu0 0
      %1356 = vmatpush1.bf16.msra.mxu0 %v1337
      %1357 = vmatprep.subr.bf16.mxu0 0
      %1358 = vmatpush1.bf16.msra.mxu0 %v1338
      %1359 = vmatprep.subr.bf16.mxu0 0
      %1360 = vmatpush1.bf16.msra.mxu0 %v1339
      %1361 = vmatprep.subr.bf16.mxu0 0
      %1362 = vmatpush1.bf16.msra.mxu0 %v1340
      %1363 = vmatprep.subr.bf16.mxu0 0
      %1364 = vmatpush1.bf16.msra.mxu0 %v1341
      %1365 = vmatprep.subr.bf16.mxu0 0
      %1366 = vmatpush1.bf16.msra.mxu0 %v1342
      %1367 = vmatprep.subr.bf16.mxu0 0
      %1368 = vmatpush1.bf16.msra.mxu0 0
      %1369 = vmatprep.subr.bf16.mxu0 0
      %1370 = vmatpush1.bf16.msra.mxu0 0
      %1371 = vmatprep.subr.bf16.mxu0 0
      %1372 = vmatpush1.bf16.msra.mxu0 0
      %1373 = vmatprep.subr.bf16.mxu0 0
      %1374 = vmatpush1.bf16.msra.mxu0 0
      %1375 = vmatprep.subr.bf16.mxu0 0
      %1376 = vmatpush1.bf16.msra.mxu0 0
      %1377 = vmatprep.subr.bf16.mxu0 0
      %1378 = vmatpush1.bf16.msra.mxu0 0
      %1379 = vmatprep.subr.bf16.mxu0 0
      %1380 = vmatpush1.bf16.msra.mxu0 0
      %1381 = vmatprep.subr.bf16.mxu0 0
      %1382 = vmatpush1.bf16.msra.mxu0 0
      %1383 = vmatprep.mubr.bf16.mxu0 0
      %1384 = vmatmul.mubr.bf16.gmra.mrb[0].mxu0 %v1106
      %v1385 = vpop.f32.mrb[0].mxu0
      %v1386 = vadd.f32 0.0, %v1385
      %v1387 = vpop.f32.mrb[0].mxu0
      %v1388 = vpop.f32.mrb[0].mxu0
      %v1389 = vadd.f32 0.0, %v1388
      %v1390 = vpop.f32.mrb[0].mxu0
      %1391 = vmatprep.mubr.bf16.mxu0 0
      %1392 = vmatmul.mubr.bf16.gmra.mrb[0].mxu0 %v1107
      %v1393 = vpop.f32.mrb[0].mxu0
      %v1394 = vadd.f32 0.0, %v1393
      %v1395 = vpop.f32.mrb[0].mxu0
      %v1396 = vpop.f32.mrb[0].mxu0
      %v1397 = vadd.f32 0.0, %v1396
      %v1398 = vpop.f32.mrb[0].mxu0
      %1399 = vmatprep.mubr.bf16.mxu0 0
      %1400 = vmatmul.mubr.bf16.gmra.mrb[0].mxu0 %v1108
      %v1401 = vpop.f32.mrb[0].mxu0
      %v1402 = vadd.f32 0.0, %v1401
      %v1403 = vpop.f32.mrb[0].mxu0
      %v1404 = vpop.f32.mrb[0].mxu0
      %v1405 = vadd.f32 0.0, %v1404
      %v1406 = vpop.f32.mrb[0].mxu0
      %1407 = vmatprep.mubr.bf16.mxu0 0
      %1408 = vmatmul.mubr.bf16.gmra.mrb[0].mxu0 %v1109
      %v1409 = vpop.f32.mrb[0].mxu0
      %v1410 = vadd.f32 0.0, %v1409
      %v1411 = vpop.f32.mrb[0].mxu0
      %v1412 = vpop.f32.mrb[0].mxu0
      %v1413 = vadd.f32 0.0, %v1412
      %v1414 = vpop.f32.mrb[0].mxu0
      %1415 = vmatprep.mubr.bf16.mxu0 0
      %1416 = vmatmul.mubr.bf16.gmra.mrb[0].mxu0 %v1110
      %v1417 = vpop.f32.mrb[0].mxu0
      %v1418 = vadd.f32 0.0, %v1417
      %v1419 = vpop.f32.mrb[0].mxu0
      %v1420 = vpop.f32.mrb[0].mxu0
      %v1421 = vadd.f32 0.0, %v1420
      %v1422 = vpop.f32.mrb[0].mxu0
      %1423 = vmatprep.mubr.bf16.mxu0 0
      %1424 = vmatmul.mubr.bf16.gmra.mrb[0].mxu0 %v1111
      %v1425 = vpop.f32.mrb[0].mxu0
      %v1426 = vadd.f32 0.0, %v1425
      %v1427 = vpop.f32.mrb[0].mxu0
      %v1428 = vpop.f32.mrb[0].mxu0
      %v1429 = vadd.f32 0.0, %v1428
      %v1430 = vpop.f32.mrb[0].mxu0
      %1431 = vmatprep.mubr.bf16.mxu0 0
      %1432 = vmatmul.mubr.bf16.gmra.mrb[0].mxu0 %v1112
      %v1433 = vpop.f32.mrb[0].mxu0
      %v1434 = vadd.f32 0.0, %v1433
      %v1435 = vpop.f32.mrb[0].mxu0
      %v1436 = vpop.f32.mrb[0].mxu0
      %v1437 = vadd.f32 0.0, %v1436
      %v1438 = vpop.f32.mrb[0].mxu0
      %1439 = vmatprep.mubr.bf16.mxu0 0
      %1440 = vmatmul.mubr.bf16.gmra.mrb[0].mxu0 %v1301
      %v1441 = vpop.f32.mrb[0].mxu0
      %v1442 = vadd.f32 0.0, %v1441
      %v1443 = vpop.f32.mrb[0].mxu0
      %v1444 = vpop.f32.mrb[0].mxu0
      %v1445 = vadd.f32 0.0, %v1444
      %v1446 = vpop.f32.mrb[0].mxu0
      %1447 = vdwg.mxu0
      %v1448 = vadd.f32 %v1266, %v1386
      %v1449 = vadd.f32 %v1267, %v1389
      %v1450 = vadd.f32 %v1268, %v1394
      %v1451 = vadd.f32 %v1269, %v1397
      %v1452 = vadd.f32 %v1270, %v1402
      %v1453 = vadd.f32 %v1271, %v1405
      %v1454 = vadd.f32 %v1272, %v1410
      %v1455 = vadd.f32 %v1273, %v1413
      %v1456 = vadd.f32 %v1274, %v1418
      %v1457 = vadd.f32 %v1275, %v1421
      %v1458 = vadd.f32 %v1276, %v1426
      %v1459 = vadd.f32 %v1277, %v1429
      %v1460 = vadd.f32 %v1278, %v1434
      %v1461 = vadd.f32 %v1279, %v1437
      %v1462 = vadd.f32 %v1280, %v1442
      %v1463 = vadd.f32 %v1281, %v1445
      %s1464 = scalar_lea.vmem %s1, 448
      %v1465 = vld [vmem:[%s1464] sm:$0xf]
      %v1466 = vld [vmem:[%s1464 + $0x4] sm:$0xf]
      %v1467 = vld [vmem:[%s1464 + $0x8] sm:$0xf]
      %v1468 = vld [vmem:[%s1464 + $0xc] sm:$0xf]
      %v1469 = vld [vmem:[%s1464 + $0x10] sm:$0xf]
      %v1470 = vld [vmem:[%s1464 + $0x14] sm:$0xf]
      %v1471 = vld [vmem:[%s1464 + $0x18] sm:$0xf]
      %v1472 = vld [vmem:[%s1464 + $0x1c] sm:$0xf]
      %v1473 = vld [vmem:[%s1464 + $0x20] sm:$0xf]
      %v1474 = vld [vmem:[%s1464 + $0x24] sm:$0xf]
      %v1475 = vld [vmem:[%s1464 + $0x28] sm:$0xf]
      %v1476 = vld [vmem:[%s1464 + $0x2c] sm:$0xf]
      %v1477 = vld [vmem:[%s1464 + $0x30] sm:$0xf]
      %v1478 = vld [vmem:[%s1464 + $0x34] sm:$0xf]
      %v1479 = vld [vmem:[%s1464 + $0x38] sm:$0xf]
      %v1480 = vld [vmem:[%s1464 + $0x3c] sm:$0xf]
      %v1481 = vunpack.c.l.b16 %v1061
      %v1482 = vunpack.c.l.b16 %v1071
      %v1483 = vpack.c.b16 %v1482, %v1481
      %v1501 = vunpack.c.l.b16 %v1465
      %v1502 = vunpack.c.l.b16 %v1466
      %v1503 = vunpack.c.l.b16 %v1467
      %v1504 = vunpack.c.l.b16 %v1468
      %v1505 = vunpack.c.l.b16 %v1469
      %v1506 = vunpack.c.l.b16 %v1470
      %v1507 = vunpack.c.l.b16 %v1471
      %v1508 = vunpack.c.l.b16 %v1472
      %v1509 = vunpack.c.l.b16 %v1473
      %v1510 = vunpack.c.l.b16 %v1474
      %v1511 = vunpack.c.l.b16 %v1475
      %v1512 = vunpack.c.l.b16 %v1476
      %v1513 = vunpack.c.l.b16 %v1477
      %v1514 = vunpack.c.l.b16 %v1478
      %v1515 = vunpack.c.l.b16 %v1479
      %v1516 = vunpack.c.l.b16 %v1480
      %v1517 = vpack.c.b16 %v1502, %v1501
      %v1518 = vpack.c.b16 %v1504, %v1503
      %v1519 = vpack.c.b16 %v1506, %v1505
      %v1520 = vpack.c.b16 %v1508, %v1507
      %v1521 = vpack.c.b16 %v1510, %v1509
      %v1522 = vpack.c.b16 %v1512, %v1511
      %v1523 = vpack.c.b16 %v1514, %v1513
      %v1524 = vpack.c.b16 %v1516, %v1515
      %1533 = vmatprep.subr.bf16.mxu0 0
      %1534 = vmatpush1.bf16.msra.mxu0 %v1517
      %1535 = vmatprep.subr.bf16.mxu0 0
      %1536 = vmatpush1.bf16.msra.mxu0 %v1518
      %1537 = vmatprep.subr.bf16.mxu0 0
      %1538 = vmatpush1.bf16.msra.mxu0 %v1519
      %1539 = vmatprep.subr.bf16.mxu0 0
      %1540 = vmatpush1.bf16.msra.mxu0 %v1520
      %1541 = vmatprep.subr.bf16.mxu0 0
      %1542 = vmatpush1.bf16.msra.mxu0 %v1521
      %1543 = vmatprep.subr.bf16.mxu0 0
      %1544 = vmatpush1.bf16.msra.mxu0 %v1522
      %1545 = vmatprep.subr.bf16.mxu0 0
      %1546 = vmatpush1.bf16.msra.mxu0 %v1523
      %1547 = vmatprep.subr.bf16.mxu0 0
      %1548 = vmatpush1.bf16.msra.mxu0 %v1524
      %1549 = vmatprep.subr.bf16.mxu0 0
      %1550 = vmatpush1.bf16.msra.mxu0 0
      %1551 = vmatprep.subr.bf16.mxu0 0
      %1552 = vmatpush1.bf16.msra.mxu0 0
      %1553 = vmatprep.subr.bf16.mxu0 0
      %1554 = vmatpush1.bf16.msra.mxu0 0
      %1555 = vmatprep.subr.bf16.mxu0 0
      %1556 = vmatpush1.bf16.msra.mxu0 0
      %1557 = vmatprep.subr.bf16.mxu0 0
      %1558 = vmatpush1.bf16.msra.mxu0 0
      %1559 = vmatprep.subr.bf16.mxu0 0
      %1560 = vmatpush1.bf16.msra.mxu0 0
      %1561 = vmatprep.subr.bf16.mxu0 0
      %1562 = vmatpush1.bf16.msra.mxu0 0
      %1563 = vmatprep.subr.bf16.mxu0 0
      %1564 = vmatpush1.bf16.msra.mxu0 0
      %1565 = vmatprep.mubr.bf16.mxu0 0
      %1566 = vmatmul.mubr.bf16.gmra.mrb[0].mxu0 %v1107
      %v1567 = vpop.f32.mrb[0].mxu0
      %v1568 = vadd.f32 0.0, %v1567
      %v1569 = vpop.f32.mrb[0].mxu0
      %v1570 = vpop.f32.mrb[0].mxu0
      %v1571 = vadd.f32 0.0, %v1570
      %v1572 = vpop.f32.mrb[0].mxu0
      %1573 = vmatprep.mubr.bf16.mxu0 0
      %1574 = vmatmul.mubr.bf16.gmra.mrb[0].mxu0 %v1108
      %v1575 = vpop.f32.mrb[0].mxu0
      %v1576 = vadd.f32 0.0, %v1575
      %v1577 = vpop.f32.mrb[0].mxu0
      %v1578 = vpop.f32.mrb[0].mxu0
      %v1579 = vadd.f32 0.0, %v1578
      %v1580 = vpop.f32.mrb[0].mxu0
      %1581 = vmatprep.mubr.bf16.mxu0 0
      %1582 = vmatmul.mubr.bf16.gmra.mrb[0].mxu0 %v1109
      %v1583 = vpop.f32.mrb[0].mxu0
      %v1584 = vadd.f32 0.0, %v1583
      %v1585 = vpop.f32.mrb[0].mxu0
      %v1586 = vpop.f32.mrb[0].mxu0
      %v1587 = vadd.f32 0.0, %v1586
      %v1588 = vpop.f32.mrb[0].mxu0
      %1589 = vmatprep.mubr.bf16.mxu0 0
      %1590 = vmatmul.mubr.bf16.gmra.mrb[0].mxu0 %v1110
      %v1591 = vpop.f32.mrb[0].mxu0
      %v1592 = vadd.f32 0.0, %v1591
      %v1593 = vpop.f32.mrb[0].mxu0
      %v1594 = vpop.f32.mrb[0].mxu0
      %v1595 = vadd.f32 0.0, %v1594
      %v1596 = vpop.f32.mrb[0].mxu0
      %1597 = vmatprep.mubr.bf16.mxu0 0
      %1598 = vmatmul.mubr.bf16.gmra.mrb[0].mxu0 %v1111
      %v1599 = vpop.f32.mrb[0].mxu0
      %v1600 = vadd.f32 0.0, %v1599
      %v1601 = vpop.f32.mrb[0].mxu0
      %v1602 = vpop.f32.mrb[0].mxu0
      %v1603 = vadd.f32 0.0, %v1602
      %v1604 = vpop.f32.mrb[0].mxu0
      %1605 = vmatprep.mubr.bf16.mxu0 0
      %1606 = vmatmul.mubr.bf16.gmra.mrb[0].mxu0 %v1112
      %v1607 = vpop.f32.mrb[0].mxu0
      %v1608 = vadd.f32 0.0, %v1607
      %v1609 = vpop.f32.mrb[0].mxu0
      %v1610 = vpop.f32.mrb[0].mxu0
      %v1611 = vadd.f32 0.0, %v1610
      %v1612 = vpop.f32.mrb[0].mxu0
      %1613 = vmatprep.mubr.bf16.mxu0 0
      %1614 = vmatmul.mubr.bf16.gmra.mrb[0].mxu0 %v1301
      %v1615 = vpop.f32.mrb[0].mxu0
      %v1616 = vadd.f32 0.0, %v1615
      %v1617 = vpop.f32.mrb[0].mxu0
      %v1618 = vpop.f32.mrb[0].mxu0
      %v1619 = vadd.f32 0.0, %v1618
      %v1620 = vpop.f32.mrb[0].mxu0
      %1621 = vmatprep.mubr.bf16.mxu0 0
      %1622 = vmatmul.mubr.bf16.gmra.mrb[0].mxu0 %v1483
      %v1623 = vpop.f32.mrb[0].mxu0
      %v1624 = vadd.f32 0.0, %v1623
      %v1625 = vpop.f32.mrb[0].mxu0
      %v1626 = vpop.f32.mrb[0].mxu0
      %v1627 = vadd.f32 0.0, %v1626
      %v1628 = vpop.f32.mrb[0].mxu0
      %1629 = vdwg.mxu0
      %v1630 = vadd.f32 %v1448, %v1568
      %v1631 = vadd.f32 %v1449, %v1571
      %v1632 = vadd.f32 %v1450, %v1576
      %v1633 = vadd.f32 %v1451, %v1579
      %v1634 = vadd.f32 %v1452, %v1584
      %v1635 = vadd.f32 %v1453, %v1587
      %v1636 = vadd.f32 %v1454, %v1592
      %v1637 = vadd.f32 %v1455, %v1595
      %v1638 = vadd.f32 %v1456, %v1600
      %v1639 = vadd.f32 %v1457, %v1603
      %v1640 = vadd.f32 %v1458, %v1608
      %v1641 = vadd.f32 %v1459, %v1611
      %v1642 = vadd.f32 %v1460, %v1616
      %v1643 = vadd.f32 %v1461, %v1619
      %v1644 = vadd.f32 %v1462, %v1624
      %v1645 = vadd.f32 %v1463, %v1627
      %vm1656 = vcmask 1042432
      %vm1657 = vcmask 1046532
      %vm1658 = vmor %vm1656, %vm1657
      %v1659 = vrot.slane %v238, 5
      %v1660 = vrot.slane %v1659, 4
      %v1661 = vrot.slane %v239, 5
      %v1662 = vsel %vm1658, %v1660, %v1661
      %v1663 = vrot.slane %v1661, 4
      %v1664 = vrot.slane %v240, 5
      %v1665 = vsel %vm1658, %v1663, %v1664
      %v1666 = vrot.slane %v241, 5
      %v1667 = vrot.slane %v1666, 4
      %v1668 = vrot.slane %v242, 5
      %v1669 = vsel %vm1658, %v1667, %v1668
      %v1670 = vrot.slane %v1668, 4
      %v1671 = vrot.slane %v243, 5
      %v1672 = vsel %vm1658, %v1670, %v1671
      %v1673 = vrot.slane %v244, 5
      %v1674 = vrot.slane %v1673, 4
      %v1675 = vrot.slane %v245, 5
      %v1676 = vsel %vm1658, %v1674, %v1675
      %v1677 = vrot.slane %v1675, 4
      %v1678 = vrot.slane %v246, 5
      %v1679 = vsel %vm1658, %v1677, %v1678
      %v1680 = vrot.slane %v247, 5
      %v1681 = vrot.slane %v1680, 4
      %v1682 = vrot.slane %v248, 5
      %v1683 = vsel %vm1658, %v1681, %v1682
      %v1684 = vrot.slane %v1682, 4
      %v1685 = vrot.slane %v249, 5
      %v1686 = vsel %vm1658, %v1684, %v1685
      %v1687 = vrot.slane %v250, 5
      %v1688 = vrot.slane %v1687, 4
      %v1689 = vrot.slane %v251, 5
      %v1690 = vsel %vm1658, %v1688, %v1689
      %v1691 = vrot.slane %v1689, 4
      %v1692 = vrot.slane %v252, 5
      %v1693 = vsel %vm1658, %v1691, %v1692
      %v1694 = vrot.slane %v253, 5
      %v1695 = vrot.slane %v1694, 4
      %v1696 = vrot.slane %v254, 5
      %v1697 = vsel %vm1658, %v1695, %v1696
      %v1698 = vrot.slane %v1696, 4
      %v1699 = vrot.slane %v255, 5
      %v1700 = vsel %vm1658, %v1698, %v1699
      %v1701 = vrot.slane %v256, 5
      %v1702 = vrot.slane %v1701, 4
      %v1703 = vrot.slane %v257, 5
      %v1704 = vsel %vm1658, %v1702, %v1703
      %v1705 = vrot.slane %v1703, 4
      %v1706 = vrot.slane %v258, 5
      %v1707 = vsel %vm1658, %v1705, %v1706
      %v1708 = vrot.slane %v259, 5
      %v1709 = vrot.slane %v1708, 4
      %v1710 = vrot.slane %v260, 5
      %v1711 = vsel %vm1658, %v1709, %v1710
      %v1712 = vrot.slane %v1710, 4
      %v1713 = vrot.slane %v261, 5
      %v1714 = vsel %vm1658, %v1712, %v1713
      %v1715 = vrot.slane %v262, 5
      %v1716 = vrot.slane %v1715, 4
      %v1717 = vrot.slane %v263, 5
      %v1718 = vsel %vm1658, %v1716, %v1717
      %v1719 = vrot.slane %v1717, 4
      %v1720 = vrot.slane %v264, 5
      %v1721 = vsel %vm1658, %v1719, %v1720
      %v1722 = vrot.slane %v265, 5
      %v1723 = vrot.slane %v1722, 4
      %v1724 = vrot.slane %v266, 5
      %v1725 = vsel %vm1658, %v1723, %v1724
      %v1726 = vrot.slane %v1724, 4
      %v1727 = vrot.slane %v267, 5
      %v1728 = vsel %vm1658, %v1726, %v1727
      %s1729 = scalar_lea.vmem %s1, 128
      %v1730 = vld [vmem:[%s1729] sm:$0xf]
      %v1731 = vld [vmem:[%s1729 + $0x4] sm:$0xf]
      %v1732 = vld [vmem:[%s1729 + $0x8] sm:$0xf]
      %v1733 = vld [vmem:[%s1729 + $0xc] sm:$0xf]
      %v1734 = vld [vmem:[%s1729 + $0x10] sm:$0xf]
      %v1735 = vld [vmem:[%s1729 + $0x14] sm:$0xf]
      %v1736 = vld [vmem:[%s1729 + $0x18] sm:$0xf]
      %v1737 = vld [vmem:[%s1729 + $0x1c] sm:$0xf]
      %v1738 = vld [vmem:[%s1729 + $0x20] sm:$0xf]
      %v1739 = vld [vmem:[%s1729 + $0x24] sm:$0xf]
      %v1740 = vld [vmem:[%s1729 + $0x28] sm:$0xf]
      %v1741 = vld [vmem:[%s1729 + $0x2c] sm:$0xf]
      %v1742 = vld [vmem:[%s1729 + $0x30] sm:$0xf]
      %v1743 = vld [vmem:[%s1729 + $0x34] sm:$0xf]
      %v1744 = vld [vmem:[%s1729 + $0x38] sm:$0xf]
      %v1745 = vld [vmem:[%s1729 + $0x3c] sm:$0xf]
      %v1746 = vunpack.c.l.b16 %v1662
      %v1747 = vunpack.c.l.b16 %v1665
      %v1748 = vunpack.c.l.b16 %v1669
      %v1749 = vunpack.c.l.b16 %v1672
      %v1750 = vunpack.c.l.b16 %v1676
      %v1751 = vunpack.c.l.b16 %v1679
      %v1752 = vunpack.c.l.b16 %v1683
      %v1753 = vunpack.c.l.b16 %v1686
      %v1754 = vunpack.c.l.b16 %v1690
      %v1755 = vunpack.c.l.b16 %v1693
      %v1756 = vunpack.c.l.b16 %v1697
      %v1757 = vunpack.c.l.b16 %v1700
      %v1758 = vunpack.c.l.b16 %v1704
      %v1759 = vunpack.c.l.b16 %v1707
      %v1760 = vunpack.c.l.b16 %v1711
      %v1761 = vunpack.c.l.b16 %v1714
      %v1762 = vpack.c.b16 %v1747, %v1746
      %v1763 = vpack.c.b16 %v1749, %v1748
      %v1764 = vpack.c.b16 %v1751, %v1750
      %v1765 = vpack.c.b16 %v1753, %v1752
      %v1766 = vpack.c.b16 %v1755, %v1754
      %v1767 = vpack.c.b16 %v1757, %v1756
      %v1768 = vpack.c.b16 %v1759, %v1758
      %v1769 = vpack.c.b16 %v1761, %v1760
      %v1794 = vunpack.c.l.b16 %v1730
      %v1795 = vunpack.c.l.b16 %v1731
      %v1796 = vunpack.c.l.b16 %v1732
      %v1797 = vunpack.c.l.b16 %v1733
      %v1798 = vunpack.c.l.b16 %v1734
      %v1799 = vunpack.c.l.b16 %v1735
      %v1800 = vunpack.c.l.b16 %v1736
      %v1801 = vunpack.c.l.b16 %v1737
      %v1802 = vunpack.c.l.b16 %v1738
      %v1803 = vunpack.c.l.b16 %v1739
      %v1804 = vunpack.c.l.b16 %v1740
      %v1805 = vunpack.c.l.b16 %v1741
      %v1806 = vunpack.c.l.b16 %v1742
      %v1807 = vunpack.c.l.b16 %v1743
      %v1808 = vunpack.c.l.b16 %v1744
      %v1809 = vunpack.c.l.b16 %v1745
      %v1810 = vpack.c.b16 %v1795, %v1794
      %v1811 = vpack.c.b16 %v1797, %v1796
      %v1812 = vpack.c.b16 %v1799, %v1798
      %v1813 = vpack.c.b16 %v1801, %v1800
      %v1814 = vpack.c.b16 %v1803, %v1802
      %v1815 = vpack.c.b16 %v1805, %v1804
      %v1816 = vpack.c.b16 %v1807, %v1806
      %v1817 = vpack.c.b16 %v1809, %v1808
      %1826 = vmatprep.subr.bf16.mxu0 0
      %1827 = vmatpush1.bf16.msra.mxu0 %v1810
      %1828 = vmatprep.subr.bf16.mxu0 0
      %1829 = vmatpush1.bf16.msra.mxu0 %v1811
      %1830 = vmatprep.subr.bf16.mxu0 0
      %1831 = vmatpush1.bf16.msra.mxu0 %v1812
      %1832 = vmatprep.subr.bf16.mxu0 0
      %1833 = vmatpush1.bf16.msra.mxu0 %v1813
      %1834 = vmatprep.subr.bf16.mxu0 0
      %1835 = vmatpush1.bf16.msra.mxu0 %v1814
      %1836 = vmatprep.subr.bf16.mxu0 0
      %1837 = vmatpush1.bf16.msra.mxu0 %v1815
      %1838 = vmatprep.subr.bf16.mxu0 0
      %1839 = vmatpush1.bf16.msra.mxu0 %v1816
      %1840 = vmatprep.subr.bf16.mxu0 0
      %1841 = vmatpush1.bf16.msra.mxu0 %v1817
      %1842 = vmatprep.subr.bf16.mxu0 0
      %1843 = vmatpush1.bf16.msra.mxu0 0
      %1844 = vmatprep.subr.bf16.mxu0 0
      %1845 = vmatpush1.bf16.msra.mxu0 0
      %1846 = vmatprep.subr.bf16.mxu0 0
      %1847 = vmatpush1.bf16.msra.mxu0 0
      %1848 = vmatprep.subr.bf16.mxu0 0
      %1849 = vmatpush1.bf16.msra.mxu0 0
      %1850 = vmatprep.subr.bf16.mxu0 0
      %1851 = vmatpush1.bf16.msra.mxu0 0
      %1852 = vmatprep.subr.bf16.mxu0 0
      %1853 = vmatpush1.bf16.msra.mxu0 0
      %1854 = vmatprep.subr.bf16.mxu0 0
      %1855 = vmatpush1.bf16.msra.mxu0 0
      %1856 = vmatprep.subr.bf16.mxu0 0
      %1857 = vmatpush1.bf16.msra.mxu0 0
      %1858 = vmatprep.mubr.bf16.mxu0 0
      %1859 = vmatmul.mubr.bf16.gmra.mrb[0].mxu0 %v1762
      %v1860 = vpop.f32.mrb[0].mxu0
      %v1861 = vadd.f32 0.0, %v1860
      %v1862 = vpop.f32.mrb[0].mxu0
      %v1863 = vpop.f32.mrb[0].mxu0
      %v1864 = vadd.f32 0.0, %v1863
      %v1865 = vpop.f32.mrb[0].mxu0
      %1866 = vmatprep.mubr.bf16.mxu0 0
      %1867 = vmatmul.mubr.bf16.gmra.mrb[0].mxu0 %v1763
      %v1868 = vpop.f32.mrb[0].mxu0
      %v1869 = vadd.f32 0.0, %v1868
      %v1870 = vpop.f32.mrb[0].mxu0
      %v1871 = vpop.f32.mrb[0].mxu0
      %v1872 = vadd.f32 0.0, %v1871
      %v1873 = vpop.f32.mrb[0].mxu0
      %1874 = vmatprep.mubr.bf16.mxu0 0
      %1875 = vmatmul.mubr.bf16.gmra.mrb[0].mxu0 %v1764
      %v1876 = vpop.f32.mrb[0].mxu0
      %v1877 = vadd.f32 0.0, %v1876
      %v1878 = vpop.f32.mrb[0].mxu0
      %v1879 = vpop.f32.mrb[0].mxu0
      %v1880 = vadd.f32 0.0, %v1879
      %v1881 = vpop.f32.mrb[0].mxu0
      %1882 = vmatprep.mubr.bf16.mxu0 0
      %1883 = vmatmul.mubr.bf16.gmra.mrb[0].mxu0 %v1765
      %v1884 = vpop.f32.mrb[0].mxu0
      %v1885 = vadd.f32 0.0, %v1884
      %v1886 = vpop.f32.mrb[0].mxu0
      %v1887 = vpop.f32.mrb[0].mxu0
      %v1888 = vadd.f32 0.0, %v1887
      %v1889 = vpop.f32.mrb[0].mxu0
      %1890 = vmatprep.mubr.bf16.mxu0 0
      %1891 = vmatmul.mubr.bf16.gmra.mrb[0].mxu0 %v1766
      %v1892 = vpop.f32.mrb[0].mxu0
      %v1893 = vadd.f32 0.0, %v1892
      %v1894 = vpop.f32.mrb[0].mxu0
      %v1895 = vpop.f32.mrb[0].mxu0
      %v1896 = vadd.f32 0.0, %v1895
      %v1897 = vpop.f32.mrb[0].mxu0
      %1898 = vmatprep.mubr.bf16.mxu0 0
      %1899 = vmatmul.mubr.bf16.gmra.mrb[0].mxu0 %v1767
      %v1900 = vpop.f32.mrb[0].mxu0
      %v1901 = vadd.f32 0.0, %v1900
      %v1902 = vpop.f32.mrb[0].mxu0
      %v1903 = vpop.f32.mrb[0].mxu0
      %v1904 = vadd.f32 0.0, %v1903
      %v1905 = vpop.f32.mrb[0].mxu0
      %1906 = vmatprep.mubr.bf16.mxu0 0
      %1907 = vmatmul.mubr.bf16.gmra.mrb[0].mxu0 %v1768
      %v1908 = vpop.f32.mrb[0].mxu0
      %v1909 = vadd.f32 0.0, %v1908
      %v1910 = vpop.f32.mrb[0].mxu0
      %v1911 = vpop.f32.mrb[0].mxu0
      %v1912 = vadd.f32 0.0, %v1911
      %v1913 = vpop.f32.mrb[0].mxu0
      %1914 = vmatprep.mubr.bf16.mxu0 0
      %1915 = vmatmul.mubr.bf16.gmra.mrb[0].mxu0 %v1769
      %v1916 = vpop.f32.mrb[0].mxu0
      %v1917 = vadd.f32 0.0, %v1916
      %v1918 = vpop.f32.mrb[0].mxu0
      %v1919 = vpop.f32.mrb[0].mxu0
      %v1920 = vadd.f32 0.0, %v1919
      %v1921 = vpop.f32.mrb[0].mxu0
      %1922 = vdwg.mxu0
      %v1923 = vadd.f32 %v1630, %v1861
      %v1924 = vadd.f32 %v1631, %v1864
      %v1925 = vadd.f32 %v1632, %v1869
      %v1926 = vadd.f32 %v1633, %v1872
      %v1927 = vadd.f32 %v1634, %v1877
      %v1928 = vadd.f32 %v1635, %v1880
      %v1929 = vadd.f32 %v1636, %v1885
      %v1930 = vadd.f32 %v1637, %v1888
      %v1931 = vadd.f32 %v1638, %v1893
      %v1932 = vadd.f32 %v1639, %v1896
      %v1933 = vadd.f32 %v1640, %v1901
      %v1934 = vadd.f32 %v1641, %v1904
      %v1935 = vadd.f32 %v1642, %v1909
      %v1936 = vadd.f32 %v1643, %v1912
      %v1937 = vadd.f32 %v1644, %v1917
      %v1938 = vadd.f32 %v1645, %v1920
      %s1939 = scalar_lea.vmem %s1, 320
      %v1940 = vld [vmem:[%s1939] sm:$0xf]
      %v1941 = vld [vmem:[%s1939 + $0x4] sm:$0xf]
      %v1942 = vld [vmem:[%s1939 + $0x8] sm:$0xf]
      %v1943 = vld [vmem:[%s1939 + $0xc] sm:$0xf]
      %v1944 = vld [vmem:[%s1939 + $0x10] sm:$0xf]
      %v1945 = vld [vmem:[%s1939 + $0x14] sm:$0xf]
      %v1946 = vld [vmem:[%s1939 + $0x18] sm:$0xf]
      %v1947 = vld [vmem:[%s1939 + $0x1c] sm:$0xf]
      %v1948 = vld [vmem:[%s1939 + $0x20] sm:$0xf]
      %v1949 = vld [vmem:[%s1939 + $0x24] sm:$0xf]
      %v1950 = vld [vmem:[%s1939 + $0x28] sm:$0xf]
      %v1951 = vld [vmem:[%s1939 + $0x2c] sm:$0xf]
      %v1952 = vld [vmem:[%s1939 + $0x30] sm:$0xf]
      %v1953 = vld [vmem:[%s1939 + $0x34] sm:$0xf]
      %v1954 = vld [vmem:[%s1939 + $0x38] sm:$0xf]
      %v1955 = vld [vmem:[%s1939 + $0x3c] sm:$0xf]
      %v1956 = vunpack.c.l.b16 %v1718
      %v1957 = vunpack.c.l.b16 %v1721
      %v1958 = vpack.c.b16 %v1957, %v1956
      %v1976 = vunpack.c.l.b16 %v1940
      %v1977 = vunpack.c.l.b16 %v1941
      %v1978 = vunpack.c.l.b16 %v1942
      %v1979 = vunpack.c.l.b16 %v1943
      %v1980 = vunpack.c.l.b16 %v1944
      %v1981 = vunpack.c.l.b16 %v1945
      %v1982 = vunpack.c.l.b16 %v1946
      %v1983 = vunpack.c.l.b16 %v1947
      %v1984 = vunpack.c.l.b16 %v1948
      %v1985 = vunpack.c.l.b16 %v1949
      %v1986 = vunpack.c.l.b16 %v1950
      %v1987 = vunpack.c.l.b16 %v1951
      %v1988 = vunpack.c.l.b16 %v1952
      %v1989 = vunpack.c.l.b16 %v1953
      %v1990 = vunpack.c.l.b16 %v1954
      %v1991 = vunpack.c.l.b16 %v1955
      %v1992 = vpack.c.b16 %v1977, %v1976
      %v1993 = vpack.c.b16 %v1979, %v1978
      %v1994 = vpack.c.b16 %v1981, %v1980
      %v1995 = vpack.c.b16 %v1983, %v1982
      %v1996 = vpack.c.b16 %v1985, %v1984
      %v1997 = vpack.c.b16 %v1987, %v1986
      %v1998 = vpack.c.b16 %v1989, %v1988
      %v1999 = vpack.c.b16 %v1991, %v1990
      %2008 = vmatprep.subr.bf16.mxu0 0
      %2009 = vmatpush1.bf16.msra.mxu0 %v1992
      %2010 = vmatprep.subr.bf16.mxu0 0
      %2011 = vmatpush1.bf16.msra.mxu0 %v1993
      %2012 = vmatprep.subr.bf16.mxu0 0
      %2013 = vmatpush1.bf16.msra.mxu0 %v1994
      %2014 = vmatprep.subr.bf16.mxu0 0
      %2015 = vmatpush1.bf16.msra.mxu0 %v1995
      %2016 = vmatprep.subr.bf16.mxu0 0
      %2017 = vmatpush1.bf16.msra.mxu0 %v1996
      %2018 = vmatprep.subr.bf16.mxu0 0
      %2019 = vmatpush1.bf16.msra.mxu0 %v1997
      %2020 = vmatprep.subr.bf16.mxu0 0
      %2021 = vmatpush1.bf16.msra.mxu0 %v1998
      %2022 = vmatprep.subr.bf16.mxu0 0
      %2023 = vmatpush1.bf16.msra.mxu0 %v1999
      %2024 = vmatprep.subr.bf16.mxu0 0
      %2025 = vmatpush1.bf16.msra.mxu0 0
      %2026 = vmatprep.subr.bf16.mxu0 0
      %2027 = vmatpush1.bf16.msra.mxu0 0
      %2028 = vmatprep.subr.bf16.mxu0 0
      %2029 = vmatpush1.bf16.msra.mxu0 0
      %2030 = vmatprep.subr.bf16.mxu0 0
      %2031 = vmatpush1.bf16.msra.mxu0 0
      %2032 = vmatprep.subr.bf16.mxu0 0
      %2033 = vmatpush1.bf16.msra.mxu0 0
      %2034 = vmatprep.subr.bf16.mxu0 0
      %2035 = vmatpush1.bf16.msra.mxu0 0
      %2036 = vmatprep.subr.bf16.mxu0 0
      %2037 = vmatpush1.bf16.msra.mxu0 0
      %2038 = vmatprep.subr.bf16.mxu0 0
      %2039 = vmatpush1.bf16.msra.mxu0 0
      %2040 = vmatprep.mubr.bf16.mxu0 0
      %2041 = vmatmul.mubr.bf16.gmra.mrb[0].mxu0 %v1763
      %v2042 = vpop.f32.mrb[0].mxu0
      %v2043 = vadd.f32 0.0, %v2042
      %v2044 = vpop.f32.mrb[0].mxu0
      %v2045 = vpop.f32.mrb[0].mxu0
      %v2046 = vadd.f32 0.0, %v2045
      %v2047 = vpop.f32.mrb[0].mxu0
      %2048 = vmatprep.mubr.bf16.mxu0 0
      %2049 = vmatmul.mubr.bf16.gmra.mrb[0].mxu0 %v1764
      %v2050 = vpop.f32.mrb[0].mxu0
      %v2051 = vadd.f32 0.0, %v2050
      %v2052 = vpop.f32.mrb[0].mxu0
      %v2053 = vpop.f32.mrb[0].mxu0
      %v2054 = vadd.f32 0.0, %v2053
      %v2055 = vpop.f32.mrb[0].mxu0
      %2056 = vmatprep.mubr.bf16.mxu0 0
      %2057 = vmatmul.mubr.bf16.gmra.mrb[0].mxu0 %v1765
      %v2058 = vpop.f32.mrb[0].mxu0
      %v2059 = vadd.f32 0.0, %v2058
      %v2060 = vpop.f32.mrb[0].mxu0
      %v2061 = vpop.f32.mrb[0].mxu0
      %v2062 = vadd.f32 0.0, %v2061
      %v2063 = vpop.f32.mrb[0].mxu0
      %2064 = vmatprep.mubr.bf16.mxu0 0
      %2065 = vmatmul.mubr.bf16.gmra.mrb[0].mxu0 %v1766
      %v2066 = vpop.f32.mrb[0].mxu0
      %v2067 = vadd.f32 0.0, %v2066
      %v2068 = vpop.f32.mrb[0].mxu0
      %v2069 = vpop.f32.mrb[0].mxu0
      %v2070 = vadd.f32 0.0, %v2069
      %v2071 = vpop.f32.mrb[0].mxu0
      %2072 = vmatprep.mubr.bf16.mxu0 0
      %2073 = vmatmul.mubr.bf16.gmra.mrb[0].mxu0 %v1767
      %v2074 = vpop.f32.mrb[0].mxu0
      %v2075 = vadd.f32 0.0, %v2074
      %v2076 = vpop.f32.mrb[0].mxu0
      %v2077 = vpop.f32.mrb[0].mxu0
      %v2078 = vadd.f32 0.0, %v2077
      %v2079 = vpop.f32.mrb[0].mxu0
      %2080 = vmatprep.mubr.bf16.mxu0 0
      %2081 = vmatmul.mubr.bf16.gmra.mrb[0].mxu0 %v1768
      %v2082 = vpop.f32.mrb[0].mxu0
      %v2083 = vadd.f32 0.0, %v2082
      %v2084 = vpop.f32.mrb[0].mxu0
      %v2085 = vpop.f32.mrb[0].mxu0
      %v2086 = vadd.f32 0.0, %v2085
      %v2087 = vpop.f32.mrb[0].mxu0
      %2088 = vmatprep.mubr.bf16.mxu0 0
      %2089 = vmatmul.mubr.bf16.gmra.mrb[0].mxu0 %v1769
      %v2090 = vpop.f32.mrb[0].mxu0
      %v2091 = vadd.f32 0.0, %v2090
      %v2092 = vpop.f32.mrb[0].mxu0
      %v2093 = vpop.f32.mrb[0].mxu0
      %v2094 = vadd.f32 0.0, %v2093
      %v2095 = vpop.f32.mrb[0].mxu0
      %2096 = vmatprep.mubr.bf16.mxu0 0
      %2097 = vmatmul.mubr.bf16.gmra.mrb[0].mxu0 %v1958
      %v2098 = vpop.f32.mrb[0].mxu0
      %v2099 = vadd.f32 0.0, %v2098
      %v2100 = vpop.f32.mrb[0].mxu0
      %v2101 = vpop.f32.mrb[0].mxu0
      %v2102 = vadd.f32 0.0, %v2101
      %v2103 = vpop.f32.mrb[0].mxu0
      %2104 = vdwg.mxu0
      %v2105 = vadd.f32 %v1923, %v2043
      %v2106 = vadd.f32 %v1924, %v2046
      %v2107 = vadd.f32 %v1925, %v2051
      %v2108 = vadd.f32 %v1926, %v2054
      %v2109 = vadd.f32 %v1927, %v2059
      %v2110 = vadd.f32 %v1928, %v2062
      %v2111 = vadd.f32 %v1929, %v2067
      %v2112 = vadd.f32 %v1930, %v2070
      %v2113 = vadd.f32 %v1931, %v2075
      %v2114 = vadd.f32 %v1932, %v2078
      %v2115 = vadd.f32 %v1933, %v2083
      %v2116 = vadd.f32 %v1934, %v2086
      %v2117 = vadd.f32 %v1935, %v2091
      %v2118 = vadd.f32 %v1936, %v2094
      %v2119 = vadd.f32 %v1937, %v2099
      %v2120 = vadd.f32 %v1938, %v2102
      %s2121 = scalar_lea.vmem %s1, 512
      %v2122 = vld [vmem:[%s2121] sm:$0xf]
      %v2123 = vld [vmem:[%s2121 + $0x4] sm:$0xf]
      %v2124 = vld [vmem:[%s2121 + $0x8] sm:$0xf]
      %v2125 = vld [vmem:[%s2121 + $0xc] sm:$0xf]
      %v2126 = vld [vmem:[%s2121 + $0x10] sm:$0xf]
      %v2127 = vld [vmem:[%s2121 + $0x14] sm:$0xf]
      %v2128 = vld [vmem:[%s2121 + $0x18] sm:$0xf]
      %v2129 = vld [vmem:[%s2121 + $0x1c] sm:$0xf]
      %v2130 = vld [vmem:[%s2121 + $0x20] sm:$0xf]
      %v2131 = vld [vmem:[%s2121 + $0x24] sm:$0xf]
      %v2132 = vld [vmem:[%s2121 + $0x28] sm:$0xf]
      %v2133 = vld [vmem:[%s2121 + $0x2c] sm:$0xf]
      %v2134 = vld [vmem:[%s2121 + $0x30] sm:$0xf]
      %v2135 = vld [vmem:[%s2121 + $0x34] sm:$0xf]
      %v2136 = vld [vmem:[%s2121 + $0x38] sm:$0xf]
      %v2137 = vld [vmem:[%s2121 + $0x3c] sm:$0xf]
      %v2138 = vunpack.c.l.b16 %v1725
      %v2139 = vunpack.c.l.b16 %v1728
      %v2140 = vpack.c.b16 %v2139, %v2138
      %v2158 = vunpack.c.l.b16 %v2122
      %v2159 = vunpack.c.l.b16 %v2123
      %v2160 = vunpack.c.l.b16 %v2124
      %v2161 = vunpack.c.l.b16 %v2125
      %v2162 = vunpack.c.l.b16 %v2126
      %v2163 = vunpack.c.l.b16 %v2127
      %v2164 = vunpack.c.l.b16 %v2128
      %v2165 = vunpack.c.l.b16 %v2129
      %v2166 = vunpack.c.l.b16 %v2130
      %v2167 = vunpack.c.l.b16 %v2131
      %v2168 = vunpack.c.l.b16 %v2132
      %v2169 = vunpack.c.l.b16 %v2133
      %v2170 = vunpack.c.l.b16 %v2134
      %v2171 = vunpack.c.l.b16 %v2135
      %v2172 = vunpack.c.l.b16 %v2136
      %v2173 = vunpack.c.l.b16 %v2137
      %v2174 = vpack.c.b16 %v2159, %v2158
      %v2175 = vpack.c.b16 %v2161, %v2160
      %v2176 = vpack.c.b16 %v2163, %v2162
      %v2177 = vpack.c.b16 %v2165, %v2164
      %v2178 = vpack.c.b16 %v2167, %v2166
      %v2179 = vpack.c.b16 %v2169, %v2168
      %v2180 = vpack.c.b16 %v2171, %v2170
      %v2181 = vpack.c.b16 %v2173, %v2172
      %2190 = vmatprep.subr.bf16.mxu0 0
      %2191 = vmatpush1.bf16.msra.mxu0 %v2174
      %2192 = vmatprep.subr.bf16.mxu0 0
      %2193 = vmatpush1.bf16.msra.mxu0 %v2175
      %2194 = vmatprep.subr.bf16.mxu0 0
      %2195 = vmatpush1.bf16.msra.mxu0 %v2176
      %2196 = vmatprep.subr.bf16.mxu0 0
      %2197 = vmatpush1.bf16.msra.mxu0 %v2177
      %2198 = vmatprep.subr.bf16.mxu0 0
      %2199 = vmatpush1.bf16.msra.mxu0 %v2178
      %2200 = vmatprep.subr.bf16.mxu0 0
      %2201 = vmatpush1.bf16.msra.mxu0 %v2179
      %2202 = vmatprep.subr.bf16.mxu0 0
      %2203 = vmatpush1.bf16.msra.mxu0 %v2180
      %2204 = vmatprep.subr.bf16.mxu0 0
      %2205 = vmatpush1.bf16.msra.mxu0 %v2181
      %2206 = vmatprep.subr.bf16.mxu0 0
      %2207 = vmatpush1.bf16.msra.mxu0 0
      %2208 = vmatprep.subr.bf16.mxu0 0
      %2209 = vmatpush1.bf16.msra.mxu0 0
      %2210 = vmatprep.subr.bf16.mxu0 0
      %2211 = vmatpush1.bf16.msra.mxu0 0
      %2212 = vmatprep.subr.bf16.mxu0 0
      %2213 = vmatpush1.bf16.msra.mxu0 0
      %2214 = vmatprep.subr.bf16.mxu0 0
      %2215 = vmatpush1.bf16.msra.mxu0 0
      %2216 = vmatprep.subr.bf16.mxu0 0
      %2217 = vmatpush1.bf16.msra.mxu0 0
      %2218 = vmatprep.subr.bf16.mxu0 0
      %2219 = vmatpush1.bf16.msra.mxu0 0
      %2220 = vmatprep.subr.bf16.mxu0 0
      %2221 = vmatpush1.bf16.msra.mxu0 0
      %2222 = vmatprep.mubr.bf16.mxu0 0
      %2223 = vmatmul.mubr.bf16.gmra.mrb[0].mxu0 %v1764
      %v2224 = vpop.f32.mrb[0].mxu0
      %v2225 = vadd.f32 0.0, %v2224
      %v2226 = vpop.f32.mrb[0].mxu0
      %v2227 = vpop.f32.mrb[0].mxu0
      %v2228 = vadd.f32 0.0, %v2227
      %v2229 = vpop.f32.mrb[0].mxu0
      %2230 = vmatprep.mubr.bf16.mxu0 0
      %2231 = vmatmul.mubr.bf16.gmra.mrb[0].mxu0 %v1765
      %v2232 = vpop.f32.mrb[0].mxu0
      %v2233 = vadd.f32 0.0, %v2232
      %v2234 = vpop.f32.mrb[0].mxu0
      %v2235 = vpop.f32.mrb[0].mxu0
      %v2236 = vadd.f32 0.0, %v2235
      %v2237 = vpop.f32.mrb[0].mxu0
      %2238 = vmatprep.mubr.bf16.mxu0 0
      %2239 = vmatmul.mubr.bf16.gmra.mrb[0].mxu0 %v1766
      %v2240 = vpop.f32.mrb[0].mxu0
      %v2241 = vadd.f32 0.0, %v2240
      %v2242 = vpop.f32.mrb[0].mxu0
      %v2243 = vpop.f32.mrb[0].mxu0
      %v2244 = vadd.f32 0.0, %v2243
      %v2245 = vpop.f32.mrb[0].mxu0
      %2246 = vmatprep.mubr.bf16.mxu0 0
      %2247 = vmatmul.mubr.bf16.gmra.mrb[0].mxu0 %v1767
      %v2248 = vpop.f32.mrb[0].mxu0
      %v2249 = vadd.f32 0.0, %v2248
      %v2250 = vpop.f32.mrb[0].mxu0
      %v2251 = vpop.f32.mrb[0].mxu0
      %v2252 = vadd.f32 0.0, %v2251
      %v2253 = vpop.f32.mrb[0].mxu0
      %2254 = vmatprep.mubr.bf16.mxu0 0
      %2255 = vmatmul.mubr.bf16.gmra.mrb[0].mxu0 %v1768
      %v2256 = vpop.f32.mrb[0].mxu0
      %v2257 = vadd.f32 0.0, %v2256
      %v2258 = vpop.f32.mrb[0].mxu0
      %v2259 = vpop.f32.mrb[0].mxu0
      %v2260 = vadd.f32 0.0, %v2259
      %v2261 = vpop.f32.mrb[0].mxu0
      %2262 = vmatprep.mubr.bf16.mxu0 0
      %2263 = vmatmul.mubr.bf16.gmra.mrb[0].mxu0 %v1769
      %v2264 = vpop.f32.mrb[0].mxu0
      %v2265 = vadd.f32 0.0, %v2264
      %v2266 = vpop.f32.mrb[0].mxu0
      %v2267 = vpop.f32.mrb[0].mxu0
      %v2268 = vadd.f32 0.0, %v2267
      %v2269 = vpop.f32.mrb[0].mxu0
      %2270 = vmatprep.mubr.bf16.mxu0 0
      %2271 = vmatmul.mubr.bf16.gmra.mrb[0].mxu0 %v1958
      %v2272 = vpop.f32.mrb[0].mxu0
      %v2273 = vadd.f32 0.0, %v2272
      %v2274 = vpop.f32.mrb[0].mxu0
      %v2275 = vpop.f32.mrb[0].mxu0
      %v2276 = vadd.f32 0.0, %v2275
      %v2277 = vpop.f32.mrb[0].mxu0
      %2278 = vmatprep.mubr.bf16.mxu0 0
      %2279 = vmatmul.mubr.bf16.gmra.mrb[0].mxu0 %v2140
      %v2280 = vpop.f32.mrb[0].mxu0
      %v2281 = vadd.f32 0.0, %v2280
      %v2282 = vpop.f32.mrb[0].mxu0
      %v2283 = vpop.f32.mrb[0].mxu0
      %v2284 = vadd.f32 0.0, %v2283
      %v2285 = vpop.f32.mrb[0].mxu0
      %2286 = vdwg.mxu0
      %v2287 = vadd.f32 %v2105, %v2225
      %v2288 = vadd.f32 %v2106, %v2228
      %v2289 = vadd.f32 %v2107, %v2233
      %v2290 = vadd.f32 %v2108, %v2236
      %v2291 = vadd.f32 %v2109, %v2241
      %v2292 = vadd.f32 %v2110, %v2244
      %v2293 = vadd.f32 %v2111, %v2249
      %v2294 = vadd.f32 %v2112, %v2252
      %v2295 = vadd.f32 %v2113, %v2257
      %v2296 = vadd.f32 %v2114, %v2260
      %v2297 = vadd.f32 %v2115, %v2265
      %v2298 = vadd.f32 %v2116, %v2268
      %v2299 = vadd.f32 %v2117, %v2273
      %v2300 = vadd.f32 %v2118, %v2276
      %v2301 = vadd.f32 %v2119, %v2281
      %v2302 = vadd.f32 %v2120, %v2284
      %v2303 = vld [vmem:[%s2] sm:$0x1]
      %v2305 = vlaneseq
      %v2306 = vshrl.u32 %v2305, 7
      %v2307 = vsub.s32 0, %v2306
      %v2308 = vrot.slane %v2303, %v2307
      %v2310 = vmul.f32 %v2287, %v2308
      %v2311 = vmul.f32 %v2288, %v2308
      %v2312 = vmul.f32 %v2289, %v2308
      %v2313 = vmul.f32 %v2290, %v2308
      %v2314 = vmul.f32 %v2291, %v2308
      %v2315 = vmul.f32 %v2292, %v2308
      %v2316 = vmul.f32 %v2293, %v2308
      %v2317 = vmul.f32 %v2294, %v2308
      %v2318 = vmul.f32 %v2295, %v2308
      %v2319 = vmul.f32 %v2296, %v2308
      %v2320 = vmul.f32 %v2297, %v2308
      %v2321 = vmul.f32 %v2298, %v2308
      %v2322 = vmul.f32 %v2299, %v2308
      %v2323 = vmul.f32 %v2300, %v2308
      %v2324 = vmul.f32 %v2301, %v2308
      %v2325 = vmul.f32 %v2302, %v2308
      %v2326 = vld [vmem:[%s3] sm:$0x1]
      %v2328 = vlaneseq
      %v2329 = vshrl.u32 %v2328, 7
      %v2330 = vsub.s32 0, %v2329
      %v2331 = vrot.slane %v2326, %v2330
      %v2333 = vadd.f32 %v2310, %v2331
      %v2334 = vadd.f32 %v2311, %v2331
      %v2335 = vadd.f32 %v2312, %v2331
      %v2336 = vadd.f32 %v2313, %v2331
      %v2337 = vadd.f32 %v2314, %v2331
      %v2338 = vadd.f32 %v2315, %v2331
      %v2339 = vadd.f32 %v2316, %v2331
      %v2340 = vadd.f32 %v2317, %v2331
      %v2341 = vadd.f32 %v2318, %v2331
      %v2342 = vadd.f32 %v2319, %v2331
      %v2343 = vadd.f32 %v2320, %v2331
      %v2344 = vadd.f32 %v2321, %v2331
      %v2345 = vadd.f32 %v2322, %v2331
      %v2346 = vadd.f32 %v2323, %v2331
      %v2347 = vadd.f32 %v2324, %v2331
      %v2348 = vadd.f32 %v2325, %v2331
      %v2349 = vmax.f32 %v2333, 0.0
      %v2350 = vmax.f32 %v2334, 0.0
      %v2351 = vmax.f32 %v2335, 0.0
      %v2352 = vmax.f32 %v2336, 0.0
      %v2353 = vmax.f32 %v2337, 0.0
      %v2354 = vmax.f32 %v2338, 0.0
      %v2355 = vmax.f32 %v2339, 0.0
      %v2356 = vmax.f32 %v2340, 0.0
      %v2357 = vmax.f32 %v2341, 0.0
      %v2358 = vmax.f32 %v2342, 0.0
      %v2359 = vmax.f32 %v2343, 0.0
      %v2360 = vmax.f32 %v2344, 0.0
      %v2361 = vmax.f32 %v2345, 0.0
      %v2362 = vmax.f32 %v2346, 0.0
      %v2363 = vmax.f32 %v2347, 0.0
      %v2364 = vmax.f32 %v2348, 0.0
      %v2365 = vpack.c.bf16 %v2350, %v2349
      %v2366 = vpack.c.bf16 %v2352, %v2351
      %v2367 = vpack.c.bf16 %v2354, %v2353
      %v2368 = vpack.c.bf16 %v2356, %v2355
      %v2369 = vpack.c.bf16 %v2358, %v2357
      %v2370 = vpack.c.bf16 %v2360, %v2359
      %v2371 = vpack.c.bf16 %v2362, %v2361
      %v2372 = vpack.c.bf16 %v2364, %v2363
      %v2381 = vunpack.c.l.b16 %v2365
      %v2382 = vunpack.c.h.b16 %v2365
      %v2383 = vunpack.c.l.b16 %v2366
      %v2384 = vunpack.c.h.b16 %v2366
      %v2385 = vunpack.c.l.b16 %v2367
      %v2386 = vunpack.c.h.b16 %v2367
      %v2387 = vunpack.c.l.b16 %v2368
      %v2388 = vunpack.c.h.b16 %v2368
      %v2389 = vunpack.c.l.b16 %v2369
      %v2390 = vunpack.c.h.b16 %v2369
      %v2391 = vunpack.c.l.b16 %v2370
      %v2392 = vunpack.c.h.b16 %v2370
      %v2393 = vunpack.c.l.b16 %v2371
      %v2394 = vunpack.c.h.b16 %v2371
      %v2395 = vunpack.c.l.b16 %v2372
      %v2396 = vunpack.c.h.b16 %v2372
      %v2397 = vpack.c.b16 %v2381, %v2381
      %v2398 = vpack.c.b16 %v2382, %v2382
      %v2399 = vpack.c.b16 %v2383, %v2383
      %v2400 = vpack.c.b16 %v2384, %v2384
      %v2401 = vpack.c.b16 %v2385, %v2385
      %v2402 = vpack.c.b16 %v2386, %v2386
      %v2403 = vpack.c.b16 %v2387, %v2387
      %v2404 = vpack.c.b16 %v2388, %v2388
      %v2405 = vpack.c.b16 %v2389, %v2389
      %v2406 = vpack.c.b16 %v2390, %v2390
      %v2407 = vpack.c.b16 %v2391, %v2391
      %v2408 = vpack.c.b16 %v2392, %v2392
      %v2409 = vpack.c.b16 %v2393, %v2393
      %v2410 = vpack.c.b16 %v2394, %v2394
      %v2411 = vpack.c.b16 %v2395, %v2395
      %v2412 = vpack.c.b16 %v2396, %v2396
      %2429 = vst [vmem:[%s235] sm:$0xf] %v2397
      %2430 = vst [vmem:[%s235 + $0x4] sm:$0xf] %v2398
      %2431 = vst [vmem:[%s235 + $0x8] sm:$0xf] %v2399
      %2432 = vst [vmem:[%s235 + $0xc] sm:$0xf] %v2400
      %2433 = vst [vmem:[%s235 + $0x10] sm:$0xf] %v2401
      %2434 = vst [vmem:[%s235 + $0x14] sm:$0xf] %v2402
      %2435 = vst [vmem:[%s235 + $0x18] sm:$0xf] %v2403
      %2436 = vst [vmem:[%s235 + $0x1c] sm:$0xf] %v2404
      %2437 = vst [vmem:[%s235 + $0x20] sm:$0xf] %v2405
      %2438 = vst [vmem:[%s235 + $0x24] sm:$0xf] %v2406
      %2439 = vst [vmem:[%s235 + $0x28] sm:$0xf] %v2407
      %2440 = vst [vmem:[%s235 + $0x2c] sm:$0xf] %v2408
      %2441 = vst [vmem:[%s235 + $0x30] sm:$0xf] %v2409
      %2442 = vst [vmem:[%s235 + $0x34] sm:$0xf] %v2410
      %2443 = vst [vmem:[%s235 + $0x38] sm:$0xf] %v2411
      %2444 = vst [vmem:[%s235 + $0x3c] sm:$0xf] %v2412
      %s2445 = smul.u32 8, %s20
      %p2446 = scmp.lt.s32.totalorder %s19, 1
      %s2447 = scalar_select %p2446, %s19, 1
      %p2448 = scmp.lt.s32.totalorder %s2445, 15
      %s2449 = scalar_select %p2448, %s2445, 15
      %s2450 = smul.addr %s2449, 2
      %s2451 = smul.addr %s2447, 32
      %s2452 = sadd.s32 %s2450, %s2451
      %s2453 = smul.addr %s2452, 4
      %s2454 = scalar_lea.vmem %s4, %s2453
      // Predicated region
      $region37: #{up_forward.5} parent=35 // pred_check
        %p2455 = pneg %p140
      $region38: #{up_forward.5} parent=35 // pred_check_branch
        %2457 = sbr.rel (%p2455) target = $region40
      $region39: #{up_forward.5} parent=35 // pred_region
        %s2458 = smul.u32 8, %s20
      $region40: #{up_forward.5} parent=35 // pred_fallthru
        _
    $region36: #{up_forward.5} parent=5 // pred_fallthru
      _
    %p2459 = scmp.le.s32.totalorder 2, %s10
    // Predicated region
    $region41: #{up_forward.5} parent=5 // pred_check
      %p2460 = pneg %p2459
    $region42: #{up_forward.5} parent=5 // pred_check_branch
      %2462 = sbr.rel (%p2460) target = $region44
    $region43: #{up_forward.5} parent=5 // pred_region
      %s2463 = ssub.s32 %s10, 2
      // Predicated region
      $region45: #{up_forward.5} parent=43 // pred_check
        %p2464 = pneg %p146
      $region46: #{up_forward.5} parent=43 // pred_check_branch
        %2466 = sbr.rel (%p2464) target = $region48
      $region47: #{up_forward.5} parent=43 // pred_region
        %s2467 = smul.u32 8, %s22
        %p2468 = scmp.lt.s32.totalorder %s21, 1
        %s2469 = scalar_select %p2468, %s21, 1
        %p2470 = scmp.lt.s32.totalorder %s2467, 15
        %s2471 = scalar_select %p2470, %s2467, 15
        %s2472 = smul.addr %s2471, 2
        %s2473 = smul.addr %s2469, 32
        %s2474 = sadd.s32 %s2472, %s2473
        %s2475 = smul.addr %s2474, 4
        %s2476 = scalar_lea.vmem %s4, %s2475
      $region48: #{up_forward.5} parent=43 // pred_fallthru
        _
    $region44: #{up_forward.5} parent=5 // pred_fallthru
      _
  $region6: #{up_forward.5} parent=0 // loop_footer
    %s14 = sadd.s32 1, %s10
  $region7: #{up_forward.5} parent=0 // loop_footer_branch
    %9 = sbr.rel target = $region3
  $region8: #{up_forward.5} parent=0 // loop_exit
    _

// kernel: up_forward.4
$region0: #{up_forward.4}
  #allocation0 [shape = 'u32[]', space=smem, size = 0x4, offset = 0x4, fixed_abs, tag = 'smem constant byte address 0x4 - core index']
  #allocation1 [shape = 'u32[144,128]{1,0:T(1,128)}', space=vmem, size = 0x12000, scoped, tag = 'internal scratch']
  %s0 = inlined_call_operand.vmem [shape: bf16[4,10,18,128], index: 0, kind: input, shape index: {}]
  %s1 = inlined_call_operand.vmem [shape: bf16[4,10,18,128], index: 1, kind: input, shape index: {}]
  %s2 = inlined_call_operand.vmem [shape: bf16[9,128,128], index: 2, kind: input, shape index: {}]
  %s3 = inlined_call_operand.vmem [shape: bf16[9,128,128], index: 3, kind: input, shape index: {}]
  %s4 = inlined_call_operand.vmem [shape: f32[1,128], index: 4, kind: input, shape index: {}]
  %s5 = inlined_call_operand.vmem [shape: f32[1,128], index: 5, kind: input, shape index: {}]
  %s6 = inlined_call_operand.vmem [shape: bf16[2,16,16,128], index: 6, kind: output, shape index: {}]
  %s7 = sld [smem:[#allocation0]]
  $region57: #{up_forward.4} parent=0
    _
  %s9 = ssub.s32 1, %s7
  %s10 = scalar_select 0, %s9, %s7
  loop: start=0, step=1, limit=6
  $region2: #{up_forward.4} parent=0 // loop_pre_header
    _
  $region3: #{up_forward.4} parent=0 // loop_header
    %s12 = sphi 0, %s16
    %p13 = scmp.ge.s32.totalorder %s12, 6
    %s19 = sphi 0, %s31
    %s20 = sphi 0, %s27
    %s21 = sphi 0, %s19
    %s22 = sphi 0, %s20
    %s23 = sphi 0, %s21
    %s24 = sphi 0, %s22
    %s38 = sphi 0, %s40
    %s41 = sphi 0, %s38
    %s42 = sphi 0, %s41
    %s58 = sphi 0, %s42
    %s68 = sphi 0, %s70
    %s71 = sphi 0, %s68
    %s72 = sphi 0, %s71
    %s88 = sphi 0, %s72
    %s92 = sphi 0, %s92
    %s94 = sphi 0, %s92
    %s95 = sphi 0, %s94
    %s109 = sphi 0, %s95
    %s113 = sphi 0, %s113
    %s115 = sphi 0, %s113
    %s116 = sphi 0, %s115
    %s130 = sphi 0, %s116
    %s134 = sphi 0, %s134
    %s136 = sphi 0, %s134
    %s137 = sphi 0, %s136
    %s151 = sphi 0, %s137
    %s155 = sphi 0, %s155
    %s157 = sphi 0, %s155
    %s158 = sphi 0, %s157
    %s172 = sphi 0, %s158
    %s180 = sphi 0, %s182
    %s183 = sphi 0, %s180
    %s184 = sphi 0, %s183
    %s200 = sphi 0, %s184
  $region4: #{up_forward.4} parent=0 // loop_header_branch
    %15 = sbr.rel (%p13) target = $region8
  $region5: #{up_forward.4} parent=0 // loop_body
    %s17 = ssub.s32 %s12, 1
    %s18 = ssub.s32 %s12, 2
    %s25 = sadd.s32 1, %s20
    %p26 = scmp.ge.s32.totalorder %s25, 2
    %s27 = scalar_select %p26, 0, %s25
    %s28 = sadd.s32 1, %s19
    %s29 = scalar_select %p26, %s28, %s19
    %p30 = scmp.ge.s32.totalorder %s29, 2
    %s31 = scalar_select %p30, 0, %s29
    %s32 = smul.u32 %s19, 2
    %s33 = sadd.s32 %s32, %s20
    %s34 = smul.u32 %s31, 2
    %s35 = sadd.s32 %s34, %s27
    %s36 = ssub.s32 %s33, %s35
    %p37 = scmp.eq.s32.totalorder %s36, 0
    %s39 = sadd.s32 %s38, 1
    %s40 = scalar_select %p37, %s38, %s39
    %p43 = pneg %p37
    %p44 = scmp.eq.s32.totalorder %s12, 3
    %p45 = por %p43, %p44
    %p46 = scmp.ne.s32.totalorder %s38, %s41
    %p47 = scmp.eq.s32.totalorder %s12, 0
    %p48 = por %p46, %p47
    %p49 = scmp.ne.s32.totalorder %s38, %s41
    %p50 = scmp.eq.s32.totalorder %s17, 3
    %p51 = por %p49, %p50
    %p52 = scmp.ne.s32.totalorder %s41, %s42
    %p53 = scmp.eq.s32.totalorder %s17, 0
    %p54 = por %p52, %p53
    %p55 = scmp.ne.s32.totalorder %s41, %s42
    %p56 = scmp.eq.s32.totalorder %s18, 3
    %p57 = por %p55, %p56
    %p59 = scmp.ne.s32.totalorder %s42, %s58
    %p60 = scmp.eq.s32.totalorder %s18, 0
    %p61 = por %p59, %p60
    %s62 = smul.u32 %s19, 2
    %s63 = sadd.s32 %s62, %s20
    %s64 = smul.u32 %s31, 2
    %s65 = sadd.s32 %s64, %s27
    %s66 = ssub.s32 %s63, %s65
    %p67 = scmp.eq.s32.totalorder %s66, 0
    %s69 = sadd.s32 %s68, 1
    %s70 = scalar_select %p67, %s68, %s69
    %p73 = pneg %p67
    %p74 = scmp.eq.s32.totalorder %s12, 3
    %p75 = por %p73, %p74
    %p76 = scmp.ne.s32.totalorder %s68, %s71
    %p77 = scmp.eq.s32.totalorder %s12, 0
    %p78 = por %p76, %p77
    %p79 = scmp.ne.s32.totalorder %s68, %s71
    %p80 = scmp.eq.s32.totalorder %s17, 3
    %p81 = por %p79, %p80
    %p82 = scmp.ne.s32.totalorder %s71, %s72
    %p83 = scmp.eq.s32.totalorder %s17, 0
    %p84 = por %p82, %p83
    %p85 = scmp.ne.s32.totalorder %s71, %s72
    %p86 = scmp.eq.s32.totalorder %s18, 3
    %p87 = por %p85, %p86
    %p89 = scmp.ne.s32.totalorder %s72, %s88
    %p90 = scmp.eq.s32.totalorder %s18, 0
    %p91 = por %p89, %p90
    %s93 = sadd.s32 %s92, 1
    %p96 = scmp.eq.s32.totalorder %s12, 3
    %p97 = scmp.ne.s32.totalorder %s92, %s94
    %p98 = scmp.eq.s32.totalorder %s12, 0
    %p99 = por %p97, %p98
    %p100 = scmp.ne.s32.totalorder %s92, %s94
    %p101 = scmp.eq.s32.totalorder %s17, 3
    %p102 = por %p100, %p101
    %p103 = scmp.ne.s32.totalorder %s94, %s95
    %p104 = scmp.eq.s32.totalorder %s17, 0
    %p105 = por %p103, %p104
    %p106 = scmp.ne.s32.totalorder %s94, %s95
    %p107 = scmp.eq.s32.totalorder %s18, 3
    %p108 = por %p106, %p107
    %p110 = scmp.ne.s32.totalorder %s95, %s109
    %p111 = scmp.eq.s32.totalorder %s18, 0
    %p112 = por %p110, %p111
    %s114 = sadd.s32 %s113, 1
    %p117 = scmp.eq.s32.totalorder %s12, 3
    %p118 = scmp.ne.s32.totalorder %s113, %s115
    %p119 = scmp.eq.s32.totalorder %s12, 0
    %p120 = por %p118, %p119
    %p121 = scmp.ne.s32.totalorder %s113, %s115
    %p122 = scmp.eq.s32.totalorder %s17, 3
    %p123 = por %p121, %p122
    %p124 = scmp.ne.s32.totalorder %s115, %s116
    %p125 = scmp.eq.s32.totalorder %s17, 0
    %p126 = por %p124, %p125
    %p127 = scmp.ne.s32.totalorder %s115, %s116
    %p128 = scmp.eq.s32.totalorder %s18, 3
    %p129 = por %p127, %p128
    %p131 = scmp.ne.s32.totalorder %s116, %s130
    %p132 = scmp.eq.s32.totalorder %s18, 0
    %p133 = por %p131, %p132
    %s135 = sadd.s32 %s134, 1
    %p138 = scmp.eq.s32.totalorder %s12, 3
    %p139 = scmp.ne.s32.totalorder %s134, %s136
    %p140 = scmp.eq.s32.totalorder %s12, 0
    %p141 = por %p139, %p140
    %p142 = scmp.ne.s32.totalorder %s134, %s136
    %p143 = scmp.eq.s32.totalorder %s17, 3
    %p144 = por %p142, %p143
    %p145 = scmp.ne.s32.totalorder %s136, %s137
    %p146 = scmp.eq.s32.totalorder %s17, 0
    %p147 = por %p145, %p146
    %p148 = scmp.ne.s32.totalorder %s136, %s137
    %p149 = scmp.eq.s32.totalorder %s18, 3
    %p150 = por %p148, %p149
    %p152 = scmp.ne.s32.totalorder %s137, %s151
    %p153 = scmp.eq.s32.totalorder %s18, 0
    %p154 = por %p152, %p153
    %s156 = sadd.s32 %s155, 1
    %p159 = scmp.eq.s32.totalorder %s12, 3
    %p160 = scmp.ne.s32.totalorder %s155, %s157
    %p161 = scmp.eq.s32.totalorder %s12, 0
    %p162 = por %p160, %p161
    %p163 = scmp.ne.s32.totalorder %s155, %s157
    %p164 = scmp.eq.s32.totalorder %s17, 3
    %p165 = por %p163, %p164
    %p166 = scmp.ne.s32.totalorder %s157, %s158
    %p167 = scmp.eq.s32.totalorder %s17, 0
    %p168 = por %p166, %p167
    %p169 = scmp.ne.s32.totalorder %s157, %s158
    %p170 = scmp.eq.s32.totalorder %s18, 3
    %p171 = por %p169, %p170
    %p173 = scmp.ne.s32.totalorder %s158, %s172
    %p174 = scmp.eq.s32.totalorder %s18, 0
    %p175 = por %p173, %p174
    %s176 = ssub.s32 %s19, %s31
    %s177 = ssub.s32 %s20, %s27
    %s178 = sor.u32 %s176, %s177
    %p179 = scmp.eq.s32.totalorder %s178, 0
    %s181 = sadd.s32 %s180, 1
    %s182 = scalar_select %p179, %s180, %s181
    %p185 = pneg %p179
    %p186 = scmp.eq.s32.totalorder %s12, 3
    %p187 = por %p185, %p186
    %p188 = scmp.ne.s32.totalorder %s180, %s183
    %p189 = scmp.eq.s32.totalorder %s12, 0
    %p190 = por %p188, %p189
    %p191 = scmp.ne.s32.totalorder %s180, %s183
    %p192 = scmp.eq.s32.totalorder %s17, 3
    %p193 = por %p191, %p192
    %p194 = scmp.ne.s32.totalorder %s183, %s184
    %p195 = scmp.eq.s32.totalorder %s17, 0
    %p196 = por %p194, %p195
    %p197 = scmp.ne.s32.totalorder %s183, %s184
    %p198 = scmp.eq.s32.totalorder %s18, 3
    %p199 = por %p197, %p198
    %p201 = scmp.ne.s32.totalorder %s184, %s200
    %p202 = scmp.eq.s32.totalorder %s18, 0
    %p203 = por %p201, %p202
    %p204 = scmp.le.s32.totalorder 1, %s12
    %p205 = scmp.lt.s32.totalorder %s12, 5
    %p206 = pnand %p204, %p205
    %p207 = pneg %p206
    // Predicated region
    $region9: #{up_forward.4} parent=5 // pred_check
      _
    $region10: #{up_forward.4} parent=5 // pred_check_branch
      %209 = sbr.rel (%p206) target = $region12
    $region11: #{up_forward.4} parent=5 // pred_region
      %s210 = ssub.s32 %s12, 1
      // Predicated region
      $region13: #{up_forward.4} parent=11 // pred_check
        %p211 = pneg %p105
      $region14: #{up_forward.4} parent=11 // pred_check_branch
        %213 = sbr.rel (%p211) target = $region16
      $region15: #{up_forward.4} parent=11 // pred_region
        _
      $region16: #{up_forward.4} parent=11 // pred_fallthru
        _
      // Predicated region
      $region17: #{up_forward.4} parent=11 // pred_check
        %p214 = pneg %p126
      $region18: #{up_forward.4} parent=11 // pred_check_branch
        %216 = sbr.rel (%p214) target = $region20
      $region19: #{up_forward.4} parent=11 // pred_region
        _
      $region20: #{up_forward.4} parent=11 // pred_fallthru
        _
      // Predicated region
      $region21: #{up_forward.4} parent=11 // pred_check
        %p217 = pneg %p147
      $region22: #{up_forward.4} parent=11 // pred_check_branch
        %219 = sbr.rel (%p217) target = $region24
      $region23: #{up_forward.4} parent=11 // pred_region
        _
      $region24: #{up_forward.4} parent=11 // pred_fallthru
        _
      // Predicated region
      $region25: #{up_forward.4} parent=11 // pred_check
        %p220 = pneg %p168
      $region26: #{up_forward.4} parent=11 // pred_check_branch
        %222 = sbr.rel (%p220) target = $region28
      $region27: #{up_forward.4} parent=11 // pred_region
        _
      $region28: #{up_forward.4} parent=11 // pred_fallthru
        _
    $region12: #{up_forward.4} parent=5 // pred_fallthru
      _
    %p223 = scmp.lt.s32.totalorder %s12, 4
    // Predicated region
    $region29: #{up_forward.4} parent=5 // pred_check
      %p224 = pneg %p223
    $region30: #{up_forward.4} parent=5 // pred_check_branch
      %226 = sbr.rel (%p224) target = $region32
    $region31: #{up_forward.4} parent=5 // pred_region
      // Predicated region
      $region33: #{up_forward.4} parent=31 // pred_check
        %p227 = pneg %p48
      $region34: #{up_forward.4} parent=31 // pred_check_branch
        %229 = sbr.rel (%p227) target = $region36
      $region35: #{up_forward.4} parent=31 // pred_region
        %s230 = smul.u32 %s19, 2
        %s231 = sadd.s32 %s230, %s20
        %p232 = scmp.lt.s32.totalorder %s231, 3
        %s233 = scalar_select %p232, %s231, 3
        %s234 = smul.addr %s233, 30
        %s235 = smul.addr %s234, 4
        %s236 = scalar_lea.vmem %s0, %s235
        %s237 = smul.u32 %s19, 2
        %s238 = sadd.s32 %s237, %s20
      $region36: #{up_forward.4} parent=31 // pred_fallthru
        _
      // Predicated region
      $region37: #{up_forward.4} parent=31 // pred_check
        %p239 = pneg %p78
      $region38: #{up_forward.4} parent=31 // pred_check_branch
        %241 = sbr.rel (%p239) target = $region40
      $region39: #{up_forward.4} parent=31 // pred_region
        %s242 = smul.u32 %s19, 2
        %s243 = sadd.s32 %s242, %s20
        %p244 = scmp.lt.s32.totalorder %s243, 3
        %s245 = scalar_select %p244, %s243, 3
        %s246 = smul.addr %s245, 30
        %s247 = smul.addr %s246, 4
        %s248 = scalar_lea.vmem %s1, %s247
        %s249 = smul.u32 %s19, 2
        %s250 = sadd.s32 %s249, %s20
      $region40: #{up_forward.4} parent=31 // pred_fallthru
        _
    $region32: #{up_forward.4} parent=5 // pred_fallthru
      _
    %p251 = scmp.le.s32.totalorder 1, %s12
    %p252 = scmp.lt.s32.totalorder %s12, 5
    %p253 = pnand %p251, %p252
    %p254 = pneg %p253
    // Predicated region
    $region41: #{up_forward.4} parent=5 // pred_check
      _
    $region42: #{up_forward.4} parent=5 // pred_check_branch
      %256 = sbr.rel (%p253) target = $region44
    $region43: #{up_forward.4} parent=5 // pred_region
      %s257 = ssub.s32 %s12, 1
      %s258 = smul.u32 %s21, 2
      %s259 = sadd.s32 %s258, %s22
      %p260 = scmp.lt.s32.totalorder %s259, 3
      %s261 = scalar_select %p260, %s259, 3
      %s262 = smul.addr %s261, 30
      %s263 = smul.addr %s262, 4
      %s264 = scalar_lea.vmem %s0, %s263
      %p265 = pneg %p54
      %p266 = pneg %p51
      %s267 = smul.u32 %s21, 2
      %s268 = sadd.s32 %s267, %s22
      %p269 = scmp.lt.s32.totalorder %s268, 3
      %s270 = scalar_select %p269, %s268, 3
      %s271 = smul.addr %s270, 30
      %s272 = smul.addr %s271, 4
      %s273 = scalar_lea.vmem %s1, %s272
      %p274 = pneg %p84
      %p275 = pneg %p81
      %p276 = pneg %p105
      %p277 = pneg %p102
      %p278 = pneg %p126
      %p279 = pneg %p123
      %p280 = pneg %p147
      %p281 = pneg %p144
      %p282 = pneg %p168
      %p283 = pneg %p165
      %p284 = pneg %p196
      %p285 = pneg %p193
      %s286 = smul.u32 8, %s22
      %p287 = scmp.lt.s32.totalorder %s21, 1
      %s288 = scalar_select %p287, %s21, 1
      %p289 = scmp.lt.s32.totalorder %s286, 15
      %s290 = scalar_select %p289, %s286, 15
      %s291 = smul.addr %s290, 2
      %s292 = smul.addr %s288, 32
      %s293 = sadd.s32 %s291, %s292
      %s294 = smul.addr %s293, 4
      %s295 = scalar_lea.vmem %s6, %s294
      %s296 = smul.u32 %s21, 2
      %s297 = sadd.s32 %s296, %s22
      %p298 = scmp.lt.s32.totalorder %s297, 3
      %s299 = scalar_select %p298, %s297, 3
      %s300 = smul.addr %s299, 30
      %s301 = smul.addr %s300, 4
      %s302 = scalar_lea.vmem %s0, %s301
      %s303 = smul.u32 %s21, 2
      %s304 = sadd.s32 %s303, %s22
      %s305 = smul.u32 %s21, 2
      %s306 = sadd.s32 %s305, %s22
      %p307 = scmp.lt.s32.totalorder %s306, 3
      %s308 = scalar_select %p307, %s306, 3
      %s309 = smul.addr %s308, 30
      %s310 = smul.addr %s309, 4
      %s311 = scalar_lea.vmem %s1, %s310
      %s312 = smul.u32 %s21, 2
      %s313 = sadd.s32 %s312, %s22
      %s314 = smul.u32 8, %s22
      %p315 = scmp.lt.s32.totalorder %s21, 1
      %s316 = scalar_select %p315, %s21, 1
      %p317 = scmp.lt.s32.totalorder %s314, 15
      %s318 = scalar_select %p317, %s314, 15
      %s319 = smul.addr %s318, 2
      %s320 = smul.addr %s316, 32
      %s321 = sadd.s32 %s319, %s320
      %s322 = smul.addr %s321, 4
      %s323 = scalar_lea.vmem %s6, %s322
      %s324 = smul.u32 8, %s22
      %v326 = vld [vmem:[%s302] sm:$0xf]
      %v327 = vld [vmem:[%s302 + $0x4] sm:$0xf]
      %v328 = vld [vmem:[%s302 + $0x8] sm:$0x1]
      %v329 = vld [vmem:[%s302 + $0xc] sm:$0xf]
      %v330 = vld [vmem:[%s302 + $0x10] sm:$0xf]
      %v331 = vld [vmem:[%s302 + $0x14] sm:$0x1]
      %v332 = vld [vmem:[%s302 + $0x18] sm:$0xf]
      %v333 = vld [vmem:[%s302 + $0x1c] sm:$0xf]
      %v334 = vld [vmem:[%s302 + $0x20] sm:$0x1]
      %v335 = vld [vmem:[%s302 + $0x24] sm:$0xf]
      %v336 = vld [vmem:[%s302 + $0x28] sm:$0xf]
      %v337 = vld [vmem:[%s302 + $0x2c] sm:$0x1]
      %v338 = vld [vmem:[%s302 + $0x30] sm:$0xf]
      %v339 = vld [vmem:[%s302 + $0x34] sm:$0xf]
      %v340 = vld [vmem:[%s302 + $0x38] sm:$0x1]
      %v341 = vld [vmem:[%s302 + $0x3c] sm:$0xf]
      %v342 = vld [vmem:[%s302 + $0x40] sm:$0xf]
      %v343 = vld [vmem:[%s302 + $0x44] sm:$0x1]
      %v344 = vld [vmem:[%s302 + $0x48] sm:$0xf]
      %v345 = vld [vmem:[%s302 + $0x4c] sm:$0xf]
      %v346 = vld [vmem:[%s302 + $0x50] sm:$0x1]
      %v347 = vld [vmem:[%s302 + $0x54] sm:$0xf]
      %v348 = vld [vmem:[%s302 + $0x58] sm:$0xf]
      %v349 = vld [vmem:[%s302 + $0x5c] sm:$0x1]
      %v350 = vld [vmem:[%s302 + $0x60] sm:$0xf]
      %v351 = vld [vmem:[%s302 + $0x64] sm:$0xf]
      %v352 = vld [vmem:[%s302 + $0x68] sm:$0x1]
      %v353 = vld [vmem:[%s302 + $0x6c] sm:$0xf]
      %v354 = vld [vmem:[%s302 + $0x70] sm:$0xf]
      %v355 = vld [vmem:[%s302 + $0x74] sm:$0x1]
      %v356 = vld [vmem:[%s2] sm:$0xf]
      %v357 = vld [vmem:[%s2 + $0x4] sm:$0xf]
      %v358 = vld [vmem:[%s2 + $0x8] sm:$0xf]
      %v359 = vld [vmem:[%s2 + $0xc] sm:$0xf]
      %v360 = vld [vmem:[%s2 + $0x10] sm:$0xf]
      %v361 = vld [vmem:[%s2 + $0x14] sm:$0xf]
      %v362 = vld [vmem:[%s2 + $0x18] sm:$0xf]
      %v363 = vld [vmem:[%s2 + $0x1c] sm:$0xf]
      %v364 = vld [vmem:[%s2 + $0x20] sm:$0xf]
      %v365 = vld [vmem:[%s2 + $0x24] sm:$0xf]
      %v366 = vld [vmem:[%s2 + $0x28] sm:$0xf]
      %v367 = vld [vmem:[%s2 + $0x2c] sm:$0xf]
      %v368 = vld [vmem:[%s2 + $0x30] sm:$0xf]
      %v369 = vld [vmem:[%s2 + $0x34] sm:$0xf]
      %v370 = vld [vmem:[%s2 + $0x38] sm:$0xf]
      %v371 = vld [vmem:[%s2 + $0x3c] sm:$0xf]
      %s372 = scalar_lea.vmem %s2, 192
      %v373 = vld [vmem:[%s372] sm:$0xf]
      %v374 = vld [vmem:[%s372 + $0x4] sm:$0xf]
      %v375 = vld [vmem:[%s372 + $0x8] sm:$0xf]
      %v376 = vld [vmem:[%s372 + $0xc] sm:$0xf]
      %v377 = vld [vmem:[%s372 + $0x10] sm:$0xf]
      %v378 = vld [vmem:[%s372 + $0x14] sm:$0xf]
      %v379 = vld [vmem:[%s372 + $0x18] sm:$0xf]
      %v380 = vld [vmem:[%s372 + $0x1c] sm:$0xf]
      %v381 = vld [vmem:[%s372 + $0x20] sm:$0xf]
      %v382 = vld [vmem:[%s372 + $0x24] sm:$0xf]
      %v383 = vld [vmem:[%s372 + $0x28] sm:$0xf]
      %v384 = vld [vmem:[%s372 + $0x2c] sm:$0xf]
      %v385 = vld [vmem:[%s372 + $0x30] sm:$0xf]
      %v386 = vld [vmem:[%s372 + $0x34] sm:$0xf]
      %v387 = vld [vmem:[%s372 + $0x38] sm:$0xf]
      %v388 = vld [vmem:[%s372 + $0x3c] sm:$0xf]
      %v405 = vunpack.c.l.b16 %v329
      %v406 = vunpack.c.l.b16 %v330
      %v407 = vunpack.c.l.b16 %v332
      %v408 = vunpack.c.l.b16 %v333
      %v409 = vunpack.c.l.b16 %v335
      %v410 = vunpack.c.l.b16 %v336
      %v411 = vunpack.c.l.b16 %v338
      %v412 = vunpack.c.l.b16 %v339
      %v413 = vunpack.c.l.b16 %v341
      %v414 = vunpack.c.l.b16 %v342
      %v415 = vunpack.c.l.b16 %v344
      %v416 = vunpack.c.l.b16 %v345
      %v417 = vunpack.c.l.b16 %v347
      %v418 = vunpack.c.l.b16 %v348
      %v419 = vunpack.c.l.b16 %v350
      %v420 = vunpack.c.l.b16 %v351
      %v421 = vpack.c.b16 %v406, %v405
      %v422 = vpack.c.b16 %v408, %v407
      %v423 = vpack.c.b16 %v410, %v409
      %v424 = vpack.c.b16 %v412, %v411
      %v425 = vpack.c.b16 %v414, %v413
      %v426 = vpack.c.b16 %v416, %v415
      %v427 = vpack.c.b16 %v418, %v417
      %v428 = vpack.c.b16 %v420, %v419
      %v453 = vunpack.c.l.b16 %v373
      %v454 = vunpack.c.l.b16 %v374
      %v455 = vunpack.c.l.b16 %v375
      %v456 = vunpack.c.l.b16 %v376
      %v457 = vunpack.c.l.b16 %v377
      %v458 = vunpack.c.l.b16 %v378
      %v459 = vunpack.c.l.b16 %v379
      %v460 = vunpack.c.l.b16 %v380
      %v461 = vunpack.c.l.b16 %v381
      %v462 = vunpack.c.l.b16 %v382
      %v463 = vunpack.c.l.b16 %v383
      %v464 = vunpack.c.l.b16 %v384
      %v465 = vunpack.c.l.b16 %v385
      %v466 = vunpack.c.l.b16 %v386
      %v467 = vunpack.c.l.b16 %v387
      %v468 = vunpack.c.l.b16 %v388
      %v469 = vpack.c.b16 %v454, %v453
      %v470 = vpack.c.b16 %v456, %v455
      %v471 = vpack.c.b16 %v458, %v457
      %v472 = vpack.c.b16 %v460, %v459
      %v473 = vpack.c.b16 %v462, %v461
      %v474 = vpack.c.b16 %v464, %v463
      %v475 = vpack.c.b16 %v466, %v465
      %v476 = vpack.c.b16 %v468, %v467
      %485 = vmatprep.subr.bf16.mxu0 0
      %486 = vmatpush1.bf16.msra.mxu0 %v469
      %487 = vmatprep.subr.bf16.mxu0 0
      %488 = vmatpush1.bf16.msra.mxu0 %v470
      %489 = vmatprep.subr.bf16.mxu0 0
      %490 = vmatpush1.bf16.msra.mxu0 %v471
      %491 = vmatprep.subr.bf16.mxu0 0
      %492 = vmatpush1.bf16.msra.mxu0 %v472
      %493 = vmatprep.subr.bf16.mxu0 0
      %494 = vmatpush1.bf16.msra.mxu0 %v473
      %495 = vmatprep.subr.bf16.mxu0 0
      %496 = vmatpush1.bf16.msra.mxu0 %v474
      %497 = vmatprep.subr.bf16.mxu0 0
      %498 = vmatpush1.bf16.msra.mxu0 %v475
      %499 = vmatprep.subr.bf16.mxu0 0
      %500 = vmatpush1.bf16.msra.mxu0 %v476
      %501 = vmatprep.subr.bf16.mxu0 0
      %502 = vmatpush1.bf16.msra.mxu0 0
      %503 = vmatprep.subr.bf16.mxu0 0
      %504 = vmatpush1.bf16.msra.mxu0 0
      %505 = vmatprep.subr.bf16.mxu0 0
      %506 = vmatpush1.bf16.msra.mxu0 0
      %507 = vmatprep.subr.bf16.mxu0 0
      %508 = vmatpush1.bf16.msra.mxu0 0
      %509 = vmatprep.subr.bf16.mxu0 0
      %510 = vmatpush1.bf16.msra.mxu0 0
      %511 = vmatprep.subr.bf16.mxu0 0
      %512 = vmatpush1.bf16.msra.mxu0 0
      %513 = vmatprep.subr.bf16.mxu0 0
      %514 = vmatpush1.bf16.msra.mxu0 0
      %515 = vmatprep.subr.bf16.mxu0 0
      %516 = vmatpush1.bf16.msra.mxu0 0
      %517 = vmatprep.mubr.bf16.mxu0 0
      %518 = vmatmul.mubr.bf16.gmra.mrb[0].mxu0 %v421
      %v519 = vpop.f32.mrb[0].mxu0
      %v520 = vadd.f32 0.0, %v519
      %v521 = vpop.f32.mrb[0].mxu0
      %v522 = vpop.f32.mrb[0].mxu0
      %v523 = vadd.f32 0.0, %v522
      %v524 = vpop.f32.mrb[0].mxu0
      %525 = vmatprep.mubr.bf16.mxu0 0
      %526 = vmatmul.mubr.bf16.gmra.mrb[0].mxu0 %v422
      %v527 = vpop.f32.mrb[0].mxu0
      %v528 = vadd.f32 0.0, %v527
      %v529 = vpop.f32.mrb[0].mxu0
      %v530 = vpop.f32.mrb[0].mxu0
      %v531 = vadd.f32 0.0, %v530
      %v532 = vpop.f32.mrb[0].mxu0
      %533 = vmatprep.mubr.bf16.mxu0 0
      %534 = vmatmul.mubr.bf16.gmra.mrb[0].mxu0 %v423
      %v535 = vpop.f32.mrb[0].mxu0
      %v536 = vadd.f32 0.0, %v535
      %v537 = vpop.f32.mrb[0].mxu0
      %v538 = vpop.f32.mrb[0].mxu0
      %v539 = vadd.f32 0.0, %v538
      %v540 = vpop.f32.mrb[0].mxu0
      %541 = vmatprep.mubr.bf16.mxu0 0
      %542 = vmatmul.mubr.bf16.gmra.mrb[0].mxu0 %v424
      %v543 = vpop.f32.mrb[0].mxu0
      %v544 = vadd.f32 0.0, %v543
      %v545 = vpop.f32.mrb[0].mxu0
      %v546 = vpop.f32.mrb[0].mxu0
      %v547 = vadd.f32 0.0, %v546
      %v548 = vpop.f32.mrb[0].mxu0
      %549 = vmatprep.mubr.bf16.mxu0 0
      %550 = vmatmul.mubr.bf16.gmra.mrb[0].mxu0 %v425
      %v551 = vpop.f32.mrb[0].mxu0
      %v552 = vadd.f32 0.0, %v551
      %v553 = vpop.f32.mrb[0].mxu0
      %v554 = vpop.f32.mrb[0].mxu0
      %v555 = vadd.f32 0.0, %v554
      %v556 = vpop.f32.mrb[0].mxu0
      %557 = vmatprep.mubr.bf16.mxu0 0
      %558 = vmatmul.mubr.bf16.gmra.mrb[0].mxu0 %v426
      %v559 = vpop.f32.mrb[0].mxu0
      %v560 = vadd.f32 0.0, %v559
      %v561 = vpop.f32.mrb[0].mxu0
      %v562 = vpop.f32.mrb[0].mxu0
      %v563 = vadd.f32 0.0, %v562
      %v564 = vpop.f32.mrb[0].mxu0
      %565 = vmatprep.mubr.bf16.mxu0 0
      %566 = vmatmul.mubr.bf16.gmra.mrb[0].mxu0 %v427
      %v567 = vpop.f32.mrb[0].mxu0
      %v568 = vadd.f32 0.0, %v567
      %v569 = vpop.f32.mrb[0].mxu0
      %v570 = vpop.f32.mrb[0].mxu0
      %v571 = vadd.f32 0.0, %v570
      %v572 = vpop.f32.mrb[0].mxu0
      %573 = vmatprep.mubr.bf16.mxu0 0
      %574 = vmatmul.mubr.bf16.gmra.mrb[0].mxu0 %v428
      %v575 = vpop.f32.mrb[0].mxu0
      %v576 = vadd.f32 0.0, %v575
      %v577 = vpop.f32.mrb[0].mxu0
      %v578 = vpop.f32.mrb[0].mxu0
      %v579 = vadd.f32 0.0, %v578
      %v580 = vpop.f32.mrb[0].mxu0
      %581 = vdwg.mxu0
      %v584 = vunpack.c.l.b16 %v326
      %v585 = vunpack.c.l.b16 %v327
      %v586 = vpack.c.b16 %v585, %v584
      %v604 = vunpack.c.l.b16 %v356
      %v605 = vunpack.c.l.b16 %v357
      %v606 = vunpack.c.l.b16 %v358
      %v607 = vunpack.c.l.b16 %v359
      %v608 = vunpack.c.l.b16 %v360
      %v609 = vunpack.c.l.b16 %v361
      %v610 = vunpack.c.l.b16 %v362
      %v611 = vunpack.c.l.b16 %v363
      %v612 = vunpack.c.l.b16 %v364
      %v613 = vunpack.c.l.b16 %v365
      %v614 = vunpack.c.l.b16 %v366
      %v615 = vunpack.c.l.b16 %v367
      %v616 = vunpack.c.l.b16 %v368
      %v617 = vunpack.c.l.b16 %v369
      %v618 = vunpack.c.l.b16 %v370
      %v619 = vunpack.c.l.b16 %v371
      %v620 = vpack.c.b16 %v605, %v604
      %v621 = vpack.c.b16 %v607, %v606
      %v622 = vpack.c.b16 %v609, %v608
      %v623 = vpack.c.b16 %v611, %v610
      %v624 = vpack.c.b16 %v613, %v612
      %v625 = vpack.c.b16 %v615, %v614
      %v626 = vpack.c.b16 %v617, %v616
      %v627 = vpack.c.b16 %v619, %v618
      %636 = vmatprep.subr.bf16.mxu0 0
      %637 = vmatpush1.bf16.msra.mxu0 %v620
      %638 = vmatprep.subr.bf16.mxu0 0
      %639 = vmatpush1.bf16.msra.mxu0 %v621
      %640 = vmatprep.subr.bf16.mxu0 0
      %641 = vmatpush1.bf16.msra.mxu0 %v622
      %642 = vmatprep.subr.bf16.mxu0 0
      %643 = vmatpush1.bf16.msra.mxu0 %v623
      %644 = vmatprep.subr.bf16.mxu0 0
      %645 = vmatpush1.bf16.msra.mxu0 %v624
      %646 = vmatprep.subr.bf16.mxu0 0
      %647 = vmatpush1.bf16.msra.mxu0 %v625
      %648 = vmatprep.subr.bf16.mxu0 0
      %649 = vmatpush1.bf16.msra.mxu0 %v626
      %650 = vmatprep.subr.bf16.mxu0 0
      %651 = vmatpush1.bf16.msra.mxu0 %v627
      %652 = vmatprep.subr.bf16.mxu0 0
      %653 = vmatpush1.bf16.msra.mxu0 0
      %654 = vmatprep.subr.bf16.mxu0 0
      %655 = vmatpush1.bf16.msra.mxu0 0
      %656 = vmatprep.subr.bf16.mxu0 0
      %657 = vmatpush1.bf16.msra.mxu0 0
      %658 = vmatprep.subr.bf16.mxu0 0
      %659 = vmatpush1.bf16.msra.mxu0 0
      %660 = vmatprep.subr.bf16.mxu0 0
      %661 = vmatpush1.bf16.msra.mxu0 0
      %662 = vmatprep.subr.bf16.mxu0 0
      %663 = vmatpush1.bf16.msra.mxu0 0
      %664 = vmatprep.subr.bf16.mxu0 0
      %665 = vmatpush1.bf16.msra.mxu0 0
      %666 = vmatprep.subr.bf16.mxu0 0
      %667 = vmatpush1.bf16.msra.mxu0 0
      %668 = vmatprep.mubr.bf16.mxu0 0
      %669 = vmatmul.mubr.bf16.gmra.mrb[0].mxu0 %v586
      %v670 = vpop.f32.mrb[0].mxu0
      %v671 = vadd.f32 %v520, %v670
      %v672 = vpop.f32.mrb[0].mxu0
      %v673 = vpop.f32.mrb[0].mxu0
      %v674 = vadd.f32 %v523, %v673
      %v675 = vpop.f32.mrb[0].mxu0
      %676 = vmatprep.mubr.bf16.mxu0 0
      %677 = vmatmul.mubr.bf16.gmra.mrb[0].mxu0 %v421
      %v678 = vpop.f32.mrb[0].mxu0
      %v679 = vadd.f32 %v528, %v678
      %v680 = vpop.f32.mrb[0].mxu0
      %v681 = vpop.f32.mrb[0].mxu0
      %v682 = vadd.f32 %v531, %v681
      %v683 = vpop.f32.mrb[0].mxu0
      %684 = vmatprep.mubr.bf16.mxu0 0
      %685 = vmatmul.mubr.bf16.gmra.mrb[0].mxu0 %v422
      %v686 = vpop.f32.mrb[0].mxu0
      %v687 = vadd.f32 %v536, %v686
      %v688 = vpop.f32.mrb[0].mxu0
      %v689 = vpop.f32.mrb[0].mxu0
      %v690 = vadd.f32 %v539, %v689
      %v691 = vpop.f32.mrb[0].mxu0
      %692 = vmatprep.mubr.bf16.mxu0 0
      %693 = vmatmul.mubr.bf16.gmra.mrb[0].mxu0 %v423
      %v694 = vpop.f32.mrb[0].mxu0
      %v695 = vadd.f32 %v544, %v694
      %v696 = vpop.f32.mrb[0].mxu0
      %v697 = vpop.f32.mrb[0].mxu0
      %v698 = vadd.f32 %v547, %v697
      %v699 = vpop.f32.mrb[0].mxu0
      %700 = vmatprep.mubr.bf16.mxu0 0
      %701 = vmatmul.mubr.bf16.gmra.mrb[0].mxu0 %v424
      %v702 = vpop.f32.mrb[0].mxu0
      %v703 = vadd.f32 %v552, %v702
      %v704 = vpop.f32.mrb[0].mxu0
      %v705 = vpop.f32.mrb[0].mxu0
      %v706 = vadd.f32 %v555, %v705
      %v707 = vpop.f32.mrb[0].mxu0
      %708 = vmatprep.mubr.bf16.mxu0 0
      %709 = vmatmul.mubr.bf16.gmra.mrb[0].mxu0 %v425
      %v710 = vpop.f32.mrb[0].mxu0
      %v711 = vadd.f32 %v560, %v710
      %v712 = vpop.f32.mrb[0].mxu0
      %v713 = vpop.f32.mrb[0].mxu0
      %v714 = vadd.f32 %v563, %v713
      %v715 = vpop.f32.mrb[0].mxu0
      %716 = vmatprep.mubr.bf16.mxu0 0
      %717 = vmatmul.mubr.bf16.gmra.mrb[0].mxu0 %v426
      %v718 = vpop.f32.mrb[0].mxu0
      %v719 = vadd.f32 %v568, %v718
      %v720 = vpop.f32.mrb[0].mxu0
      %v721 = vpop.f32.mrb[0].mxu0
      %v722 = vadd.f32 %v571, %v721
      %v723 = vpop.f32.mrb[0].mxu0
      %724 = vmatprep.mubr.bf16.mxu0 0
      %725 = vmatmul.mubr.bf16.gmra.mrb[0].mxu0 %v427
      %v726 = vpop.f32.mrb[0].mxu0
      %v727 = vadd.f32 %v576, %v726
      %v728 = vpop.f32.mrb[0].mxu0
      %v729 = vpop.f32.mrb[0].mxu0
      %v730 = vadd.f32 %v579, %v729
      %v731 = vpop.f32.mrb[0].mxu0
      %732 = vdwg.mxu0
      %s733 = scalar_lea.vmem %s2, 384
      %v734 = vld [vmem:[%s733] sm:$0xf]
      %v735 = vld [vmem:[%s733 + $0x4] sm:$0xf]
      %v736 = vld [vmem:[%s733 + $0x8] sm:$0xf]
      %v737 = vld [vmem:[%s733 + $0xc] sm:$0xf]
      %v738 = vld [vmem:[%s733 + $0x10] sm:$0xf]
      %v739 = vld [vmem:[%s733 + $0x14] sm:$0xf]
      %v740 = vld [vmem:[%s733 + $0x18] sm:$0xf]
      %v741 = vld [vmem:[%s733 + $0x1c] sm:$0xf]
      %v742 = vld [vmem:[%s733 + $0x20] sm:$0xf]
      %v743 = vld [vmem:[%s733 + $0x24] sm:$0xf]
      %v744 = vld [vmem:[%s733 + $0x28] sm:$0xf]
      %v745 = vld [vmem:[%s733 + $0x2c] sm:$0xf]
      %v746 = vld [vmem:[%s733 + $0x30] sm:$0xf]
      %v747 = vld [vmem:[%s733 + $0x34] sm:$0xf]
      %v748 = vld [vmem:[%s733 + $0x38] sm:$0xf]
      %v749 = vld [vmem:[%s733 + $0x3c] sm:$0xf]
      %v752 = vunpack.c.l.b16 %v353
      %v753 = vunpack.c.l.b16 %v354
      %v754 = vpack.c.b16 %v753, %v752
      %v772 = vunpack.c.l.b16 %v734
      %v773 = vunpack.c.l.b16 %v735
      %v774 = vunpack.c.l.b16 %v736
      %v775 = vunpack.c.l.b16 %v737
      %v776 = vunpack.c.l.b16 %v738
      %v777 = vunpack.c.l.b16 %v739
      %v778 = vunpack.c.l.b16 %v740
      %v779 = vunpack.c.l.b16 %v741
      %v780 = vunpack.c.l.b16 %v742
      %v781 = vunpack.c.l.b16 %v743
      %v782 = vunpack.c.l.b16 %v744
      %v783 = vunpack.c.l.b16 %v745
      %v784 = vunpack.c.l.b16 %v746
      %v785 = vunpack.c.l.b16 %v747
      %v786 = vunpack.c.l.b16 %v748
      %v787 = vunpack.c.l.b16 %v749
      %v788 = vpack.c.b16 %v773, %v772
      %v789 = vpack.c.b16 %v775, %v774
      %v790 = vpack.c.b16 %v777, %v776
      %v791 = vpack.c.b16 %v779, %v778
      %v792 = vpack.c.b16 %v781, %v780
      %v793 = vpack.c.b16 %v783, %v782
      %v794 = vpack.c.b16 %v785, %v784
      %v795 = vpack.c.b16 %v787, %v786
      %804 = vmatprep.subr.bf16.mxu0 0
      %805 = vmatpush1.bf16.msra.mxu0 %v788
      %806 = vmatprep.subr.bf16.mxu0 0
      %807 = vmatpush1.bf16.msra.mxu0 %v789
      %808 = vmatprep.subr.bf16.mxu0 0
      %809 = vmatpush1.bf16.msra.mxu0 %v790
      %810 = vmatprep.subr.bf16.mxu0 0
      %811 = vmatpush1.bf16.msra.mxu0 %v791
      %812 = vmatprep.subr.bf16.mxu0 0
      %813 = vmatpush1.bf16.msra.mxu0 %v792
      %814 = vmatprep.subr.bf16.mxu0 0
      %815 = vmatpush1.bf16.msra.mxu0 %v793
      %816 = vmatprep.subr.bf16.mxu0 0
      %817 = vmatpush1.bf16.msra.mxu0 %v794
      %818 = vmatprep.subr.bf16.mxu0 0
      %819 = vmatpush1.bf16.msra.mxu0 %v795
      %820 = vmatprep.subr.bf16.mxu0 0
      %821 = vmatpush1.bf16.msra.mxu0 0
      %822 = vmatprep.subr.bf16.mxu0 0
      %823 = vmatpush1.bf16.msra.mxu0 0
      %824 = vmatprep.subr.bf16.mxu0 0
      %825 = vmatpush1.bf16.msra.mxu0 0
      %826 = vmatprep.subr.bf16.mxu0 0
      %827 = vmatpush1.bf16.msra.mxu0 0
      %828 = vmatprep.subr.bf16.mxu0 0
      %829 = vmatpush1.bf16.msra.mxu0 0
      %830 = vmatprep.subr.bf16.mxu0 0
      %831 = vmatpush1.bf16.msra.mxu0 0
      %832 = vmatprep.subr.bf16.mxu0 0
      %833 = vmatpush1.bf16.msra.mxu0 0
      %834 = vmatprep.subr.bf16.mxu0 0
      %835 = vmatpush1.bf16.msra.mxu0 0
      %836 = vmatprep.mubr.bf16.mxu0 0
      %837 = vmatmul.mubr.bf16.gmra.mrb[0].mxu0 %v422
      %v838 = vpop.f32.mrb[0].mxu0
      %v839 = vadd.f32 0.0, %v838
      %v840 = vpop.f32.mrb[0].mxu0
      %v841 = vpop.f32.mrb[0].mxu0
      %v842 = vadd.f32 0.0, %v841
      %v843 = vpop.f32.mrb[0].mxu0
      %844 = vmatprep.mubr.bf16.mxu0 0
      %845 = vmatmul.mubr.bf16.gmra.mrb[0].mxu0 %v423
      %v846 = vpop.f32.mrb[0].mxu0
      %v847 = vadd.f32 0.0, %v846
      %v848 = vpop.f32.mrb[0].mxu0
      %v849 = vpop.f32.mrb[0].mxu0
      %v850 = vadd.f32 0.0, %v849
      %v851 = vpop.f32.mrb[0].mxu0
      %852 = vmatprep.mubr.bf16.mxu0 0
      %853 = vmatmul.mubr.bf16.gmra.mrb[0].mxu0 %v424
      %v854 = vpop.f32.mrb[0].mxu0
      %v855 = vadd.f32 0.0, %v854
      %v856 = vpop.f32.mrb[0].mxu0
      %v857 = vpop.f32.mrb[0].mxu0
      %v858 = vadd.f32 0.0, %v857
      %v859 = vpop.f32.mrb[0].mxu0
      %860 = vmatprep.mubr.bf16.mxu0 0
      %861 = vmatmul.mubr.bf16.gmra.mrb[0].mxu0 %v425
      %v862 = vpop.f32.mrb[0].mxu0
      %v863 = vadd.f32 0.0, %v862
      %v864 = vpop.f32.mrb[0].mxu0
      %v865 = vpop.f32.mrb[0].mxu0
      %v866 = vadd.f32 0.0, %v865
      %v867 = vpop.f32.mrb[0].mxu0
      %868 = vmatprep.mubr.bf16.mxu0 0
      %869 = vmatmul.mubr.bf16.gmra.mrb[0].mxu0 %v426
      %v870 = vpop.f32.mrb[0].mxu0
      %v871 = vadd.f32 0.0, %v870
      %v872 = vpop.f32.mrb[0].mxu0
      %v873 = vpop.f32.mrb[0].mxu0
      %v874 = vadd.f32 0.0, %v873
      %v875 = vpop.f32.mrb[0].mxu0
      %876 = vmatprep.mubr.bf16.mxu0 0
      %877 = vmatmul.mubr.bf16.gmra.mrb[0].mxu0 %v427
      %v878 = vpop.f32.mrb[0].mxu0
      %v879 = vadd.f32 0.0, %v878
      %v880 = vpop.f32.mrb[0].mxu0
      %v881 = vpop.f32.mrb[0].mxu0
      %v882 = vadd.f32 0.0, %v881
      %v883 = vpop.f32.mrb[0].mxu0
      %884 = vmatprep.mubr.bf16.mxu0 0
      %885 = vmatmul.mubr.bf16.gmra.mrb[0].mxu0 %v428
      %v886 = vpop.f32.mrb[0].mxu0
      %v887 = vadd.f32 0.0, %v886
      %v888 = vpop.f32.mrb[0].mxu0
      %v889 = vpop.f32.mrb[0].mxu0
      %v890 = vadd.f32 0.0, %v889
      %v891 = vpop.f32.mrb[0].mxu0
      %892 = vmatprep.mubr.bf16.mxu0 0
      %893 = vmatmul.mubr.bf16.gmra.mrb[0].mxu0 %v754
      %v894 = vpop.f32.mrb[0].mxu0
      %v895 = vadd.f32 0.0, %v894
      %v896 = vpop.f32.mrb[0].mxu0
      %v897 = vpop.f32.mrb[0].mxu0
      %v898 = vadd.f32 0.0, %v897
      %v899 = vpop.f32.mrb[0].mxu0
      %900 = vdwg.mxu0
      %v901 = vadd.f32 %v671, %v839
      %v902 = vadd.f32 %v674, %v842
      %v903 = vadd.f32 %v679, %v847
      %v904 = vadd.f32 %v682, %v850
      %v905 = vadd.f32 %v687, %v855
      %v906 = vadd.f32 %v690, %v858
      %v907 = vadd.f32 %v695, %v863
      %v908 = vadd.f32 %v698, %v866
      %v909 = vadd.f32 %v703, %v871
      %v910 = vadd.f32 %v706, %v874
      %v911 = vadd.f32 %v711, %v879
      %v912 = vadd.f32 %v714, %v882
      %v913 = vadd.f32 %v719, %v887
      %v914 = vadd.f32 %v722, %v890
      %v915 = vadd.f32 %v727, %v895
      %v916 = vadd.f32 %v730, %v898
      %vm917 = vsmask.f32 3328
      %vm918 = vsmask.f32 7440
      %vm919 = vmor %vm917, %vm918
      %v921 = vshrl.u32 %v326, 16
      %v923 = vrot.slane %v921, 4
      %v924 = vshll.u32 %v326, 16
      %v926 = vrot.slane %v924, 5
      %v927 = vor.u32 %v923, %v926
      %v928 = vrot.slane %v927, 4
      %v930 = vshll.u32 %v327, 16
      %v932 = vrot.slane %v930, 5
      %v933 = vsel %vm919, %v928, %v932
      %v934 = vshrl.u32 %v327, 16
      %v936 = vrot.slane %v934, 4
      %v937 = vor.u32 %v936, %v932
      %v938 = vrot.slane %v937, 4
      %v940 = vshll.u32 %v328, 16
      %v942 = vrot.slane %v940, 5
      %v943 = vsel %vm919, %v938, %v942
      %v945 = vshrl.u32 %v329, 16
      %v947 = vrot.slane %v945, 4
      %v948 = vshll.u32 %v329, 16
      %v950 = vrot.slane %v948, 5
      %v951 = vor.u32 %v947, %v950
      %v952 = vrot.slane %v951, 4
      %v954 = vshll.u32 %v330, 16
      %v956 = vrot.slane %v954, 5
      %v957 = vsel %vm919, %v952, %v956
      %v958 = vshrl.u32 %v330, 16
      %v960 = vrot.slane %v958, 4
      %v961 = vor.u32 %v960, %v956
      %v962 = vrot.slane %v961, 4
      %v964 = vshll.u32 %v331, 16
      %v966 = vrot.slane %v964, 5
      %v967 = vsel %vm919, %v962, %v966
      %v969 = vshrl.u32 %v332, 16
      %v971 = vrot.slane %v969, 4
      %v972 = vshll.u32 %v332, 16
      %v974 = vrot.slane %v972, 5
      %v975 = vor.u32 %v971, %v974
      %v976 = vrot.slane %v975, 4
      %v978 = vshll.u32 %v333, 16
      %v980 = vrot.slane %v978, 5
      %v981 = vsel %vm919, %v976, %v980
      %v982 = vshrl.u32 %v333, 16
      %v984 = vrot.slane %v982, 4
      %v985 = vor.u32 %v984, %v980
      %v986 = vrot.slane %v985, 4
      %v988 = vshll.u32 %v334, 16
      %v990 = vrot.slane %v988, 5
      %v991 = vsel %vm919, %v986, %v990
      %v993 = vshrl.u32 %v335, 16
      %v995 = vrot.slane %v993, 4
      %v996 = vshll.u32 %v335, 16
      %v998 = vrot.slane %v996, 5
      %v999 = vor.u32 %v995, %v998
      %v1000 = vrot.slane %v999, 4
      %v1002 = vshll.u32 %v336, 16
      %v1004 = vrot.slane %v1002, 5
      %v1005 = vsel %vm919, %v1000, %v1004
      %v1006 = vshrl.u32 %v336, 16
      %v1008 = vrot.slane %v1006, 4
      %v1009 = vor.u32 %v1008, %v1004
      %v1010 = vrot.slane %v1009, 4
      %v1012 = vshll.u32 %v337, 16
      %v1014 = vrot.slane %v1012, 5
      %v1015 = vsel %vm919, %v1010, %v1014
      %v1017 = vshrl.u32 %v338, 16
      %v1019 = vrot.slane %v1017, 4
      %v1020 = vshll.u32 %v338, 16
      %v1022 = vrot.slane %v1020, 5
      %v1023 = vor.u32 %v1019, %v1022
      %v1024 = vrot.slane %v1023, 4
      %v1026 = vshll.u32 %v339, 16
      %v1028 = vrot.slane %v1026, 5
      %v1029 = vsel %vm919, %v1024, %v1028
      %v1030 = vshrl.u32 %v339, 16
      %v1032 = vrot.slane %v1030, 4
      %v1033 = vor.u32 %v1032, %v1028
      %v1034 = vrot.slane %v1033, 4
      %v1036 = vshll.u32 %v340, 16
      %v1038 = vrot.slane %v1036, 5
      %v1039 = vsel %vm919, %v1034, %v1038
      %v1041 = vshrl.u32 %v341, 16
      %v1043 = vrot.slane %v1041, 4
      %v1044 = vshll.u32 %v341, 16
      %v1046 = vrot.slane %v1044, 5
      %v1047 = vor.u32 %v1043, %v1046
      %v1048 = vrot.slane %v1047, 4
      %v1050 = vshll.u32 %v342, 16
      %v1052 = vrot.slane %v1050, 5
      %v1053 = vsel %vm919, %v1048, %v1052
      %v1054 = vshrl.u32 %v342, 16
      %v1056 = vrot.slane %v1054, 4
      %v1057 = vor.u32 %v1056, %v1052
      %v1058 = vrot.slane %v1057, 4
      %v1060 = vshll.u32 %v343, 16
      %v1062 = vrot.slane %v1060, 5
      %v1063 = vsel %vm919, %v1058, %v1062
      %v1065 = vshrl.u32 %v344, 16
      %v1067 = vrot.slane %v1065, 4
      %v1068 = vshll.u32 %v344, 16
      %v1070 = vrot.slane %v1068, 5
      %v1071 = vor.u32 %v1067, %v1070
      %v1072 = vrot.slane %v1071, 4
      %v1074 = vshll.u32 %v345, 16
      %v1076 = vrot.slane %v1074, 5
      %v1077 = vsel %vm919, %v1072, %v1076
      %v1078 = vshrl.u32 %v345, 16
      %v1080 = vrot.slane %v1078, 4
      %v1081 = vor.u32 %v1080, %v1076
      %v1082 = vrot.slane %v1081, 4
      %v1084 = vshll.u32 %v346, 16
      %v1086 = vrot.slane %v1084, 5
      %v1087 = vsel %vm919, %v1082, %v1086
      %v1089 = vshrl.u32 %v347, 16
      %v1091 = vrot.slane %v1089, 4
      %v1092 = vshll.u32 %v347, 16
      %v1094 = vrot.slane %v1092, 5
      %v1095 = vor.u32 %v1091, %v1094
      %v1096 = vrot.slane %v1095, 4
      %v1098 = vshll.u32 %v348, 16
      %v1100 = vrot.slane %v1098, 5
      %v1101 = vsel %vm919, %v1096, %v1100
      %v1102 = vshrl.u32 %v348, 16
      %v1104 = vrot.slane %v1102, 4
      %v1105 = vor.u32 %v1104, %v1100
      %v1106 = vrot.slane %v1105, 4
      %v1108 = vshll.u32 %v349, 16
      %v1110 = vrot.slane %v1108, 5
      %v1111 = vsel %vm919, %v1106, %v1110
      %v1113 = vshrl.u32 %v350, 16
      %v1115 = vrot.slane %v1113, 4
      %v1116 = vshll.u32 %v350, 16
      %v1118 = vrot.slane %v1116, 5
      %v1119 = vor.u32 %v1115, %v1118
      %v1120 = vrot.slane %v1119, 4
      %v1122 = vshll.u32 %v351, 16
      %v1124 = vrot.slane %v1122, 5
      %v1125 = vsel %vm919, %v1120, %v1124
      %v1126 = vshrl.u32 %v351, 16
      %v1128 = vrot.slane %v1126, 4
      %v1129 = vor.u32 %v1128, %v1124
      %v1130 = vrot.slane %v1129, 4
      %v1132 = vshll.u32 %v352, 16
      %v1134 = vrot.slane %v1132, 5
      %v1135 = vsel %vm919, %v1130, %v1134
      %v1137 = vshrl.u32 %v353, 16
      %v1139 = vrot.slane %v1137, 4
      %v1140 = vshll.u32 %v353, 16
      %v1142 = vrot.slane %v1140, 5
      %v1143 = vor.u32 %v1139, %v1142
      %v1144 = vrot.slane %v1143, 4
      %v1146 = vshll.u32 %v354, 16
      %v1148 = vrot.slane %v1146, 5
      %v1149 = vsel %vm919, %v1144, %v1148
      %v1150 = vshrl.u32 %v354, 16
      %v1152 = vrot.slane %v1150, 4
      %v1153 = vor.u32 %v1152, %v1148
      %v1154 = vrot.slane %v1153, 4
      %v1156 = vshll.u32 %v355, 16
      %v1158 = vrot.slane %v1156, 5
      %v1159 = vsel %vm919, %v1154, %v1158
      %s1160 = scalar_lea.vmem %s2, 64
      %v1161 = vld [vmem:[%s1160] sm:$0xf]
      %v1162 = vld [vmem:[%s1160 + $0x4] sm:$0xf]
      %v1163 = vld [vmem:[%s1160 + $0x8] sm:$0xf]
      %v1164 = vld [vmem:[%s1160 + $0xc] sm:$0xf]
      %v1165 = vld [vmem:[%s1160 + $0x10] sm:$0xf]
      %v1166 = vld [vmem:[%s1160 + $0x14] sm:$0xf]
      %v1167 = vld [vmem:[%s1160 + $0x18] sm:$0xf]
      %v1168 = vld [vmem:[%s1160 + $0x1c] sm:$0xf]
      %v1169 = vld [vmem:[%s1160 + $0x20] sm:$0xf]
      %v1170 = vld [vmem:[%s1160 + $0x24] sm:$0xf]
      %v1171 = vld [vmem:[%s1160 + $0x28] sm:$0xf]
      %v1172 = vld [vmem:[%s1160 + $0x2c] sm:$0xf]
      %v1173 = vld [vmem:[%s1160 + $0x30] sm:$0xf]
      %v1174 = vld [vmem:[%s1160 + $0x34] sm:$0xf]
      %v1175 = vld [vmem:[%s1160 + $0x38] sm:$0xf]
      %v1176 = vld [vmem:[%s1160 + $0x3c] sm:$0xf]
      %v1177 = vunpack.c.l.b16 %v933
      %v1178 = vunpack.c.l.b16 %v943
      %v1179 = vunpack.c.l.b16 %v957
      %v1180 = vunpack.c.l.b16 %v967
      %v1181 = vunpack.c.l.b16 %v981
      %v1182 = vunpack.c.l.b16 %v991
      %v1183 = vunpack.c.l.b16 %v1005
      %v1184 = vunpack.c.l.b16 %v1015
      %v1185 = vunpack.c.l.b16 %v1029
      %v1186 = vunpack.c.l.b16 %v1039
      %v1187 = vunpack.c.l.b16 %v1053
      %v1188 = vunpack.c.l.b16 %v1063
      %v1189 = vunpack.c.l.b16 %v1077
      %v1190 = vunpack.c.l.b16 %v1087
      %v1191 = vunpack.c.l.b16 %v1101
      %v1192 = vunpack.c.l.b16 %v1111
      %v1193 = vpack.c.b16 %v1178, %v1177
      %v1194 = vpack.c.b16 %v1180, %v1179
      %v1195 = vpack.c.b16 %v1182, %v1181
      %v1196 = vpack.c.b16 %v1184, %v1183
      %v1197 = vpack.c.b16 %v1186, %v1185
      %v1198 = vpack.c.b16 %v1188, %v1187
      %v1199 = vpack.c.b16 %v1190, %v1189
      %v1200 = vpack.c.b16 %v1192, %v1191
      %v1225 = vunpack.c.l.b16 %v1161
      %v1226 = vunpack.c.l.b16 %v1162
      %v1227 = vunpack.c.l.b16 %v1163
      %v1228 = vunpack.c.l.b16 %v1164
      %v1229 = vunpack.c.l.b16 %v1165
      %v1230 = vunpack.c.l.b16 %v1166
      %v1231 = vunpack.c.l.b16 %v1167
      %v1232 = vunpack.c.l.b16 %v1168
      %v1233 = vunpack.c.l.b16 %v1169
      %v1234 = vunpack.c.l.b16 %v1170
      %v1235 = vunpack.c.l.b16 %v1171
      %v1236 = vunpack.c.l.b16 %v1172
      %v1237 = vunpack.c.l.b16 %v1173
      %v1238 = vunpack.c.l.b16 %v1174
      %v1239 = vunpack.c.l.b16 %v1175
      %v1240 = vunpack.c.l.b16 %v1176
      %v1241 = vpack.c.b16 %v1226, %v1225
      %v1242 = vpack.c.b16 %v1228, %v1227
      %v1243 = vpack.c.b16 %v1230, %v1229
      %v1244 = vpack.c.b16 %v1232, %v1231
      %v1245 = vpack.c.b16 %v1234, %v1233
      %v1246 = vpack.c.b16 %v1236, %v1235
      %v1247 = vpack.c.b16 %v1238, %v1237
      %v1248 = vpack.c.b16 %v1240, %v1239
      %1257 = vmatprep.subr.bf16.mxu0 0
      %1258 = vmatpush1.bf16.msra.mxu0 %v1241
      %1259 = vmatprep.subr.bf16.mxu0 0
      %1260 = vmatpush1.bf16.msra.mxu0 %v1242
      %1261 = vmatprep.subr.bf16.mxu0 0
      %1262 = vmatpush1.bf16.msra.mxu0 %v1243
      %1263 = vmatprep.subr.bf16.mxu0 0
      %1264 = vmatpush1.bf16.msra.mxu0 %v1244
      %1265 = vmatprep.subr.bf16.mxu0 0
      %1266 = vmatpush1.bf16.msra.mxu0 %v1245
      %1267 = vmatprep.subr.bf16.mxu0 0
      %1268 = vmatpush1.bf16.msra.mxu0 %v1246
      %1269 = vmatprep.subr.bf16.mxu0 0
      %1270 = vmatpush1.bf16.msra.mxu0 %v1247
      %1271 = vmatprep.subr.bf16.mxu0 0
      %1272 = vmatpush1.bf16.msra.mxu0 %v1248
      %1273 = vmatprep.subr.bf16.mxu0 0
      %1274 = vmatpush1.bf16.msra.mxu0 0
      %1275 = vmatprep.subr.bf16.mxu0 0
      %1276 = vmatpush1.bf16.msra.mxu0 0
      %1277 = vmatprep.subr.bf16.mxu0 0
      %1278 = vmatpush1.bf16.msra.mxu0 0
      %1279 = vmatprep.subr.bf16.mxu0 0
      %1280 = vmatpush1.bf16.msra.mxu0 0
      %1281 = vmatprep.subr.bf16.mxu0 0
      %1282 = vmatpush1.bf16.msra.mxu0 0
      %1283 = vmatprep.subr.bf16.mxu0 0
      %1284 = vmatpush1.bf16.msra.mxu0 0
      %1285 = vmatprep.subr.bf16.mxu0 0
      %1286 = vmatpush1.bf16.msra.mxu0 0
      %1287 = vmatprep.subr.bf16.mxu0 0
      %1288 = vmatpush1.bf16.msra.mxu0 0
      %1289 = vmatprep.mubr.bf16.mxu0 0
      %1290 = vmatmul.mubr.bf16.gmra.mrb[0].mxu0 %v1193
      %v1291 = vpop.f32.mrb[0].mxu0
      %v1292 = vadd.f32 0.0, %v1291
      %v1293 = vpop.f32.mrb[0].mxu0
      %v1294 = vpop.f32.mrb[0].mxu0
      %v1295 = vadd.f32 0.0, %v1294
      %v1296 = vpop.f32.mrb[0].mxu0
      %1297 = vmatprep.mubr.bf16.mxu0 0
      %1298 = vmatmul.mubr.bf16.gmra.mrb[0].mxu0 %v1194
      %v1299 = vpop.f32.mrb[0].mxu0
      %v1300 = vadd.f32 0.0, %v1299
      %v1301 = vpop.f32.mrb[0].mxu0
      %v1302 = vpop.f32.mrb[0].mxu0
      %v1303 = vadd.f32 0.0, %v1302
      %v1304 = vpop.f32.mrb[0].mxu0
      %1305 = vmatprep.mubr.bf16.mxu0 0
      %1306 = vmatmul.mubr.bf16.gmra.mrb[0].mxu0 %v1195
      %v1307 = vpop.f32.mrb[0].mxu0
      %v1308 = vadd.f32 0.0, %v1307
      %v1309 = vpop.f32.mrb[0].mxu0
      %v1310 = vpop.f32.mrb[0].mxu0
      %v1311 = vadd.f32 0.0, %v1310
      %v1312 = vpop.f32.mrb[0].mxu0
      %1313 = vmatprep.mubr.bf16.mxu0 0
      %1314 = vmatmul.mubr.bf16.gmra.mrb[0].mxu0 %v1196
      %v1315 = vpop.f32.mrb[0].mxu0
      %v1316 = vadd.f32 0.0, %v1315
      %v1317 = vpop.f32.mrb[0].mxu0
      %v1318 = vpop.f32.mrb[0].mxu0
      %v1319 = vadd.f32 0.0, %v1318
      %v1320 = vpop.f32.mrb[0].mxu0
      %1321 = vmatprep.mubr.bf16.mxu0 0
      %1322 = vmatmul.mubr.bf16.gmra.mrb[0].mxu0 %v1197
      %v1323 = vpop.f32.mrb[0].mxu0
      %v1324 = vadd.f32 0.0, %v1323
      %v1325 = vpop.f32.mrb[0].mxu0
      %v1326 = vpop.f32.mrb[0].mxu0
      %v1327 = vadd.f32 0.0, %v1326
      %v1328 = vpop.f32.mrb[0].mxu0
      %1329 = vmatprep.mubr.bf16.mxu0 0
      %1330 = vmatmul.mubr.bf16.gmra.mrb[0].mxu0 %v1198
      %v1331 = vpop.f32.mrb[0].mxu0
      %v1332 = vadd.f32 0.0, %v1331
      %v1333 = vpop.f32.mrb[0].mxu0
      %v1334 = vpop.f32.mrb[0].mxu0
      %v1335 = vadd.f32 0.0, %v1334
      %v1336 = vpop.f32.mrb[0].mxu0
      %1337 = vmatprep.mubr.bf16.mxu0 0
      %1338 = vmatmul.mubr.bf16.gmra.mrb[0].mxu0 %v1199
      %v1339 = vpop.f32.mrb[0].mxu0
      %v1340 = vadd.f32 0.0, %v1339
      %v1341 = vpop.f32.mrb[0].mxu0
      %v1342 = vpop.f32.mrb[0].mxu0
      %v1343 = vadd.f32 0.0, %v1342
      %v1344 = vpop.f32.mrb[0].mxu0
      %1345 = vmatprep.mubr.bf16.mxu0 0
      %1346 = vmatmul.mubr.bf16.gmra.mrb[0].mxu0 %v1200
      %v1347 = vpop.f32.mrb[0].mxu0
      %v1348 = vadd.f32 0.0, %v1347
      %v1349 = vpop.f32.mrb[0].mxu0
      %v1350 = vpop.f32.mrb[0].mxu0
      %v1351 = vadd.f32 0.0, %v1350
      %v1352 = vpop.f32.mrb[0].mxu0
      %1353 = vdwg.mxu0
      %v1354 = vadd.f32 %v901, %v1292
      %v1355 = vadd.f32 %v902, %v1295
      %v1356 = vadd.f32 %v903, %v1300
      %v1357 = vadd.f32 %v904, %v1303
      %v1358 = vadd.f32 %v905, %v1308
      %v1359 = vadd.f32 %v906, %v1311
      %v1360 = vadd.f32 %v907, %v1316
      %v1361 = vadd.f32 %v908, %v1319
      %v1362 = vadd.f32 %v909, %v1324
      %v1363 = vadd.f32 %v910, %v1327
      %v1364 = vadd.f32 %v911, %v1332
      %v1365 = vadd.f32 %v912, %v1335
      %v1366 = vadd.f32 %v913, %v1340
      %v1367 = vadd.f32 %v914, %v1343
      %v1368 = vadd.f32 %v915, %v1348
      %v1369 = vadd.f32 %v916, %v1351
      %s1370 = scalar_lea.vmem %s2, 256
      %v1371 = vld [vmem:[%s1370] sm:$0xf]
      %v1372 = vld [vmem:[%s1370 + $0x4] sm:$0xf]
      %v1373 = vld [vmem:[%s1370 + $0x8] sm:$0xf]
      %v1374 = vld [vmem:[%s1370 + $0xc] sm:$0xf]
      %v1375 = vld [vmem:[%s1370 + $0x10] sm:$0xf]
      %v1376 = vld [vmem:[%s1370 + $0x14] sm:$0xf]
      %v1377 = vld [vmem:[%s1370 + $0x18] sm:$0xf]
      %v1378 = vld [vmem:[%s1370 + $0x1c] sm:$0xf]
      %v1379 = vld [vmem:[%s1370 + $0x20] sm:$0xf]
      %v1380 = vld [vmem:[%s1370 + $0x24] sm:$0xf]
      %v1381 = vld [vmem:[%s1370 + $0x28] sm:$0xf]
      %v1382 = vld [vmem:[%s1370 + $0x2c] sm:$0xf]
      %v1383 = vld [vmem:[%s1370 + $0x30] sm:$0xf]
      %v1384 = vld [vmem:[%s1370 + $0x34] sm:$0xf]
      %v1385 = vld [vmem:[%s1370 + $0x38] sm:$0xf]
      %v1386 = vld [vmem:[%s1370 + $0x3c] sm:$0xf]
      %v1387 = vunpack.c.l.b16 %v1125
      %v1388 = vunpack.c.l.b16 %v1135
      %v1389 = vpack.c.b16 %v1388, %v1387
      %v1407 = vunpack.c.l.b16 %v1371
      %v1408 = vunpack.c.l.b16 %v1372
      %v1409 = vunpack.c.l.b16 %v1373
      %v1410 = vunpack.c.l.b16 %v1374
      %v1411 = vunpack.c.l.b16 %v1375
      %v1412 = vunpack.c.l.b16 %v1376
      %v1413 = vunpack.c.l.b16 %v1377
      %v1414 = vunpack.c.l.b16 %v1378
      %v1415 = vunpack.c.l.b16 %v1379
      %v1416 = vunpack.c.l.b16 %v1380
      %v1417 = vunpack.c.l.b16 %v1381
      %v1418 = vunpack.c.l.b16 %v1382
      %v1419 = vunpack.c.l.b16 %v1383
      %v1420 = vunpack.c.l.b16 %v1384
      %v1421 = vunpack.c.l.b16 %v1385
      %v1422 = vunpack.c.l.b16 %v1386
      %v1423 = vpack.c.b16 %v1408, %v1407
      %v1424 = vpack.c.b16 %v1410, %v1409
      %v1425 = vpack.c.b16 %v1412, %v1411
      %v1426 = vpack.c.b16 %v1414, %v1413
      %v1427 = vpack.c.b16 %v1416, %v1415
      %v1428 = vpack.c.b16 %v1418, %v1417
      %v1429 = vpack.c.b16 %v1420, %v1419
      %v1430 = vpack.c.b16 %v1422, %v1421
      %1439 = vmatprep.subr.bf16.mxu0 0
      %1440 = vmatpush1.bf16.msra.mxu0 %v1423
      %1441 = vmatprep.subr.bf16.mxu0 0
      %1442 = vmatpush1.bf16.msra.mxu0 %v1424
      %1443 = vmatprep.subr.bf16.mxu0 0
      %1444 = vmatpush1.bf16.msra.mxu0 %v1425
      %1445 = vmatprep.subr.bf16.mxu0 0
      %1446 = vmatpush1.bf16.msra.mxu0 %v1426
      %1447 = vmatprep.subr.bf16.mxu0 0
      %1448 = vmatpush1.bf16.msra.mxu0 %v1427
      %1449 = vmatprep.subr.bf16.mxu0 0
      %1450 = vmatpush1.bf16.msra.mxu0 %v1428
      %1451 = vmatprep.subr.bf16.mxu0 0
      %1452 = vmatpush1.bf16.msra.mxu0 %v1429
      %1453 = vmatprep.subr.bf16.mxu0 0
      %1454 = vmatpush1.bf16.msra.mxu0 %v1430
      %1455 = vmatprep.subr.bf16.mxu0 0
      %1456 = vmatpush1.bf16.msra.mxu0 0
      %1457 = vmatprep.subr.bf16.mxu0 0
      %1458 = vmatpush1.bf16.msra.mxu0 0
      %1459 = vmatprep.subr.bf16.mxu0 0
      %1460 = vmatpush1.bf16.msra.mxu0 0
      %1461 = vmatprep.subr.bf16.mxu0 0
      %1462 = vmatpush1.bf16.msra.mxu0 0
      %1463 = vmatprep.subr.bf16.mxu0 0
      %1464 = vmatpush1.bf16.msra.mxu0 0
      %1465 = vmatprep.subr.bf16.mxu0 0
      %1466 = vmatpush1.bf16.msra.mxu0 0
      %1467 = vmatprep.subr.bf16.mxu0 0
      %1468 = vmatpush1.bf16.msra.mxu0 0
      %1469 = vmatprep.subr.bf16.mxu0 0
      %1470 = vmatpush1.bf16.msra.mxu0 0
      %1471 = vmatprep.mubr.bf16.mxu0 0
      %1472 = vmatmul.mubr.bf16.gmra.mrb[0].mxu0 %v1194
      %v1473 = vpop.f32.mrb[0].mxu0
      %v1474 = vadd.f32 0.0, %v1473
      %v1475 = vpop.f32.mrb[0].mxu0
      %v1476 = vpop.f32.mrb[0].mxu0
      %v1477 = vadd.f32 0.0, %v1476
      %v1478 = vpop.f32.mrb[0].mxu0
      %1479 = vmatprep.mubr.bf16.mxu0 0
      %1480 = vmatmul.mubr.bf16.gmra.mrb[0].mxu0 %v1195
      %v1481 = vpop.f32.mrb[0].mxu0
      %v1482 = vadd.f32 0.0, %v1481
      %v1483 = vpop.f32.mrb[0].mxu0
      %v1484 = vpop.f32.mrb[0].mxu0
      %v1485 = vadd.f32 0.0, %v1484
      %v1486 = vpop.f32.mrb[0].mxu0
      %1487 = vmatprep.mubr.bf16.mxu0 0
      %1488 = vmatmul.mubr.bf16.gmra.mrb[0].mxu0 %v1196
      %v1489 = vpop.f32.mrb[0].mxu0
      %v1490 = vadd.f32 0.0, %v1489
      %v1491 = vpop.f32.mrb[0].mxu0
      %v1492 = vpop.f32.mrb[0].mxu0
      %v1493 = vadd.f32 0.0, %v1492
      %v1494 = vpop.f32.mrb[0].mxu0
      %1495 = vmatprep.mubr.bf16.mxu0 0
      %1496 = vmatmul.mubr.bf16.gmra.mrb[0].mxu0 %v1197
      %v1497 = vpop.f32.mrb[0].mxu0
      %v1498 = vadd.f32 0.0, %v1497
      %v1499 = vpop.f32.mrb[0].mxu0
      %v1500 = vpop.f32.mrb[0].mxu0
      %v1501 = vadd.f32 0.0, %v1500
      %v1502 = vpop.f32.mrb[0].mxu0
      %1503 = vmatprep.mubr.bf16.mxu0 0
      %1504 = vmatmul.mubr.bf16.gmra.mrb[0].mxu0 %v1198
      %v1505 = vpop.f32.mrb[0].mxu0
      %v1506 = vadd.f32 0.0, %v1505
      %v1507 = vpop.f32.mrb[0].mxu0
      %v1508 = vpop.f32.mrb[0].mxu0
      %v1509 = vadd.f32 0.0, %v1508
      %v1510 = vpop.f32.mrb[0].mxu0
      %1511 = vmatprep.mubr.bf16.mxu0 0
      %1512 = vmatmul.mubr.bf16.gmra.mrb[0].mxu0 %v1199
      %v1513 = vpop.f32.mrb[0].mxu0
      %v1514 = vadd.f32 0.0, %v1513
      %v1515 = vpop.f32.mrb[0].mxu0
      %v1516 = vpop.f32.mrb[0].mxu0
      %v1517 = vadd.f32 0.0, %v1516
      %v1518 = vpop.f32.mrb[0].mxu0
      %1519 = vmatprep.mubr.bf16.mxu0 0
      %1520 = vmatmul.mubr.bf16.gmra.mrb[0].mxu0 %v1200
      %v1521 = vpop.f32.mrb[0].mxu0
      %v1522 = vadd.f32 0.0, %v1521
      %v1523 = vpop.f32.mrb[0].mxu0
      %v1524 = vpop.f32.mrb[0].mxu0
      %v1525 = vadd.f32 0.0, %v1524
      %v1526 = vpop.f32.mrb[0].mxu0
      %1527 = vmatprep.mubr.bf16.mxu0 0
      %1528 = vmatmul.mubr.bf16.gmra.mrb[0].mxu0 %v1389
      %v1529 = vpop.f32.mrb[0].mxu0
      %v1530 = vadd.f32 0.0, %v1529
      %v1531 = vpop.f32.mrb[0].mxu0
      %v1532 = vpop.f32.mrb[0].mxu0
      %v1533 = vadd.f32 0.0, %v1532
      %v1534 = vpop.f32.mrb[0].mxu0
      %1535 = vdwg.mxu0
      %v1536 = vadd.f32 %v1354, %v1474
      %v1537 = vadd.f32 %v1355, %v1477
      %v1538 = vadd.f32 %v1356, %v1482
      %v1539 = vadd.f32 %v1357, %v1485
      %v1540 = vadd.f32 %v1358, %v1490
      %v1541 = vadd.f32 %v1359, %v1493
      %v1542 = vadd.f32 %v1360, %v1498
      %v1543 = vadd.f32 %v1361, %v1501
      %v1544 = vadd.f32 %v1362, %v1506
      %v1545 = vadd.f32 %v1363, %v1509
      %v1546 = vadd.f32 %v1364, %v1514
      %v1547 = vadd.f32 %v1365, %v1517
      %v1548 = vadd.f32 %v1366, %v1522
      %v1549 = vadd.f32 %v1367, %v1525
      %v1550 = vadd.f32 %v1368, %v1530
      %v1551 = vadd.f32 %v1369, %v1533
      %s1552 = scalar_lea.vmem %s2, 448
      %v1553 = vld [vmem:[%s1552] sm:$0xf]
      %v1554 = vld [vmem:[%s1552 + $0x4] sm:$0xf]
      %v1555 = vld [vmem:[%s1552 + $0x8] sm:$0xf]
      %v1556 = vld [vmem:[%s1552 + $0xc] sm:$0xf]
      %v1557 = vld [vmem:[%s1552 + $0x10] sm:$0xf]
      %v1558 = vld [vmem:[%s1552 + $0x14] sm:$0xf]
      %v1559 = vld [vmem:[%s1552 + $0x18] sm:$0xf]
      %v1560 = vld [vmem:[%s1552 + $0x1c] sm:$0xf]
      %v1561 = vld [vmem:[%s1552 + $0x20] sm:$0xf]
      %v1562 = vld [vmem:[%s1552 + $0x24] sm:$0xf]
      %v1563 = vld [vmem:[%s1552 + $0x28] sm:$0xf]
      %v1564 = vld [vmem:[%s1552 + $0x2c] sm:$0xf]
      %v1565 = vld [vmem:[%s1552 + $0x30] sm:$0xf]
      %v1566 = vld [vmem:[%s1552 + $0x34] sm:$0xf]
      %v1567 = vld [vmem:[%s1552 + $0x38] sm:$0xf]
      %v1568 = vld [vmem:[%s1552 + $0x3c] sm:$0xf]
      %v1569 = vunpack.c.l.b16 %v1149
      %v1570 = vunpack.c.l.b16 %v1159
      %v1571 = vpack.c.b16 %v1570, %v1569
      %v1589 = vunpack.c.l.b16 %v1553
      %v1590 = vunpack.c.l.b16 %v1554
      %v1591 = vunpack.c.l.b16 %v1555
      %v1592 = vunpack.c.l.b16 %v1556
      %v1593 = vunpack.c.l.b16 %v1557
      %v1594 = vunpack.c.l.b16 %v1558
      %v1595 = vunpack.c.l.b16 %v1559
      %v1596 = vunpack.c.l.b16 %v1560
      %v1597 = vunpack.c.l.b16 %v1561
      %v1598 = vunpack.c.l.b16 %v1562
      %v1599 = vunpack.c.l.b16 %v1563
      %v1600 = vunpack.c.l.b16 %v1564
      %v1601 = vunpack.c.l.b16 %v1565
      %v1602 = vunpack.c.l.b16 %v1566
      %v1603 = vunpack.c.l.b16 %v1567
      %v1604 = vunpack.c.l.b16 %v1568
      %v1605 = vpack.c.b16 %v1590, %v1589
      %v1606 = vpack.c.b16 %v1592, %v1591
      %v1607 = vpack.c.b16 %v1594, %v1593
      %v1608 = vpack.c.b16 %v1596, %v1595
      %v1609 = vpack.c.b16 %v1598, %v1597
      %v1610 = vpack.c.b16 %v1600, %v1599
      %v1611 = vpack.c.b16 %v1602, %v1601
      %v1612 = vpack.c.b16 %v1604, %v1603
      %1621 = vmatprep.subr.bf16.mxu0 0
      %1622 = vmatpush1.bf16.msra.mxu0 %v1605
      %1623 = vmatprep.subr.bf16.mxu0 0
      %1624 = vmatpush1.bf16.msra.mxu0 %v1606
      %1625 = vmatprep.subr.bf16.mxu0 0
      %1626 = vmatpush1.bf16.msra.mxu0 %v1607
      %1627 = vmatprep.subr.bf16.mxu0 0
      %1628 = vmatpush1.bf16.msra.mxu0 %v1608
      %1629 = vmatprep.subr.bf16.mxu0 0
      %1630 = vmatpush1.bf16.msra.mxu0 %v1609
      %1631 = vmatprep.subr.bf16.mxu0 0
      %1632 = vmatpush1.bf16.msra.mxu0 %v1610
      %1633 = vmatprep.subr.bf16.mxu0 0
      %1634 = vmatpush1.bf16.msra.mxu0 %v1611
      %1635 = vmatprep.subr.bf16.mxu0 0
      %1636 = vmatpush1.bf16.msra.mxu0 %v1612
      %1637 = vmatprep.subr.bf16.mxu0 0
      %1638 = vmatpush1.bf16.msra.mxu0 0
      %1639 = vmatprep.subr.bf16.mxu0 0
      %1640 = vmatpush1.bf16.msra.mxu0 0
      %1641 = vmatprep.subr.bf16.mxu0 0
      %1642 = vmatpush1.bf16.msra.mxu0 0
      %1643 = vmatprep.subr.bf16.mxu0 0
      %1644 = vmatpush1.bf16.msra.mxu0 0
      %1645 = vmatprep.subr.bf16.mxu0 0
      %1646 = vmatpush1.bf16.msra.mxu0 0
      %1647 = vmatprep.subr.bf16.mxu0 0
      %1648 = vmatpush1.bf16.msra.mxu0 0
      %1649 = vmatprep.subr.bf16.mxu0 0
      %1650 = vmatpush1.bf16.msra.mxu0 0
      %1651 = vmatprep.subr.bf16.mxu0 0
      %1652 = vmatpush1.bf16.msra.mxu0 0
      %1653 = vmatprep.mubr.bf16.mxu0 0
      %1654 = vmatmul.mubr.bf16.gmra.mrb[0].mxu0 %v1195
      %v1655 = vpop.f32.mrb[0].mxu0
      %v1656 = vadd.f32 0.0, %v1655
      %v1657 = vpop.f32.mrb[0].mxu0
      %v1658 = vpop.f32.mrb[0].mxu0
      %v1659 = vadd.f32 0.0, %v1658
      %v1660 = vpop.f32.mrb[0].mxu0
      %1661 = vmatprep.mubr.bf16.mxu0 0
      %1662 = vmatmul.mubr.bf16.gmra.mrb[0].mxu0 %v1196
      %v1663 = vpop.f32.mrb[0].mxu0
      %v1664 = vadd.f32 0.0, %v1663
      %v1665 = vpop.f32.mrb[0].mxu0
      %v1666 = vpop.f32.mrb[0].mxu0
      %v1667 = vadd.f32 0.0, %v1666
      %v1668 = vpop.f32.mrb[0].mxu0
      %1669 = vmatprep.mubr.bf16.mxu0 0
      %1670 = vmatmul.mubr.bf16.gmra.mrb[0].mxu0 %v1197
      %v1671 = vpop.f32.mrb[0].mxu0
      %v1672 = vadd.f32 0.0, %v1671
      %v1673 = vpop.f32.mrb[0].mxu0
      %v1674 = vpop.f32.mrb[0].mxu0
      %v1675 = vadd.f32 0.0, %v1674
      %v1676 = vpop.f32.mrb[0].mxu0
      %1677 = vmatprep.mubr.bf16.mxu0 0
      %1678 = vmatmul.mubr.bf16.gmra.mrb[0].mxu0 %v1198
      %v1679 = vpop.f32.mrb[0].mxu0
      %v1680 = vadd.f32 0.0, %v1679
      %v1681 = vpop.f32.mrb[0].mxu0
      %v1682 = vpop.f32.mrb[0].mxu0
      %v1683 = vadd.f32 0.0, %v1682
      %v1684 = vpop.f32.mrb[0].mxu0
      %1685 = vmatprep.mubr.bf16.mxu0 0
      %1686 = vmatmul.mubr.bf16.gmra.mrb[0].mxu0 %v1199
      %v1687 = vpop.f32.mrb[0].mxu0
      %v1688 = vadd.f32 0.0, %v1687
      %v1689 = vpop.f32.mrb[0].mxu0
      %v1690 = vpop.f32.mrb[0].mxu0
      %v1691 = vadd.f32 0.0, %v1690
      %v1692 = vpop.f32.mrb[0].mxu0
      %1693 = vmatprep.mubr.bf16.mxu0 0
      %1694 = vmatmul.mubr.bf16.gmra.mrb[0].mxu0 %v1200
      %v1695 = vpop.f32.mrb[0].mxu0
      %v1696 = vadd.f32 0.0, %v1695
      %v1697 = vpop.f32.mrb[0].mxu0
      %v1698 = vpop.f32.mrb[0].mxu0
      %v1699 = vadd.f32 0.0, %v1698
      %v1700 = vpop.f32.mrb[0].mxu0
      %1701 = vmatprep.mubr.bf16.mxu0 0
      %1702 = vmatmul.mubr.bf16.gmra.mrb[0].mxu0 %v1389
      %v1703 = vpop.f32.mrb[0].mxu0
      %v1704 = vadd.f32 0.0, %v1703
      %v1705 = vpop.f32.mrb[0].mxu0
      %v1706 = vpop.f32.mrb[0].mxu0
      %v1707 = vadd.f32 0.0, %v1706
      %v1708 = vpop.f32.mrb[0].mxu0
      %1709 = vmatprep.mubr.bf16.mxu0 0
      %1710 = vmatmul.mubr.bf16.gmra.mrb[0].mxu0 %v1571
      %v1711 = vpop.f32.mrb[0].mxu0
      %v1712 = vadd.f32 0.0, %v1711
      %v1713 = vpop.f32.mrb[0].mxu0
      %v1714 = vpop.f32.mrb[0].mxu0
      %v1715 = vadd.f32 0.0, %v1714
      %v1716 = vpop.f32.mrb[0].mxu0
      %1717 = vdwg.mxu0
      %v1718 = vadd.f32 %v1536, %v1656
      %v1719 = vadd.f32 %v1537, %v1659
      %v1720 = vadd.f32 %v1538, %v1664
      %v1721 = vadd.f32 %v1539, %v1667
      %v1722 = vadd.f32 %v1540, %v1672
      %v1723 = vadd.f32 %v1541, %v1675
      %v1724 = vadd.f32 %v1542, %v1680
      %v1725 = vadd.f32 %v1543, %v1683
      %v1726 = vadd.f32 %v1544, %v1688
      %v1727 = vadd.f32 %v1545, %v1691
      %v1728 = vadd.f32 %v1546, %v1696
      %v1729 = vadd.f32 %v1547, %v1699
      %v1730 = vadd.f32 %v1548, %v1704
      %v1731 = vadd.f32 %v1549, %v1707
      %v1732 = vadd.f32 %v1550, %v1712
      %v1733 = vadd.f32 %v1551, %v1715
      %vm1744 = vcmask 1042432
      %vm1745 = vcmask 1046532
      %vm1746 = vmor %vm1744, %vm1745
      %v1747 = vrot.slane %v326, 5
      %v1748 = vrot.slane %v1747, 4
      %v1749 = vrot.slane %v327, 5
      %v1750 = vsel %vm1746, %v1748, %v1749
      %v1751 = vrot.slane %v1749, 4
      %v1752 = vrot.slane %v328, 5
      %v1753 = vsel %vm1746, %v1751, %v1752
      %v1754 = vrot.slane %v329, 5
      %v1755 = vrot.slane %v1754, 4
      %v1756 = vrot.slane %v330, 5
      %v1757 = vsel %vm1746, %v1755, %v1756
      %v1758 = vrot.slane %v1756, 4
      %v1759 = vrot.slane %v331, 5
      %v1760 = vsel %vm1746, %v1758, %v1759
      %v1761 = vrot.slane %v332, 5
      %v1762 = vrot.slane %v1761, 4
      %v1763 = vrot.slane %v333, 5
      %v1764 = vsel %vm1746, %v1762, %v1763
      %v1765 = vrot.slane %v1763, 4
      %v1766 = vrot.slane %v334, 5
      %v1767 = vsel %vm1746, %v1765, %v1766
      %v1768 = vrot.slane %v335, 5
      %v1769 = vrot.slane %v1768, 4
      %v1770 = vrot.slane %v336, 5
      %v1771 = vsel %vm1746, %v1769, %v1770
      %v1772 = vrot.slane %v1770, 4
      %v1773 = vrot.slane %v337, 5
      %v1774 = vsel %vm1746, %v1772, %v1773
      %v1775 = vrot.slane %v338, 5
      %v1776 = vrot.slane %v1775, 4
      %v1777 = vrot.slane %v339, 5
      %v1778 = vsel %vm1746, %v1776, %v1777
      %v1779 = vrot.slane %v1777, 4
      %v1780 = vrot.slane %v340, 5
      %v1781 = vsel %vm1746, %v1779, %v1780
      %v1782 = vrot.slane %v341, 5
      %v1783 = vrot.slane %v1782, 4
      %v1784 = vrot.slane %v342, 5
      %v1785 = vsel %vm1746, %v1783, %v1784
      %v1786 = vrot.slane %v1784, 4
      %v1787 = vrot.slane %v343, 5
      %v1788 = vsel %vm1746, %v1786, %v1787
      %v1789 = vrot.slane %v344, 5
      %v1790 = vrot.slane %v1789, 4
      %v1791 = vrot.slane %v345, 5
      %v1792 = vsel %vm1746, %v1790, %v1791
      %v1793 = vrot.slane %v1791, 4
      %v1794 = vrot.slane %v346, 5
      %v1795 = vsel %vm1746, %v1793, %v1794
      %v1796 = vrot.slane %v347, 5
      %v1797 = vrot.slane %v1796, 4
      %v1798 = vrot.slane %v348, 5
      %v1799 = vsel %vm1746, %v1797, %v1798
      %v1800 = vrot.slane %v1798, 4
      %v1801 = vrot.slane %v349, 5
      %v1802 = vsel %vm1746, %v1800, %v1801
      %v1803 = vrot.slane %v350, 5
      %v1804 = vrot.slane %v1803, 4
      %v1805 = vrot.slane %v351, 5
      %v1806 = vsel %vm1746, %v1804, %v1805
      %v1807 = vrot.slane %v1805, 4
      %v1808 = vrot.slane %v352, 5
      %v1809 = vsel %vm1746, %v1807, %v1808
      %v1810 = vrot.slane %v353, 5
      %v1811 = vrot.slane %v1810, 4
      %v1812 = vrot.slane %v354, 5
      %v1813 = vsel %vm1746, %v1811, %v1812
      %v1814 = vrot.slane %v1812, 4
      %v1815 = vrot.slane %v355, 5
      %v1816 = vsel %vm1746, %v1814, %v1815
      %s1817 = scalar_lea.vmem %s2, 128
      %v1818 = vld [vmem:[%s1817] sm:$0xf]
      %v1819 = vld [vmem:[%s1817 + $0x4] sm:$0xf]
      %v1820 = vld [vmem:[%s1817 + $0x8] sm:$0xf]
      %v1821 = vld [vmem:[%s1817 + $0xc] sm:$0xf]
      %v1822 = vld [vmem:[%s1817 + $0x10] sm:$0xf]
      %v1823 = vld [vmem:[%s1817 + $0x14] sm:$0xf]
      %v1824 = vld [vmem:[%s1817 + $0x18] sm:$0xf]
      %v1825 = vld [vmem:[%s1817 + $0x1c] sm:$0xf]
      %v1826 = vld [vmem:[%s1817 + $0x20] sm:$0xf]
      %v1827 = vld [vmem:[%s1817 + $0x24] sm:$0xf]
      %v1828 = vld [vmem:[%s1817 + $0x28] sm:$0xf]
      %v1829 = vld [vmem:[%s1817 + $0x2c] sm:$0xf]
      %v1830 = vld [vmem:[%s1817 + $0x30] sm:$0xf]
      %v1831 = vld [vmem:[%s1817 + $0x34] sm:$0xf]
      %v1832 = vld [vmem:[%s1817 + $0x38] sm:$0xf]
      %v1833 = vld [vmem:[%s1817 + $0x3c] sm:$0xf]
      %v1834 = vunpack.c.l.b16 %v1750
      %v1835 = vunpack.c.l.b16 %v1753
      %v1836 = vunpack.c.l.b16 %v1757
      %v1837 = vunpack.c.l.b16 %v1760
      %v1838 = vunpack.c.l.b16 %v1764
      %v1839 = vunpack.c.l.b16 %v1767
      %v1840 = vunpack.c.l.b16 %v1771
      %v1841 = vunpack.c.l.b16 %v1774
      %v1842 = vunpack.c.l.b16 %v1778
      %v1843 = vunpack.c.l.b16 %v1781
      %v1844 = vunpack.c.l.b16 %v1785
      %v1845 = vunpack.c.l.b16 %v1788
      %v1846 = vunpack.c.l.b16 %v1792
      %v1847 = vunpack.c.l.b16 %v1795
      %v1848 = vunpack.c.l.b16 %v1799
      %v1849 = vunpack.c.l.b16 %v1802
      %v1850 = vpack.c.b16 %v1835, %v1834
      %v1851 = vpack.c.b16 %v1837, %v1836
      %v1852 = vpack.c.b16 %v1839, %v1838
      %v1853 = vpack.c.b16 %v1841, %v1840
      %v1854 = vpack.c.b16 %v1843, %v1842
      %v1855 = vpack.c.b16 %v1845, %v1844
      %v1856 = vpack.c.b16 %v1847, %v1846
      %v1857 = vpack.c.b16 %v1849, %v1848
      %v1882 = vunpack.c.l.b16 %v1818
      %v1883 = vunpack.c.l.b16 %v1819
      %v1884 = vunpack.c.l.b16 %v1820
      %v1885 = vunpack.c.l.b16 %v1821
      %v1886 = vunpack.c.l.b16 %v1822
      %v1887 = vunpack.c.l.b16 %v1823
      %v1888 = vunpack.c.l.b16 %v1824
      %v1889 = vunpack.c.l.b16 %v1825
      %v1890 = vunpack.c.l.b16 %v1826
      %v1891 = vunpack.c.l.b16 %v1827
      %v1892 = vunpack.c.l.b16 %v1828
      %v1893 = vunpack.c.l.b16 %v1829
      %v1894 = vunpack.c.l.b16 %v1830
      %v1895 = vunpack.c.l.b16 %v1831
      %v1896 = vunpack.c.l.b16 %v1832
      %v1897 = vunpack.c.l.b16 %v1833
      %v1898 = vpack.c.b16 %v1883, %v1882
      %v1899 = vpack.c.b16 %v1885, %v1884
      %v1900 = vpack.c.b16 %v1887, %v1886
      %v1901 = vpack.c.b16 %v1889, %v1888
      %v1902 = vpack.c.b16 %v1891, %v1890
      %v1903 = vpack.c.b16 %v1893, %v1892
      %v1904 = vpack.c.b16 %v1895, %v1894
      %v1905 = vpack.c.b16 %v1897, %v1896
      %1914 = vmatprep.subr.bf16.mxu0 0
      %1915 = vmatpush1.bf16.msra.mxu0 %v1898
      %1916 = vmatprep.subr.bf16.mxu0 0
      %1917 = vmatpush1.bf16.msra.mxu0 %v1899
      %1918 = vmatprep.subr.bf16.mxu0 0
      %1919 = vmatpush1.bf16.msra.mxu0 %v1900
      %1920 = vmatprep.subr.bf16.mxu0 0
      %1921 = vmatpush1.bf16.msra.mxu0 %v1901
      %1922 = vmatprep.subr.bf16.mxu0 0
      %1923 = vmatpush1.bf16.msra.mxu0 %v1902
      %1924 = vmatprep.subr.bf16.mxu0 0
      %1925 = vmatpush1.bf16.msra.mxu0 %v1903
      %1926 = vmatprep.subr.bf16.mxu0 0
      %1927 = vmatpush1.bf16.msra.mxu0 %v1904
      %1928 = vmatprep.subr.bf16.mxu0 0
      %1929 = vmatpush1.bf16.msra.mxu0 %v1905
      %1930 = vmatprep.subr.bf16.mxu0 0
      %1931 = vmatpush1.bf16.msra.mxu0 0
      %1932 = vmatprep.subr.bf16.mxu0 0
      %1933 = vmatpush1.bf16.msra.mxu0 0
      %1934 = vmatprep.subr.bf16.mxu0 0
      %1935 = vmatpush1.bf16.msra.mxu0 0
      %1936 = vmatprep.subr.bf16.mxu0 0
      %1937 = vmatpush1.bf16.msra.mxu0 0
      %1938 = vmatprep.subr.bf16.mxu0 0
      %1939 = vmatpush1.bf16.msra.mxu0 0
      %1940 = vmatprep.subr.bf16.mxu0 0
      %1941 = vmatpush1.bf16.msra.mxu0 0
      %1942 = vmatprep.subr.bf16.mxu0 0
      %1943 = vmatpush1.bf16.msra.mxu0 0
      %1944 = vmatprep.subr.bf16.mxu0 0
      %1945 = vmatpush1.bf16.msra.mxu0 0
      %1946 = vmatprep.mubr.bf16.mxu0 0
      %1947 = vmatmul.mubr.bf16.gmra.mrb[0].mxu0 %v1850
      %v1948 = vpop.f32.mrb[0].mxu0
      %v1949 = vadd.f32 0.0, %v1948
      %v1950 = vpop.f32.mrb[0].mxu0
      %v1951 = vpop.f32.mrb[0].mxu0
      %v1952 = vadd.f32 0.0, %v1951
      %v1953 = vpop.f32.mrb[0].mxu0
      %1954 = vmatprep.mubr.bf16.mxu0 0
      %1955 = vmatmul.mubr.bf16.gmra.mrb[0].mxu0 %v1851
      %v1956 = vpop.f32.mrb[0].mxu0
      %v1957 = vadd.f32 0.0, %v1956
      %v1958 = vpop.f32.mrb[0].mxu0
      %v1959 = vpop.f32.mrb[0].mxu0
      %v1960 = vadd.f32 0.0, %v1959
      %v1961 = vpop.f32.mrb[0].mxu0
      %1962 = vmatprep.mubr.bf16.mxu0 0
      %1963 = vmatmul.mubr.bf16.gmra.mrb[0].mxu0 %v1852
      %v1964 = vpop.f32.mrb[0].mxu0
      %v1965 = vadd.f32 0.0, %v1964
      %v1966 = vpop.f32.mrb[0].mxu0
      %v1967 = vpop.f32.mrb[0].mxu0
      %v1968 = vadd.f32 0.0, %v1967
      %v1969 = vpop.f32.mrb[0].mxu0
      %1970 = vmatprep.mubr.bf16.mxu0 0
      %1971 = vmatmul.mubr.bf16.gmra.mrb[0].mxu0 %v1853
      %v1972 = vpop.f32.mrb[0].mxu0
      %v1973 = vadd.f32 0.0, %v1972
      %v1974 = vpop.f32.mrb[0].mxu0
      %v1975 = vpop.f32.mrb[0].mxu0
      %v1976 = vadd.f32 0.0, %v1975
      %v1977 = vpop.f32.mrb[0].mxu0
      %1978 = vmatprep.mubr.bf16.mxu0 0
      %1979 = vmatmul.mubr.bf16.gmra.mrb[0].mxu0 %v1854
      %v1980 = vpop.f32.mrb[0].mxu0
      %v1981 = vadd.f32 0.0, %v1980
      %v1982 = vpop.f32.mrb[0].mxu0
      %v1983 = vpop.f32.mrb[0].mxu0
      %v1984 = vadd.f32 0.0, %v1983
      %v1985 = vpop.f32.mrb[0].mxu0
      %1986 = vmatprep.mubr.bf16.mxu0 0
      %1987 = vmatmul.mubr.bf16.gmra.mrb[0].mxu0 %v1855
      %v1988 = vpop.f32.mrb[0].mxu0
      %v1989 = vadd.f32 0.0, %v1988
      %v1990 = vpop.f32.mrb[0].mxu0
      %v1991 = vpop.f32.mrb[0].mxu0
      %v1992 = vadd.f32 0.0, %v1991
      %v1993 = vpop.f32.mrb[0].mxu0
      %1994 = vmatprep.mubr.bf16.mxu0 0
      %1995 = vmatmul.mubr.bf16.gmra.mrb[0].mxu0 %v1856
      %v1996 = vpop.f32.mrb[0].mxu0
      %v1997 = vadd.f32 0.0, %v1996
      %v1998 = vpop.f32.mrb[0].mxu0
      %v1999 = vpop.f32.mrb[0].mxu0
      %v2000 = vadd.f32 0.0, %v1999
      %v2001 = vpop.f32.mrb[0].mxu0
      %2002 = vmatprep.mubr.bf16.mxu0 0
      %2003 = vmatmul.mubr.bf16.gmra.mrb[0].mxu0 %v1857
      %v2004 = vpop.f32.mrb[0].mxu0
      %v2005 = vadd.f32 0.0, %v2004
      %v2006 = vpop.f32.mrb[0].mxu0
      %v2007 = vpop.f32.mrb[0].mxu0
      %v2008 = vadd.f32 0.0, %v2007
      %v2009 = vpop.f32.mrb[0].mxu0
      %2010 = vdwg.mxu0
      %v2011 = vadd.f32 %v1718, %v1949
      %v2012 = vadd.f32 %v1719, %v1952
      %v2013 = vadd.f32 %v1720, %v1957
      %v2014 = vadd.f32 %v1721, %v1960
      %v2015 = vadd.f32 %v1722, %v1965
      %v2016 = vadd.f32 %v1723, %v1968
      %v2017 = vadd.f32 %v1724, %v1973
      %v2018 = vadd.f32 %v1725, %v1976
      %v2019 = vadd.f32 %v1726, %v1981
      %v2020 = vadd.f32 %v1727, %v1984
      %v2021 = vadd.f32 %v1728, %v1989
      %v2022 = vadd.f32 %v1729, %v1992
      %v2023 = vadd.f32 %v1730, %v1997
      %v2024 = vadd.f32 %v1731, %v2000
      %v2025 = vadd.f32 %v1732, %v2005
      %v2026 = vadd.f32 %v1733, %v2008
      %s2027 = scalar_lea.vmem %s2, 320
      %v2028 = vld [vmem:[%s2027] sm:$0xf]
      %v2029 = vld [vmem:[%s2027 + $0x4] sm:$0xf]
      %v2030 = vld [vmem:[%s2027 + $0x8] sm:$0xf]
      %v2031 = vld [vmem:[%s2027 + $0xc] sm:$0xf]
      %v2032 = vld [vmem:[%s2027 + $0x10] sm:$0xf]
      %v2033 = vld [vmem:[%s2027 + $0x14] sm:$0xf]
      %v2034 = vld [vmem:[%s2027 + $0x18] sm:$0xf]
      %v2035 = vld [vmem:[%s2027 + $0x1c] sm:$0xf]
      %v2036 = vld [vmem:[%s2027 + $0x20] sm:$0xf]
      %v2037 = vld [vmem:[%s2027 + $0x24] sm:$0xf]
      %v2038 = vld [vmem:[%s2027 + $0x28] sm:$0xf]
      %v2039 = vld [vmem:[%s2027 + $0x2c] sm:$0xf]
      %v2040 = vld [vmem:[%s2027 + $0x30] sm:$0xf]
      %v2041 = vld [vmem:[%s2027 + $0x34] sm:$0xf]
      %v2042 = vld [vmem:[%s2027 + $0x38] sm:$0xf]
      %v2043 = vld [vmem:[%s2027 + $0x3c] sm:$0xf]
      %v2044 = vunpack.c.l.b16 %v1806
      %v2045 = vunpack.c.l.b16 %v1809
      %v2046 = vpack.c.b16 %v2045, %v2044
      %v2064 = vunpack.c.l.b16 %v2028
      %v2065 = vunpack.c.l.b16 %v2029
      %v2066 = vunpack.c.l.b16 %v2030
      %v2067 = vunpack.c.l.b16 %v2031
      %v2068 = vunpack.c.l.b16 %v2032
      %v2069 = vunpack.c.l.b16 %v2033
      %v2070 = vunpack.c.l.b16 %v2034
      %v2071 = vunpack.c.l.b16 %v2035
      %v2072 = vunpack.c.l.b16 %v2036
      %v2073 = vunpack.c.l.b16 %v2037
      %v2074 = vunpack.c.l.b16 %v2038
      %v2075 = vunpack.c.l.b16 %v2039
      %v2076 = vunpack.c.l.b16 %v2040
      %v2077 = vunpack.c.l.b16 %v2041
      %v2078 = vunpack.c.l.b16 %v2042
      %v2079 = vunpack.c.l.b16 %v2043
      %v2080 = vpack.c.b16 %v2065, %v2064
      %v2081 = vpack.c.b16 %v2067, %v2066
      %v2082 = vpack.c.b16 %v2069, %v2068
      %v2083 = vpack.c.b16 %v2071, %v2070
      %v2084 = vpack.c.b16 %v2073, %v2072
      %v2085 = vpack.c.b16 %v2075, %v2074
      %v2086 = vpack.c.b16 %v2077, %v2076
      %v2087 = vpack.c.b16 %v2079, %v2078
      %2096 = vmatprep.subr.bf16.mxu0 0
      %2097 = vmatpush1.bf16.msra.mxu0 %v2080
      %2098 = vmatprep.subr.bf16.mxu0 0
      %2099 = vmatpush1.bf16.msra.mxu0 %v2081
      %2100 = vmatprep.subr.bf16.mxu0 0
      %2101 = vmatpush1.bf16.msra.mxu0 %v2082
      %2102 = vmatprep.subr.bf16.mxu0 0
      %2103 = vmatpush1.bf16.msra.mxu0 %v2083
      %2104 = vmatprep.subr.bf16.mxu0 0
      %2105 = vmatpush1.bf16.msra.mxu0 %v2084
      %2106 = vmatprep.subr.bf16.mxu0 0
      %2107 = vmatpush1.bf16.msra.mxu0 %v2085
      %2108 = vmatprep.subr.bf16.mxu0 0
      %2109 = vmatpush1.bf16.msra.mxu0 %v2086
      %2110 = vmatprep.subr.bf16.mxu0 0
      %2111 = vmatpush1.bf16.msra.mxu0 %v2087
      %2112 = vmatprep.subr.bf16.mxu0 0
      %2113 = vmatpush1.bf16.msra.mxu0 0
      %2114 = vmatprep.subr.bf16.mxu0 0
      %2115 = vmatpush1.bf16.msra.mxu0 0
      %2116 = vmatprep.subr.bf16.mxu0 0
      %2117 = vmatpush1.bf16.msra.mxu0 0
      %2118 = vmatprep.subr.bf16.mxu0 0
      %2119 = vmatpush1.bf16.msra.mxu0 0
      %2120 = vmatprep.subr.bf16.mxu0 0
      %2121 = vmatpush1.bf16.msra.mxu0 0
      %2122 = vmatprep.subr.bf16.mxu0 0
      %2123 = vmatpush1.bf16.msra.mxu0 0
      %2124 = vmatprep.subr.bf16.mxu0 0
      %2125 = vmatpush1.bf16.msra.mxu0 0
      %2126 = vmatprep.subr.bf16.mxu0 0
      %2127 = vmatpush1.bf16.msra.mxu0 0
      %2128 = vmatprep.mubr.bf16.mxu0 0
      %2129 = vmatmul.mubr.bf16.gmra.mrb[0].mxu0 %v1851
      %v2130 = vpop.f32.mrb[0].mxu0
      %v2131 = vadd.f32 0.0, %v2130
      %v2132 = vpop.f32.mrb[0].mxu0
      %v2133 = vpop.f32.mrb[0].mxu0
      %v2134 = vadd.f32 0.0, %v2133
      %v2135 = vpop.f32.mrb[0].mxu0
      %2136 = vmatprep.mubr.bf16.mxu0 0
      %2137 = vmatmul.mubr.bf16.gmra.mrb[0].mxu0 %v1852
      %v2138 = vpop.f32.mrb[0].mxu0
      %v2139 = vadd.f32 0.0, %v2138
      %v2140 = vpop.f32.mrb[0].mxu0
      %v2141 = vpop.f32.mrb[0].mxu0
      %v2142 = vadd.f32 0.0, %v2141
      %v2143 = vpop.f32.mrb[0].mxu0
      %2144 = vmatprep.mubr.bf16.mxu0 0
      %2145 = vmatmul.mubr.bf16.gmra.mrb[0].mxu0 %v1853
      %v2146 = vpop.f32.mrb[0].mxu0
      %v2147 = vadd.f32 0.0, %v2146
      %v2148 = vpop.f32.mrb[0].mxu0
      %v2149 = vpop.f32.mrb[0].mxu0
      %v2150 = vadd.f32 0.0, %v2149
      %v2151 = vpop.f32.mrb[0].mxu0
      %2152 = vmatprep.mubr.bf16.mxu0 0
      %2153 = vmatmul.mubr.bf16.gmra.mrb[0].mxu0 %v1854
      %v2154 = vpop.f32.mrb[0].mxu0
      %v2155 = vadd.f32 0.0, %v2154
      %v2156 = vpop.f32.mrb[0].mxu0
      %v2157 = vpop.f32.mrb[0].mxu0
      %v2158 = vadd.f32 0.0, %v2157
      %v2159 = vpop.f32.mrb[0].mxu0
      %2160 = vmatprep.mubr.bf16.mxu0 0
      %2161 = vmatmul.mubr.bf16.gmra.mrb[0].mxu0 %v1855
      %v2162 = vpop.f32.mrb[0].mxu0
      %v2163 = vadd.f32 0.0, %v2162
      %v2164 = vpop.f32.mrb[0].mxu0
      %v2165 = vpop.f32.mrb[0].mxu0
      %v2166 = vadd.f32 0.0, %v2165
      %v2167 = vpop.f32.mrb[0].mxu0
      %2168 = vmatprep.mubr.bf16.mxu0 0
      %2169 = vmatmul.mubr.bf16.gmra.mrb[0].mxu0 %v1856
      %v2170 = vpop.f32.mrb[0].mxu0
      %v2171 = vadd.f32 0.0, %v2170
      %v2172 = vpop.f32.mrb[0].mxu0
      %v2173 = vpop.f32.mrb[0].mxu0
      %v2174 = vadd.f32 0.0, %v2173
      %v2175 = vpop.f32.mrb[0].mxu0
      %2176 = vmatprep.mubr.bf16.mxu0 0
      %2177 = vmatmul.mubr.bf16.gmra.mrb[0].mxu0 %v1857
      %v2178 = vpop.f32.mrb[0].mxu0
      %v2179 = vadd.f32 0.0, %v2178
      %v2180 = vpop.f32.mrb[0].mxu0
      %v2181 = vpop.f32.mrb[0].mxu0
      %v2182 = vadd.f32 0.0, %v2181
      %v2183 = vpop.f32.mrb[0].mxu0
      %2184 = vmatprep.mubr.bf16.mxu0 0
      %2185 = vmatmul.mubr.bf16.gmra.mrb[0].mxu0 %v2046
      %v2186 = vpop.f32.mrb[0].mxu0
      %v2187 = vadd.f32 0.0, %v2186
      %v2188 = vpop.f32.mrb[0].mxu0
      %v2189 = vpop.f32.mrb[0].mxu0
      %v2190 = vadd.f32 0.0, %v2189
      %v2191 = vpop.f32.mrb[0].mxu0
      %2192 = vdwg.mxu0
      %v2193 = vadd.f32 %v2011, %v2131
      %v2194 = vadd.f32 %v2012, %v2134
      %v2195 = vadd.f32 %v2013, %v2139
      %v2196 = vadd.f32 %v2014, %v2142
      %v2197 = vadd.f32 %v2015, %v2147
      %v2198 = vadd.f32 %v2016, %v2150
      %v2199 = vadd.f32 %v2017, %v2155
      %v2200 = vadd.f32 %v2018, %v2158
      %v2201 = vadd.f32 %v2019, %v2163
      %v2202 = vadd.f32 %v2020, %v2166
      %v2203 = vadd.f32 %v2021, %v2171
      %v2204 = vadd.f32 %v2022, %v2174
      %v2205 = vadd.f32 %v2023, %v2179
      %v2206 = vadd.f32 %v2024, %v2182
      %v2207 = vadd.f32 %v2025, %v2187
      %v2208 = vadd.f32 %v2026, %v2190
      %s2209 = scalar_lea.vmem %s2, 512
      %v2210 = vld [vmem:[%s2209] sm:$0xf]
      %v2211 = vld [vmem:[%s2209 + $0x4] sm:$0xf]
      %v2212 = vld [vmem:[%s2209 + $0x8] sm:$0xf]
      %v2213 = vld [vmem:[%s2209 + $0xc] sm:$0xf]
      %v2214 = vld [vmem:[%s2209 + $0x10] sm:$0xf]
      %v2215 = vld [vmem:[%s2209 + $0x14] sm:$0xf]
      %v2216 = vld [vmem:[%s2209 + $0x18] sm:$0xf]
      %v2217 = vld [vmem:[%s2209 + $0x1c] sm:$0xf]
      %v2218 = vld [vmem:[%s2209 + $0x20] sm:$0xf]
      %v2219 = vld [vmem:[%s2209 + $0x24] sm:$0xf]
      %v2220 = vld [vmem:[%s2209 + $0x28] sm:$0xf]
      %v2221 = vld [vmem:[%s2209 + $0x2c] sm:$0xf]
      %v2222 = vld [vmem:[%s2209 + $0x30] sm:$0xf]
      %v2223 = vld [vmem:[%s2209 + $0x34] sm:$0xf]
      %v2224 = vld [vmem:[%s2209 + $0x38] sm:$0xf]
      %v2225 = vld [vmem:[%s2209 + $0x3c] sm:$0xf]
      %v2226 = vunpack.c.l.b16 %v1813
      %v2227 = vunpack.c.l.b16 %v1816
      %v2228 = vpack.c.b16 %v2227, %v2226
      %v2246 = vunpack.c.l.b16 %v2210
      %v2247 = vunpack.c.l.b16 %v2211
      %v2248 = vunpack.c.l.b16 %v2212
      %v2249 = vunpack.c.l.b16 %v2213
      %v2250 = vunpack.c.l.b16 %v2214
      %v2251 = vunpack.c.l.b16 %v2215
      %v2252 = vunpack.c.l.b16 %v2216
      %v2253 = vunpack.c.l.b16 %v2217
      %v2254 = vunpack.c.l.b16 %v2218
      %v2255 = vunpack.c.l.b16 %v2219
      %v2256 = vunpack.c.l.b16 %v2220
      %v2257 = vunpack.c.l.b16 %v2221
      %v2258 = vunpack.c.l.b16 %v2222
      %v2259 = vunpack.c.l.b16 %v2223
      %v2260 = vunpack.c.l.b16 %v2224
      %v2261 = vunpack.c.l.b16 %v2225
      %v2262 = vpack.c.b16 %v2247, %v2246
      %v2263 = vpack.c.b16 %v2249, %v2248
      %v2264 = vpack.c.b16 %v2251, %v2250
      %v2265 = vpack.c.b16 %v2253, %v2252
      %v2266 = vpack.c.b16 %v2255, %v2254
      %v2267 = vpack.c.b16 %v2257, %v2256
      %v2268 = vpack.c.b16 %v2259, %v2258
      %v2269 = vpack.c.b16 %v2261, %v2260
      %2278 = vmatprep.subr.bf16.mxu0 0
      %2279 = vmatpush1.bf16.msra.mxu0 %v2262
      %2280 = vmatprep.subr.bf16.mxu0 0
      %2281 = vmatpush1.bf16.msra.mxu0 %v2263
      %2282 = vmatprep.subr.bf16.mxu0 0
      %2283 = vmatpush1.bf16.msra.mxu0 %v2264
      %2284 = vmatprep.subr.bf16.mxu0 0
      %2285 = vmatpush1.bf16.msra.mxu0 %v2265
      %2286 = vmatprep.subr.bf16.mxu0 0
      %2287 = vmatpush1.bf16.msra.mxu0 %v2266
      %2288 = vmatprep.subr.bf16.mxu0 0
      %2289 = vmatpush1.bf16.msra.mxu0 %v2267
      %2290 = vmatprep.subr.bf16.mxu0 0
      %2291 = vmatpush1.bf16.msra.mxu0 %v2268
      %2292 = vmatprep.subr.bf16.mxu0 0
      %2293 = vmatpush1.bf16.msra.mxu0 %v2269
      %2294 = vmatprep.subr.bf16.mxu0 0
      %2295 = vmatpush1.bf16.msra.mxu0 0
      %2296 = vmatprep.subr.bf16.mxu0 0
      %2297 = vmatpush1.bf16.msra.mxu0 0
      %2298 = vmatprep.subr.bf16.mxu0 0
      %2299 = vmatpush1.bf16.msra.mxu0 0
      %2300 = vmatprep.subr.bf16.mxu0 0
      %2301 = vmatpush1.bf16.msra.mxu0 0
      %2302 = vmatprep.subr.bf16.mxu0 0
      %2303 = vmatpush1.bf16.msra.mxu0 0
      %2304 = vmatprep.subr.bf16.mxu0 0
      %2305 = vmatpush1.bf16.msra.mxu0 0
      %2306 = vmatprep.subr.bf16.mxu0 0
      %2307 = vmatpush1.bf16.msra.mxu0 0
      %2308 = vmatprep.subr.bf16.mxu0 0
      %2309 = vmatpush1.bf16.msra.mxu0 0
      %2310 = vmatprep.mubr.bf16.mxu0 0
      %2311 = vmatmul.mubr.bf16.gmra.mrb[0].mxu0 %v1852
      %v2312 = vpop.f32.mrb[0].mxu0
      %v2313 = vadd.f32 0.0, %v2312
      %v2314 = vpop.f32.mrb[0].mxu0
      %v2315 = vpop.f32.mrb[0].mxu0
      %v2316 = vadd.f32 0.0, %v2315
      %v2317 = vpop.f32.mrb[0].mxu0
      %2318 = vmatprep.mubr.bf16.mxu0 0
      %2319 = vmatmul.mubr.bf16.gmra.mrb[0].mxu0 %v1853
      %v2320 = vpop.f32.mrb[0].mxu0
      %v2321 = vadd.f32 0.0, %v2320
      %v2322 = vpop.f32.mrb[0].mxu0
      %v2323 = vpop.f32.mrb[0].mxu0
      %v2324 = vadd.f32 0.0, %v2323
      %v2325 = vpop.f32.mrb[0].mxu0
      %2326 = vmatprep.mubr.bf16.mxu0 0
      %2327 = vmatmul.mubr.bf16.gmra.mrb[0].mxu0 %v1854
      %v2328 = vpop.f32.mrb[0].mxu0
      %v2329 = vadd.f32 0.0, %v2328
      %v2330 = vpop.f32.mrb[0].mxu0
      %v2331 = vpop.f32.mrb[0].mxu0
      %v2332 = vadd.f32 0.0, %v2331
      %v2333 = vpop.f32.mrb[0].mxu0
      %2334 = vmatprep.mubr.bf16.mxu0 0
      %2335 = vmatmul.mubr.bf16.gmra.mrb[0].mxu0 %v1855
      %v2336 = vpop.f32.mrb[0].mxu0
      %v2337 = vadd.f32 0.0, %v2336
      %v2338 = vpop.f32.mrb[0].mxu0
      %v2339 = vpop.f32.mrb[0].mxu0
      %v2340 = vadd.f32 0.0, %v2339
      %v2341 = vpop.f32.mrb[0].mxu0
      %2342 = vmatprep.mubr.bf16.mxu0 0
      %2343 = vmatmul.mubr.bf16.gmra.mrb[0].mxu0 %v1856
      %v2344 = vpop.f32.mrb[0].mxu0
      %v2345 = vadd.f32 0.0, %v2344
      %v2346 = vpop.f32.mrb[0].mxu0
      %v2347 = vpop.f32.mrb[0].mxu0
      %v2348 = vadd.f32 0.0, %v2347
      %v2349 = vpop.f32.mrb[0].mxu0
      %2350 = vmatprep.mubr.bf16.mxu0 0
      %2351 = vmatmul.mubr.bf16.gmra.mrb[0].mxu0 %v1857
      %v2352 = vpop.f32.mrb[0].mxu0
      %v2353 = vadd.f32 0.0, %v2352
      %v2354 = vpop.f32.mrb[0].mxu0
      %v2355 = vpop.f32.mrb[0].mxu0
      %v2356 = vadd.f32 0.0, %v2355
      %v2357 = vpop.f32.mrb[0].mxu0
      %2358 = vmatprep.mubr.bf16.mxu0 0
      %2359 = vmatmul.mubr.bf16.gmra.mrb[0].mxu0 %v2046
      %v2360 = vpop.f32.mrb[0].mxu0
      %v2361 = vadd.f32 0.0, %v2360
      %v2362 = vpop.f32.mrb[0].mxu0
      %v2363 = vpop.f32.mrb[0].mxu0
      %v2364 = vadd.f32 0.0, %v2363
      %v2365 = vpop.f32.mrb[0].mxu0
      %2366 = vmatprep.mubr.bf16.mxu0 0
      %2367 = vmatmul.mubr.bf16.gmra.mrb[0].mxu0 %v2228
      %v2368 = vpop.f32.mrb[0].mxu0
      %v2369 = vadd.f32 0.0, %v2368
      %v2370 = vpop.f32.mrb[0].mxu0
      %v2371 = vpop.f32.mrb[0].mxu0
      %v2372 = vadd.f32 0.0, %v2371
      %v2373 = vpop.f32.mrb[0].mxu0
      %2374 = vdwg.mxu0
      %v2375 = vadd.f32 %v2193, %v2313
      %v2376 = vadd.f32 %v2194, %v2316
      %v2377 = vadd.f32 %v2195, %v2321
      %v2378 = vadd.f32 %v2196, %v2324
      %v2379 = vadd.f32 %v2197, %v2329
      %v2380 = vadd.f32 %v2198, %v2332
      %v2381 = vadd.f32 %v2199, %v2337
      %v2382 = vadd.f32 %v2200, %v2340
      %v2383 = vadd.f32 %v2201, %v2345
      %v2384 = vadd.f32 %v2202, %v2348
      %v2385 = vadd.f32 %v2203, %v2353
      %v2386 = vadd.f32 %v2204, %v2356
      %v2387 = vadd.f32 %v2205, %v2361
      %v2388 = vadd.f32 %v2206, %v2364
      %v2389 = vadd.f32 %v2207, %v2369
      %v2390 = vadd.f32 %v2208, %v2372
      %v2391 = vld [vmem:[%s311] sm:$0xf]
      %v2392 = vld [vmem:[%s311 + $0x4] sm:$0xf]
      %v2393 = vld [vmem:[%s311 + $0x8] sm:$0x1]
      %v2394 = vld [vmem:[%s311 + $0xc] sm:$0xf]
      %v2395 = vld [vmem:[%s311 + $0x10] sm:$0xf]
      %v2396 = vld [vmem:[%s311 + $0x14] sm:$0x1]
      %v2397 = vld [vmem:[%s311 + $0x18] sm:$0xf]
      %v2398 = vld [vmem:[%s311 + $0x1c] sm:$0xf]
      %v2399 = vld [vmem:[%s311 + $0x20] sm:$0x1]
      %v2400 = vld [vmem:[%s311 + $0x24] sm:$0xf]
      %v2401 = vld [vmem:[%s311 + $0x28] sm:$0xf]
      %v2402 = vld [vmem:[%s311 + $0x2c] sm:$0x1]
      %v2403 = vld [vmem:[%s311 + $0x30] sm:$0xf]
      %v2404 = vld [vmem:[%s311 + $0x34] sm:$0xf]
      %v2405 = vld [vmem:[%s311 + $0x38] sm:$0x1]
      %v2406 = vld [vmem:[%s311 + $0x3c] sm:$0xf]
      %v2407 = vld [vmem:[%s311 + $0x40] sm:$0xf]
      %v2408 = vld [vmem:[%s311 + $0x44] sm:$0x1]
      %v2409 = vld [vmem:[%s311 + $0x48] sm:$0xf]
      %v2410 = vld [vmem:[%s311 + $0x4c] sm:$0xf]
      %v2411 = vld [vmem:[%s311 + $0x50] sm:$0x1]
      %v2412 = vld [vmem:[%s311 + $0x54] sm:$0xf]
      %v2413 = vld [vmem:[%s311 + $0x58] sm:$0xf]
      %v2414 = vld [vmem:[%s311 + $0x5c] sm:$0x1]
      %v2415 = vld [vmem:[%s311 + $0x60] sm:$0xf]
      %v2416 = vld [vmem:[%s311 + $0x64] sm:$0xf]
      %v2417 = vld [vmem:[%s311 + $0x68] sm:$0x1]
      %v2418 = vld [vmem:[%s311 + $0x6c] sm:$0xf]
      %v2419 = vld [vmem:[%s311 + $0x70] sm:$0xf]
      %v2420 = vld [vmem:[%s311 + $0x74] sm:$0x1]
      %v2421 = vld [vmem:[%s3] sm:$0xf]
      %v2422 = vld [vmem:[%s3 + $0x4] sm:$0xf]
      %v2423 = vld [vmem:[%s3 + $0x8] sm:$0xf]
      %v2424 = vld [vmem:[%s3 + $0xc] sm:$0xf]
      %v2425 = vld [vmem:[%s3 + $0x10] sm:$0xf]
      %v2426 = vld [vmem:[%s3 + $0x14] sm:$0xf]
      %v2427 = vld [vmem:[%s3 + $0x18] sm:$0xf]
      %v2428 = vld [vmem:[%s3 + $0x1c] sm:$0xf]
      %v2429 = vld [vmem:[%s3 + $0x20] sm:$0xf]
      %v2430 = vld [vmem:[%s3 + $0x24] sm:$0xf]
      %v2431 = vld [vmem:[%s3 + $0x28] sm:$0xf]
      %v2432 = vld [vmem:[%s3 + $0x2c] sm:$0xf]
      %v2433 = vld [vmem:[%s3 + $0x30] sm:$0xf]
      %v2434 = vld [vmem:[%s3 + $0x34] sm:$0xf]
      %v2435 = vld [vmem:[%s3 + $0x38] sm:$0xf]
      %v2436 = vld [vmem:[%s3 + $0x3c] sm:$0xf]
      %v2453 = vunpack.c.l.b16 %v2391
      %v2454 = vunpack.c.l.b16 %v2392
      %v2455 = vunpack.c.l.b16 %v2394
      %v2456 = vunpack.c.l.b16 %v2395
      %v2457 = vunpack.c.l.b16 %v2397
      %v2458 = vunpack.c.l.b16 %v2398
      %v2459 = vunpack.c.l.b16 %v2400
      %v2460 = vunpack.c.l.b16 %v2401
      %v2461 = vunpack.c.l.b16 %v2403
      %v2462 = vunpack.c.l.b16 %v2404
      %v2463 = vunpack.c.l.b16 %v2406
      %v2464 = vunpack.c.l.b16 %v2407
      %v2465 = vunpack.c.l.b16 %v2409
      %v2466 = vunpack.c.l.b16 %v2410
      %v2467 = vunpack.c.l.b16 %v2412
      %v2468 = vunpack.c.l.b16 %v2413
      %v2469 = vpack.c.b16 %v2454, %v2453
      %v2470 = vpack.c.b16 %v2456, %v2455
      %v2471 = vpack.c.b16 %v2458, %v2457
      %v2472 = vpack.c.b16 %v2460, %v2459
      %v2473 = vpack.c.b16 %v2462, %v2461
      %v2474 = vpack.c.b16 %v2464, %v2463
      %v2475 = vpack.c.b16 %v2466, %v2465
      %v2476 = vpack.c.b16 %v2468, %v2467
      %v2501 = vunpack.c.l.b16 %v2421
      %v2502 = vunpack.c.l.b16 %v2422
      %v2503 = vunpack.c.l.b16 %v2423
      %v2504 = vunpack.c.l.b16 %v2424
      %v2505 = vunpack.c.l.b16 %v2425
      %v2506 = vunpack.c.l.b16 %v2426
      %v2507 = vunpack.c.l.b16 %v2427
      %v2508 = vunpack.c.l.b16 %v2428
      %v2509 = vunpack.c.l.b16 %v2429
      %v2510 = vunpack.c.l.b16 %v2430
      %v2511 = vunpack.c.l.b16 %v2431
      %v2512 = vunpack.c.l.b16 %v2432
      %v2513 = vunpack.c.l.b16 %v2433
      %v2514 = vunpack.c.l.b16 %v2434
      %v2515 = vunpack.c.l.b16 %v2435
      %v2516 = vunpack.c.l.b16 %v2436
      %v2517 = vpack.c.b16 %v2502, %v2501
      %v2518 = vpack.c.b16 %v2504, %v2503
      %v2519 = vpack.c.b16 %v2506, %v2505
      %v2520 = vpack.c.b16 %v2508, %v2507
      %v2521 = vpack.c.b16 %v2510, %v2509
      %v2522 = vpack.c.b16 %v2512, %v2511
      %v2523 = vpack.c.b16 %v2514, %v2513
      %v2524 = vpack.c.b16 %v2516, %v2515
      %2533 = vmatprep.subr.bf16.mxu0 0
      %2534 = vmatpush1.bf16.msra.mxu0 %v2517
      %2535 = vmatprep.subr.bf16.mxu0 0
      %2536 = vmatpush1.bf16.msra.mxu0 %v2518
      %2537 = vmatprep.subr.bf16.mxu0 0
      %2538 = vmatpush1.bf16.msra.mxu0 %v2519
      %2539 = vmatprep.subr.bf16.mxu0 0
      %2540 = vmatpush1.bf16.msra.mxu0 %v2520
      %2541 = vmatprep.subr.bf16.mxu0 0
      %2542 = vmatpush1.bf16.msra.mxu0 %v2521
      %2543 = vmatprep.subr.bf16.mxu0 0
      %2544 = vmatpush1.bf16.msra.mxu0 %v2522
      %2545 = vmatprep.subr.bf16.mxu0 0
      %2546 = vmatpush1.bf16.msra.mxu0 %v2523
      %2547 = vmatprep.subr.bf16.mxu0 0
      %2548 = vmatpush1.bf16.msra.mxu0 %v2524
      %2549 = vmatprep.subr.bf16.mxu0 0
      %2550 = vmatpush1.bf16.msra.mxu0 0
      %2551 = vmatprep.subr.bf16.mxu0 0
      %2552 = vmatpush1.bf16.msra.mxu0 0
      %2553 = vmatprep.subr.bf16.mxu0 0
      %2554 = vmatpush1.bf16.msra.mxu0 0
      %2555 = vmatprep.subr.bf16.mxu0 0
      %2556 = vmatpush1.bf16.msra.mxu0 0
      %2557 = vmatprep.subr.bf16.mxu0 0
      %2558 = vmatpush1.bf16.msra.mxu0 0
      %2559 = vmatprep.subr.bf16.mxu0 0
      %2560 = vmatpush1.bf16.msra.mxu0 0
      %2561 = vmatprep.subr.bf16.mxu0 0
      %2562 = vmatpush1.bf16.msra.mxu0 0
      %2563 = vmatprep.subr.bf16.mxu0 0
      %2564 = vmatpush1.bf16.msra.mxu0 0
      %2565 = vmatprep.mubr.bf16.mxu0 0
      %2566 = vmatmul.mubr.bf16.gmra.mrb[0].mxu0 %v2469
      %v2567 = vpop.f32.mrb[0].mxu0
      %v2568 = vadd.f32 0.0, %v2567
      %v2569 = vpop.f32.mrb[0].mxu0
      %v2570 = vpop.f32.mrb[0].mxu0
      %v2571 = vadd.f32 0.0, %v2570
      %v2572 = vpop.f32.mrb[0].mxu0
      %2573 = vmatprep.mubr.bf16.mxu0 0
      %2574 = vmatmul.mubr.bf16.gmra.mrb[0].mxu0 %v2470
      %v2575 = vpop.f32.mrb[0].mxu0
      %v2576 = vadd.f32 0.0, %v2575
      %v2577 = vpop.f32.mrb[0].mxu0
      %v2578 = vpop.f32.mrb[0].mxu0
      %v2579 = vadd.f32 0.0, %v2578
      %v2580 = vpop.f32.mrb[0].mxu0
      %2581 = vmatprep.mubr.bf16.mxu0 0
      %2582 = vmatmul.mubr.bf16.gmra.mrb[0].mxu0 %v2471
      %v2583 = vpop.f32.mrb[0].mxu0
      %v2584 = vadd.f32 0.0, %v2583
      %v2585 = vpop.f32.mrb[0].mxu0
      %v2586 = vpop.f32.mrb[0].mxu0
      %v2587 = vadd.f32 0.0, %v2586
      %v2588 = vpop.f32.mrb[0].mxu0
      %2589 = vmatprep.mubr.bf16.mxu0 0
      %2590 = vmatmul.mubr.bf16.gmra.mrb[0].mxu0 %v2472
      %v2591 = vpop.f32.mrb[0].mxu0
      %v2592 = vadd.f32 0.0, %v2591
      %v2593 = vpop.f32.mrb[0].mxu0
      %v2594 = vpop.f32.mrb[0].mxu0
      %v2595 = vadd.f32 0.0, %v2594
      %v2596 = vpop.f32.mrb[0].mxu0
      %2597 = vmatprep.mubr.bf16.mxu0 0
      %2598 = vmatmul.mubr.bf16.gmra.mrb[0].mxu0 %v2473
      %v2599 = vpop.f32.mrb[0].mxu0
      %v2600 = vadd.f32 0.0, %v2599
      %v2601 = vpop.f32.mrb[0].mxu0
      %v2602 = vpop.f32.mrb[0].mxu0
      %v2603 = vadd.f32 0.0, %v2602
      %v2604 = vpop.f32.mrb[0].mxu0
      %2605 = vmatprep.mubr.bf16.mxu0 0
      %2606 = vmatmul.mubr.bf16.gmra.mrb[0].mxu0 %v2474
      %v2607 = vpop.f32.mrb[0].mxu0
      %v2608 = vadd.f32 0.0, %v2607
      %v2609 = vpop.f32.mrb[0].mxu0
      %v2610 = vpop.f32.mrb[0].mxu0
      %v2611 = vadd.f32 0.0, %v2610
      %v2612 = vpop.f32.mrb[0].mxu0
      %2613 = vmatprep.mubr.bf16.mxu0 0
      %2614 = vmatmul.mubr.bf16.gmra.mrb[0].mxu0 %v2475
      %v2615 = vpop.f32.mrb[0].mxu0
      %v2616 = vadd.f32 0.0, %v2615
      %v2617 = vpop.f32.mrb[0].mxu0
      %v2618 = vpop.f32.mrb[0].mxu0
      %v2619 = vadd.f32 0.0, %v2618
      %v2620 = vpop.f32.mrb[0].mxu0
      %2621 = vmatprep.mubr.bf16.mxu0 0
      %2622 = vmatmul.mubr.bf16.gmra.mrb[0].mxu0 %v2476
      %v2623 = vpop.f32.mrb[0].mxu0
      %v2624 = vadd.f32 0.0, %v2623
      %v2625 = vpop.f32.mrb[0].mxu0
      %v2626 = vpop.f32.mrb[0].mxu0
      %v2627 = vadd.f32 0.0, %v2626
      %v2628 = vpop.f32.mrb[0].mxu0
      %2629 = vdwg.mxu0
      %v2630 = vadd.f32 %v2375, %v2568
      %v2631 = vadd.f32 %v2376, %v2571
      %v2632 = vadd.f32 %v2377, %v2576
      %v2633 = vadd.f32 %v2378, %v2579
      %v2634 = vadd.f32 %v2379, %v2584
      %v2635 = vadd.f32 %v2380, %v2587
      %v2636 = vadd.f32 %v2381, %v2592
      %v2637 = vadd.f32 %v2382, %v2595
      %v2638 = vadd.f32 %v2383, %v2600
      %v2639 = vadd.f32 %v2384, %v2603
      %v2640 = vadd.f32 %v2385, %v2608
      %v2641 = vadd.f32 %v2386, %v2611
      %v2642 = vadd.f32 %v2387, %v2616
      %v2643 = vadd.f32 %v2388, %v2619
      %v2644 = vadd.f32 %v2389, %v2624
      %v2645 = vadd.f32 %v2390, %v2627
      %s2646 = scalar_lea.vmem %s3, 192
      %v2647 = vld [vmem:[%s2646] sm:$0xf]
      %v2648 = vld [vmem:[%s2646 + $0x4] sm:$0xf]
      %v2649 = vld [vmem:[%s2646 + $0x8] sm:$0xf]
      %v2650 = vld [vmem:[%s2646 + $0xc] sm:$0xf]
      %v2651 = vld [vmem:[%s2646 + $0x10] sm:$0xf]
      %v2652 = vld [vmem:[%s2646 + $0x14] sm:$0xf]
      %v2653 = vld [vmem:[%s2646 + $0x18] sm:$0xf]
      %v2654 = vld [vmem:[%s2646 + $0x1c] sm:$0xf]
      %v2655 = vld [vmem:[%s2646 + $0x20] sm:$0xf]
      %v2656 = vld [vmem:[%s2646 + $0x24] sm:$0xf]
      %v2657 = vld [vmem:[%s2646 + $0x28] sm:$0xf]
      %v2658 = vld [vmem:[%s2646 + $0x2c] sm:$0xf]
      %v2659 = vld [vmem:[%s2646 + $0x30] sm:$0xf]
      %v2660 = vld [vmem:[%s2646 + $0x34] sm:$0xf]
      %v2661 = vld [vmem:[%s2646 + $0x38] sm:$0xf]
      %v2662 = vld [vmem:[%s2646 + $0x3c] sm:$0xf]
      %v2665 = vunpack.c.l.b16 %v2415
      %v2666 = vunpack.c.l.b16 %v2416
      %v2667 = vpack.c.b16 %v2666, %v2665
      %v2685 = vunpack.c.l.b16 %v2647
      %v2686 = vunpack.c.l.b16 %v2648
      %v2687 = vunpack.c.l.b16 %v2649
      %v2688 = vunpack.c.l.b16 %v2650
      %v2689 = vunpack.c.l.b16 %v2651
      %v2690 = vunpack.c.l.b16 %v2652
      %v2691 = vunpack.c.l.b16 %v2653
      %v2692 = vunpack.c.l.b16 %v2654
      %v2693 = vunpack.c.l.b16 %v2655
      %v2694 = vunpack.c.l.b16 %v2656
      %v2695 = vunpack.c.l.b16 %v2657
      %v2696 = vunpack.c.l.b16 %v2658
      %v2697 = vunpack.c.l.b16 %v2659
      %v2698 = vunpack.c.l.b16 %v2660
      %v2699 = vunpack.c.l.b16 %v2661
      %v2700 = vunpack.c.l.b16 %v2662
      %v2701 = vpack.c.b16 %v2686, %v2685
      %v2702 = vpack.c.b16 %v2688, %v2687
      %v2703 = vpack.c.b16 %v2690, %v2689
      %v2704 = vpack.c.b16 %v2692, %v2691
      %v2705 = vpack.c.b16 %v2694, %v2693
      %v2706 = vpack.c.b16 %v2696, %v2695
      %v2707 = vpack.c.b16 %v2698, %v2697
      %v2708 = vpack.c.b16 %v2700, %v2699
      %2717 = vmatprep.subr.bf16.mxu0 0
      %2718 = vmatpush1.bf16.msra.mxu0 %v2701
      %2719 = vmatprep.subr.bf16.mxu0 0
      %2720 = vmatpush1.bf16.msra.mxu0 %v2702
      %2721 = vmatprep.subr.bf16.mxu0 0
      %2722 = vmatpush1.bf16.msra.mxu0 %v2703
      %2723 = vmatprep.subr.bf16.mxu0 0
      %2724 = vmatpush1.bf16.msra.mxu0 %v2704
      %2725 = vmatprep.subr.bf16.mxu0 0
      %2726 = vmatpush1.bf16.msra.mxu0 %v2705
      %2727 = vmatprep.subr.bf16.mxu0 0
      %2728 = vmatpush1.bf16.msra.mxu0 %v2706
      %2729 = vmatprep.subr.bf16.mxu0 0
      %2730 = vmatpush1.bf16.msra.mxu0 %v2707
      %2731 = vmatprep.subr.bf16.mxu0 0
      %2732 = vmatpush1.bf16.msra.mxu0 %v2708
      %2733 = vmatprep.subr.bf16.mxu0 0
      %2734 = vmatpush1.bf16.msra.mxu0 0
      %2735 = vmatprep.subr.bf16.mxu0 0
      %2736 = vmatpush1.bf16.msra.mxu0 0
      %2737 = vmatprep.subr.bf16.mxu0 0
      %2738 = vmatpush1.bf16.msra.mxu0 0
      %2739 = vmatprep.subr.bf16.mxu0 0
      %2740 = vmatpush1.bf16.msra.mxu0 0
      %2741 = vmatprep.subr.bf16.mxu0 0
      %2742 = vmatpush1.bf16.msra.mxu0 0
      %2743 = vmatprep.subr.bf16.mxu0 0
      %2744 = vmatpush1.bf16.msra.mxu0 0
      %2745 = vmatprep.subr.bf16.mxu0 0
      %2746 = vmatpush1.bf16.msra.mxu0 0
      %2747 = vmatprep.subr.bf16.mxu0 0
      %2748 = vmatpush1.bf16.msra.mxu0 0
      %2749 = vmatprep.mubr.bf16.mxu0 0
      %2750 = vmatmul.mubr.bf16.gmra.mrb[0].mxu0 %v2470
      %v2751 = vpop.f32.mrb[0].mxu0
      %v2752 = vadd.f32 0.0, %v2751
      %v2753 = vpop.f32.mrb[0].mxu0
      %v2754 = vpop.f32.mrb[0].mxu0
      %v2755 = vadd.f32 0.0, %v2754
      %v2756 = vpop.f32.mrb[0].mxu0
      %2757 = vmatprep.mubr.bf16.mxu0 0
      %2758 = vmatmul.mubr.bf16.gmra.mrb[0].mxu0 %v2471
      %v2759 = vpop.f32.mrb[0].mxu0
      %v2760 = vadd.f32 0.0, %v2759
      %v2761 = vpop.f32.mrb[0].mxu0
      %v2762 = vpop.f32.mrb[0].mxu0
      %v2763 = vadd.f32 0.0, %v2762
      %v2764 = vpop.f32.mrb[0].mxu0
      %2765 = vmatprep.mubr.bf16.mxu0 0
      %2766 = vmatmul.mubr.bf16.gmra.mrb[0].mxu0 %v2472
      %v2767 = vpop.f32.mrb[0].mxu0
      %v2768 = vadd.f32 0.0, %v2767
      %v2769 = vpop.f32.mrb[0].mxu0
      %v2770 = vpop.f32.mrb[0].mxu0
      %v2771 = vadd.f32 0.0, %v2770
      %v2772 = vpop.f32.mrb[0].mxu0
      %2773 = vmatprep.mubr.bf16.mxu0 0
      %2774 = vmatmul.mubr.bf16.gmra.mrb[0].mxu0 %v2473
      %v2775 = vpop.f32.mrb[0].mxu0
      %v2776 = vadd.f32 0.0, %v2775
      %v2777 = vpop.f32.mrb[0].mxu0
      %v2778 = vpop.f32.mrb[0].mxu0
      %v2779 = vadd.f32 0.0, %v2778
      %v2780 = vpop.f32.mrb[0].mxu0
      %2781 = vmatprep.mubr.bf16.mxu0 0
      %2782 = vmatmul.mubr.bf16.gmra.mrb[0].mxu0 %v2474
      %v2783 = vpop.f32.mrb[0].mxu0
      %v2784 = vadd.f32 0.0, %v2783
      %v2785 = vpop.f32.mrb[0].mxu0
      %v2786 = vpop.f32.mrb[0].mxu0
      %v2787 = vadd.f32 0.0, %v2786
      %v2788 = vpop.f32.mrb[0].mxu0
      %2789 = vmatprep.mubr.bf16.mxu0 0
      %2790 = vmatmul.mubr.bf16.gmra.mrb[0].mxu0 %v2475
      %v2791 = vpop.f32.mrb[0].mxu0
      %v2792 = vadd.f32 0.0, %v2791
      %v2793 = vpop.f32.mrb[0].mxu0
      %v2794 = vpop.f32.mrb[0].mxu0
      %v2795 = vadd.f32 0.0, %v2794
      %v2796 = vpop.f32.mrb[0].mxu0
      %2797 = vmatprep.mubr.bf16.mxu0 0
      %2798 = vmatmul.mubr.bf16.gmra.mrb[0].mxu0 %v2476
      %v2799 = vpop.f32.mrb[0].mxu0
      %v2800 = vadd.f32 0.0, %v2799
      %v2801 = vpop.f32.mrb[0].mxu0
      %v2802 = vpop.f32.mrb[0].mxu0
      %v2803 = vadd.f32 0.0, %v2802
      %v2804 = vpop.f32.mrb[0].mxu0
      %2805 = vmatprep.mubr.bf16.mxu0 0
      %2806 = vmatmul.mubr.bf16.gmra.mrb[0].mxu0 %v2667
      %v2807 = vpop.f32.mrb[0].mxu0
      %v2808 = vadd.f32 0.0, %v2807
      %v2809 = vpop.f32.mrb[0].mxu0
      %v2810 = vpop.f32.mrb[0].mxu0
      %v2811 = vadd.f32 0.0, %v2810
      %v2812 = vpop.f32.mrb[0].mxu0
      %2813 = vdwg.mxu0
      %v2814 = vadd.f32 %v2630, %v2752
      %v2815 = vadd.f32 %v2631, %v2755
      %v2816 = vadd.f32 %v2632, %v2760
      %v2817 = vadd.f32 %v2633, %v2763
      %v2818 = vadd.f32 %v2634, %v2768
      %v2819 = vadd.f32 %v2635, %v2771
      %v2820 = vadd.f32 %v2636, %v2776
      %v2821 = vadd.f32 %v2637, %v2779
      %v2822 = vadd.f32 %v2638, %v2784
      %v2823 = vadd.f32 %v2639, %v2787
      %v2824 = vadd.f32 %v2640, %v2792
      %v2825 = vadd.f32 %v2641, %v2795
      %v2826 = vadd.f32 %v2642, %v2800
      %v2827 = vadd.f32 %v2643, %v2803
      %v2828 = vadd.f32 %v2644, %v2808
      %v2829 = vadd.f32 %v2645, %v2811
      %s2830 = scalar_lea.vmem %s3, 384
      %v2831 = vld [vmem:[%s2830] sm:$0xf]
      %v2832 = vld [vmem:[%s2830 + $0x4] sm:$0xf]
      %v2833 = vld [vmem:[%s2830 + $0x8] sm:$0xf]
      %v2834 = vld [vmem:[%s2830 + $0xc] sm:$0xf]
      %v2835 = vld [vmem:[%s2830 + $0x10] sm:$0xf]
      %v2836 = vld [vmem:[%s2830 + $0x14] sm:$0xf]
      %v2837 = vld [vmem:[%s2830 + $0x18] sm:$0xf]
      %v2838 = vld [vmem:[%s2830 + $0x1c] sm:$0xf]
      %v2839 = vld [vmem:[%s2830 + $0x20] sm:$0xf]
      %v2840 = vld [vmem:[%s2830 + $0x24] sm:$0xf]
      %v2841 = vld [vmem:[%s2830 + $0x28] sm:$0xf]
      %v2842 = vld [vmem:[%s2830 + $0x2c] sm:$0xf]
      %v2843 = vld [vmem:[%s2830 + $0x30] sm:$0xf]
      %v2844 = vld [vmem:[%s2830 + $0x34] sm:$0xf]
      %v2845 = vld [vmem:[%s2830 + $0x38] sm:$0xf]
      %v2846 = vld [vmem:[%s2830 + $0x3c] sm:$0xf]
      %v2849 = vunpack.c.l.b16 %v2418
      %v2850 = vunpack.c.l.b16 %v2419
      %v2851 = vpack.c.b16 %v2850, %v2849
      %v2869 = vunpack.c.l.b16 %v2831
      %v2870 = vunpack.c.l.b16 %v2832
      %v2871 = vunpack.c.l.b16 %v2833
      %v2872 = vunpack.c.l.b16 %v2834
      %v2873 = vunpack.c.l.b16 %v2835
      %v2874 = vunpack.c.l.b16 %v2836
      %v2875 = vunpack.c.l.b16 %v2837
      %v2876 = vunpack.c.l.b16 %v2838
      %v2877 = vunpack.c.l.b16 %v2839
      %v2878 = vunpack.c.l.b16 %v2840
      %v2879 = vunpack.c.l.b16 %v2841
      %v2880 = vunpack.c.l.b16 %v2842
      %v2881 = vunpack.c.l.b16 %v2843
      %v2882 = vunpack.c.l.b16 %v2844
      %v2883 = vunpack.c.l.b16 %v2845
      %v2884 = vunpack.c.l.b16 %v2846
      %v2885 = vpack.c.b16 %v2870, %v2869
      %v2886 = vpack.c.b16 %v2872, %v2871
      %v2887 = vpack.c.b16 %v2874, %v2873
      %v2888 = vpack.c.b16 %v2876, %v2875
      %v2889 = vpack.c.b16 %v2878, %v2877
      %v2890 = vpack.c.b16 %v2880, %v2879
      %v2891 = vpack.c.b16 %v2882, %v2881
      %v2892 = vpack.c.b16 %v2884, %v2883
      %2901 = vmatprep.subr.bf16.mxu0 0
      %2902 = vmatpush1.bf16.msra.mxu0 %v2885
      %2903 = vmatprep.subr.bf16.mxu0 0
      %2904 = vmatpush1.bf16.msra.mxu0 %v2886
      %2905 = vmatprep.subr.bf16.mxu0 0
      %2906 = vmatpush1.bf16.msra.mxu0 %v2887
      %2907 = vmatprep.subr.bf16.mxu0 0
      %2908 = vmatpush1.bf16.msra.mxu0 %v2888
      %2909 = vmatprep.subr.bf16.mxu0 0
      %2910 = vmatpush1.bf16.msra.mxu0 %v2889
      %2911 = vmatprep.subr.bf16.mxu0 0
      %2912 = vmatpush1.bf16.msra.mxu0 %v2890
      %2913 = vmatprep.subr.bf16.mxu0 0
      %2914 = vmatpush1.bf16.msra.mxu0 %v2891
      %2915 = vmatprep.subr.bf16.mxu0 0
      %2916 = vmatpush1.bf16.msra.mxu0 %v2892
      %2917 = vmatprep.subr.bf16.mxu0 0
      %2918 = vmatpush1.bf16.msra.mxu0 0
      %2919 = vmatprep.subr.bf16.mxu0 0
      %2920 = vmatpush1.bf16.msra.mxu0 0
      %2921 = vmatprep.subr.bf16.mxu0 0
      %2922 = vmatpush1.bf16.msra.mxu0 0
      %2923 = vmatprep.subr.bf16.mxu0 0
      %2924 = vmatpush1.bf16.msra.mxu0 0
      %2925 = vmatprep.subr.bf16.mxu0 0
      %2926 = vmatpush1.bf16.msra.mxu0 0
      %2927 = vmatprep.subr.bf16.mxu0 0
      %2928 = vmatpush1.bf16.msra.mxu0 0
      %2929 = vmatprep.subr.bf16.mxu0 0
      %2930 = vmatpush1.bf16.msra.mxu0 0
      %2931 = vmatprep.subr.bf16.mxu0 0
      %2932 = vmatpush1.bf16.msra.mxu0 0
      %2933 = vmatprep.mubr.bf16.mxu0 0
      %2934 = vmatmul.mubr.bf16.gmra.mrb[0].mxu0 %v2471
      %v2935 = vpop.f32.mrb[0].mxu0
      %v2936 = vadd.f32 0.0, %v2935
      %v2937 = vpop.f32.mrb[0].mxu0
      %v2938 = vpop.f32.mrb[0].mxu0
      %v2939 = vadd.f32 0.0, %v2938
      %v2940 = vpop.f32.mrb[0].mxu0
      %2941 = vmatprep.mubr.bf16.mxu0 0
      %2942 = vmatmul.mubr.bf16.gmra.mrb[0].mxu0 %v2472
      %v2943 = vpop.f32.mrb[0].mxu0
      %v2944 = vadd.f32 0.0, %v2943
      %v2945 = vpop.f32.mrb[0].mxu0
      %v2946 = vpop.f32.mrb[0].mxu0
      %v2947 = vadd.f32 0.0, %v2946
      %v2948 = vpop.f32.mrb[0].mxu0
      %2949 = vmatprep.mubr.bf16.mxu0 0
      %2950 = vmatmul.mubr.bf16.gmra.mrb[0].mxu0 %v2473
      %v2951 = vpop.f32.mrb[0].mxu0
      %v2952 = vadd.f32 0.0, %v2951
      %v2953 = vpop.f32.mrb[0].mxu0
      %v2954 = vpop.f32.mrb[0].mxu0
      %v2955 = vadd.f32 0.0, %v2954
      %v2956 = vpop.f32.mrb[0].mxu0
      %2957 = vmatprep.mubr.bf16.mxu0 0
      %2958 = vmatmul.mubr.bf16.gmra.mrb[0].mxu0 %v2474
      %v2959 = vpop.f32.mrb[0].mxu0
      %v2960 = vadd.f32 0.0, %v2959
      %v2961 = vpop.f32.mrb[0].mxu0
      %v2962 = vpop.f32.mrb[0].mxu0
      %v2963 = vadd.f32 0.0, %v2962
      %v2964 = vpop.f32.mrb[0].mxu0
      %2965 = vmatprep.mubr.bf16.mxu0 0
      %2966 = vmatmul.mubr.bf16.gmra.mrb[0].mxu0 %v2475
      %v2967 = vpop.f32.mrb[0].mxu0
      %v2968 = vadd.f32 0.0, %v2967
      %v2969 = vpop.f32.mrb[0].mxu0
      %v2970 = vpop.f32.mrb[0].mxu0
      %v2971 = vadd.f32 0.0, %v2970
      %v2972 = vpop.f32.mrb[0].mxu0
      %2973 = vmatprep.mubr.bf16.mxu0 0
      %2974 = vmatmul.mubr.bf16.gmra.mrb[0].mxu0 %v2476
      %v2975 = vpop.f32.mrb[0].mxu0
      %v2976 = vadd.f32 0.0, %v2975
      %v2977 = vpop.f32.mrb[0].mxu0
      %v2978 = vpop.f32.mrb[0].mxu0
      %v2979 = vadd.f32 0.0, %v2978
      %v2980 = vpop.f32.mrb[0].mxu0
      %2981 = vmatprep.mubr.bf16.mxu0 0
      %2982 = vmatmul.mubr.bf16.gmra.mrb[0].mxu0 %v2667
      %v2983 = vpop.f32.mrb[0].mxu0
      %v2984 = vadd.f32 0.0, %v2983
      %v2985 = vpop.f32.mrb[0].mxu0
      %v2986 = vpop.f32.mrb[0].mxu0
      %v2987 = vadd.f32 0.0, %v2986
      %v2988 = vpop.f32.mrb[0].mxu0
      %2989 = vmatprep.mubr.bf16.mxu0 0
      %2990 = vmatmul.mubr.bf16.gmra.mrb[0].mxu0 %v2851
      %v2991 = vpop.f32.mrb[0].mxu0
      %v2992 = vadd.f32 0.0, %v2991
      %v2993 = vpop.f32.mrb[0].mxu0
      %v2994 = vpop.f32.mrb[0].mxu0
      %v2995 = vadd.f32 0.0, %v2994
      %v2996 = vpop.f32.mrb[0].mxu0
      %2997 = vdwg.mxu0
      %v2998 = vadd.f32 %v2814, %v2936
      %v2999 = vadd.f32 %v2815, %v2939
      %v3000 = vadd.f32 %v2816, %v2944
      %v3001 = vadd.f32 %v2817, %v2947
      %v3002 = vadd.f32 %v2818, %v2952
      %v3003 = vadd.f32 %v2819, %v2955
      %v3004 = vadd.f32 %v2820, %v2960
      %v3005 = vadd.f32 %v2821, %v2963
      %v3006 = vadd.f32 %v2822, %v2968
      %v3007 = vadd.f32 %v2823, %v2971
      %v3008 = vadd.f32 %v2824, %v2976
      %v3009 = vadd.f32 %v2825, %v2979
      %v3010 = vadd.f32 %v2826, %v2984
      %v3011 = vadd.f32 %v2827, %v2987
      %v3012 = vadd.f32 %v2828, %v2992
      %v3013 = vadd.f32 %v2829, %v2995
      %v3015 = vshrl.u32 %v2391, 16
      %v3017 = vrot.slane %v3015, 4
      %v3018 = vshll.u32 %v2391, 16
      %v3020 = vrot.slane %v3018, 5
      %v3021 = vor.u32 %v3017, %v3020
      %v3022 = vrot.slane %v3021, 4
      %v3024 = vshll.u32 %v2392, 16
      %v3026 = vrot.slane %v3024, 5
      %v3027 = vsel %vm919, %v3022, %v3026
      %v3028 = vshrl.u32 %v2392, 16
      %v3030 = vrot.slane %v3028, 4
      %v3031 = vor.u32 %v3030, %v3026
      %v3032 = vrot.slane %v3031, 4
      %v3034 = vshll.u32 %v2393, 16
      %v3036 = vrot.slane %v3034, 5
      %v3037 = vsel %vm919, %v3032, %v3036
      %v3039 = vshrl.u32 %v2394, 16
      %v3041 = vrot.slane %v3039, 4
      %v3042 = vshll.u32 %v2394, 16
      %v3044 = vrot.slane %v3042, 5
      %v3045 = vor.u32 %v3041, %v3044
      %v3046 = vrot.slane %v3045, 4
      %v3048 = vshll.u32 %v2395, 16
      %v3050 = vrot.slane %v3048, 5
      %v3051 = vsel %vm919, %v3046, %v3050
      %v3052 = vshrl.u32 %v2395, 16
      %v3054 = vrot.slane %v3052, 4
      %v3055 = vor.u32 %v3054, %v3050
      %v3056 = vrot.slane %v3055, 4
      %v3058 = vshll.u32 %v2396, 16
      %v3060 = vrot.slane %v3058, 5
      %v3061 = vsel %vm919, %v3056, %v3060
      %v3063 = vshrl.u32 %v2397, 16
      %v3065 = vrot.slane %v3063, 4
      %v3066 = vshll.u32 %v2397, 16
      %v3068 = vrot.slane %v3066, 5
      %v3069 = vor.u32 %v3065, %v3068
      %v3070 = vrot.slane %v3069, 4
      %v3072 = vshll.u32 %v2398, 16
      %v3074 = vrot.slane %v3072, 5
      %v3075 = vsel %vm919, %v3070, %v3074
      %v3076 = vshrl.u32 %v2398, 16
      %v3078 = vrot.slane %v3076, 4
      %v3079 = vor.u32 %v3078, %v3074
      %v3080 = vrot.slane %v3079, 4
      %v3082 = vshll.u32 %v2399, 16
      %v3084 = vrot.slane %v3082, 5
      %v3085 = vsel %vm919, %v3080, %v3084
      %v3087 = vshrl.u32 %v2400, 16
      %v3089 = vrot.slane %v3087, 4
      %v3090 = vshll.u32 %v2400, 16
      %v3092 = vrot.slane %v3090, 5
      %v3093 = vor.u32 %v3089, %v3092
      %v3094 = vrot.slane %v3093, 4
      %v3096 = vshll.u32 %v2401, 16
      %v3098 = vrot.slane %v3096, 5
      %v3099 = vsel %vm919, %v3094, %v3098
      %v3100 = vshrl.u32 %v2401, 16
      %v3102 = vrot.slane %v3100, 4
      %v3103 = vor.u32 %v3102, %v3098
      %v3104 = vrot.slane %v3103, 4
      %v3106 = vshll.u32 %v2402, 16
      %v3108 = vrot.slane %v3106, 5
      %v3109 = vsel %vm919, %v3104, %v3108
      %v3111 = vshrl.u32 %v2403, 16
      %v3113 = vrot.slane %v3111, 4
      %v3114 = vshll.u32 %v2403, 16
      %v3116 = vrot.slane %v3114, 5
      %v3117 = vor.u32 %v3113, %v3116
      %v3118 = vrot.slane %v3117, 4
      %v3120 = vshll.u32 %v2404, 16
      %v3122 = vrot.slane %v3120, 5
      %v3123 = vsel %vm919, %v3118, %v3122
      %v3124 = vshrl.u32 %v2404, 16
      %v3126 = vrot.slane %v3124, 4
      %v3127 = vor.u32 %v3126, %v3122
      %v3128 = vrot.slane %v3127, 4
      %v3130 = vshll.u32 %v2405, 16
      %v3132 = vrot.slane %v3130, 5
      %v3133 = vsel %vm919, %v3128, %v3132
      %v3135 = vshrl.u32 %v2406, 16
      %v3137 = vrot.slane %v3135, 4
      %v3138 = vshll.u32 %v2406, 16
      %v3140 = vrot.slane %v3138, 5
      %v3141 = vor.u32 %v3137, %v3140
      %v3142 = vrot.slane %v3141, 4
      %v3144 = vshll.u32 %v2407, 16
      %v3146 = vrot.slane %v3144, 5
      %v3147 = vsel %vm919, %v3142, %v3146
      %v3148 = vshrl.u32 %v2407, 16
      %v3150 = vrot.slane %v3148, 4
      %v3151 = vor.u32 %v3150, %v3146
      %v3152 = vrot.slane %v3151, 4
      %v3154 = vshll.u32 %v2408, 16
      %v3156 = vrot.slane %v3154, 5
      %v3157 = vsel %vm919, %v3152, %v3156
      %v3159 = vshrl.u32 %v2409, 16
      %v3161 = vrot.slane %v3159, 4
      %v3162 = vshll.u32 %v2409, 16
      %v3164 = vrot.slane %v3162, 5
      %v3165 = vor.u32 %v3161, %v3164
      %v3166 = vrot.slane %v3165, 4
      %v3168 = vshll.u32 %v2410, 16
      %v3170 = vrot.slane %v3168, 5
      %v3171 = vsel %vm919, %v3166, %v3170
      %v3172 = vshrl.u32 %v2410, 16
      %v3174 = vrot.slane %v3172, 4
      %v3175 = vor.u32 %v3174, %v3170
      %v3176 = vrot.slane %v3175, 4
      %v3178 = vshll.u32 %v2411, 16
      %v3180 = vrot.slane %v3178, 5
      %v3181 = vsel %vm919, %v3176, %v3180
      %v3183 = vshrl.u32 %v2412, 16
      %v3185 = vrot.slane %v3183, 4
      %v3186 = vshll.u32 %v2412, 16
      %v3188 = vrot.slane %v3186, 5
      %v3189 = vor.u32 %v3185, %v3188
      %v3190 = vrot.slane %v3189, 4
      %v3192 = vshll.u32 %v2413, 16
      %v3194 = vrot.slane %v3192, 5
      %v3195 = vsel %vm919, %v3190, %v3194
      %v3196 = vshrl.u32 %v2413, 16
      %v3198 = vrot.slane %v3196, 4
      %v3199 = vor.u32 %v3198, %v3194
      %v3200 = vrot.slane %v3199, 4
      %v3202 = vshll.u32 %v2414, 16
      %v3204 = vrot.slane %v3202, 5
      %v3205 = vsel %vm919, %v3200, %v3204
      %v3207 = vshrl.u32 %v2415, 16
      %v3209 = vrot.slane %v3207, 4
      %v3210 = vshll.u32 %v2415, 16
      %v3212 = vrot.slane %v3210, 5
      %v3213 = vor.u32 %v3209, %v3212
      %v3214 = vrot.slane %v3213, 4
      %v3216 = vshll.u32 %v2416, 16
      %v3218 = vrot.slane %v3216, 5
      %v3219 = vsel %vm919, %v3214, %v3218
      %v3220 = vshrl.u32 %v2416, 16
      %v3222 = vrot.slane %v3220, 4
      %v3223 = vor.u32 %v3222, %v3218
      %v3224 = vrot.slane %v3223, 4
      %v3226 = vshll.u32 %v2417, 16
      %v3228 = vrot.slane %v3226, 5
      %v3229 = vsel %vm919, %v3224, %v3228
      %v3231 = vshrl.u32 %v2418, 16
      %v3233 = vrot.slane %v3231, 4
      %v3234 = vshll.u32 %v2418, 16
      %v3236 = vrot.slane %v3234, 5
      %v3237 = vor.u32 %v3233, %v3236
      %v3238 = vrot.slane %v3237, 4
      %v3240 = vshll.u32 %v2419, 16
      %v3242 = vrot.slane %v3240, 5
      %v3243 = vsel %vm919, %v3238, %v3242
      %v3244 = vshrl.u32 %v2419, 16
      %v3246 = vrot.slane %v3244, 4
      %v3247 = vor.u32 %v3246, %v3242
      %v3248 = vrot.slane %v3247, 4
      %v3250 = vshll.u32 %v2420, 16
      %v3252 = vrot.slane %v3250, 5
      %v3253 = vsel %vm919, %v3248, %v3252
      %s3254 = scalar_lea.vmem %s3, 64
      %v3255 = vld [vmem:[%s3254] sm:$0xf]
      %v3256 = vld [vmem:[%s3254 + $0x4] sm:$0xf]
      %v3257 = vld [vmem:[%s3254 + $0x8] sm:$0xf]
      %v3258 = vld [vmem:[%s3254 + $0xc] sm:$0xf]
      %v3259 = vld [vmem:[%s3254 + $0x10] sm:$0xf]
      %v3260 = vld [vmem:[%s3254 + $0x14] sm:$0xf]
      %v3261 = vld [vmem:[%s3254 + $0x18] sm:$0xf]
      %v3262 = vld [vmem:[%s3254 + $0x1c] sm:$0xf]
      %v3263 = vld [vmem:[%s3254 + $0x20] sm:$0xf]
      %v3264 = vld [vmem:[%s3254 + $0x24] sm:$0xf]
      %v3265 = vld [vmem:[%s3254 + $0x28] sm:$0xf]
      %v3266 = vld [vmem:[%s3254 + $0x2c] sm:$0xf]
      %v3267 = vld [vmem:[%s3254 + $0x30] sm:$0xf]
      %v3268 = vld [vmem:[%s3254 + $0x34] sm:$0xf]
      %v3269 = vld [vmem:[%s3254 + $0x38] sm:$0xf]
      %v3270 = vld [vmem:[%s3254 + $0x3c] sm:$0xf]
      %v3271 = vunpack.c.l.b16 %v3027
      %v3272 = vunpack.c.l.b16 %v3037
      %v3273 = vunpack.c.l.b16 %v3051
      %v3274 = vunpack.c.l.b16 %v3061
      %v3275 = vunpack.c.l.b16 %v3075
      %v3276 = vunpack.c.l.b16 %v3085
      %v3277 = vunpack.c.l.b16 %v3099
      %v3278 = vunpack.c.l.b16 %v3109
      %v3279 = vunpack.c.l.b16 %v3123
      %v3280 = vunpack.c.l.b16 %v3133
      %v3281 = vunpack.c.l.b16 %v3147
      %v3282 = vunpack.c.l.b16 %v3157
      %v3283 = vunpack.c.l.b16 %v3171
      %v3284 = vunpack.c.l.b16 %v3181
      %v3285 = vunpack.c.l.b16 %v3195
      %v3286 = vunpack.c.l.b16 %v3205
      %v3287 = vpack.c.b16 %v3272, %v3271
      %v3288 = vpack.c.b16 %v3274, %v3273
      %v3289 = vpack.c.b16 %v3276, %v3275
      %v3290 = vpack.c.b16 %v3278, %v3277
      %v3291 = vpack.c.b16 %v3280, %v3279
      %v3292 = vpack.c.b16 %v3282, %v3281
      %v3293 = vpack.c.b16 %v3284, %v3283
      %v3294 = vpack.c.b16 %v3286, %v3285
      %v3319 = vunpack.c.l.b16 %v3255
      %v3320 = vunpack.c.l.b16 %v3256
      %v3321 = vunpack.c.l.b16 %v3257
      %v3322 = vunpack.c.l.b16 %v3258
      %v3323 = vunpack.c.l.b16 %v3259
      %v3324 = vunpack.c.l.b16 %v3260
      %v3325 = vunpack.c.l.b16 %v3261
      %v3326 = vunpack.c.l.b16 %v3262
      %v3327 = vunpack.c.l.b16 %v3263
      %v3328 = vunpack.c.l.b16 %v3264
      %v3329 = vunpack.c.l.b16 %v3265
      %v3330 = vunpack.c.l.b16 %v3266
      %v3331 = vunpack.c.l.b16 %v3267
      %v3332 = vunpack.c.l.b16 %v3268
      %v3333 = vunpack.c.l.b16 %v3269
      %v3334 = vunpack.c.l.b16 %v3270
      %v3335 = vpack.c.b16 %v3320, %v3319
      %v3336 = vpack.c.b16 %v3322, %v3321
      %v3337 = vpack.c.b16 %v3324, %v3323
      %v3338 = vpack.c.b16 %v3326, %v3325
      %v3339 = vpack.c.b16 %v3328, %v3327
      %v3340 = vpack.c.b16 %v3330, %v3329
      %v3341 = vpack.c.b16 %v3332, %v3331
      %v3342 = vpack.c.b16 %v3334, %v3333
      %3351 = vmatprep.subr.bf16.mxu0 0
      %3352 = vmatpush1.bf16.msra.mxu0 %v3335
      %3353 = vmatprep.subr.bf16.mxu0 0
      %3354 = vmatpush1.bf16.msra.mxu0 %v3336
      %3355 = vmatprep.subr.bf16.mxu0 0
      %3356 = vmatpush1.bf16.msra.mxu0 %v3337
      %3357 = vmatprep.subr.bf16.mxu0 0
      %3358 = vmatpush1.bf16.msra.mxu0 %v3338
      %3359 = vmatprep.subr.bf16.mxu0 0
      %3360 = vmatpush1.bf16.msra.mxu0 %v3339
      %3361 = vmatprep.subr.bf16.mxu0 0
      %3362 = vmatpush1.bf16.msra.mxu0 %v3340
      %3363 = vmatprep.subr.bf16.mxu0 0
      %3364 = vmatpush1.bf16.msra.mxu0 %v3341
      %3365 = vmatprep.subr.bf16.mxu0 0
      %3366 = vmatpush1.bf16.msra.mxu0 %v3342
      %3367 = vmatprep.subr.bf16.mxu0 0
      %3368 = vmatpush1.bf16.msra.mxu0 0
      %3369 = vmatprep.subr.bf16.mxu0 0
      %3370 = vmatpush1.bf16.msra.mxu0 0
      %3371 = vmatprep.subr.bf16.mxu0 0
      %3372 = vmatpush1.bf16.msra.mxu0 0
      %3373 = vmatprep.subr.bf16.mxu0 0
      %3374 = vmatpush1.bf16.msra.mxu0 0
      %3375 = vmatprep.subr.bf16.mxu0 0
      %3376 = vmatpush1.bf16.msra.mxu0 0
      %3377 = vmatprep.subr.bf16.mxu0 0
      %3378 = vmatpush1.bf16.msra.mxu0 0
      %3379 = vmatprep.subr.bf16.mxu0 0
      %3380 = vmatpush1.bf16.msra.mxu0 0
      %3381 = vmatprep.subr.bf16.mxu0 0
      %3382 = vmatpush1.bf16.msra.mxu0 0
      %3383 = vmatprep.mubr.bf16.mxu0 0
      %3384 = vmatmul.mubr.bf16.gmra.mrb[0].mxu0 %v3287
      %v3385 = vpop.f32.mrb[0].mxu0
      %v3386 = vadd.f32 0.0, %v3385
      %v3387 = vpop.f32.mrb[0].mxu0
      %v3388 = vpop.f32.mrb[0].mxu0
      %v3389 = vadd.f32 0.0, %v3388
      %v3390 = vpop.f32.mrb[0].mxu0
      %3391 = vmatprep.mubr.bf16.mxu0 0
      %3392 = vmatmul.mubr.bf16.gmra.mrb[0].mxu0 %v3288
      %v3393 = vpop.f32.mrb[0].mxu0
      %v3394 = vadd.f32 0.0, %v3393
      %v3395 = vpop.f32.mrb[0].mxu0
      %v3396 = vpop.f32.mrb[0].mxu0
      %v3397 = vadd.f32 0.0, %v3396
      %v3398 = vpop.f32.mrb[0].mxu0
      %3399 = vmatprep.mubr.bf16.mxu0 0
      %3400 = vmatmul.mubr.bf16.gmra.mrb[0].mxu0 %v3289
      %v3401 = vpop.f32.mrb[0].mxu0
      %v3402 = vadd.f32 0.0, %v3401
      %v3403 = vpop.f32.mrb[0].mxu0
      %v3404 = vpop.f32.mrb[0].mxu0
      %v3405 = vadd.f32 0.0, %v3404
      %v3406 = vpop.f32.mrb[0].mxu0
      %3407 = vmatprep.mubr.bf16.mxu0 0
      %3408 = vmatmul.mubr.bf16.gmra.mrb[0].mxu0 %v3290
      %v3409 = vpop.f32.mrb[0].mxu0
      %v3410 = vadd.f32 0.0, %v3409
      %v3411 = vpop.f32.mrb[0].mxu0
      %v3412 = vpop.f32.mrb[0].mxu0
      %v3413 = vadd.f32 0.0, %v3412
      %v3414 = vpop.f32.mrb[0].mxu0
      %3415 = vmatprep.mubr.bf16.mxu0 0
      %3416 = vmatmul.mubr.bf16.gmra.mrb[0].mxu0 %v3291
      %v3417 = vpop.f32.mrb[0].mxu0
      %v3418 = vadd.f32 0.0, %v3417
      %v3419 = vpop.f32.mrb[0].mxu0
      %v3420 = vpop.f32.mrb[0].mxu0
      %v3421 = vadd.f32 0.0, %v3420
      %v3422 = vpop.f32.mrb[0].mxu0
      %3423 = vmatprep.mubr.bf16.mxu0 0
      %3424 = vmatmul.mubr.bf16.gmra.mrb[0].mxu0 %v3292
      %v3425 = vpop.f32.mrb[0].mxu0
      %v3426 = vadd.f32 0.0, %v3425
      %v3427 = vpop.f32.mrb[0].mxu0
      %v3428 = vpop.f32.mrb[0].mxu0
      %v3429 = vadd.f32 0.0, %v3428
      %v3430 = vpop.f32.mrb[0].mxu0
      %3431 = vmatprep.mubr.bf16.mxu0 0
      %3432 = vmatmul.mubr.bf16.gmra.mrb[0].mxu0 %v3293
      %v3433 = vpop.f32.mrb[0].mxu0
      %v3434 = vadd.f32 0.0, %v3433
      %v3435 = vpop.f32.mrb[0].mxu0
      %v3436 = vpop.f32.mrb[0].mxu0
      %v3437 = vadd.f32 0.0, %v3436
      %v3438 = vpop.f32.mrb[0].mxu0
      %3439 = vmatprep.mubr.bf16.mxu0 0
      %3440 = vmatmul.mubr.bf16.gmra.mrb[0].mxu0 %v3294
      %v3441 = vpop.f32.mrb[0].mxu0
      %v3442 = vadd.f32 0.0, %v3441
      %v3443 = vpop.f32.mrb[0].mxu0
      %v3444 = vpop.f32.mrb[0].mxu0
      %v3445 = vadd.f32 0.0, %v3444
      %v3446 = vpop.f32.mrb[0].mxu0
      %3447 = vdwg.mxu0
      %v3448 = vadd.f32 %v2998, %v3386
      %v3449 = vadd.f32 %v2999, %v3389
      %v3450 = vadd.f32 %v3000, %v3394
      %v3451 = vadd.f32 %v3001, %v3397
      %v3452 = vadd.f32 %v3002, %v3402
      %v3453 = vadd.f32 %v3003, %v3405
      %v3454 = vadd.f32 %v3004, %v3410
      %v3455 = vadd.f32 %v3005, %v3413
      %v3456 = vadd.f32 %v3006, %v3418
      %v3457 = vadd.f32 %v3007, %v3421
      %v3458 = vadd.f32 %v3008, %v3426
      %v3459 = vadd.f32 %v3009, %v3429
      %v3460 = vadd.f32 %v3010, %v3434
      %v3461 = vadd.f32 %v3011, %v3437
      %v3462 = vadd.f32 %v3012, %v3442
      %v3463 = vadd.f32 %v3013, %v3445
      %s3464 = scalar_lea.vmem %s3, 256
      %v3465 = vld [vmem:[%s3464] sm:$0xf]
      %v3466 = vld [vmem:[%s3464 + $0x4] sm:$0xf]
      %v3467 = vld [vmem:[%s3464 + $0x8] sm:$0xf]
      %v3468 = vld [vmem:[%s3464 + $0xc] sm:$0xf]
      %v3469 = vld [vmem:[%s3464 + $0x10] sm:$0xf]
      %v3470 = vld [vmem:[%s3464 + $0x14] sm:$0xf]
      %v3471 = vld [vmem:[%s3464 + $0x18] sm:$0xf]
      %v3472 = vld [vmem:[%s3464 + $0x1c] sm:$0xf]
      %v3473 = vld [vmem:[%s3464 + $0x20] sm:$0xf]
      %v3474 = vld [vmem:[%s3464 + $0x24] sm:$0xf]
      %v3475 = vld [vmem:[%s3464 + $0x28] sm:$0xf]
      %v3476 = vld [vmem:[%s3464 + $0x2c] sm:$0xf]
      %v3477 = vld [vmem:[%s3464 + $0x30] sm:$0xf]
      %v3478 = vld [vmem:[%s3464 + $0x34] sm:$0xf]
      %v3479 = vld [vmem:[%s3464 + $0x38] sm:$0xf]
      %v3480 = vld [vmem:[%s3464 + $0x3c] sm:$0xf]
      %v3481 = vunpack.c.l.b16 %v3219
      %v3482 = vunpack.c.l.b16 %v3229
      %v3483 = vpack.c.b16 %v3482, %v3481
      %v3501 = vunpack.c.l.b16 %v3465
      %v3502 = vunpack.c.l.b16 %v3466
      %v3503 = vunpack.c.l.b16 %v3467
      %v3504 = vunpack.c.l.b16 %v3468
      %v3505 = vunpack.c.l.b16 %v3469
      %v3506 = vunpack.c.l.b16 %v3470
      %v3507 = vunpack.c.l.b16 %v3471
      %v3508 = vunpack.c.l.b16 %v3472
      %v3509 = vunpack.c.l.b16 %v3473
      %v3510 = vunpack.c.l.b16 %v3474
      %v3511 = vunpack.c.l.b16 %v3475
      %v3512 = vunpack.c.l.b16 %v3476
      %v3513 = vunpack.c.l.b16 %v3477
      %v3514 = vunpack.c.l.b16 %v3478
      %v3515 = vunpack.c.l.b16 %v3479
      %v3516 = vunpack.c.l.b16 %v3480
      %v3517 = vpack.c.b16 %v3502, %v3501
      %v3518 = vpack.c.b16 %v3504, %v3503
      %v3519 = vpack.c.b16 %v3506, %v3505
      %v3520 = vpack.c.b16 %v3508, %v3507
      %v3521 = vpack.c.b16 %v3510, %v3509
      %v3522 = vpack.c.b16 %v3512, %v3511
      %v3523 = vpack.c.b16 %v3514, %v3513
      %v3524 = vpack.c.b16 %v3516, %v3515
      %3533 = vmatprep.subr.bf16.mxu0 0
      %3534 = vmatpush1.bf16.msra.mxu0 %v3517
      %3535 = vmatprep.subr.bf16.mxu0 0
      %3536 = vmatpush1.bf16.msra.mxu0 %v3518
      %3537 = vmatprep.subr.bf16.mxu0 0
      %3538 = vmatpush1.bf16.msra.mxu0 %v3519
      %3539 = vmatprep.subr.bf16.mxu0 0
      %3540 = vmatpush1.bf16.msra.mxu0 %v3520
      %3541 = vmatprep.subr.bf16.mxu0 0
      %3542 = vmatpush1.bf16.msra.mxu0 %v3521
      %3543 = vmatprep.subr.bf16.mxu0 0
      %3544 = vmatpush1.bf16.msra.mxu0 %v3522
      %3545 = vmatprep.subr.bf16.mxu0 0
      %3546 = vmatpush1.bf16.msra.mxu0 %v3523
      %3547 = vmatprep.subr.bf16.mxu0 0
      %3548 = vmatpush1.bf16.msra.mxu0 %v3524
      %3549 = vmatprep.subr.bf16.mxu0 0
      %3550 = vmatpush1.bf16.msra.mxu0 0
      %3551 = vmatprep.subr.bf16.mxu0 0
      %3552 = vmatpush1.bf16.msra.mxu0 0
      %3553 = vmatprep.subr.bf16.mxu0 0
      %3554 = vmatpush1.bf16.msra.mxu0 0
      %3555 = vmatprep.subr.bf16.mxu0 0
      %3556 = vmatpush1.bf16.msra.mxu0 0
      %3557 = vmatprep.subr.bf16.mxu0 0
      %3558 = vmatpush1.bf16.msra.mxu0 0
      %3559 = vmatprep.subr.bf16.mxu0 0
      %3560 = vmatpush1.bf16.msra.mxu0 0
      %3561 = vmatprep.subr.bf16.mxu0 0
      %3562 = vmatpush1.bf16.msra.mxu0 0
      %3563 = vmatprep.subr.bf16.mxu0 0
      %3564 = vmatpush1.bf16.msra.mxu0 0
      %3565 = vmatprep.mubr.bf16.mxu0 0
      %3566 = vmatmul.mubr.bf16.gmra.mrb[0].mxu0 %v3288
      %v3567 = vpop.f32.mrb[0].mxu0
      %v3568 = vadd.f32 0.0, %v3567
      %v3569 = vpop.f32.mrb[0].mxu0
      %v3570 = vpop.f32.mrb[0].mxu0
      %v3571 = vadd.f32 0.0, %v3570
      %v3572 = vpop.f32.mrb[0].mxu0
      %3573 = vmatprep.mubr.bf16.mxu0 0
      %3574 = vmatmul.mubr.bf16.gmra.mrb[0].mxu0 %v3289
      %v3575 = vpop.f32.mrb[0].mxu0
      %v3576 = vadd.f32 0.0, %v3575
      %v3577 = vpop.f32.mrb[0].mxu0
      %v3578 = vpop.f32.mrb[0].mxu0
      %v3579 = vadd.f32 0.0, %v3578
      %v3580 = vpop.f32.mrb[0].mxu0
      %3581 = vmatprep.mubr.bf16.mxu0 0
      %3582 = vmatmul.mubr.bf16.gmra.mrb[0].mxu0 %v3290
      %v3583 = vpop.f32.mrb[0].mxu0
      %v3584 = vadd.f32 0.0, %v3583
      %v3585 = vpop.f32.mrb[0].mxu0
      %v3586 = vpop.f32.mrb[0].mxu0
      %v3587 = vadd.f32 0.0, %v3586
      %v3588 = vpop.f32.mrb[0].mxu0
      %3589 = vmatprep.mubr.bf16.mxu0 0
      %3590 = vmatmul.mubr.bf16.gmra.mrb[0].mxu0 %v3291
      %v3591 = vpop.f32.mrb[0].mxu0
      %v3592 = vadd.f32 0.0, %v3591
      %v3593 = vpop.f32.mrb[0].mxu0
      %v3594 = vpop.f32.mrb[0].mxu0
      %v3595 = vadd.f32 0.0, %v3594
      %v3596 = vpop.f32.mrb[0].mxu0
      %3597 = vmatprep.mubr.bf16.mxu0 0
      %3598 = vmatmul.mubr.bf16.gmra.mrb[0].mxu0 %v3292
      %v3599 = vpop.f32.mrb[0].mxu0
      %v3600 = vadd.f32 0.0, %v3599
      %v3601 = vpop.f32.mrb[0].mxu0
      %v3602 = vpop.f32.mrb[0].mxu0
      %v3603 = vadd.f32 0.0, %v3602
      %v3604 = vpop.f32.mrb[0].mxu0
      %3605 = vmatprep.mubr.bf16.mxu0 0
      %3606 = vmatmul.mubr.bf16.gmra.mrb[0].mxu0 %v3293
      %v3607 = vpop.f32.mrb[0].mxu0
      %v3608 = vadd.f32 0.0, %v3607
      %v3609 = vpop.f32.mrb[0].mxu0
      %v3610 = vpop.f32.mrb[0].mxu0
      %v3611 = vadd.f32 0.0, %v3610
      %v3612 = vpop.f32.mrb[0].mxu0
      %3613 = vmatprep.mubr.bf16.mxu0 0
      %3614 = vmatmul.mubr.bf16.gmra.mrb[0].mxu0 %v3294
      %v3615 = vpop.f32.mrb[0].mxu0
      %v3616 = vadd.f32 0.0, %v3615
      %v3617 = vpop.f32.mrb[0].mxu0
      %v3618 = vpop.f32.mrb[0].mxu0
      %v3619 = vadd.f32 0.0, %v3618
      %v3620 = vpop.f32.mrb[0].mxu0
      %3621 = vmatprep.mubr.bf16.mxu0 0
      %3622 = vmatmul.mubr.bf16.gmra.mrb[0].mxu0 %v3483
      %v3623 = vpop.f32.mrb[0].mxu0
      %v3624 = vadd.f32 0.0, %v3623
      %v3625 = vpop.f32.mrb[0].mxu0
      %v3626 = vpop.f32.mrb[0].mxu0
      %v3627 = vadd.f32 0.0, %v3626
      %v3628 = vpop.f32.mrb[0].mxu0
      %3629 = vdwg.mxu0
      %v3630 = vadd.f32 %v3448, %v3568
      %v3631 = vadd.f32 %v3449, %v3571
      %v3632 = vadd.f32 %v3450, %v3576
      %v3633 = vadd.f32 %v3451, %v3579
      %v3634 = vadd.f32 %v3452, %v3584
      %v3635 = vadd.f32 %v3453, %v3587
      %v3636 = vadd.f32 %v3454, %v3592
      %v3637 = vadd.f32 %v3455, %v3595
      %v3638 = vadd.f32 %v3456, %v3600
      %v3639 = vadd.f32 %v3457, %v3603
      %v3640 = vadd.f32 %v3458, %v3608
      %v3641 = vadd.f32 %v3459, %v3611
      %v3642 = vadd.f32 %v3460, %v3616
      %v3643 = vadd.f32 %v3461, %v3619
      %v3644 = vadd.f32 %v3462, %v3624
      %v3645 = vadd.f32 %v3463, %v3627
      %s3646 = scalar_lea.vmem %s3, 448
      %v3647 = vld [vmem:[%s3646] sm:$0xf]
      %v3648 = vld [vmem:[%s3646 + $0x4] sm:$0xf]
      %v3649 = vld [vmem:[%s3646 + $0x8] sm:$0xf]
      %v3650 = vld [vmem:[%s3646 + $0xc] sm:$0xf]
      %v3651 = vld [vmem:[%s3646 + $0x10] sm:$0xf]
      %v3652 = vld [vmem:[%s3646 + $0x14] sm:$0xf]
      %v3653 = vld [vmem:[%s3646 + $0x18] sm:$0xf]
      %v3654 = vld [vmem:[%s3646 + $0x1c] sm:$0xf]
      %v3655 = vld [vmem:[%s3646 + $0x20] sm:$0xf]
      %v3656 = vld [vmem:[%s3646 + $0x24] sm:$0xf]
      %v3657 = vld [vmem:[%s3646 + $0x28] sm:$0xf]
      %v3658 = vld [vmem:[%s3646 + $0x2c] sm:$0xf]
      %v3659 = vld [vmem:[%s3646 + $0x30] sm:$0xf]
      %v3660 = vld [vmem:[%s3646 + $0x34] sm:$0xf]
      %v3661 = vld [vmem:[%s3646 + $0x38] sm:$0xf]
      %v3662 = vld [vmem:[%s3646 + $0x3c] sm:$0xf]
      %v3663 = vunpack.c.l.b16 %v3243
      %v3664 = vunpack.c.l.b16 %v3253
      %v3665 = vpack.c.b16 %v3664, %v3663
      %v3683 = vunpack.c.l.b16 %v3647
      %v3684 = vunpack.c.l.b16 %v3648
      %v3685 = vunpack.c.l.b16 %v3649
      %v3686 = vunpack.c.l.b16 %v3650
      %v3687 = vunpack.c.l.b16 %v3651
      %v3688 = vunpack.c.l.b16 %v3652
      %v3689 = vunpack.c.l.b16 %v3653
      %v3690 = vunpack.c.l.b16 %v3654
      %v3691 = vunpack.c.l.b16 %v3655
      %v3692 = vunpack.c.l.b16 %v3656
      %v3693 = vunpack.c.l.b16 %v3657
      %v3694 = vunpack.c.l.b16 %v3658
      %v3695 = vunpack.c.l.b16 %v3659
      %v3696 = vunpack.c.l.b16 %v3660
      %v3697 = vunpack.c.l.b16 %v3661
      %v3698 = vunpack.c.l.b16 %v3662
      %v3699 = vpack.c.b16 %v3684, %v3683
      %v3700 = vpack.c.b16 %v3686, %v3685
      %v3701 = vpack.c.b16 %v3688, %v3687
      %v3702 = vpack.c.b16 %v3690, %v3689
      %v3703 = vpack.c.b16 %v3692, %v3691
      %v3704 = vpack.c.b16 %v3694, %v3693
      %v3705 = vpack.c.b16 %v3696, %v3695
      %v3706 = vpack.c.b16 %v3698, %v3697
      %3715 = vmatprep.subr.bf16.mxu0 0
      %3716 = vmatpush1.bf16.msra.mxu0 %v3699
      %3717 = vmatprep.subr.bf16.mxu0 0
      %3718 = vmatpush1.bf16.msra.mxu0 %v3700
      %3719 = vmatprep.subr.bf16.mxu0 0
      %3720 = vmatpush1.bf16.msra.mxu0 %v3701
      %3721 = vmatprep.subr.bf16.mxu0 0
      %3722 = vmatpush1.bf16.msra.mxu0 %v3702
      %3723 = vmatprep.subr.bf16.mxu0 0
      %3724 = vmatpush1.bf16.msra.mxu0 %v3703
      %3725 = vmatprep.subr.bf16.mxu0 0
      %3726 = vmatpush1.bf16.msra.mxu0 %v3704
      %3727 = vmatprep.subr.bf16.mxu0 0
      %3728 = vmatpush1.bf16.msra.mxu0 %v3705
      %3729 = vmatprep.subr.bf16.mxu0 0
      %3730 = vmatpush1.bf16.msra.mxu0 %v3706
      %3731 = vmatprep.subr.bf16.mxu0 0
      %3732 = vmatpush1.bf16.msra.mxu0 0
      %3733 = vmatprep.subr.bf16.mxu0 0
      %3734 = vmatpush1.bf16.msra.mxu0 0
      %3735 = vmatprep.subr.bf16.mxu0 0
      %3736 = vmatpush1.bf16.msra.mxu0 0
      %3737 = vmatprep.subr.bf16.mxu0 0
      %3738 = vmatpush1.bf16.msra.mxu0 0
      %3739 = vmatprep.subr.bf16.mxu0 0
      %3740 = vmatpush1.bf16.msra.mxu0 0
      %3741 = vmatprep.subr.bf16.mxu0 0
      %3742 = vmatpush1.bf16.msra.mxu0 0
      %3743 = vmatprep.subr.bf16.mxu0 0
      %3744 = vmatpush1.bf16.msra.mxu0 0
      %3745 = vmatprep.subr.bf16.mxu0 0
      %3746 = vmatpush1.bf16.msra.mxu0 0
      %3747 = vmatprep.mubr.bf16.mxu0 0
      %3748 = vmatmul.mubr.bf16.gmra.mrb[0].mxu0 %v3289
      %v3749 = vpop.f32.mrb[0].mxu0
      %v3750 = vadd.f32 0.0, %v3749
      %v3751 = vpop.f32.mrb[0].mxu0
      %v3752 = vpop.f32.mrb[0].mxu0
      %v3753 = vadd.f32 0.0, %v3752
      %v3754 = vpop.f32.mrb[0].mxu0
      %3755 = vmatprep.mubr.bf16.mxu0 0
      %3756 = vmatmul.mubr.bf16.gmra.mrb[0].mxu0 %v3290
      %v3757 = vpop.f32.mrb[0].mxu0
      %v3758 = vadd.f32 0.0, %v3757
      %v3759 = vpop.f32.mrb[0].mxu0
      %v3760 = vpop.f32.mrb[0].mxu0
      %v3761 = vadd.f32 0.0, %v3760
      %v3762 = vpop.f32.mrb[0].mxu0
      %3763 = vmatprep.mubr.bf16.mxu0 0
      %3764 = vmatmul.mubr.bf16.gmra.mrb[0].mxu0 %v3291
      %v3765 = vpop.f32.mrb[0].mxu0
      %v3766 = vadd.f32 0.0, %v3765
      %v3767 = vpop.f32.mrb[0].mxu0
      %v3768 = vpop.f32.mrb[0].mxu0
      %v3769 = vadd.f32 0.0, %v3768
      %v3770 = vpop.f32.mrb[0].mxu0
      %3771 = vmatprep.mubr.bf16.mxu0 0
      %3772 = vmatmul.mubr.bf16.gmra.mrb[0].mxu0 %v3292
      %v3773 = vpop.f32.mrb[0].mxu0
      %v3774 = vadd.f32 0.0, %v3773
      %v3775 = vpop.f32.mrb[0].mxu0
      %v3776 = vpop.f32.mrb[0].mxu0
      %v3777 = vadd.f32 0.0, %v3776
      %v3778 = vpop.f32.mrb[0].mxu0
      %3779 = vmatprep.mubr.bf16.mxu0 0
      %3780 = vmatmul.mubr.bf16.gmra.mrb[0].mxu0 %v3293
      %v3781 = vpop.f32.mrb[0].mxu0
      %v3782 = vadd.f32 0.0, %v3781
      %v3783 = vpop.f32.mrb[0].mxu0
      %v3784 = vpop.f32.mrb[0].mxu0
      %v3785 = vadd.f32 0.0, %v3784
      %v3786 = vpop.f32.mrb[0].mxu0
      %3787 = vmatprep.mubr.bf16.mxu0 0
      %3788 = vmatmul.mubr.bf16.gmra.mrb[0].mxu0 %v3294
      %v3789 = vpop.f32.mrb[0].mxu0
      %v3790 = vadd.f32 0.0, %v3789
      %v3791 = vpop.f32.mrb[0].mxu0
      %v3792 = vpop.f32.mrb[0].mxu0
      %v3793 = vadd.f32 0.0, %v3792
      %v3794 = vpop.f32.mrb[0].mxu0
      %3795 = vmatprep.mubr.bf16.mxu0 0
      %3796 = vmatmul.mubr.bf16.gmra.mrb[0].mxu0 %v3483
      %v3797 = vpop.f32.mrb[0].mxu0
      %v3798 = vadd.f32 0.0, %v3797
      %v3799 = vpop.f32.mrb[0].mxu0
      %v3800 = vpop.f32.mrb[0].mxu0
      %v3801 = vadd.f32 0.0, %v3800
      %v3802 = vpop.f32.mrb[0].mxu0
      %3803 = vmatprep.mubr.bf16.mxu0 0
      %3804 = vmatmul.mubr.bf16.gmra.mrb[0].mxu0 %v3665
      %v3805 = vpop.f32.mrb[0].mxu0
      %v3806 = vadd.f32 0.0, %v3805
      %v3807 = vpop.f32.mrb[0].mxu0
      %v3808 = vpop.f32.mrb[0].mxu0
      %v3809 = vadd.f32 0.0, %v3808
      %v3810 = vpop.f32.mrb[0].mxu0
      %3811 = vdwg.mxu0
      %v3812 = vadd.f32 %v3630, %v3750
      %v3813 = vadd.f32 %v3631, %v3753
      %v3814 = vadd.f32 %v3632, %v3758
      %v3815 = vadd.f32 %v3633, %v3761
      %v3816 = vadd.f32 %v3634, %v3766
      %v3817 = vadd.f32 %v3635, %v3769
      %v3818 = vadd.f32 %v3636, %v3774
      %v3819 = vadd.f32 %v3637, %v3777
      %v3820 = vadd.f32 %v3638, %v3782
      %v3821 = vadd.f32 %v3639, %v3785
      %v3822 = vadd.f32 %v3640, %v3790
      %v3823 = vadd.f32 %v3641, %v3793
      %v3824 = vadd.f32 %v3642, %v3798
      %v3825 = vadd.f32 %v3643, %v3801
      %v3826 = vadd.f32 %v3644, %v3806
      %v3827 = vadd.f32 %v3645, %v3809
      %v3838 = vrot.slane %v2391, 5
      %v3839 = vrot.slane %v3838, 4
      %v3840 = vrot.slane %v2392, 5
      %v3841 = vsel %vm1746, %v3839, %v3840
      %v3842 = vrot.slane %v3840, 4
      %v3843 = vrot.slane %v2393, 5
      %v3844 = vsel %vm1746, %v3842, %v3843
      %v3845 = vrot.slane %v2394, 5
      %v3846 = vrot.slane %v3845, 4
      %v3847 = vrot.slane %v2395, 5
      %v3848 = vsel %vm1746, %v3846, %v3847
      %v3849 = vrot.slane %v3847, 4
      %v3850 = vrot.slane %v2396, 5
      %v3851 = vsel %vm1746, %v3849, %v3850
      %v3852 = vrot.slane %v2397, 5
      %v3853 = vrot.slane %v3852, 4
      %v3854 = vrot.slane %v2398, 5
      %v3855 = vsel %vm1746, %v3853, %v3854
      %v3856 = vrot.slane %v3854, 4
      %v3857 = vrot.slane %v2399, 5
      %v3858 = vsel %vm1746, %v3856, %v3857
      %v3859 = vrot.slane %v2400, 5
      %v3860 = vrot.slane %v3859, 4
      %v3861 = vrot.slane %v2401, 5
      %v3862 = vsel %vm1746, %v3860, %v3861
      %v3863 = vrot.slane %v3861, 4
      %v3864 = vrot.slane %v2402, 5
      %v3865 = vsel %vm1746, %v3863, %v3864
      %v3866 = vrot.slane %v2403, 5
      %v3867 = vrot.slane %v3866, 4
      %v3868 = vrot.slane %v2404, 5
      %v3869 = vsel %vm1746, %v3867, %v3868
      %v3870 = vrot.slane %v3868, 4
      %v3871 = vrot.slane %v2405, 5
      %v3872 = vsel %vm1746, %v3870, %v3871
      %v3873 = vrot.slane %v2406, 5
      %v3874 = vrot.slane %v3873, 4
      %v3875 = vrot.slane %v2407, 5
      %v3876 = vsel %vm1746, %v3874, %v3875
      %v3877 = vrot.slane %v3875, 4
      %v3878 = vrot.slane %v2408, 5
      %v3879 = vsel %vm1746, %v3877, %v3878
      %v3880 = vrot.slane %v2409, 5
      %v3881 = vrot.slane %v3880, 4
      %v3882 = vrot.slane %v2410, 5
      %v3883 = vsel %vm1746, %v3881, %v3882
      %v3884 = vrot.slane %v3882, 4
      %v3885 = vrot.slane %v2411, 5
      %v3886 = vsel %vm1746, %v3884, %v3885
      %v3887 = vrot.slane %v2412, 5
      %v3888 = vrot.slane %v3887, 4
      %v3889 = vrot.slane %v2413, 5
      %v3890 = vsel %vm1746, %v3888, %v3889
      %v3891 = vrot.slane %v3889, 4
      %v3892 = vrot.slane %v2414, 5
      %v3893 = vsel %vm1746, %v3891, %v3892
      %v3894 = vrot.slane %v2415, 5
      %v3895 = vrot.slane %v3894, 4
      %v3896 = vrot.slane %v2416, 5
      %v3897 = vsel %vm1746, %v3895, %v3896
      %v3898 = vrot.slane %v3896, 4
      %v3899 = vrot.slane %v2417, 5
      %v3900 = vsel %vm1746, %v3898, %v3899
      %v3901 = vrot.slane %v2418, 5
      %v3902 = vrot.slane %v3901, 4
      %v3903 = vrot.slane %v2419, 5
      %v3904 = vsel %vm1746, %v3902, %v3903
      %v3905 = vrot.slane %v3903, 4
      %v3906 = vrot.slane %v2420, 5
      %v3907 = vsel %vm1746, %v3905, %v3906
      %s3908 = scalar_lea.vmem %s3, 128
      %v3909 = vld [vmem:[%s3908] sm:$0xf]
      %v3910 = vld [vmem:[%s3908 + $0x4] sm:$0xf]
      %v3911 = vld [vmem:[%s3908 + $0x8] sm:$0xf]
      %v3912 = vld [vmem:[%s3908 + $0xc] sm:$0xf]
      %v3913 = vld [vmem:[%s3908 + $0x10] sm:$0xf]
      %v3914 = vld [vmem:[%s3908 + $0x14] sm:$0xf]
      %v3915 = vld [vmem:[%s3908 + $0x18] sm:$0xf]
      %v3916 = vld [vmem:[%s3908 + $0x1c] sm:$0xf]
      %v3917 = vld [vmem:[%s3908 + $0x20] sm:$0xf]
      %v3918 = vld [vmem:[%s3908 + $0x24] sm:$0xf]
      %v3919 = vld [vmem:[%s3908 + $0x28] sm:$0xf]
      %v3920 = vld [vmem:[%s3908 + $0x2c] sm:$0xf]
      %v3921 = vld [vmem:[%s3908 + $0x30] sm:$0xf]
      %v3922 = vld [vmem:[%s3908 + $0x34] sm:$0xf]
      %v3923 = vld [vmem:[%s3908 + $0x38] sm:$0xf]
      %v3924 = vld [vmem:[%s3908 + $0x3c] sm:$0xf]
      %v3925 = vunpack.c.l.b16 %v3841
      %v3926 = vunpack.c.l.b16 %v3844
      %v3927 = vunpack.c.l.b16 %v3848
      %v3928 = vunpack.c.l.b16 %v3851
      %v3929 = vunpack.c.l.b16 %v3855
      %v3930 = vunpack.c.l.b16 %v3858
      %v3931 = vunpack.c.l.b16 %v3862
      %v3932 = vunpack.c.l.b16 %v3865
      %v3933 = vunpack.c.l.b16 %v3869
      %v3934 = vunpack.c.l.b16 %v3872
      %v3935 = vunpack.c.l.b16 %v3876
      %v3936 = vunpack.c.l.b16 %v3879
      %v3937 = vunpack.c.l.b16 %v3883
      %v3938 = vunpack.c.l.b16 %v3886
      %v3939 = vunpack.c.l.b16 %v3890
      %v3940 = vunpack.c.l.b16 %v3893
      %v3941 = vpack.c.b16 %v3926, %v3925
      %v3942 = vpack.c.b16 %v3928, %v3927
      %v3943 = vpack.c.b16 %v3930, %v3929
      %v3944 = vpack.c.b16 %v3932, %v3931
      %v3945 = vpack.c.b16 %v3934, %v3933
      %v3946 = vpack.c.b16 %v3936, %v3935
      %v3947 = vpack.c.b16 %v3938, %v3937
      %v3948 = vpack.c.b16 %v3940, %v3939
      %v3973 = vunpack.c.l.b16 %v3909
      %v3974 = vunpack.c.l.b16 %v3910
      %v3975 = vunpack.c.l.b16 %v3911
      %v3976 = vunpack.c.l.b16 %v3912
      %v3977 = vunpack.c.l.b16 %v3913
      %v3978 = vunpack.c.l.b16 %v3914
      %v3979 = vunpack.c.l.b16 %v3915
      %v3980 = vunpack.c.l.b16 %v3916
      %v3981 = vunpack.c.l.b16 %v3917
      %v3982 = vunpack.c.l.b16 %v3918
      %v3983 = vunpack.c.l.b16 %v3919
      %v3984 = vunpack.c.l.b16 %v3920
      %v3985 = vunpack.c.l.b16 %v3921
      %v3986 = vunpack.c.l.b16 %v3922
      %v3987 = vunpack.c.l.b16 %v3923
      %v3988 = vunpack.c.l.b16 %v3924
      %v3989 = vpack.c.b16 %v3974, %v3973
      %v3990 = vpack.c.b16 %v3976, %v3975
      %v3991 = vpack.c.b16 %v3978, %v3977
      %v3992 = vpack.c.b16 %v3980, %v3979
      %v3993 = vpack.c.b16 %v3982, %v3981
      %v3994 = vpack.c.b16 %v3984, %v3983
      %v3995 = vpack.c.b16 %v3986, %v3985
      %v3996 = vpack.c.b16 %v3988, %v3987
      %4005 = vmatprep.subr.bf16.mxu0 0
      %4006 = vmatpush1.bf16.msra.mxu0 %v3989
      %4007 = vmatprep.subr.bf16.mxu0 0
      %4008 = vmatpush1.bf16.msra.mxu0 %v3990
      %4009 = vmatprep.subr.bf16.mxu0 0
      %4010 = vmatpush1.bf16.msra.mxu0 %v3991
      %4011 = vmatprep.subr.bf16.mxu0 0
      %4012 = vmatpush1.bf16.msra.mxu0 %v3992
      %4013 = vmatprep.subr.bf16.mxu0 0
      %4014 = vmatpush1.bf16.msra.mxu0 %v3993
      %4015 = vmatprep.subr.bf16.mxu0 0
      %4016 = vmatpush1.bf16.msra.mxu0 %v3994
      %4017 = vmatprep.subr.bf16.mxu0 0
      %4018 = vmatpush1.bf16.msra.mxu0 %v3995
      %4019 = vmatprep.subr.bf16.mxu0 0
      %4020 = vmatpush1.bf16.msra.mxu0 %v3996
      %4021 = vmatprep.subr.bf16.mxu0 0
      %4022 = vmatpush1.bf16.msra.mxu0 0
      %4023 = vmatprep.subr.bf16.mxu0 0
      %4024 = vmatpush1.bf16.msra.mxu0 0
      %4025 = vmatprep.subr.bf16.mxu0 0
      %4026 = vmatpush1.bf16.msra.mxu0 0
      %4027 = vmatprep.subr.bf16.mxu0 0
      %4028 = vmatpush1.bf16.msra.mxu0 0
      %4029 = vmatprep.subr.bf16.mxu0 0
      %4030 = vmatpush1.bf16.msra.mxu0 0
      %4031 = vmatprep.subr.bf16.mxu0 0
      %4032 = vmatpush1.bf16.msra.mxu0 0
      %4033 = vmatprep.subr.bf16.mxu0 0
      %4034 = vmatpush1.bf16.msra.mxu0 0
      %4035 = vmatprep.subr.bf16.mxu0 0
      %4036 = vmatpush1.bf16.msra.mxu0 0
      %4037 = vmatprep.mubr.bf16.mxu0 0
      %4038 = vmatmul.mubr.bf16.gmra.mrb[0].mxu0 %v3941
      %v4039 = vpop.f32.mrb[0].mxu0
      %v4040 = vadd.f32 0.0, %v4039
      %v4041 = vpop.f32.mrb[0].mxu0
      %v4042 = vpop.f32.mrb[0].mxu0
      %v4043 = vadd.f32 0.0, %v4042
      %v4044 = vpop.f32.mrb[0].mxu0
      %4045 = vmatprep.mubr.bf16.mxu0 0
      %4046 = vmatmul.mubr.bf16.gmra.mrb[0].mxu0 %v3942
      %v4047 = vpop.f32.mrb[0].mxu0
      %v4048 = vadd.f32 0.0, %v4047
      %v4049 = vpop.f32.mrb[0].mxu0
      %v4050 = vpop.f32.mrb[0].mxu0
      %v4051 = vadd.f32 0.0, %v4050
      %v4052 = vpop.f32.mrb[0].mxu0
      %4053 = vmatprep.mubr.bf16.mxu0 0
      %4054 = vmatmul.mubr.bf16.gmra.mrb[0].mxu0 %v3943
      %v4055 = vpop.f32.mrb[0].mxu0
      %v4056 = vadd.f32 0.0, %v4055
      %v4057 = vpop.f32.mrb[0].mxu0
      %v4058 = vpop.f32.mrb[0].mxu0
      %v4059 = vadd.f32 0.0, %v4058
      %v4060 = vpop.f32.mrb[0].mxu0
      %4061 = vmatprep.mubr.bf16.mxu0 0
      %4062 = vmatmul.mubr.bf16.gmra.mrb[0].mxu0 %v3944
      %v4063 = vpop.f32.mrb[0].mxu0
      %v4064 = vadd.f32 0.0, %v4063
      %v4065 = vpop.f32.mrb[0].mxu0
      %v4066 = vpop.f32.mrb[0].mxu0
      %v4067 = vadd.f32 0.0, %v4066
      %v4068 = vpop.f32.mrb[0].mxu0
      %4069 = vmatprep.mubr.bf16.mxu0 0
      %4070 = vmatmul.mubr.bf16.gmra.mrb[0].mxu0 %v3945
      %v4071 = vpop.f32.mrb[0].mxu0
      %v4072 = vadd.f32 0.0, %v4071
      %v4073 = vpop.f32.mrb[0].mxu0
      %v4074 = vpop.f32.mrb[0].mxu0
      %v4075 = vadd.f32 0.0, %v4074
      %v4076 = vpop.f32.mrb[0].mxu0
      %4077 = vmatprep.mubr.bf16.mxu0 0
      %4078 = vmatmul.mubr.bf16.gmra.mrb[0].mxu0 %v3946
      %v4079 = vpop.f32.mrb[0].mxu0
      %v4080 = vadd.f32 0.0, %v4079
      %v4081 = vpop.f32.mrb[0].mxu0
      %v4082 = vpop.f32.mrb[0].mxu0
      %v4083 = vadd.f32 0.0, %v4082
      %v4084 = vpop.f32.mrb[0].mxu0
      %4085 = vmatprep.mubr.bf16.mxu0 0
      %4086 = vmatmul.mubr.bf16.gmra.mrb[0].mxu0 %v3947
      %v4087 = vpop.f32.mrb[0].mxu0
      %v4088 = vadd.f32 0.0, %v4087
      %v4089 = vpop.f32.mrb[0].mxu0
      %v4090 = vpop.f32.mrb[0].mxu0
      %v4091 = vadd.f32 0.0, %v4090
      %v4092 = vpop.f32.mrb[0].mxu0
      %4093 = vmatprep.mubr.bf16.mxu0 0
      %4094 = vmatmul.mubr.bf16.gmra.mrb[0].mxu0 %v3948
      %v4095 = vpop.f32.mrb[0].mxu0
      %v4096 = vadd.f32 0.0, %v4095
      %v4097 = vpop.f32.mrb[0].mxu0
      %v4098 = vpop.f32.mrb[0].mxu0
      %v4099 = vadd.f32 0.0, %v4098
      %v4100 = vpop.f32.mrb[0].mxu0
      %4101 = vdwg.mxu0
      %v4102 = vadd.f32 %v3812, %v4040
      %v4103 = vadd.f32 %v3813, %v4043
      %v4104 = vadd.f32 %v3814, %v4048
      %v4105 = vadd.f32 %v3815, %v4051
      %v4106 = vadd.f32 %v3816, %v4056
      %v4107 = vadd.f32 %v3817, %v4059
      %v4108 = vadd.f32 %v3818, %v4064
      %v4109 = vadd.f32 %v3819, %v4067
      %v4110 = vadd.f32 %v3820, %v4072
      %v4111 = vadd.f32 %v3821, %v4075
      %v4112 = vadd.f32 %v3822, %v4080
      %v4113 = vadd.f32 %v3823, %v4083
      %v4114 = vadd.f32 %v3824, %v4088
      %v4115 = vadd.f32 %v3825, %v4091
      %v4116 = vadd.f32 %v3826, %v4096
      %v4117 = vadd.f32 %v3827, %v4099
      %s4118 = scalar_lea.vmem %s3, 320
      %v4119 = vld [vmem:[%s4118] sm:$0xf]
      %v4120 = vld [vmem:[%s4118 + $0x4] sm:$0xf]
      %v4121 = vld [vmem:[%s4118 + $0x8] sm:$0xf]
      %v4122 = vld [vmem:[%s4118 + $0xc] sm:$0xf]
      %v4123 = vld [vmem:[%s4118 + $0x10] sm:$0xf]
      %v4124 = vld [vmem:[%s4118 + $0x14] sm:$0xf]
      %v4125 = vld [vmem:[%s4118 + $0x18] sm:$0xf]
      %v4126 = vld [vmem:[%s4118 + $0x1c] sm:$0xf]
      %v4127 = vld [vmem:[%s4118 + $0x20] sm:$0xf]
      %v4128 = vld [vmem:[%s4118 + $0x24] sm:$0xf]
      %v4129 = vld [vmem:[%s4118 + $0x28] sm:$0xf]
      %v4130 = vld [vmem:[%s4118 + $0x2c] sm:$0xf]
      %v4131 = vld [vmem:[%s4118 + $0x30] sm:$0xf]
      %v4132 = vld [vmem:[%s4118 + $0x34] sm:$0xf]
      %v4133 = vld [vmem:[%s4118 + $0x38] sm:$0xf]
      %v4134 = vld [vmem:[%s4118 + $0x3c] sm:$0xf]
      %v4135 = vunpack.c.l.b16 %v3897
      %v4136 = vunpack.c.l.b16 %v3900
      %v4137 = vpack.c.b16 %v4136, %v4135
      %v4155 = vunpack.c.l.b16 %v4119
      %v4156 = vunpack.c.l.b16 %v4120
      %v4157 = vunpack.c.l.b16 %v4121
      %v4158 = vunpack.c.l.b16 %v4122
      %v4159 = vunpack.c.l.b16 %v4123
      %v4160 = vunpack.c.l.b16 %v4124
      %v4161 = vunpack.c.l.b16 %v4125
      %v4162 = vunpack.c.l.b16 %v4126
      %v4163 = vunpack.c.l.b16 %v4127
      %v4164 = vunpack.c.l.b16 %v4128
      %v4165 = vunpack.c.l.b16 %v4129
      %v4166 = vunpack.c.l.b16 %v4130
      %v4167 = vunpack.c.l.b16 %v4131
      %v4168 = vunpack.c.l.b16 %v4132
      %v4169 = vunpack.c.l.b16 %v4133
      %v4170 = vunpack.c.l.b16 %v4134
      %v4171 = vpack.c.b16 %v4156, %v4155
      %v4172 = vpack.c.b16 %v4158, %v4157
      %v4173 = vpack.c.b16 %v4160, %v4159
      %v4174 = vpack.c.b16 %v4162, %v4161
      %v4175 = vpack.c.b16 %v4164, %v4163
      %v4176 = vpack.c.b16 %v4166, %v4165
      %v4177 = vpack.c.b16 %v4168, %v4167
      %v4178 = vpack.c.b16 %v4170, %v4169
      %4187 = vmatprep.subr.bf16.mxu0 0
      %4188 = vmatpush1.bf16.msra.mxu0 %v4171
      %4189 = vmatprep.subr.bf16.mxu0 0
      %4190 = vmatpush1.bf16.msra.mxu0 %v4172
      %4191 = vmatprep.subr.bf16.mxu0 0
      %4192 = vmatpush1.bf16.msra.mxu0 %v4173
      %4193 = vmatprep.subr.bf16.mxu0 0
      %4194 = vmatpush1.bf16.msra.mxu0 %v4174
      %4195 = vmatprep.subr.bf16.mxu0 0
      %4196 = vmatpush1.bf16.msra.mxu0 %v4175
      %4197 = vmatprep.subr.bf16.mxu0 0
      %4198 = vmatpush1.bf16.msra.mxu0 %v4176
      %4199 = vmatprep.subr.bf16.mxu0 0
      %4200 = vmatpush1.bf16.msra.mxu0 %v4177
      %4201 = vmatprep.subr.bf16.mxu0 0
      %4202 = vmatpush1.bf16.msra.mxu0 %v4178
      %4203 = vmatprep.subr.bf16.mxu0 0
      %4204 = vmatpush1.bf16.msra.mxu0 0
      %4205 = vmatprep.subr.bf16.mxu0 0
      %4206 = vmatpush1.bf16.msra.mxu0 0
      %4207 = vmatprep.subr.bf16.mxu0 0
      %4208 = vmatpush1.bf16.msra.mxu0 0
      %4209 = vmatprep.subr.bf16.mxu0 0
      %4210 = vmatpush1.bf16.msra.mxu0 0
      %4211 = vmatprep.subr.bf16.mxu0 0
      %4212 = vmatpush1.bf16.msra.mxu0 0
      %4213 = vmatprep.subr.bf16.mxu0 0
      %4214 = vmatpush1.bf16.msra.mxu0 0
      %4215 = vmatprep.subr.bf16.mxu0 0
      %4216 = vmatpush1.bf16.msra.mxu0 0
      %4217 = vmatprep.subr.bf16.mxu0 0
      %4218 = vmatpush1.bf16.msra.mxu0 0
      %4219 = vmatprep.mubr.bf16.mxu0 0
      %4220 = vmatmul.mubr.bf16.gmra.mrb[0].mxu0 %v3942
      %v4221 = vpop.f32.mrb[0].mxu0
      %v4222 = vadd.f32 0.0, %v4221
      %v4223 = vpop.f32.mrb[0].mxu0
      %v4224 = vpop.f32.mrb[0].mxu0
      %v4225 = vadd.f32 0.0, %v4224
      %v4226 = vpop.f32.mrb[0].mxu0
      %4227 = vmatprep.mubr.bf16.mxu0 0
      %4228 = vmatmul.mubr.bf16.gmra.mrb[0].mxu0 %v3943
      %v4229 = vpop.f32.mrb[0].mxu0
      %v4230 = vadd.f32 0.0, %v4229
      %v4231 = vpop.f32.mrb[0].mxu0
      %v4232 = vpop.f32.mrb[0].mxu0
      %v4233 = vadd.f32 0.0, %v4232
      %v4234 = vpop.f32.mrb[0].mxu0
      %4235 = vmatprep.mubr.bf16.mxu0 0
      %4236 = vmatmul.mubr.bf16.gmra.mrb[0].mxu0 %v3944
      %v4237 = vpop.f32.mrb[0].mxu0
      %v4238 = vadd.f32 0.0, %v4237
      %v4239 = vpop.f32.mrb[0].mxu0
      %v4240 = vpop.f32.mrb[0].mxu0
      %v4241 = vadd.f32 0.0, %v4240
      %v4242 = vpop.f32.mrb[0].mxu0
      %4243 = vmatprep.mubr.bf16.mxu0 0
      %4244 = vmatmul.mubr.bf16.gmra.mrb[0].mxu0 %v3945
      %v4245 = vpop.f32.mrb[0].mxu0
      %v4246 = vadd.f32 0.0, %v4245
      %v4247 = vpop.f32.mrb[0].mxu0
      %v4248 = vpop.f32.mrb[0].mxu0
      %v4249 = vadd.f32 0.0, %v4248
      %v4250 = vpop.f32.mrb[0].mxu0
      %4251 = vmatprep.mubr.bf16.mxu0 0
      %4252 = vmatmul.mubr.bf16.gmra.mrb[0].mxu0 %v3946
      %v4253 = vpop.f32.mrb[0].mxu0
      %v4254 = vadd.f32 0.0, %v4253
      %v4255 = vpop.f32.mrb[0].mxu0
      %v4256 = vpop.f32.mrb[0].mxu0
      %v4257 = vadd.f32 0.0, %v4256
      %v4258 = vpop.f32.mrb[0].mxu0
      %4259 = vmatprep.mubr.bf16.mxu0 0
      %4260 = vmatmul.mubr.bf16.gmra.mrb[0].mxu0 %v3947
      %v4261 = vpop.f32.mrb[0].mxu0
      %v4262 = vadd.f32 0.0, %v4261
      %v4263 = vpop.f32.mrb[0].mxu0
      %v4264 = vpop.f32.mrb[0].mxu0
      %v4265 = vadd.f32 0.0, %v4264
      %v4266 = vpop.f32.mrb[0].mxu0
      %4267 = vmatprep.mubr.bf16.mxu0 0
      %4268 = vmatmul.mubr.bf16.gmra.mrb[0].mxu0 %v3948
      %v4269 = vpop.f32.mrb[0].mxu0
      %v4270 = vadd.f32 0.0, %v4269
      %v4271 = vpop.f32.mrb[0].mxu0
      %v4272 = vpop.f32.mrb[0].mxu0
      %v4273 = vadd.f32 0.0, %v4272
      %v4274 = vpop.f32.mrb[0].mxu0
      %4275 = vmatprep.mubr.bf16.mxu0 0
      %4276 = vmatmul.mubr.bf16.gmra.mrb[0].mxu0 %v4137
      %v4277 = vpop.f32.mrb[0].mxu0
      %v4278 = vadd.f32 0.0, %v4277
      %v4279 = vpop.f32.mrb[0].mxu0
      %v4280 = vpop.f32.mrb[0].mxu0
      %v4281 = vadd.f32 0.0, %v4280
      %v4282 = vpop.f32.mrb[0].mxu0
      %4283 = vdwg.mxu0
      %v4284 = vadd.f32 %v4102, %v4222
      %v4285 = vadd.f32 %v4103, %v4225
      %v4286 = vadd.f32 %v4104, %v4230
      %v4287 = vadd.f32 %v4105, %v4233
      %v4288 = vadd.f32 %v4106, %v4238
      %v4289 = vadd.f32 %v4107, %v4241
      %v4290 = vadd.f32 %v4108, %v4246
      %v4291 = vadd.f32 %v4109, %v4249
      %v4292 = vadd.f32 %v4110, %v4254
      %v4293 = vadd.f32 %v4111, %v4257
      %v4294 = vadd.f32 %v4112, %v4262
      %v4295 = vadd.f32 %v4113, %v4265
      %v4296 = vadd.f32 %v4114, %v4270
      %v4297 = vadd.f32 %v4115, %v4273
      %v4298 = vadd.f32 %v4116, %v4278
      %v4299 = vadd.f32 %v4117, %v4281
      %s4300 = scalar_lea.vmem %s3, 512
      %v4301 = vld [vmem:[%s4300] sm:$0xf]
      %v4302 = vld [vmem:[%s4300 + $0x4] sm:$0xf]
      %v4303 = vld [vmem:[%s4300 + $0x8] sm:$0xf]
      %v4304 = vld [vmem:[%s4300 + $0xc] sm:$0xf]
      %v4305 = vld [vmem:[%s4300 + $0x10] sm:$0xf]
      %v4306 = vld [vmem:[%s4300 + $0x14] sm:$0xf]
      %v4307 = vld [vmem:[%s4300 + $0x18] sm:$0xf]
      %v4308 = vld [vmem:[%s4300 + $0x1c] sm:$0xf]
      %v4309 = vld [vmem:[%s4300 + $0x20] sm:$0xf]
      %v4310 = vld [vmem:[%s4300 + $0x24] sm:$0xf]
      %v4311 = vld [vmem:[%s4300 + $0x28] sm:$0xf]
      %v4312 = vld [vmem:[%s4300 + $0x2c] sm:$0xf]
      %v4313 = vld [vmem:[%s4300 + $0x30] sm:$0xf]
      %v4314 = vld [vmem:[%s4300 + $0x34] sm:$0xf]
      %v4315 = vld [vmem:[%s4300 + $0x38] sm:$0xf]
      %v4316 = vld [vmem:[%s4300 + $0x3c] sm:$0xf]
      %v4317 = vunpack.c.l.b16 %v3904
      %v4318 = vunpack.c.l.b16 %v3907
      %v4319 = vpack.c.b16 %v4318, %v4317
      %v4337 = vunpack.c.l.b16 %v4301
      %v4338 = vunpack.c.l.b16 %v4302
      %v4339 = vunpack.c.l.b16 %v4303
      %v4340 = vunpack.c.l.b16 %v4304
      %v4341 = vunpack.c.l.b16 %v4305
      %v4342 = vunpack.c.l.b16 %v4306
      %v4343 = vunpack.c.l.b16 %v4307
      %v4344 = vunpack.c.l.b16 %v4308
      %v4345 = vunpack.c.l.b16 %v4309
      %v4346 = vunpack.c.l.b16 %v4310
      %v4347 = vunpack.c.l.b16 %v4311
      %v4348 = vunpack.c.l.b16 %v4312
      %v4349 = vunpack.c.l.b16 %v4313
      %v4350 = vunpack.c.l.b16 %v4314
      %v4351 = vunpack.c.l.b16 %v4315
      %v4352 = vunpack.c.l.b16 %v4316
      %v4353 = vpack.c.b16 %v4338, %v4337
      %v4354 = vpack.c.b16 %v4340, %v4339
      %v4355 = vpack.c.b16 %v4342, %v4341
      %v4356 = vpack.c.b16 %v4344, %v4343
      %v4357 = vpack.c.b16 %v4346, %v4345
      %v4358 = vpack.c.b16 %v4348, %v4347
      %v4359 = vpack.c.b16 %v4350, %v4349
      %v4360 = vpack.c.b16 %v4352, %v4351
      %4369 = vmatprep.subr.bf16.mxu0 0
      %4370 = vmatpush1.bf16.msra.mxu0 %v4353
      %4371 = vmatprep.subr.bf16.mxu0 0
      %4372 = vmatpush1.bf16.msra.mxu0 %v4354
      %4373 = vmatprep.subr.bf16.mxu0 0
      %4374 = vmatpush1.bf16.msra.mxu0 %v4355
      %4375 = vmatprep.subr.bf16.mxu0 0
      %4376 = vmatpush1.bf16.msra.mxu0 %v4356
      %4377 = vmatprep.subr.bf16.mxu0 0
      %4378 = vmatpush1.bf16.msra.mxu0 %v4357
      %4379 = vmatprep.subr.bf16.mxu0 0
      %4380 = vmatpush1.bf16.msra.mxu0 %v4358
      %4381 = vmatprep.subr.bf16.mxu0 0
      %4382 = vmatpush1.bf16.msra.mxu0 %v4359
      %4383 = vmatprep.subr.bf16.mxu0 0
      %4384 = vmatpush1.bf16.msra.mxu0 %v4360
      %4385 = vmatprep.subr.bf16.mxu0 0
      %4386 = vmatpush1.bf16.msra.mxu0 0
      %4387 = vmatprep.subr.bf16.mxu0 0
      %4388 = vmatpush1.bf16.msra.mxu0 0
      %4389 = vmatprep.subr.bf16.mxu0 0
      %4390 = vmatpush1.bf16.msra.mxu0 0
      %4391 = vmatprep.subr.bf16.mxu0 0
      %4392 = vmatpush1.bf16.msra.mxu0 0
      %4393 = vmatprep.subr.bf16.mxu0 0
      %4394 = vmatpush1.bf16.msra.mxu0 0
      %4395 = vmatprep.subr.bf16.mxu0 0
      %4396 = vmatpush1.bf16.msra.mxu0 0
      %4397 = vmatprep.subr.bf16.mxu0 0
      %4398 = vmatpush1.bf16.msra.mxu0 0
      %4399 = vmatprep.subr.bf16.mxu0 0
      %4400 = vmatpush1.bf16.msra.mxu0 0
      %4401 = vmatprep.mubr.bf16.mxu0 0
      %4402 = vmatmul.mubr.bf16.gmra.mrb[0].mxu0 %v3943
      %v4403 = vpop.f32.mrb[0].mxu0
      %v4404 = vadd.f32 0.0, %v4403
      %v4405 = vpop.f32.mrb[0].mxu0
      %v4406 = vpop.f32.mrb[0].mxu0
      %v4407 = vadd.f32 0.0, %v4406
      %v4408 = vpop.f32.mrb[0].mxu0
      %4409 = vmatprep.mubr.bf16.mxu0 0
      %4410 = vmatmul.mubr.bf16.gmra.mrb[0].mxu0 %v3944
      %v4411 = vpop.f32.mrb[0].mxu0
      %v4412 = vadd.f32 0.0, %v4411
      %v4413 = vpop.f32.mrb[0].mxu0
      %v4414 = vpop.f32.mrb[0].mxu0
      %v4415 = vadd.f32 0.0, %v4414
      %v4416 = vpop.f32.mrb[0].mxu0
      %4417 = vmatprep.mubr.bf16.mxu0 0
      %4418 = vmatmul.mubr.bf16.gmra.mrb[0].mxu0 %v3945
      %v4419 = vpop.f32.mrb[0].mxu0
      %v4420 = vadd.f32 0.0, %v4419
      %v4421 = vpop.f32.mrb[0].mxu0
      %v4422 = vpop.f32.mrb[0].mxu0
      %v4423 = vadd.f32 0.0, %v4422
      %v4424 = vpop.f32.mrb[0].mxu0
      %4425 = vmatprep.mubr.bf16.mxu0 0
      %4426 = vmatmul.mubr.bf16.gmra.mrb[0].mxu0 %v3946
      %v4427 = vpop.f32.mrb[0].mxu0
      %v4428 = vadd.f32 0.0, %v4427
      %v4429 = vpop.f32.mrb[0].mxu0
      %v4430 = vpop.f32.mrb[0].mxu0
      %v4431 = vadd.f32 0.0, %v4430
      %v4432 = vpop.f32.mrb[0].mxu0
      %4433 = vmatprep.mubr.bf16.mxu0 0
      %4434 = vmatmul.mubr.bf16.gmra.mrb[0].mxu0 %v3947
      %v4435 = vpop.f32.mrb[0].mxu0
      %v4436 = vadd.f32 0.0, %v4435
      %v4437 = vpop.f32.mrb[0].mxu0
      %v4438 = vpop.f32.mrb[0].mxu0
      %v4439 = vadd.f32 0.0, %v4438
      %v4440 = vpop.f32.mrb[0].mxu0
      %4441 = vmatprep.mubr.bf16.mxu0 0
      %4442 = vmatmul.mubr.bf16.gmra.mrb[0].mxu0 %v3948
      %v4443 = vpop.f32.mrb[0].mxu0
      %v4444 = vadd.f32 0.0, %v4443
      %v4445 = vpop.f32.mrb[0].mxu0
      %v4446 = vpop.f32.mrb[0].mxu0
      %v4447 = vadd.f32 0.0, %v4446
      %v4448 = vpop.f32.mrb[0].mxu0
      %4449 = vmatprep.mubr.bf16.mxu0 0
      %4450 = vmatmul.mubr.bf16.gmra.mrb[0].mxu0 %v4137
      %v4451 = vpop.f32.mrb[0].mxu0
      %v4452 = vadd.f32 0.0, %v4451
      %v4453 = vpop.f32.mrb[0].mxu0
      %v4454 = vpop.f32.mrb[0].mxu0
      %v4455 = vadd.f32 0.0, %v4454
      %v4456 = vpop.f32.mrb[0].mxu0
      %4457 = vmatprep.mubr.bf16.mxu0 0
      %4458 = vmatmul.mubr.bf16.gmra.mrb[0].mxu0 %v4319
      %v4459 = vpop.f32.mrb[0].mxu0
      %v4460 = vadd.f32 0.0, %v4459
      %v4461 = vpop.f32.mrb[0].mxu0
      %v4462 = vpop.f32.mrb[0].mxu0
      %v4463 = vadd.f32 0.0, %v4462
      %v4464 = vpop.f32.mrb[0].mxu0
      %4465 = vdwg.mxu0
      %v4466 = vadd.f32 %v4284, %v4404
      %v4467 = vadd.f32 %v4285, %v4407
      %v4468 = vadd.f32 %v4286, %v4412
      %v4469 = vadd.f32 %v4287, %v4415
      %v4470 = vadd.f32 %v4288, %v4420
      %v4471 = vadd.f32 %v4289, %v4423
      %v4472 = vadd.f32 %v4290, %v4428
      %v4473 = vadd.f32 %v4291, %v4431
      %v4474 = vadd.f32 %v4292, %v4436
      %v4475 = vadd.f32 %v4293, %v4439
      %v4476 = vadd.f32 %v4294, %v4444
      %v4477 = vadd.f32 %v4295, %v4447
      %v4478 = vadd.f32 %v4296, %v4452
      %v4479 = vadd.f32 %v4297, %v4455
      %v4480 = vadd.f32 %v4298, %v4460
      %v4481 = vadd.f32 %v4299, %v4463
      %v4482 = vld [vmem:[%s4] sm:$0x1]
      %v4484 = vlaneseq
      %v4485 = vshrl.u32 %v4484, 7
      %v4486 = vsub.s32 0, %v4485
      %v4487 = vrot.slane %v4482, %v4486
      %v4489 = vmul.f32 %v4466, %v4487
      %v4490 = vmul.f32 %v4467, %v4487
      %v4491 = vmul.f32 %v4468, %v4487
      %v4492 = vmul.f32 %v4469, %v4487
      %v4493 = vmul.f32 %v4470, %v4487
      %v4494 = vmul.f32 %v4471, %v4487
      %v4495 = vmul.f32 %v4472, %v4487
      %v4496 = vmul.f32 %v4473, %v4487
      %v4497 = vmul.f32 %v4474, %v4487
      %v4498 = vmul.f32 %v4475, %v4487
      %v4499 = vmul.f32 %v4476, %v4487
      %v4500 = vmul.f32 %v4477, %v4487
      %v4501 = vmul.f32 %v4478, %v4487
      %v4502 = vmul.f32 %v4479, %v4487
      %v4503 = vmul.f32 %v4480, %v4487
      %v4504 = vmul.f32 %v4481, %v4487
      %v4505 = vld [vmem:[%s5] sm:$0x1]
      %v4507 = vlaneseq
      %v4508 = vshrl.u32 %v4507, 7
      %v4509 = vsub.s32 0, %v4508
      %v4510 = vrot.slane %v4505, %v4509
      %v4512 = vadd.f32 %v4489, %v4510
      %v4513 = vadd.f32 %v4490, %v4510
      %v4514 = vadd.f32 %v4491, %v4510
      %v4515 = vadd.f32 %v4492, %v4510
      %v4516 = vadd.f32 %v4493, %v4510
      %v4517 = vadd.f32 %v4494, %v4510
      %v4518 = vadd.f32 %v4495, %v4510
      %v4519 = vadd.f32 %v4496, %v4510
      %v4520 = vadd.f32 %v4497, %v4510
      %v4521 = vadd.f32 %v4498, %v4510
      %v4522 = vadd.f32 %v4499, %v4510
      %v4523 = vadd.f32 %v4500, %v4510
      %v4524 = vadd.f32 %v4501, %v4510
      %v4525 = vadd.f32 %v4502, %v4510
      %v4526 = vadd.f32 %v4503, %v4510
      %v4527 = vadd.f32 %v4504, %v4510
      %v4528 = vmax.f32 %v4512, 0.0
      %v4529 = vmax.f32 %v4513, 0.0
      %v4530 = vmax.f32 %v4514, 0.0
      %v4531 = vmax.f32 %v4515, 0.0
      %v4532 = vmax.f32 %v4516, 0.0
      %v4533 = vmax.f32 %v4517, 0.0
      %v4534 = vmax.f32 %v4518, 0.0
      %v4535 = vmax.f32 %v4519, 0.0
      %v4536 = vmax.f32 %v4520, 0.0
      %v4537 = vmax.f32 %v4521, 0.0
      %v4538 = vmax.f32 %v4522, 0.0
      %v4539 = vmax.f32 %v4523, 0.0
      %v4540 = vmax.f32 %v4524, 0.0
      %v4541 = vmax.f32 %v4525, 0.0
      %v4542 = vmax.f32 %v4526, 0.0
      %v4543 = vmax.f32 %v4527, 0.0
      %v4544 = vpack.c.bf16 %v4529, %v4528
      %v4545 = vpack.c.bf16 %v4531, %v4530
      %v4546 = vpack.c.bf16 %v4533, %v4532
      %v4547 = vpack.c.bf16 %v4535, %v4534
      %v4548 = vpack.c.bf16 %v4537, %v4536
      %v4549 = vpack.c.bf16 %v4539, %v4538
      %v4550 = vpack.c.bf16 %v4541, %v4540
      %v4551 = vpack.c.bf16 %v4543, %v4542
      %v4560 = vunpack.c.l.b16 %v4544
      %v4561 = vunpack.c.h.b16 %v4544
      %v4562 = vunpack.c.l.b16 %v4545
      %v4563 = vunpack.c.h.b16 %v4545
      %v4564 = vunpack.c.l.b16 %v4546
      %v4565 = vunpack.c.h.b16 %v4546
      %v4566 = vunpack.c.l.b16 %v4547
      %v4567 = vunpack.c.h.b16 %v4547
      %v4568 = vunpack.c.l.b16 %v4548
      %v4569 = vunpack.c.h.b16 %v4548
      %v4570 = vunpack.c.l.b16 %v4549
      %v4571 = vunpack.c.h.b16 %v4549
      %v4572 = vunpack.c.l.b16 %v4550
      %v4573 = vunpack.c.h.b16 %v4550
      %v4574 = vunpack.c.l.b16 %v4551
      %v4575 = vunpack.c.h.b16 %v4551
      %v4576 = vpack.c.b16 %v4560, %v4560
      %v4577 = vpack.c.b16 %v4561, %v4561
      %v4578 = vpack.c.b16 %v4562, %v4562
      %v4579 = vpack.c.b16 %v4563, %v4563
      %v4580 = vpack.c.b16 %v4564, %v4564
      %v4581 = vpack.c.b16 %v4565, %v4565
      %v4582 = vpack.c.b16 %v4566, %v4566
      %v4583 = vpack.c.b16 %v4567, %v4567
      %v4584 = vpack.c.b16 %v4568, %v4568
      %v4585 = vpack.c.b16 %v4569, %v4569
      %v4586 = vpack.c.b16 %v4570, %v4570
      %v4587 = vpack.c.b16 %v4571, %v4571
      %v4588 = vpack.c.b16 %v4572, %v4572
      %v4589 = vpack.c.b16 %v4573, %v4573
      %v4590 = vpack.c.b16 %v4574, %v4574
      %v4591 = vpack.c.b16 %v4575, %v4575
      %4608 = vst [vmem:[%s323] sm:$0xf] %v4576
      %4609 = vst [vmem:[%s323 + $0x4] sm:$0xf] %v4577
      %4610 = vst [vmem:[%s323 + $0x8] sm:$0xf] %v4578
      %4611 = vst [vmem:[%s323 + $0xc] sm:$0xf] %v4579
      %4612 = vst [vmem:[%s323 + $0x10] sm:$0xf] %v4580
      %4613 = vst [vmem:[%s323 + $0x14] sm:$0xf] %v4581
      %4614 = vst [vmem:[%s323 + $0x18] sm:$0xf] %v4582
      %4615 = vst [vmem:[%s323 + $0x1c] sm:$0xf] %v4583
      %4616 = vst [vmem:[%s323 + $0x20] sm:$0xf] %v4584
      %4617 = vst [vmem:[%s323 + $0x24] sm:$0xf] %v4585
      %4618 = vst [vmem:[%s323 + $0x28] sm:$0xf] %v4586
      %4619 = vst [vmem:[%s323 + $0x2c] sm:$0xf] %v4587
      %4620 = vst [vmem:[%s323 + $0x30] sm:$0xf] %v4588
      %4621 = vst [vmem:[%s323 + $0x34] sm:$0xf] %v4589
      %4622 = vst [vmem:[%s323 + $0x38] sm:$0xf] %v4590
      %4623 = vst [vmem:[%s323 + $0x3c] sm:$0xf] %v4591
      %s4624 = smul.u32 8, %s22
      %p4625 = scmp.lt.s32.totalorder %s21, 1
      %s4626 = scalar_select %p4625, %s21, 1
      %p4627 = scmp.lt.s32.totalorder %s4624, 15
      %s4628 = scalar_select %p4627, %s4624, 15
      %s4629 = smul.addr %s4628, 2
      %s4630 = smul.addr %s4626, 32
      %s4631 = sadd.s32 %s4629, %s4630
      %s4632 = smul.addr %s4631, 4
      %s4633 = scalar_lea.vmem %s6, %s4632
      // Predicated region
      $region45: #{up_forward.4} parent=43 // pred_check
        %p4634 = pneg %p193
      $region46: #{up_forward.4} parent=43 // pred_check_branch
        %4636 = sbr.rel (%p4634) target = $region48
      $region47: #{up_forward.4} parent=43 // pred_region
        %s4637 = smul.u32 8, %s22
      $region48: #{up_forward.4} parent=43 // pred_fallthru
        _
    $region44: #{up_forward.4} parent=5 // pred_fallthru
      _
    %p4638 = scmp.le.s32.totalorder 2, %s12
    // Predicated region
    $region49: #{up_forward.4} parent=5 // pred_check
      %p4639 = pneg %p4638
    $region50: #{up_forward.4} parent=5 // pred_check_branch
      %4641 = sbr.rel (%p4639) target = $region52
    $region51: #{up_forward.4} parent=5 // pred_region
      %s4642 = ssub.s32 %s12, 2
      // Predicated region
      $region53: #{up_forward.4} parent=51 // pred_check
        %p4643 = pneg %p199
      $region54: #{up_forward.4} parent=51 // pred_check_branch
        %4645 = sbr.rel (%p4643) target = $region56
      $region55: #{up_forward.4} parent=51 // pred_region
        %s4646 = smul.u32 8, %s24
        %p4647 = scmp.lt.s32.totalorder %s23, 1
        %s4648 = scalar_select %p4647, %s23, 1
        %p4649 = scmp.lt.s32.totalorder %s4646, 15
        %s4650 = scalar_select %p4649, %s4646, 15
        %s4651 = smul.addr %s4650, 2
        %s4652 = smul.addr %s4648, 32
        %s4653 = sadd.s32 %s4651, %s4652
        %s4654 = smul.addr %s4653, 4
        %s4655 = scalar_lea.vmem %s6, %s4654
      $region56: #{up_forward.4} parent=51 // pred_fallthru
        _
    $region52: #{up_forward.4} parent=5 // pred_fallthru
      _
  $region6: #{up_forward.4} parent=0 // loop_footer
    %s16 = sadd.s32 1, %s12
  $region7: #{up_forward.4} parent=0 // loop_footer_branch
    %11 = sbr.rel target = $region3
  $region8: #{up_forward.4} parent=0 // loop_exit
    _

</llo_original>
